<compile_context>
chip_gen: v5e
topology: v5e:2x2
jax: 0.10.0
libtpu: 0.0.40
codegen_flags: <defaults>
</compile_context>

<pallas_src>
import functools
import math

import jax
import jax.numpy as jnp
from jax import lax
from jax.experimental import pallas as pl

# ----------------------------- model config (small) -----------------------------
B = 2
ENC_IN = 4
DEC_IN = 4
C_OUT = 1
SEQ_LEN = 8            # encoder length
LABEL_LEN = 4
PRED_LEN = 1
DEC_LEN = LABEL_LEN + PRED_LEN
D_MODEL = 32
N_HEADS = 4
D_HEAD = D_MODEL // N_HEADS
D_FF = 64
E_LAYERS = 2
D_LAYERS = 1
LN_EPS = 1e-5


# ----------------------------- in-kernel math helpers -----------------------------
def _erf(x):
    # Abramowitz-Stegun 7.1.26 rational approximation of erf (|err| < 1.5e-7).
    a1, a2, a3 = 0.254829592, -0.284496736, 1.421413741
    a4, a5, p = -1.453152027, 1.061405429, 0.3275911
    s = jnp.where(x < 0.0, -1.0, 1.0)
    ax = jnp.abs(x)
    t = 1.0 / (1.0 + p * ax)
    poly = ((((a5 * t + a4) * t + a3) * t + a2) * t + a1) * t
    return s * (1.0 - poly * jnp.exp(-ax * ax))


def _gelu(x):
    # exact (erf-based) gelu, matching torch.nn.functional.gelu default
    return 0.5 * x * (1.0 + _erf(x * (1.0 / math.sqrt(2.0))))


def _layer_norm(x, p):
    mu = jnp.mean(x, axis=-1, keepdims=True)
    xc = x - mu
    var = jnp.mean(xc * xc, axis=-1, keepdims=True)
    return xc * lax.rsqrt(var + LN_EPS) * p["g"] + p["b"]


def _ffn(x, p):
    h = jnp.dot(x, p["w1"], preferred_element_type=jnp.float32) + p["b1"]
    h = _gelu(h)
    return jnp.dot(h, p["w2"], preferred_element_type=jnp.float32) + p["b2"]


def _mha(xq, xkv, p, *, mask, mix, fused_qkv):
    """Multi-head attention with fused QKV projection and lane-dense output.

    xq:  [Lq, D_MODEL], xkv: [Lk, D_MODEL].
    p['wqkv']: [D_MODEL, 3*D_MODEL] (columns = [Wq | Wk | Wv], feature-major),
    p['bqkv']: [1, 3*D_MODEL], p['wo']: [D_MODEL, D_MODEL], p['bo']: [1, D_MODEL].
    """
    wqkv, bqkv, wo, bo = p["wqkv"], p["bqkv"], p["wo"], p["bo"]
    scale = 1.0 / math.sqrt(D_HEAD)

    if fused_qkv:
        # single [L, 32] @ [32, 96] projection (self-attention)
        qkv = jnp.dot(xq, wqkv, preferred_element_type=jnp.float32) + bqkv
        q = qkv[:, :D_MODEL]
        k = qkv[:, D_MODEL:2 * D_MODEL]
        v = qkv[:, 2 * D_MODEL:]
    else:
        # cross-attention: Q from xq, K/V from xkv
        q = jnp.dot(xq, wqkv[:, :D_MODEL],
                    preferred_element_type=jnp.float32) + bqkv[:, :D_MODEL]
        kv = jnp.dot(xkv, wqkv[:, D_MODEL:],
                     preferred_element_type=jnp.float32) + bqkv[:, D_MODEL:]
        k = kv[:, :D_MODEL]
        v = kv[:, D_MODEL:]

    lq = xq.shape[0]
    ctx = []
    for h in range(N_HEADS):
        sl = slice(h * D_HEAD, (h + 1) * D_HEAD)
        s = lax.dot_general(q[:, sl], k[:, sl], (((1,), (1,)), ((), ())),
                            preferred_element_type=jnp.float32) * scale      # [Lq, Lk]
        if mask is not None:
            s = jnp.where(mask, -jnp.inf, s)
        m = jnp.max(s, axis=-1, keepdims=True)
        e = jnp.exp(s - m)
        a = e * pl.reciprocal(jnp.sum(e, axis=-1, keepdims=True), approx=True)
        ctx.append(jnp.dot(a, v[:, sl], preferred_element_type=jnp.float32))  # [Lq, Dh]

    if mix:
        # torch: context [B,H,L,Dh] -> view(B, L, H*Dh): output row l, chunk c comes from
        # flat index l*D_MODEL + c*D_HEAD of the row-major [H, L, Dh] tensor.
        rows = []
        for l in range(lq):
            chunks = []
            for c in range(N_HEADS):
                f = l * D_MODEL + c * D_HEAD
                h_src = f // (lq * D_HEAD)
                l_src = (f % (lq * D_HEAD)) // D_HEAD
                chunks.append(ctx[h_src][l_src:l_src + 1, :])
            rows.append(jnp.concatenate(chunks, axis=-1))                    # [1, D_MODEL]
        merged = jnp.concatenate(rows, axis=0)                               # [Lq, D_MODEL]
    else:
        merged = jnp.concatenate(ctx, axis=-1)                               # [Lq, D_MODEL]

    return jnp.dot(merged, wo, preferred_element_type=jnp.float32) + bo


# ----------------------------- the single fused kernel -----------------------------
def _informer_kernel(treedef, n_leaves, x_enc_ref, x_dec_ref, *rest):
    # rest = (param leaf refs ..., out_ref)
    leaves = [r[...] for r in rest[:n_leaves]]
    out_ref = rest[n_leaves]
    P = jax.tree_util.tree_unflatten(treedef, leaves)

    # causal mask for the decoder self-attention, built once (hoisted out of all loops)
    row = lax.broadcasted_iota(jnp.int32, (DEC_LEN, DEC_LEN), 0)
    col = lax.broadcasted_iota(jnp.int32, (DEC_LEN, DEC_LEN), 1)
    causal = col > row

    for b in range(B):
        # ---------------- encoder ----------------
        xe = x_enc_ref[b]                                                    # [SEQ_LEN, ENC_IN]
        enc = (jnp.dot(xe, P["enc_emb"]["w"], preferred_element_type=jnp.float32)
               + P["enc_emb"]["b"] + P["enc_emb"]["pos"])                    # [SEQ_LEN, D_MODEL]
        for lp in P["enc_layers"]:
            a = _mha(enc, enc, lp["attn"], mask=None, mix=False, fused_qkv=True)
            x1 = _layer_norm(enc + a, lp["ln1"])
            enc = _layer_norm(x1 + _ffn(x1, lp["ffn"]), lp["ln2"])
        enc = _layer_norm(enc, P["enc_norm"])

        # ---------------- decoder ----------------
        xd = x_dec_ref[b]                                                    # [DEC_LEN, DEC_IN]
        dec = (jnp.dot(xd, P["dec_emb"]["w"], preferred_element_type=jnp.float32)
               + P["dec_emb"]["b"] + P["dec_emb"]["pos"])                    # [DEC_LEN, D_MODEL]
        for lp in P["dec_layers"]:
            sa = _mha(dec, dec, lp["self_attn"], mask=causal, mix=True, fused_qkv=True)
            x1 = _layer_norm(dec + sa, lp["ln1"])
            ca = _mha(x1, enc, lp["cross_attn"], mask=None, mix=False, fused_qkv=False)
            x2 = _layer_norm(x1 + ca, lp["ln2"])
            dec = _layer_norm(x2 + _ffn(x2, lp["ffn"]), lp["ln3"])
        dec = _layer_norm(dec, P["dec_norm"])

        # ---------------- final projection (only the predicted positions) ----------------
        proj = (jnp.dot(dec[DEC_LEN - PRED_LEN:, :], P["proj_w"],
                        preferred_element_type=jnp.float32) + P["proj_b"])   # [PRED_LEN, C_OUT]
        out_ref[b] = proj.astype(out_ref.dtype)


def informer_forward(params, x_enc, x_mark_enc, x_dec, x_mark_dec):
    del x_mark_enc, x_mark_dec  # DataEmbedding ignores x_mark (as in the PyTorch code)
    leaves, treedef = jax.tree_util.tree_flatten(params)
    kernel = functools.partial(_informer_kernel, treedef, len(leaves))
    # One fused pallas_call: every input/weight is a full-array VMEM block (~0.12 MiB total),
    # all intermediates stay in vregs/VMEM — no grid, no inter-op HBM round trips.
    return pl.pallas_call(
        kernel,
        out_shape=jax.ShapeDtypeStruct((B, PRED_LEN, C_OUT), jnp.float32),
    )(x_enc, x_dec, *leaves)


# ----------------------------- deterministic parameter init -----------------------------
def init_params(key):
    keys = iter(jax.random.split(key, 512))

    def nrm(shape, scale=0.1):
        return (scale * jax.random.normal(next(keys), shape)).astype(jnp.float32)

    def ln_params():
        return dict(g=jnp.ones((1, D_MODEL), jnp.float32),
                    b=jnp.zeros((1, D_MODEL), jnp.float32))

    def attn_params():
        # fused QKV: columns [Wq | Wk | Wv], feature-major ([in, out])
        return dict(
            wqkv=nrm((D_MODEL, 3 * D_MODEL)), bqkv=nrm((1, 3 * D_MODEL)),
            wo=nrm((D_MODEL, D_MODEL)), bo=nrm((1, D_MODEL)),
        )

    def ffn_params():
        return dict(w1=nrm((D_MODEL, D_FF)), b1=nrm((1, D_FF)),
                    w2=nrm((D_FF, D_MODEL)), b2=nrm((1, D_MODEL)))

    return dict(
        enc_emb=dict(w=nrm((ENC_IN, D_MODEL)), b=nrm((1, D_MODEL)), pos=nrm((SEQ_LEN, D_MODEL))),
        dec_emb=dict(w=nrm((DEC_IN, D_MODEL)), b=nrm((1, D_MODEL)), pos=nrm((DEC_LEN, D_MODEL))),
        enc_layers=[dict(attn=attn_params(), ln1=ln_params(), ffn=ffn_params(), ln2=ln_params())
                    for _ in range(E_LAYERS)],
        enc_norm=ln_params(),
        dec_layers=[dict(self_attn=attn_params(), ln1=ln_params(),
                         cross_attn=attn_params(), ln2=ln_params(),
                         ffn=ffn_params(), ln3=ln_params())
                    for _ in range(D_LAYERS)],
        dec_norm=ln_params(),
        proj_w=nrm((D_MODEL, C_OUT)),
        proj_b=nrm((1, C_OUT)),
    )


# ----------------------------- main -----------------------------
if __name__ == "__main__":
    key = jax.random.PRNGKey(0)
    k_p, k1, k2 = jax.random.split(key, 3)

    params = init_params(k_p)
    x_enc = jax.random.normal(k1, (B, SEQ_LEN, ENC_IN), jnp.float32)
    x_mark_enc = jnp.zeros((B, SEQ_LEN, 3), jnp.float32)      # unused (matches PyTorch behavior)
    x_dec = jax.random.normal(k2, (B, DEC_LEN, DEC_IN), jnp.float32)
    x_mark_dec = jnp.zeros((B, DEC_LEN, 3), jnp.float32)      # unused

    fwd = jax.jit(informer_forward)
    out = fwd(params, x_enc, x_mark_enc, x_dec, x_mark_dec)
    out = jax.block_until_ready(out)

    assert out.shape == (B, PRED_LEN, C_OUT), out.shape
    assert bool(jnp.all(jnp.isfinite(out)))
    print("KERNEL_OK")
</pallas_src>

<mosaic_0001>
module attributes {stable_mosaic.version = 11 : i64} {
  func.func @_informer_kernel(%arg0: memref<2x8x4xf32, #tpu.memory_space<vmem>>, %arg1: memref<2x5x4xf32, #tpu.memory_space<vmem>>, %arg2: memref<1x32xf32, #tpu.memory_space<vmem>>, %arg3: memref<5x32xf32, #tpu.memory_space<vmem>>, %arg4: memref<4x32xf32, #tpu.memory_space<vmem>>, %arg5: memref<1x32xf32, #tpu.memory_space<vmem>>, %arg6: memref<1x96xf32, #tpu.memory_space<vmem>>, %arg7: memref<32x32xf32, #tpu.memory_space<vmem>>, %arg8: memref<32x96xf32, #tpu.memory_space<vmem>>, %arg9: memref<1x64xf32, #tpu.memory_space<vmem>>, %arg10: memref<1x32xf32, #tpu.memory_space<vmem>>, %arg11: memref<32x64xf32, #tpu.memory_space<vmem>>, %arg12: memref<64x32xf32, #tpu.memory_space<vmem>>, %arg13: memref<1x32xf32, #tpu.memory_space<vmem>>, %arg14: memref<1x32xf32, #tpu.memory_space<vmem>>, %arg15: memref<1x32xf32, #tpu.memory_space<vmem>>, %arg16: memref<1x32xf32, #tpu.memory_space<vmem>>, %arg17: memref<1x32xf32, #tpu.memory_space<vmem>>, %arg18: memref<1x32xf32, #tpu.memory_space<vmem>>, %arg19: memref<1x32xf32, #tpu.memory_space<vmem>>, %arg20: memref<1x96xf32, #tpu.memory_space<vmem>>, %arg21: memref<32x32xf32, #tpu.memory_space<vmem>>, %arg22: memref<32x96xf32, #tpu.memory_space<vmem>>, %arg23: memref<1x32xf32, #tpu.memory_space<vmem>>, %arg24: memref<1x32xf32, #tpu.memory_space<vmem>>, %arg25: memref<1x32xf32, #tpu.memory_space<vmem>>, %arg26: memref<8x32xf32, #tpu.memory_space<vmem>>, %arg27: memref<4x32xf32, #tpu.memory_space<vmem>>, %arg28: memref<1x32xf32, #tpu.memory_space<vmem>>, %arg29: memref<1x96xf32, #tpu.memory_space<vmem>>, %arg30: memref<32x32xf32, #tpu.memory_space<vmem>>, %arg31: memref<32x96xf32, #tpu.memory_space<vmem>>, %arg32: memref<1x64xf32, #tpu.memory_space<vmem>>, %arg33: memref<1x32xf32, #tpu.memory_space<vmem>>, %arg34: memref<32x64xf32, #tpu.memory_space<vmem>>, %arg35: memref<64x32xf32, #tpu.memory_space<vmem>>, %arg36: memref<1x32xf32, #tpu.memory_space<vmem>>, %arg37: memref<1x32xf32, #tpu.memory_space<vmem>>, %arg38: memref<1x32xf32, #tpu.memory_space<vmem>>, %arg39: memref<1x32xf32, #tpu.memory_space<vmem>>, %arg40: memref<1x32xf32, #tpu.memory_space<vmem>>, %arg41: memref<1x96xf32, #tpu.memory_space<vmem>>, %arg42: memref<32x32xf32, #tpu.memory_space<vmem>>, %arg43: memref<32x96xf32, #tpu.memory_space<vmem>>, %arg44: memref<1x64xf32, #tpu.memory_space<vmem>>, %arg45: memref<1x32xf32, #tpu.memory_space<vmem>>, %arg46: memref<32x64xf32, #tpu.memory_space<vmem>>, %arg47: memref<64x32xf32, #tpu.memory_space<vmem>>, %arg48: memref<1x32xf32, #tpu.memory_space<vmem>>, %arg49: memref<1x32xf32, #tpu.memory_space<vmem>>, %arg50: memref<1x32xf32, #tpu.memory_space<vmem>>, %arg51: memref<1x32xf32, #tpu.memory_space<vmem>>, %arg52: memref<1x32xf32, #tpu.memory_space<vmem>>, %arg53: memref<1x32xf32, #tpu.memory_space<vmem>>, %arg54: memref<1x1xf32, #tpu.memory_space<vmem>>, %arg55: memref<32x1xf32, #tpu.memory_space<vmem>>, %arg56: memref<2x1x1xf32, #tpu.memory_space<vmem>>) attributes {dimension_semantics = [], scalar_prefetch = 0 : i64, scratch_operands = 0 : i64, tpu.core_type = #tpu.core_type<tc>} {
    %c0 = arith.constant 0 : index
    %c0_0 = arith.constant 0 : index
    %0 = vector.load %arg2[%c0, %c0_0] : memref<1x32xf32, #tpu.memory_space<vmem>>, vector<1x32xf32>
    %c0_1 = arith.constant 0 : index
    %c0_2 = arith.constant 0 : index
    %1 = vector.load %arg3[%c0_1, %c0_2] : memref<5x32xf32, #tpu.memory_space<vmem>>, vector<5x32xf32>
    %c0_3 = arith.constant 0 : index
    %c0_4 = arith.constant 0 : index
    %2 = vector.load %arg4[%c0_3, %c0_4] : memref<4x32xf32, #tpu.memory_space<vmem>>, vector<4x32xf32>
    %c0_5 = arith.constant 0 : index
    %c0_6 = arith.constant 0 : index
    %3 = vector.load %arg5[%c0_5, %c0_6] : memref<1x32xf32, #tpu.memory_space<vmem>>, vector<1x32xf32>
    %c0_7 = arith.constant 0 : index
    %c0_8 = arith.constant 0 : index
    %4 = vector.load %arg6[%c0_7, %c0_8] : memref<1x96xf32, #tpu.memory_space<vmem>>, vector<1x96xf32>
    %c0_9 = arith.constant 0 : index
    %c0_10 = arith.constant 0 : index
    %5 = vector.load %arg7[%c0_9, %c0_10] : memref<32x32xf32, #tpu.memory_space<vmem>>, vector<32x32xf32>
    %c0_11 = arith.constant 0 : index
    %c0_12 = arith.constant 0 : index
    %6 = vector.load %arg8[%c0_11, %c0_12] : memref<32x96xf32, #tpu.memory_space<vmem>>, vector<32x96xf32>
    %c0_13 = arith.constant 0 : index
    %c0_14 = arith.constant 0 : index
    %7 = vector.load %arg9[%c0_13, %c0_14] : memref<1x64xf32, #tpu.memory_space<vmem>>, vector<1x64xf32>
    %c0_15 = arith.constant 0 : index
    %c0_16 = arith.constant 0 : index
    %8 = vector.load %arg10[%c0_15, %c0_16] : memref<1x32xf32, #tpu.memory_space<vmem>>, vector<1x32xf32>
    %c0_17 = arith.constant 0 : index
    %c0_18 = arith.constant 0 : index
    %9 = vector.load %arg11[%c0_17, %c0_18] : memref<32x64xf32, #tpu.memory_space<vmem>>, vector<32x64xf32>
    %c0_19 = arith.constant 0 : index
    %c0_20 = arith.constant 0 : index
    %10 = vector.load %arg12[%c0_19, %c0_20] : memref<64x32xf32, #tpu.memory_space<vmem>>, vector<64x32xf32>
    %c0_21 = arith.constant 0 : index
    %c0_22 = arith.constant 0 : index
    %11 = vector.load %arg13[%c0_21, %c0_22] : memref<1x32xf32, #tpu.memory_space<vmem>>, vector<1x32xf32>
    %c0_23 = arith.constant 0 : index
    %c0_24 = arith.constant 0 : index
    %12 = vector.load %arg14[%c0_23, %c0_24] : memref<1x32xf32, #tpu.memory_space<vmem>>, vector<1x32xf32>
    %c0_25 = arith.constant 0 : index
    %c0_26 = arith.constant 0 : index
    %13 = vector.load %arg15[%c0_25, %c0_26] : memref<1x32xf32, #tpu.memory_space<vmem>>, vector<1x32xf32>
    %c0_27 = arith.constant 0 : index
    %c0_28 = arith.constant 0 : index
    %14 = vector.load %arg16[%c0_27, %c0_28] : memref<1x32xf32, #tpu.memory_space<vmem>>, vector<1x32xf32>
    %c0_29 = arith.constant 0 : index
    %c0_30 = arith.constant 0 : index
    %15 = vector.load %arg17[%c0_29, %c0_30] : memref<1x32xf32, #tpu.memory_space<vmem>>, vector<1x32xf32>
    %c0_31 = arith.constant 0 : index
    %c0_32 = arith.constant 0 : index
    %16 = vector.load %arg18[%c0_31, %c0_32] : memref<1x32xf32, #tpu.memory_space<vmem>>, vector<1x32xf32>
    %c0_33 = arith.constant 0 : index
    %c0_34 = arith.constant 0 : index
    %17 = vector.load %arg19[%c0_33, %c0_34] : memref<1x32xf32, #tpu.memory_space<vmem>>, vector<1x32xf32>
    %c0_35 = arith.constant 0 : index
    %c0_36 = arith.constant 0 : index
    %18 = vector.load %arg20[%c0_35, %c0_36] : memref<1x96xf32, #tpu.memory_space<vmem>>, vector<1x96xf32>
    %c0_37 = arith.constant 0 : index
    %c0_38 = arith.constant 0 : index
    %19 = vector.load %arg21[%c0_37, %c0_38] : memref<32x32xf32, #tpu.memory_space<vmem>>, vector<32x32xf32>
    %c0_39 = arith.constant 0 : index
    %c0_40 = arith.constant 0 : index
    %20 = vector.load %arg22[%c0_39, %c0_40] : memref<32x96xf32, #tpu.memory_space<vmem>>, vector<32x96xf32>
    %c0_41 = arith.constant 0 : index
    %c0_42 = arith.constant 0 : index
    %21 = vector.load %arg23[%c0_41, %c0_42] : memref<1x32xf32, #tpu.memory_space<vmem>>, vector<1x32xf32>
    %c0_43 = arith.constant 0 : index
    %c0_44 = arith.constant 0 : index
    %22 = vector.load %arg24[%c0_43, %c0_44] : memref<1x32xf32, #tpu.memory_space<vmem>>, vector<1x32xf32>
    %c0_45 = arith.constant 0 : index
    %c0_46 = arith.constant 0 : index
    %23 = vector.load %arg25[%c0_45, %c0_46] : memref<1x32xf32, #tpu.memory_space<vmem>>, vector<1x32xf32>
    %c0_47 = arith.constant 0 : index
    %c0_48 = arith.constant 0 : index
    %24 = vector.load %arg26[%c0_47, %c0_48] : memref<8x32xf32, #tpu.memory_space<vmem>>, vector<8x32xf32>
    %c0_49 = arith.constant 0 : index
    %c0_50 = arith.constant 0 : index
    %25 = vector.load %arg27[%c0_49, %c0_50] : memref<4x32xf32, #tpu.memory_space<vmem>>, vector<4x32xf32>
    %c0_51 = arith.constant 0 : index
    %c0_52 = arith.constant 0 : index
    %26 = vector.load %arg28[%c0_51, %c0_52] : memref<1x32xf32, #tpu.memory_space<vmem>>, vector<1x32xf32>
    %c0_53 = arith.constant 0 : index
    %c0_54 = arith.constant 0 : index
    %27 = vector.load %arg29[%c0_53, %c0_54] : memref<1x96xf32, #tpu.memory_space<vmem>>, vector<1x96xf32>
    %c0_55 = arith.constant 0 : index
    %c0_56 = arith.constant 0 : index
    %28 = vector.load %arg30[%c0_55, %c0_56] : memref<32x32xf32, #tpu.memory_space<vmem>>, vector<32x32xf32>
    %c0_57 = arith.constant 0 : index
    %c0_58 = arith.constant 0 : index
    %29 = vector.load %arg31[%c0_57, %c0_58] : memref<32x96xf32, #tpu.memory_space<vmem>>, vector<32x96xf32>
    %c0_59 = arith.constant 0 : index
    %c0_60 = arith.constant 0 : index
    %30 = vector.load %arg32[%c0_59, %c0_60] : memref<1x64xf32, #tpu.memory_space<vmem>>, vector<1x64xf32>
    %c0_61 = arith.constant 0 : index
    %c0_62 = arith.constant 0 : index
    %31 = vector.load %arg33[%c0_61, %c0_62] : memref<1x32xf32, #tpu.memory_space<vmem>>, vector<1x32xf32>
    %c0_63 = arith.constant 0 : index
    %c0_64 = arith.constant 0 : index
    %32 = vector.load %arg34[%c0_63, %c0_64] : memref<32x64xf32, #tpu.memory_space<vmem>>, vector<32x64xf32>
    %c0_65 = arith.constant 0 : index
    %c0_66 = arith.constant 0 : index
    %33 = vector.load %arg35[%c0_65, %c0_66] : memref<64x32xf32, #tpu.memory_space<vmem>>, vector<64x32xf32>
    %c0_67 = arith.constant 0 : index
    %c0_68 = arith.constant 0 : index
    %34 = vector.load %arg36[%c0_67, %c0_68] : memref<1x32xf32, #tpu.memory_space<vmem>>, vector<1x32xf32>
    %c0_69 = arith.constant 0 : index
    %c0_70 = arith.constant 0 : index
    %35 = vector.load %arg37[%c0_69, %c0_70] : memref<1x32xf32, #tpu.memory_space<vmem>>, vector<1x32xf32>
    %c0_71 = arith.constant 0 : index
    %c0_72 = arith.constant 0 : index
    %36 = vector.load %arg38[%c0_71, %c0_72] : memref<1x32xf32, #tpu.memory_space<vmem>>, vector<1x32xf32>
    %c0_73 = arith.constant 0 : index
    %c0_74 = arith.constant 0 : index
    %37 = vector.load %arg39[%c0_73, %c0_74] : memref<1x32xf32, #tpu.memory_space<vmem>>, vector<1x32xf32>
    %c0_75 = arith.constant 0 : index
    %c0_76 = arith.constant 0 : index
    %38 = vector.load %arg40[%c0_75, %c0_76] : memref<1x32xf32, #tpu.memory_space<vmem>>, vector<1x32xf32>
    %c0_77 = arith.constant 0 : index
    %c0_78 = arith.constant 0 : index
    %39 = vector.load %arg41[%c0_77, %c0_78] : memref<1x96xf32, #tpu.memory_space<vmem>>, vector<1x96xf32>
    %c0_79 = arith.constant 0 : index
    %c0_80 = arith.constant 0 : index
    %40 = vector.load %arg42[%c0_79, %c0_80] : memref<32x32xf32, #tpu.memory_space<vmem>>, vector<32x32xf32>
    %c0_81 = arith.constant 0 : index
    %c0_82 = arith.constant 0 : index
    %41 = vector.load %arg43[%c0_81, %c0_82] : memref<32x96xf32, #tpu.memory_space<vmem>>, vector<32x96xf32>
    %c0_83 = arith.constant 0 : index
    %c0_84 = arith.constant 0 : index
    %42 = vector.load %arg44[%c0_83, %c0_84] : memref<1x64xf32, #tpu.memory_space<vmem>>, vector<1x64xf32>
    %c0_85 = arith.constant 0 : index
    %c0_86 = arith.constant 0 : index
    %43 = vector.load %arg45[%c0_85, %c0_86] : memref<1x32xf32, #tpu.memory_space<vmem>>, vector<1x32xf32>
    %c0_87 = arith.constant 0 : index
    %c0_88 = arith.constant 0 : index
    %44 = vector.load %arg46[%c0_87, %c0_88] : memref<32x64xf32, #tpu.memory_space<vmem>>, vector<32x64xf32>
    %c0_89 = arith.constant 0 : index
    %c0_90 = arith.constant 0 : index
    %45 = vector.load %arg47[%c0_89, %c0_90] : memref<64x32xf32, #tpu.memory_space<vmem>>, vector<64x32xf32>
    %c0_91 = arith.constant 0 : index
    %c0_92 = arith.constant 0 : index
    %46 = vector.load %arg48[%c0_91, %c0_92] : memref<1x32xf32, #tpu.memory_space<vmem>>, vector<1x32xf32>
    %c0_93 = arith.constant 0 : index
    %c0_94 = arith.constant 0 : index
    %47 = vector.load %arg49[%c0_93, %c0_94] : memref<1x32xf32, #tpu.memory_space<vmem>>, vector<1x32xf32>
    %c0_95 = arith.constant 0 : index
    %c0_96 = arith.constant 0 : index
    %48 = vector.load %arg50[%c0_95, %c0_96] : memref<1x32xf32, #tpu.memory_space<vmem>>, vector<1x32xf32>
    %c0_97 = arith.constant 0 : index
    %c0_98 = arith.constant 0 : index
    %49 = vector.load %arg51[%c0_97, %c0_98] : memref<1x32xf32, #tpu.memory_space<vmem>>, vector<1x32xf32>
    %c0_99 = arith.constant 0 : index
    %c0_100 = arith.constant 0 : index
    %50 = vector.load %arg52[%c0_99, %c0_100] : memref<1x32xf32, #tpu.memory_space<vmem>>, vector<1x32xf32>
    %c0_101 = arith.constant 0 : index
    %c0_102 = arith.constant 0 : index
    %51 = vector.load %arg53[%c0_101, %c0_102] : memref<1x32xf32, #tpu.memory_space<vmem>>, vector<1x32xf32>
    %c0_103 = arith.constant 0 : index
    %c0_104 = arith.constant 0 : index
    %52 = vector.load %arg54[%c0_103, %c0_104] : memref<1x1xf32, #tpu.memory_space<vmem>>, vector<1x1xf32>
    %c0_105 = arith.constant 0 : index
    %c0_106 = arith.constant 0 : index
    %53 = vector.load %arg55[%c0_105, %c0_106] : memref<32x1xf32, #tpu.memory_space<vmem>>, vector<32x1xf32>
    %54 = tpu.iota {dimensions = array<i32: 0>} : vector<5x5xi32>
    %55 = tpu.iota {dimensions = array<i32: 1>} : vector<5x5xi32>
    %56 = arith.cmpi sgt, %55, %54 : vector<5x5xi32>
    %c0_107 = arith.constant 0 : index
    %c0_108 = arith.constant 0 : index
    %c0_109 = arith.constant 0 : index
    %57 = vector.load %arg0[%c0_107, %c0_108, %c0_109] : memref<2x8x4xf32, #tpu.memory_space<vmem>>, vector<1x8x4xf32>
    %58 = vector.shape_cast %57 : vector<1x8x4xf32> to vector<8x4xf32>
    %cst = arith.constant dense<0.000000e+00> : vector<8x32xf32>
    %59 = tpu.matmul %58, %25, %cst {dimension_numbers = #tpu.dot_dimension_numbers<[1], [0], [0], [1], [0, 0, 1, 1], [], []>} : vector<8x4xf32>, vector<4x32xf32>, vector<8x32xf32> -> vector<8x32xf32>
    %60 = vector.broadcast %23 : vector<1x32xf32> to vector<8x32xf32>
    %61 = arith.addf %59, %60 : vector<8x32xf32>
    %62 = arith.addf %61, %24 : vector<8x32xf32>
    %cst_110 = arith.constant dense<0.000000e+00> : vector<8x96xf32>
    %63 = tpu.matmul %62, %29, %cst_110 {dimension_numbers = #tpu.dot_dimension_numbers<[1], [0], [0], [1], [0, 0, 1, 1], [], []>} : vector<8x32xf32>, vector<32x96xf32>, vector<8x96xf32> -> vector<8x96xf32>
    %64 = vector.broadcast %27 : vector<1x96xf32> to vector<8x96xf32>
    %65 = arith.addf %63, %64 : vector<8x96xf32>
    %66 = vector.extract_strided_slice %65 {offsets = [0, 0], sizes = [8, 32], strides = [1, 1]} : vector<8x96xf32> to vector<8x32xf32>
    %67 = vector.extract_strided_slice %65 {offsets = [0, 32], sizes = [8, 32], strides = [1, 1]} : vector<8x96xf32> to vector<8x32xf32>
    %68 = vector.extract_strided_slice %65 {offsets = [0, 64], sizes = [8, 32], strides = [1, 1]} : vector<8x96xf32> to vector<8x32xf32>
    %69 = vector.extract_strided_slice %66 {offsets = [0, 0], sizes = [8, 8], strides = [1, 1]} : vector<8x32xf32> to vector<8x8xf32>
    %70 = vector.extract_strided_slice %67 {offsets = [0, 0], sizes = [8, 8], strides = [1, 1]} : vector<8x32xf32> to vector<8x8xf32>
    %cst_111 = arith.constant dense<0.000000e+00> : vector<8x8xf32>
    %71 = tpu.matmul %69, %70, %cst_111 {dimension_numbers = #tpu.dot_dimension_numbers<[1], [1], [0], [0], [0, 0, 1, 0], [], []>} : vector<8x8xf32>, vector<8x8xf32>, vector<8x8xf32> -> vector<8x8xf32>
    %cst_112 = arith.constant 0.353553385 : f32
    %72 = vector.broadcast %cst_112 : f32 to vector<8x8xf32>
    %73 = arith.mulf %71, %72 : vector<8x8xf32>
    %cst_113 = arith.constant dense<0xFF800000> : vector<8xf32>
    %74 = vector.multi_reduction <maximumf>, %73, %cst_113 [1] : vector<8x8xf32> to vector<8xf32>
    %75 = vector.shape_cast %74 : vector<8xf32> to vector<8x1xf32>
    %76 = vector.broadcast %75 : vector<8x1xf32> to vector<8x8xf32>
    %77 = arith.subf %73, %76 : vector<8x8xf32>
    %78 = math.exp %77 : vector<8x8xf32>
    %cst_114 = arith.constant dense<0.000000e+00> : vector<8xf32>
    %79 = vector.multi_reduction <add>, %78, %cst_114 [1] : vector<8x8xf32> to vector<8xf32>
    %80 = vector.shape_cast %79 : vector<8xf32> to vector<8x1xf32>
    %81 = tpu.reciprocal %80 {approx = true} : vector<8x1xf32> -> vector<8x1xf32>
    %82 = vector.broadcast %81 : vector<8x1xf32> to vector<8x8xf32>
    %83 = arith.mulf %78, %82 : vector<8x8xf32>
    %84 = vector.extract_strided_slice %68 {offsets = [0, 0], sizes = [8, 8], strides = [1, 1]} : vector<8x32xf32> to vector<8x8xf32>
    %cst_115 = arith.constant dense<0.000000e+00> : vector<8x8xf32>
    %85 = tpu.matmul %83, %84, %cst_115 {dimension_numbers = #tpu.dot_dimension_numbers<[1], [0], [0], [1], [0, 0, 1, 1], [], []>} : vector<8x8xf32>, vector<8x8xf32>, vector<8x8xf32> -> vector<8x8xf32>
    %86 = vector.extract_strided_slice %66 {offsets = [0, 8], sizes = [8, 8], strides = [1, 1]} : vector<8x32xf32> to vector<8x8xf32>
    %87 = vector.extract_strided_slice %67 {offsets = [0, 8], sizes = [8, 8], strides = [1, 1]} : vector<8x32xf32> to vector<8x8xf32>
    %cst_116 = arith.constant dense<0.000000e+00> : vector<8x8xf32>
    %88 = tpu.matmul %86, %87, %cst_116 {dimension_numbers = #tpu.dot_dimension_numbers<[1], [1], [0], [0], [0, 0, 1, 0], [], []>} : vector<8x8xf32>, vector<8x8xf32>, vector<8x8xf32> -> vector<8x8xf32>
    %cst_117 = arith.constant 0.353553385 : f32
    %89 = vector.broadcast %cst_117 : f32 to vector<8x8xf32>
    %90 = arith.mulf %88, %89 : vector<8x8xf32>
    %cst_118 = arith.constant dense<0xFF800000> : vector<8xf32>
    %91 = vector.multi_reduction <maximumf>, %90, %cst_118 [1] : vector<8x8xf32> to vector<8xf32>
    %92 = vector.shape_cast %91 : vector<8xf32> to vector<8x1xf32>
    %93 = vector.broadcast %92 : vector<8x1xf32> to vector<8x8xf32>
    %94 = arith.subf %90, %93 : vector<8x8xf32>
    %95 = math.exp %94 : vector<8x8xf32>
    %cst_119 = arith.constant dense<0.000000e+00> : vector<8xf32>
    %96 = vector.multi_reduction <add>, %95, %cst_119 [1] : vector<8x8xf32> to vector<8xf32>
    %97 = vector.shape_cast %96 : vector<8xf32> to vector<8x1xf32>
    %98 = tpu.reciprocal %97 {approx = true} : vector<8x1xf32> -> vector<8x1xf32>
    %99 = vector.broadcast %98 : vector<8x1xf32> to vector<8x8xf32>
    %100 = arith.mulf %95, %99 : vector<8x8xf32>
    %101 = vector.extract_strided_slice %68 {offsets = [0, 8], sizes = [8, 8], strides = [1, 1]} : vector<8x32xf32> to vector<8x8xf32>
    %cst_120 = arith.constant dense<0.000000e+00> : vector<8x8xf32>
    %102 = tpu.matmul %100, %101, %cst_120 {dimension_numbers = #tpu.dot_dimension_numbers<[1], [0], [0], [1], [0, 0, 1, 1], [], []>} : vector<8x8xf32>, vector<8x8xf32>, vector<8x8xf32> -> vector<8x8xf32>
    %103 = vector.extract_strided_slice %66 {offsets = [0, 16], sizes = [8, 8], strides = [1, 1]} : vector<8x32xf32> to vector<8x8xf32>
    %104 = vector.extract_strided_slice %67 {offsets = [0, 16], sizes = [8, 8], strides = [1, 1]} : vector<8x32xf32> to vector<8x8xf32>
    %cst_121 = arith.constant dense<0.000000e+00> : vector<8x8xf32>
    %105 = tpu.matmul %103, %104, %cst_121 {dimension_numbers = #tpu.dot_dimension_numbers<[1], [1], [0], [0], [0, 0, 1, 0], [], []>} : vector<8x8xf32>, vector<8x8xf32>, vector<8x8xf32> -> vector<8x8xf32>
    %cst_122 = arith.constant 0.353553385 : f32
    %106 = vector.broadcast %cst_122 : f32 to vector<8x8xf32>
    %107 = arith.mulf %105, %106 : vector<8x8xf32>
    %cst_123 = arith.constant dense<0xFF800000> : vector<8xf32>
    %108 = vector.multi_reduction <maximumf>, %107, %cst_123 [1] : vector<8x8xf32> to vector<8xf32>
    %109 = vector.shape_cast %108 : vector<8xf32> to vector<8x1xf32>
    %110 = vector.broadcast %109 : vector<8x1xf32> to vector<8x8xf32>
    %111 = arith.subf %107, %110 : vector<8x8xf32>
    %112 = math.exp %111 : vector<8x8xf32>
    %cst_124 = arith.constant dense<0.000000e+00> : vector<8xf32>
    %113 = vector.multi_reduction <add>, %112, %cst_124 [1] : vector<8x8xf32> to vector<8xf32>
    %114 = vector.shape_cast %113 : vector<8xf32> to vector<8x1xf32>
    %115 = tpu.reciprocal %114 {approx = true} : vector<8x1xf32> -> vector<8x1xf32>
    %116 = vector.broadcast %115 : vector<8x1xf32> to vector<8x8xf32>
    %117 = arith.mulf %112, %116 : vector<8x8xf32>
    %118 = vector.extract_strided_slice %68 {offsets = [0, 16], sizes = [8, 8], strides = [1, 1]} : vector<8x32xf32> to vector<8x8xf32>
    %cst_125 = arith.constant dense<0.000000e+00> : vector<8x8xf32>
    %119 = tpu.matmul %117, %118, %cst_125 {dimension_numbers = #tpu.dot_dimension_numbers<[1], [0], [0], [1], [0, 0, 1, 1], [], []>} : vector<8x8xf32>, vector<8x8xf32>, vector<8x8xf32> -> vector<8x8xf32>
    %120 = vector.extract_strided_slice %66 {offsets = [0, 24], sizes = [8, 8], strides = [1, 1]} : vector<8x32xf32> to vector<8x8xf32>
    %121 = vector.extract_strided_slice %67 {offsets = [0, 24], sizes = [8, 8], strides = [1, 1]} : vector<8x32xf32> to vector<8x8xf32>
    %cst_126 = arith.constant dense<0.000000e+00> : vector<8x8xf32>
    %122 = tpu.matmul %120, %121, %cst_126 {dimension_numbers = #tpu.dot_dimension_numbers<[1], [1], [0], [0], [0, 0, 1, 0], [], []>} : vector<8x8xf32>, vector<8x8xf32>, vector<8x8xf32> -> vector<8x8xf32>
    %cst_127 = arith.constant 0.353553385 : f32
    %123 = vector.broadcast %cst_127 : f32 to vector<8x8xf32>
    %124 = arith.mulf %122, %123 : vector<8x8xf32>
    %cst_128 = arith.constant dense<0xFF800000> : vector<8xf32>
    %125 = vector.multi_reduction <maximumf>, %124, %cst_128 [1] : vector<8x8xf32> to vector<8xf32>
    %126 = vector.shape_cast %125 : vector<8xf32> to vector<8x1xf32>
    %127 = vector.broadcast %126 : vector<8x1xf32> to vector<8x8xf32>
    %128 = arith.subf %124, %127 : vector<8x8xf32>
    %129 = math.exp %128 : vector<8x8xf32>
    %cst_129 = arith.constant dense<0.000000e+00> : vector<8xf32>
    %130 = vector.multi_reduction <add>, %129, %cst_129 [1] : vector<8x8xf32> to vector<8xf32>
    %131 = vector.shape_cast %130 : vector<8xf32> to vector<8x1xf32>
    %132 = tpu.reciprocal %131 {approx = true} : vector<8x1xf32> -> vector<8x1xf32>
    %133 = vector.broadcast %132 : vector<8x1xf32> to vector<8x8xf32>
    %134 = arith.mulf %129, %133 : vector<8x8xf32>
    %135 = vector.extract_strided_slice %68 {offsets = [0, 24], sizes = [8, 8], strides = [1, 1]} : vector<8x32xf32> to vector<8x8xf32>
    %cst_130 = arith.constant dense<0.000000e+00> : vector<8x8xf32>
    %136 = tpu.matmul %134, %135, %cst_130 {dimension_numbers = #tpu.dot_dimension_numbers<[1], [0], [0], [1], [0, 0, 1, 1], [], []>} : vector<8x8xf32>, vector<8x8xf32>, vector<8x8xf32> -> vector<8x8xf32>
    %137 = tpu.concatenate %85, %102, %119, %136 in 1 : vector<8x8xf32>, vector<8x8xf32>, vector<8x8xf32>, vector<8x8xf32> -> vector<8x32xf32>
    %cst_131 = arith.constant dense<0.000000e+00> : vector<8x32xf32>
    %138 = tpu.matmul %137, %28, %cst_131 {dimension_numbers = #tpu.dot_dimension_numbers<[1], [0], [0], [1], [0, 0, 1, 1], [], []>} : vector<8x32xf32>, vector<32x32xf32>, vector<8x32xf32> -> vector<8x32xf32>
    %139 = vector.broadcast %26 : vector<1x32xf32> to vector<8x32xf32>
    %140 = arith.addf %138, %139 : vector<8x32xf32>
    %141 = arith.addf %62, %140 : vector<8x32xf32>
    %cst_132 = arith.constant dense<0.000000e+00> : vector<8xf32>
    %142 = vector.multi_reduction <add>, %141, %cst_132 [1] : vector<8x32xf32> to vector<8xf32>
    %143 = vector.shape_cast %142 : vector<8xf32> to vector<8x1xf32>
    %cst_133 = arith.constant 3.200000e+01 : f32
    %144 = vector.broadcast %cst_133 : f32 to vector<8x1xf32>
    %145 = arith.divf %143, %144 : vector<8x1xf32>
    %146 = vector.broadcast %145 : vector<8x1xf32> to vector<8x32xf32>
    %147 = arith.subf %141, %146 : vector<8x32xf32>
    %148 = arith.mulf %147, %147 : vector<8x32xf32>
    %cst_134 = arith.constant dense<0.000000e+00> : vector<8xf32>
    %149 = vector.multi_reduction <add>, %148, %cst_134 [1] : vector<8x32xf32> to vector<8xf32>
    %150 = vector.shape_cast %149 : vector<8xf32> to vector<8x1xf32>
    %cst_135 = arith.constant 3.200000e+01 : f32
    %151 = vector.broadcast %cst_135 : f32 to vector<8x1xf32>
    %152 = arith.divf %150, %151 : vector<8x1xf32>
    %cst_136 = arith.constant 9.99999974E-6 : f32
    %153 = vector.broadcast %cst_136 : f32 to vector<8x1xf32>
    %154 = arith.addf %152, %153 : vector<8x1xf32>
    %155 = math.rsqrt %154 : vector<8x1xf32>
    %156 = vector.broadcast %155 : vector<8x1xf32> to vector<8x32xf32>
    %157 = arith.mulf %147, %156 : vector<8x32xf32>
    %158 = vector.broadcast %35 : vector<1x32xf32> to vector<8x32xf32>
    %159 = arith.mulf %157, %158 : vector<8x32xf32>
    %160 = vector.broadcast %34 : vector<1x32xf32> to vector<8x32xf32>
    %161 = arith.addf %159, %160 : vector<8x32xf32>
    %cst_137 = arith.constant dense<0.000000e+00> : vector<8x64xf32>
    %162 = tpu.matmul %161, %32, %cst_137 {dimension_numbers = #tpu.dot_dimension_numbers<[1], [0], [0], [1], [0, 0, 1, 1], [], []>} : vector<8x32xf32>, vector<32x64xf32>, vector<8x64xf32> -> vector<8x64xf32>
    %163 = vector.broadcast %30 : vector<1x64xf32> to vector<8x64xf32>
    %164 = arith.addf %162, %163 : vector<8x64xf32>
    %cst_138 = arith.constant 5.000000e-01 : f32
    %165 = vector.broadcast %cst_138 : f32 to vector<8x64xf32>
    %166 = arith.mulf %165, %164 : vector<8x64xf32>
    %cst_139 = arith.constant 0.707106769 : f32
    %167 = vector.broadcast %cst_139 : f32 to vector<8x64xf32>
    %168 = arith.mulf %164, %167 : vector<8x64xf32>
    %cst_140 = arith.constant 0.000000e+00 : f32
    %169 = vector.broadcast %cst_140 : f32 to vector<8x64xf32>
    %170 = arith.cmpf olt, %168, %169 : vector<8x64xf32>
    %cst_141 = arith.constant -1.000000e+00 : f32
    %cst_142 = arith.constant 1.000000e+00 : f32
    %171 = vector.broadcast %cst_141 : f32 to vector<8x64xf32>
    %172 = vector.broadcast %cst_142 : f32 to vector<8x64xf32>
    %173 = arith.select %170, %171, %172 : vector<8x64xi1>, vector<8x64xf32>
    %174 = math.absf %168 : vector<8x64xf32>
    %cst_143 = arith.constant 0.327591091 : f32
    %175 = vector.broadcast %cst_143 : f32 to vector<8x64xf32>
    %176 = arith.mulf %175, %174 : vector<8x64xf32>
    %cst_144 = arith.constant 1.000000e+00 : f32
    %177 = vector.broadcast %cst_144 : f32 to vector<8x64xf32>
    %178 = arith.addf %177, %176 : vector<8x64xf32>
    %cst_145 = arith.constant 1.000000e+00 : f32
    %179 = vector.broadcast %cst_145 : f32 to vector<8x64xf32>
    %180 = arith.divf %179, %178 : vector<8x64xf32>
    %cst_146 = arith.constant 1.06140542 : f32
    %181 = vector.broadcast %cst_146 : f32 to vector<8x64xf32>
    %182 = arith.mulf %181, %180 : vector<8x64xf32>
    %cst_147 = arith.constant -1.45315206 : f32
    %183 = vector.broadcast %cst_147 : f32 to vector<8x64xf32>
    %184 = arith.addf %182, %183 : vector<8x64xf32>
    %185 = arith.mulf %184, %180 : vector<8x64xf32>
    %cst_148 = arith.constant 1.42141378 : f32
    %186 = vector.broadcast %cst_148 : f32 to vector<8x64xf32>
    %187 = arith.addf %185, %186 : vector<8x64xf32>
    %188 = arith.mulf %187, %180 : vector<8x64xf32>
    %cst_149 = arith.constant -0.284496725 : f32
    %189 = vector.broadcast %cst_149 : f32 to vector<8x64xf32>
    %190 = arith.addf %188, %189 : vector<8x64xf32>
    %191 = arith.mulf %190, %180 : vector<8x64xf32>
    %cst_150 = arith.constant 0.254829586 : f32
    %192 = vector.broadcast %cst_150 : f32 to vector<8x64xf32>
    %193 = arith.addf %191, %192 : vector<8x64xf32>
    %194 = arith.mulf %193, %180 : vector<8x64xf32>
    %cst_151 = arith.constant 0.000000e+00 : f32
    %195 = vector.broadcast %cst_151 : f32 to vector<8x64xf32>
    %196 = arith.subf %195, %174 : vector<8x64xf32>
    %197 = arith.mulf %196, %174 : vector<8x64xf32>
    %198 = math.exp %197 : vector<8x64xf32>
    %199 = arith.mulf %194, %198 : vector<8x64xf32>
    %cst_152 = arith.constant 1.000000e+00 : f32
    %200 = vector.broadcast %cst_152 : f32 to vector<8x64xf32>
    %201 = arith.subf %200, %199 : vector<8x64xf32>
    %202 = arith.mulf %173, %201 : vector<8x64xf32>
    %cst_153 = arith.constant 1.000000e+00 : f32
    %203 = vector.broadcast %cst_153 : f32 to vector<8x64xf32>
    %204 = arith.addf %203, %202 : vector<8x64xf32>
    %205 = arith.mulf %166, %204 : vector<8x64xf32>
    %cst_154 = arith.constant dense<0.000000e+00> : vector<8x32xf32>
    %206 = tpu.matmul %205, %33, %cst_154 {dimension_numbers = #tpu.dot_dimension_numbers<[1], [0], [0], [1], [0, 0, 1, 1], [], []>} : vector<8x64xf32>, vector<64x32xf32>, vector<8x32xf32> -> vector<8x32xf32>
    %207 = vector.broadcast %31 : vector<1x32xf32> to vector<8x32xf32>
    %208 = arith.addf %206, %207 : vector<8x32xf32>
    %209 = arith.addf %161, %208 : vector<8x32xf32>
    %cst_155 = arith.constant dense<0.000000e+00> : vector<8xf32>
    %210 = vector.multi_reduction <add>, %209, %cst_155 [1] : vector<8x32xf32> to vector<8xf32>
    %211 = vector.shape_cast %210 : vector<8xf32> to vector<8x1xf32>
    %cst_156 = arith.constant 3.200000e+01 : f32
    %212 = vector.broadcast %cst_156 : f32 to vector<8x1xf32>
    %213 = arith.divf %211, %212 : vector<8x1xf32>
    %214 = vector.broadcast %213 : vector<8x1xf32> to vector<8x32xf32>
    %215 = arith.subf %209, %214 : vector<8x32xf32>
    %216 = arith.mulf %215, %215 : vector<8x32xf32>
    %cst_157 = arith.constant dense<0.000000e+00> : vector<8xf32>
    %217 = vector.multi_reduction <add>, %216, %cst_157 [1] : vector<8x32xf32> to vector<8xf32>
    %218 = vector.shape_cast %217 : vector<8xf32> to vector<8x1xf32>
    %cst_158 = arith.constant 3.200000e+01 : f32
    %219 = vector.broadcast %cst_158 : f32 to vector<8x1xf32>
    %220 = arith.divf %218, %219 : vector<8x1xf32>
    %cst_159 = arith.constant 9.99999974E-6 : f32
    %221 = vector.broadcast %cst_159 : f32 to vector<8x1xf32>
    %222 = arith.addf %220, %221 : vector<8x1xf32>
    %223 = math.rsqrt %222 : vector<8x1xf32>
    %224 = vector.broadcast %223 : vector<8x1xf32> to vector<8x32xf32>
    %225 = arith.mulf %215, %224 : vector<8x32xf32>
    %226 = vector.broadcast %37 : vector<1x32xf32> to vector<8x32xf32>
    %227 = arith.mulf %225, %226 : vector<8x32xf32>
    %228 = vector.broadcast %36 : vector<1x32xf32> to vector<8x32xf32>
    %229 = arith.addf %227, %228 : vector<8x32xf32>
    %cst_160 = arith.constant dense<0.000000e+00> : vector<8x96xf32>
    %230 = tpu.matmul %229, %41, %cst_160 {dimension_numbers = #tpu.dot_dimension_numbers<[1], [0], [0], [1], [0, 0, 1, 1], [], []>} : vector<8x32xf32>, vector<32x96xf32>, vector<8x96xf32> -> vector<8x96xf32>
    %231 = vector.broadcast %39 : vector<1x96xf32> to vector<8x96xf32>
    %232 = arith.addf %230, %231 : vector<8x96xf32>
    %233 = vector.extract_strided_slice %232 {offsets = [0, 0], sizes = [8, 32], strides = [1, 1]} : vector<8x96xf32> to vector<8x32xf32>
    %234 = vector.extract_strided_slice %232 {offsets = [0, 32], sizes = [8, 32], strides = [1, 1]} : vector<8x96xf32> to vector<8x32xf32>
    %235 = vector.extract_strided_slice %232 {offsets = [0, 64], sizes = [8, 32], strides = [1, 1]} : vector<8x96xf32> to vector<8x32xf32>
    %236 = vector.extract_strided_slice %233 {offsets = [0, 0], sizes = [8, 8], strides = [1, 1]} : vector<8x32xf32> to vector<8x8xf32>
    %237 = vector.extract_strided_slice %234 {offsets = [0, 0], sizes = [8, 8], strides = [1, 1]} : vector<8x32xf32> to vector<8x8xf32>
    %cst_161 = arith.constant dense<0.000000e+00> : vector<8x8xf32>
    %238 = tpu.matmul %236, %237, %cst_161 {dimension_numbers = #tpu.dot_dimension_numbers<[1], [1], [0], [0], [0, 0, 1, 0], [], []>} : vector<8x8xf32>, vector<8x8xf32>, vector<8x8xf32> -> vector<8x8xf32>
    %cst_162 = arith.constant 0.353553385 : f32
    %239 = vector.broadcast %cst_162 : f32 to vector<8x8xf32>
    %240 = arith.mulf %238, %239 : vector<8x8xf32>
    %cst_163 = arith.constant dense<0xFF800000> : vector<8xf32>
    %241 = vector.multi_reduction <maximumf>, %240, %cst_163 [1] : vector<8x8xf32> to vector<8xf32>
    %242 = vector.shape_cast %241 : vector<8xf32> to vector<8x1xf32>
    %243 = vector.broadcast %242 : vector<8x1xf32> to vector<8x8xf32>
    %244 = arith.subf %240, %243 : vector<8x8xf32>
    %245 = math.exp %244 : vector<8x8xf32>
    %cst_164 = arith.constant dense<0.000000e+00> : vector<8xf32>
    %246 = vector.multi_reduction <add>, %245, %cst_164 [1] : vector<8x8xf32> to vector<8xf32>
    %247 = vector.shape_cast %246 : vector<8xf32> to vector<8x1xf32>
    %248 = tpu.reciprocal %247 {approx = true} : vector<8x1xf32> -> vector<8x1xf32>
    %249 = vector.broadcast %248 : vector<8x1xf32> to vector<8x8xf32>
    %250 = arith.mulf %245, %249 : vector<8x8xf32>
    %251 = vector.extract_strided_slice %235 {offsets = [0, 0], sizes = [8, 8], strides = [1, 1]} : vector<8x32xf32> to vector<8x8xf32>
    %cst_165 = arith.constant dense<0.000000e+00> : vector<8x8xf32>
    %252 = tpu.matmul %250, %251, %cst_165 {dimension_numbers = #tpu.dot_dimension_numbers<[1], [0], [0], [1], [0, 0, 1, 1], [], []>} : vector<8x8xf32>, vector<8x8xf32>, vector<8x8xf32> -> vector<8x8xf32>
    %253 = vector.extract_strided_slice %233 {offsets = [0, 8], sizes = [8, 8], strides = [1, 1]} : vector<8x32xf32> to vector<8x8xf32>
    %254 = vector.extract_strided_slice %234 {offsets = [0, 8], sizes = [8, 8], strides = [1, 1]} : vector<8x32xf32> to vector<8x8xf32>
    %cst_166 = arith.constant dense<0.000000e+00> : vector<8x8xf32>
    %255 = tpu.matmul %253, %254, %cst_166 {dimension_numbers = #tpu.dot_dimension_numbers<[1], [1], [0], [0], [0, 0, 1, 0], [], []>} : vector<8x8xf32>, vector<8x8xf32>, vector<8x8xf32> -> vector<8x8xf32>
    %cst_167 = arith.constant 0.353553385 : f32
    %256 = vector.broadcast %cst_167 : f32 to vector<8x8xf32>
    %257 = arith.mulf %255, %256 : vector<8x8xf32>
    %cst_168 = arith.constant dense<0xFF800000> : vector<8xf32>
    %258 = vector.multi_reduction <maximumf>, %257, %cst_168 [1] : vector<8x8xf32> to vector<8xf32>
    %259 = vector.shape_cast %258 : vector<8xf32> to vector<8x1xf32>
    %260 = vector.broadcast %259 : vector<8x1xf32> to vector<8x8xf32>
    %261 = arith.subf %257, %260 : vector<8x8xf32>
    %262 = math.exp %261 : vector<8x8xf32>
    %cst_169 = arith.constant dense<0.000000e+00> : vector<8xf32>
    %263 = vector.multi_reduction <add>, %262, %cst_169 [1] : vector<8x8xf32> to vector<8xf32>
    %264 = vector.shape_cast %263 : vector<8xf32> to vector<8x1xf32>
    %265 = tpu.reciprocal %264 {approx = true} : vector<8x1xf32> -> vector<8x1xf32>
    %266 = vector.broadcast %265 : vector<8x1xf32> to vector<8x8xf32>
    %267 = arith.mulf %262, %266 : vector<8x8xf32>
    %268 = vector.extract_strided_slice %235 {offsets = [0, 8], sizes = [8, 8], strides = [1, 1]} : vector<8x32xf32> to vector<8x8xf32>
    %cst_170 = arith.constant dense<0.000000e+00> : vector<8x8xf32>
    %269 = tpu.matmul %267, %268, %cst_170 {dimension_numbers = #tpu.dot_dimension_numbers<[1], [0], [0], [1], [0, 0, 1, 1], [], []>} : vector<8x8xf32>, vector<8x8xf32>, vector<8x8xf32> -> vector<8x8xf32>
    %270 = vector.extract_strided_slice %233 {offsets = [0, 16], sizes = [8, 8], strides = [1, 1]} : vector<8x32xf32> to vector<8x8xf32>
    %271 = vector.extract_strided_slice %234 {offsets = [0, 16], sizes = [8, 8], strides = [1, 1]} : vector<8x32xf32> to vector<8x8xf32>
    %cst_171 = arith.constant dense<0.000000e+00> : vector<8x8xf32>
    %272 = tpu.matmul %270, %271, %cst_171 {dimension_numbers = #tpu.dot_dimension_numbers<[1], [1], [0], [0], [0, 0, 1, 0], [], []>} : vector<8x8xf32>, vector<8x8xf32>, vector<8x8xf32> -> vector<8x8xf32>
    %cst_172 = arith.constant 0.353553385 : f32
    %273 = vector.broadcast %cst_172 : f32 to vector<8x8xf32>
    %274 = arith.mulf %272, %273 : vector<8x8xf32>
    %cst_173 = arith.constant dense<0xFF800000> : vector<8xf32>
    %275 = vector.multi_reduction <maximumf>, %274, %cst_173 [1] : vector<8x8xf32> to vector<8xf32>
    %276 = vector.shape_cast %275 : vector<8xf32> to vector<8x1xf32>
    %277 = vector.broadcast %276 : vector<8x1xf32> to vector<8x8xf32>
    %278 = arith.subf %274, %277 : vector<8x8xf32>
    %279 = math.exp %278 : vector<8x8xf32>
    %cst_174 = arith.constant dense<0.000000e+00> : vector<8xf32>
    %280 = vector.multi_reduction <add>, %279, %cst_174 [1] : vector<8x8xf32> to vector<8xf32>
    %281 = vector.shape_cast %280 : vector<8xf32> to vector<8x1xf32>
    %282 = tpu.reciprocal %281 {approx = true} : vector<8x1xf32> -> vector<8x1xf32>
    %283 = vector.broadcast %282 : vector<8x1xf32> to vector<8x8xf32>
    %284 = arith.mulf %279, %283 : vector<8x8xf32>
    %285 = vector.extract_strided_slice %235 {offsets = [0, 16], sizes = [8, 8], strides = [1, 1]} : vector<8x32xf32> to vector<8x8xf32>
    %cst_175 = arith.constant dense<0.000000e+00> : vector<8x8xf32>
    %286 = tpu.matmul %284, %285, %cst_175 {dimension_numbers = #tpu.dot_dimension_numbers<[1], [0], [0], [1], [0, 0, 1, 1], [], []>} : vector<8x8xf32>, vector<8x8xf32>, vector<8x8xf32> -> vector<8x8xf32>
    %287 = vector.extract_strided_slice %233 {offsets = [0, 24], sizes = [8, 8], strides = [1, 1]} : vector<8x32xf32> to vector<8x8xf32>
    %288 = vector.extract_strided_slice %234 {offsets = [0, 24], sizes = [8, 8], strides = [1, 1]} : vector<8x32xf32> to vector<8x8xf32>
    %cst_176 = arith.constant dense<0.000000e+00> : vector<8x8xf32>
    %289 = tpu.matmul %287, %288, %cst_176 {dimension_numbers = #tpu.dot_dimension_numbers<[1], [1], [0], [0], [0, 0, 1, 0], [], []>} : vector<8x8xf32>, vector<8x8xf32>, vector<8x8xf32> -> vector<8x8xf32>
    %cst_177 = arith.constant 0.353553385 : f32
    %290 = vector.broadcast %cst_177 : f32 to vector<8x8xf32>
    %291 = arith.mulf %289, %290 : vector<8x8xf32>
    %cst_178 = arith.constant dense<0xFF800000> : vector<8xf32>
    %292 = vector.multi_reduction <maximumf>, %291, %cst_178 [1] : vector<8x8xf32> to vector<8xf32>
    %293 = vector.shape_cast %292 : vector<8xf32> to vector<8x1xf32>
    %294 = vector.broadcast %293 : vector<8x1xf32> to vector<8x8xf32>
    %295 = arith.subf %291, %294 : vector<8x8xf32>
    %296 = math.exp %295 : vector<8x8xf32>
    %cst_179 = arith.constant dense<0.000000e+00> : vector<8xf32>
    %297 = vector.multi_reduction <add>, %296, %cst_179 [1] : vector<8x8xf32> to vector<8xf32>
    %298 = vector.shape_cast %297 : vector<8xf32> to vector<8x1xf32>
    %299 = tpu.reciprocal %298 {approx = true} : vector<8x1xf32> -> vector<8x1xf32>
    %300 = vector.broadcast %299 : vector<8x1xf32> to vector<8x8xf32>
    %301 = arith.mulf %296, %300 : vector<8x8xf32>
    %302 = vector.extract_strided_slice %235 {offsets = [0, 24], sizes = [8, 8], strides = [1, 1]} : vector<8x32xf32> to vector<8x8xf32>
    %cst_180 = arith.constant dense<0.000000e+00> : vector<8x8xf32>
    %303 = tpu.matmul %301, %302, %cst_180 {dimension_numbers = #tpu.dot_dimension_numbers<[1], [0], [0], [1], [0, 0, 1, 1], [], []>} : vector<8x8xf32>, vector<8x8xf32>, vector<8x8xf32> -> vector<8x8xf32>
    %304 = tpu.concatenate %252, %269, %286, %303 in 1 : vector<8x8xf32>, vector<8x8xf32>, vector<8x8xf32>, vector<8x8xf32> -> vector<8x32xf32>
    %cst_181 = arith.constant dense<0.000000e+00> : vector<8x32xf32>
    %305 = tpu.matmul %304, %40, %cst_181 {dimension_numbers = #tpu.dot_dimension_numbers<[1], [0], [0], [1], [0, 0, 1, 1], [], []>} : vector<8x32xf32>, vector<32x32xf32>, vector<8x32xf32> -> vector<8x32xf32>
    %306 = vector.broadcast %38 : vector<1x32xf32> to vector<8x32xf32>
    %307 = arith.addf %305, %306 : vector<8x32xf32>
    %308 = arith.addf %229, %307 : vector<8x32xf32>
    %cst_182 = arith.constant dense<0.000000e+00> : vector<8xf32>
    %309 = vector.multi_reduction <add>, %308, %cst_182 [1] : vector<8x32xf32> to vector<8xf32>
    %310 = vector.shape_cast %309 : vector<8xf32> to vector<8x1xf32>
    %cst_183 = arith.constant 3.200000e+01 : f32
    %311 = vector.broadcast %cst_183 : f32 to vector<8x1xf32>
    %312 = arith.divf %310, %311 : vector<8x1xf32>
    %313 = vector.broadcast %312 : vector<8x1xf32> to vector<8x32xf32>
    %314 = arith.subf %308, %313 : vector<8x32xf32>
    %315 = arith.mulf %314, %314 : vector<8x32xf32>
    %cst_184 = arith.constant dense<0.000000e+00> : vector<8xf32>
    %316 = vector.multi_reduction <add>, %315, %cst_184 [1] : vector<8x32xf32> to vector<8xf32>
    %317 = vector.shape_cast %316 : vector<8xf32> to vector<8x1xf32>
    %cst_185 = arith.constant 3.200000e+01 : f32
    %318 = vector.broadcast %cst_185 : f32 to vector<8x1xf32>
    %319 = arith.divf %317, %318 : vector<8x1xf32>
    %cst_186 = arith.constant 9.99999974E-6 : f32
    %320 = vector.broadcast %cst_186 : f32 to vector<8x1xf32>
    %321 = arith.addf %319, %320 : vector<8x1xf32>
    %322 = math.rsqrt %321 : vector<8x1xf32>
    %323 = vector.broadcast %322 : vector<8x1xf32> to vector<8x32xf32>
    %324 = arith.mulf %314, %323 : vector<8x32xf32>
    %325 = vector.broadcast %47 : vector<1x32xf32> to vector<8x32xf32>
    %326 = arith.mulf %324, %325 : vector<8x32xf32>
    %327 = vector.broadcast %46 : vector<1x32xf32> to vector<8x32xf32>
    %328 = arith.addf %326, %327 : vector<8x32xf32>
    %cst_187 = arith.constant dense<0.000000e+00> : vector<8x64xf32>
    %329 = tpu.matmul %328, %44, %cst_187 {dimension_numbers = #tpu.dot_dimension_numbers<[1], [0], [0], [1], [0, 0, 1, 1], [], []>} : vector<8x32xf32>, vector<32x64xf32>, vector<8x64xf32> -> vector<8x64xf32>
    %330 = vector.broadcast %42 : vector<1x64xf32> to vector<8x64xf32>
    %331 = arith.addf %329, %330 : vector<8x64xf32>
    %cst_188 = arith.constant 5.000000e-01 : f32
    %332 = vector.broadcast %cst_188 : f32 to vector<8x64xf32>
    %333 = arith.mulf %332, %331 : vector<8x64xf32>
    %cst_189 = arith.constant 0.707106769 : f32
    %334 = vector.broadcast %cst_189 : f32 to vector<8x64xf32>
    %335 = arith.mulf %331, %334 : vector<8x64xf32>
    %cst_190 = arith.constant 0.000000e+00 : f32
    %336 = vector.broadcast %cst_190 : f32 to vector<8x64xf32>
    %337 = arith.cmpf olt, %335, %336 : vector<8x64xf32>
    %cst_191 = arith.constant -1.000000e+00 : f32
    %cst_192 = arith.constant 1.000000e+00 : f32
    %338 = vector.broadcast %cst_191 : f32 to vector<8x64xf32>
    %339 = vector.broadcast %cst_192 : f32 to vector<8x64xf32>
    %340 = arith.select %337, %338, %339 : vector<8x64xi1>, vector<8x64xf32>
    %341 = math.absf %335 : vector<8x64xf32>
    %cst_193 = arith.constant 0.327591091 : f32
    %342 = vector.broadcast %cst_193 : f32 to vector<8x64xf32>
    %343 = arith.mulf %342, %341 : vector<8x64xf32>
    %cst_194 = arith.constant 1.000000e+00 : f32
    %344 = vector.broadcast %cst_194 : f32 to vector<8x64xf32>
    %345 = arith.addf %344, %343 : vector<8x64xf32>
    %cst_195 = arith.constant 1.000000e+00 : f32
    %346 = vector.broadcast %cst_195 : f32 to vector<8x64xf32>
    %347 = arith.divf %346, %345 : vector<8x64xf32>
    %cst_196 = arith.constant 1.06140542 : f32
    %348 = vector.broadcast %cst_196 : f32 to vector<8x64xf32>
    %349 = arith.mulf %348, %347 : vector<8x64xf32>
    %cst_197 = arith.constant -1.45315206 : f32
    %350 = vector.broadcast %cst_197 : f32 to vector<8x64xf32>
    %351 = arith.addf %349, %350 : vector<8x64xf32>
    %352 = arith.mulf %351, %347 : vector<8x64xf32>
    %cst_198 = arith.constant 1.42141378 : f32
    %353 = vector.broadcast %cst_198 : f32 to vector<8x64xf32>
    %354 = arith.addf %352, %353 : vector<8x64xf32>
    %355 = arith.mulf %354, %347 : vector<8x64xf32>
    %cst_199 = arith.constant -0.284496725 : f32
    %356 = vector.broadcast %cst_199 : f32 to vector<8x64xf32>
    %357 = arith.addf %355, %356 : vector<8x64xf32>
    %358 = arith.mulf %357, %347 : vector<8x64xf32>
    %cst_200 = arith.constant 0.254829586 : f32
    %359 = vector.broadcast %cst_200 : f32 to vector<8x64xf32>
    %360 = arith.addf %358, %359 : vector<8x64xf32>
    %361 = arith.mulf %360, %347 : vector<8x64xf32>
    %cst_201 = arith.constant 0.000000e+00 : f32
    %362 = vector.broadcast %cst_201 : f32 to vector<8x64xf32>
    %363 = arith.subf %362, %341 : vector<8x64xf32>
    %364 = arith.mulf %363, %341 : vector<8x64xf32>
    %365 = math.exp %364 : vector<8x64xf32>
    %366 = arith.mulf %361, %365 : vector<8x64xf32>
    %cst_202 = arith.constant 1.000000e+00 : f32
    %367 = vector.broadcast %cst_202 : f32 to vector<8x64xf32>
    %368 = arith.subf %367, %366 : vector<8x64xf32>
    %369 = arith.mulf %340, %368 : vector<8x64xf32>
    %cst_203 = arith.constant 1.000000e+00 : f32
    %370 = vector.broadcast %cst_203 : f32 to vector<8x64xf32>
    %371 = arith.addf %370, %369 : vector<8x64xf32>
    %372 = arith.mulf %333, %371 : vector<8x64xf32>
    %cst_204 = arith.constant dense<0.000000e+00> : vector<8x32xf32>
    %373 = tpu.matmul %372, %45, %cst_204 {dimension_numbers = #tpu.dot_dimension_numbers<[1], [0], [0], [1], [0, 0, 1, 1], [], []>} : vector<8x64xf32>, vector<64x32xf32>, vector<8x32xf32> -> vector<8x32xf32>
    %374 = vector.broadcast %43 : vector<1x32xf32> to vector<8x32xf32>
    %375 = arith.addf %373, %374 : vector<8x32xf32>
    %376 = arith.addf %328, %375 : vector<8x32xf32>
    %cst_205 = arith.constant dense<0.000000e+00> : vector<8xf32>
    %377 = vector.multi_reduction <add>, %376, %cst_205 [1] : vector<8x32xf32> to vector<8xf32>
    %378 = vector.shape_cast %377 : vector<8xf32> to vector<8x1xf32>
    %cst_206 = arith.constant 3.200000e+01 : f32
    %379 = vector.broadcast %cst_206 : f32 to vector<8x1xf32>
    %380 = arith.divf %378, %379 : vector<8x1xf32>
    %381 = vector.broadcast %380 : vector<8x1xf32> to vector<8x32xf32>
    %382 = arith.subf %376, %381 : vector<8x32xf32>
    %383 = arith.mulf %382, %382 : vector<8x32xf32>
    %cst_207 = arith.constant dense<0.000000e+00> : vector<8xf32>
    %384 = vector.multi_reduction <add>, %383, %cst_207 [1] : vector<8x32xf32> to vector<8xf32>
    %385 = vector.shape_cast %384 : vector<8xf32> to vector<8x1xf32>
    %cst_208 = arith.constant 3.200000e+01 : f32
    %386 = vector.broadcast %cst_208 : f32 to vector<8x1xf32>
    %387 = arith.divf %385, %386 : vector<8x1xf32>
    %cst_209 = arith.constant 9.99999974E-6 : f32
    %388 = vector.broadcast %cst_209 : f32 to vector<8x1xf32>
    %389 = arith.addf %387, %388 : vector<8x1xf32>
    %390 = math.rsqrt %389 : vector<8x1xf32>
    %391 = vector.broadcast %390 : vector<8x1xf32> to vector<8x32xf32>
    %392 = arith.mulf %382, %391 : vector<8x32xf32>
    %393 = vector.broadcast %49 : vector<1x32xf32> to vector<8x32xf32>
    %394 = arith.mulf %392, %393 : vector<8x32xf32>
    %395 = vector.broadcast %48 : vector<1x32xf32> to vector<8x32xf32>
    %396 = arith.addf %394, %395 : vector<8x32xf32>
    %cst_210 = arith.constant dense<0.000000e+00> : vector<8xf32>
    %397 = vector.multi_reduction <add>, %396, %cst_210 [1] : vector<8x32xf32> to vector<8xf32>
    %398 = vector.shape_cast %397 : vector<8xf32> to vector<8x1xf32>
    %cst_211 = arith.constant 3.200000e+01 : f32
    %399 = vector.broadcast %cst_211 : f32 to vector<8x1xf32>
    %400 = arith.divf %398, %399 : vector<8x1xf32>
    %401 = vector.broadcast %400 : vector<8x1xf32> to vector<8x32xf32>
    %402 = arith.subf %396, %401 : vector<8x32xf32>
    %403 = arith.mulf %402, %402 : vector<8x32xf32>
    %cst_212 = arith.constant dense<0.000000e+00> : vector<8xf32>
    %404 = vector.multi_reduction <add>, %403, %cst_212 [1] : vector<8x32xf32> to vector<8xf32>
    %405 = vector.shape_cast %404 : vector<8xf32> to vector<8x1xf32>
    %cst_213 = arith.constant 3.200000e+01 : f32
    %406 = vector.broadcast %cst_213 : f32 to vector<8x1xf32>
    %407 = arith.divf %405, %406 : vector<8x1xf32>
    %cst_214 = arith.constant 9.99999974E-6 : f32
    %408 = vector.broadcast %cst_214 : f32 to vector<8x1xf32>
    %409 = arith.addf %407, %408 : vector<8x1xf32>
    %410 = math.rsqrt %409 : vector<8x1xf32>
    %411 = vector.broadcast %410 : vector<8x1xf32> to vector<8x32xf32>
    %412 = arith.mulf %402, %411 : vector<8x32xf32>
    %413 = vector.broadcast %51 : vector<1x32xf32> to vector<8x32xf32>
    %414 = arith.mulf %412, %413 : vector<8x32xf32>
    %415 = vector.broadcast %50 : vector<1x32xf32> to vector<8x32xf32>
    %416 = arith.addf %414, %415 : vector<8x32xf32>
    %c0_215 = arith.constant 0 : index
    %c0_216 = arith.constant 0 : index
    %c0_217 = arith.constant 0 : index
    %417 = vector.load %arg1[%c0_215, %c0_216, %c0_217] : memref<2x5x4xf32, #tpu.memory_space<vmem>>, vector<1x5x4xf32>
    %418 = vector.shape_cast %417 : vector<1x5x4xf32> to vector<5x4xf32>
    %cst_218 = arith.constant dense<0.000000e+00> : vector<5x32xf32>
    %419 = tpu.matmul %418, %2, %cst_218 {dimension_numbers = #tpu.dot_dimension_numbers<[1], [0], [0], [1], [0, 0, 1, 1], [], []>} : vector<5x4xf32>, vector<4x32xf32>, vector<5x32xf32> -> vector<5x32xf32>
    %420 = vector.broadcast %0 : vector<1x32xf32> to vector<5x32xf32>
    %421 = arith.addf %419, %420 : vector<5x32xf32>
    %422 = arith.addf %421, %1 : vector<5x32xf32>
    %cst_219 = arith.constant dense<0.000000e+00> : vector<5x96xf32>
    %423 = tpu.matmul %422, %20, %cst_219 {dimension_numbers = #tpu.dot_dimension_numbers<[1], [0], [0], [1], [0, 0, 1, 1], [], []>} : vector<5x32xf32>, vector<32x96xf32>, vector<5x96xf32> -> vector<5x96xf32>
    %424 = vector.broadcast %18 : vector<1x96xf32> to vector<5x96xf32>
    %425 = arith.addf %423, %424 : vector<5x96xf32>
    %426 = vector.extract_strided_slice %425 {offsets = [0, 0], sizes = [5, 32], strides = [1, 1]} : vector<5x96xf32> to vector<5x32xf32>
    %427 = vector.extract_strided_slice %425 {offsets = [0, 32], sizes = [5, 32], strides = [1, 1]} : vector<5x96xf32> to vector<5x32xf32>
    %428 = vector.extract_strided_slice %425 {offsets = [0, 64], sizes = [5, 32], strides = [1, 1]} : vector<5x96xf32> to vector<5x32xf32>
    %429 = vector.extract_strided_slice %426 {offsets = [0, 0], sizes = [5, 8], strides = [1, 1]} : vector<5x32xf32> to vector<5x8xf32>
    %430 = vector.extract_strided_slice %427 {offsets = [0, 0], sizes = [5, 8], strides = [1, 1]} : vector<5x32xf32> to vector<5x8xf32>
    %cst_220 = arith.constant dense<0.000000e+00> : vector<5x5xf32>
    %431 = tpu.matmul %429, %430, %cst_220 {dimension_numbers = #tpu.dot_dimension_numbers<[1], [1], [0], [0], [0, 0, 1, 0], [], []>} : vector<5x8xf32>, vector<5x8xf32>, vector<5x5xf32> -> vector<5x5xf32>
    %cst_221 = arith.constant 0.353553385 : f32
    %432 = vector.broadcast %cst_221 : f32 to vector<5x5xf32>
    %433 = arith.mulf %431, %432 : vector<5x5xf32>
    %cst_222 = arith.constant 0xFF800000 : f32
    %434 = vector.broadcast %cst_222 : f32 to vector<5x5xf32>
    %435 = arith.select %56, %434, %433 : vector<5x5xi1>, vector<5x5xf32>
    %cst_223 = arith.constant dense<0xFF800000> : vector<5xf32>
    %436 = vector.multi_reduction <maximumf>, %435, %cst_223 [1] : vector<5x5xf32> to vector<5xf32>
    %437 = vector.shape_cast %436 : vector<5xf32> to vector<5x1xf32>
    %438 = vector.broadcast %437 : vector<5x1xf32> to vector<5x5xf32>
    %439 = arith.subf %435, %438 : vector<5x5xf32>
    %440 = math.exp %439 : vector<5x5xf32>
    %cst_224 = arith.constant dense<0.000000e+00> : vector<5xf32>
    %441 = vector.multi_reduction <add>, %440, %cst_224 [1] : vector<5x5xf32> to vector<5xf32>
    %442 = vector.shape_cast %441 : vector<5xf32> to vector<5x1xf32>
    %443 = tpu.reciprocal %442 {approx = true} : vector<5x1xf32> -> vector<5x1xf32>
    %444 = vector.broadcast %443 : vector<5x1xf32> to vector<5x5xf32>
    %445 = arith.mulf %440, %444 : vector<5x5xf32>
    %446 = vector.extract_strided_slice %428 {offsets = [0, 0], sizes = [5, 8], strides = [1, 1]} : vector<5x32xf32> to vector<5x8xf32>
    %cst_225 = arith.constant dense<0.000000e+00> : vector<5x8xf32>
    %447 = tpu.matmul %445, %446, %cst_225 {dimension_numbers = #tpu.dot_dimension_numbers<[1], [0], [0], [1], [0, 0, 1, 1], [], []>} : vector<5x5xf32>, vector<5x8xf32>, vector<5x8xf32> -> vector<5x8xf32>
    %448 = vector.extract_strided_slice %426 {offsets = [0, 8], sizes = [5, 8], strides = [1, 1]} : vector<5x32xf32> to vector<5x8xf32>
    %449 = vector.extract_strided_slice %427 {offsets = [0, 8], sizes = [5, 8], strides = [1, 1]} : vector<5x32xf32> to vector<5x8xf32>
    %cst_226 = arith.constant dense<0.000000e+00> : vector<5x5xf32>
    %450 = tpu.matmul %448, %449, %cst_226 {dimension_numbers = #tpu.dot_dimension_numbers<[1], [1], [0], [0], [0, 0, 1, 0], [], []>} : vector<5x8xf32>, vector<5x8xf32>, vector<5x5xf32> -> vector<5x5xf32>
    %cst_227 = arith.constant 0.353553385 : f32
    %451 = vector.broadcast %cst_227 : f32 to vector<5x5xf32>
    %452 = arith.mulf %450, %451 : vector<5x5xf32>
    %cst_228 = arith.constant 0xFF800000 : f32
    %453 = vector.broadcast %cst_228 : f32 to vector<5x5xf32>
    %454 = arith.select %56, %453, %452 : vector<5x5xi1>, vector<5x5xf32>
    %cst_229 = arith.constant dense<0xFF800000> : vector<5xf32>
    %455 = vector.multi_reduction <maximumf>, %454, %cst_229 [1] : vector<5x5xf32> to vector<5xf32>
    %456 = vector.shape_cast %455 : vector<5xf32> to vector<5x1xf32>
    %457 = vector.broadcast %456 : vector<5x1xf32> to vector<5x5xf32>
    %458 = arith.subf %454, %457 : vector<5x5xf32>
    %459 = math.exp %458 : vector<5x5xf32>
    %cst_230 = arith.constant dense<0.000000e+00> : vector<5xf32>
    %460 = vector.multi_reduction <add>, %459, %cst_230 [1] : vector<5x5xf32> to vector<5xf32>
    %461 = vector.shape_cast %460 : vector<5xf32> to vector<5x1xf32>
    %462 = tpu.reciprocal %461 {approx = true} : vector<5x1xf32> -> vector<5x1xf32>
    %463 = vector.broadcast %462 : vector<5x1xf32> to vector<5x5xf32>
    %464 = arith.mulf %459, %463 : vector<5x5xf32>
    %465 = vector.extract_strided_slice %428 {offsets = [0, 8], sizes = [5, 8], strides = [1, 1]} : vector<5x32xf32> to vector<5x8xf32>
    %cst_231 = arith.constant dense<0.000000e+00> : vector<5x8xf32>
    %466 = tpu.matmul %464, %465, %cst_231 {dimension_numbers = #tpu.dot_dimension_numbers<[1], [0], [0], [1], [0, 0, 1, 1], [], []>} : vector<5x5xf32>, vector<5x8xf32>, vector<5x8xf32> -> vector<5x8xf32>
    %467 = vector.extract_strided_slice %426 {offsets = [0, 16], sizes = [5, 8], strides = [1, 1]} : vector<5x32xf32> to vector<5x8xf32>
    %468 = vector.extract_strided_slice %427 {offsets = [0, 16], sizes = [5, 8], strides = [1, 1]} : vector<5x32xf32> to vector<5x8xf32>
    %cst_232 = arith.constant dense<0.000000e+00> : vector<5x5xf32>
    %469 = tpu.matmul %467, %468, %cst_232 {dimension_numbers = #tpu.dot_dimension_numbers<[1], [1], [0], [0], [0, 0, 1, 0], [], []>} : vector<5x8xf32>, vector<5x8xf32>, vector<5x5xf32> -> vector<5x5xf32>
    %cst_233 = arith.constant 0.353553385 : f32
    %470 = vector.broadcast %cst_233 : f32 to vector<5x5xf32>
    %471 = arith.mulf %469, %470 : vector<5x5xf32>
    %cst_234 = arith.constant 0xFF800000 : f32
    %472 = vector.broadcast %cst_234 : f32 to vector<5x5xf32>
    %473 = arith.select %56, %472, %471 : vector<5x5xi1>, vector<5x5xf32>
    %cst_235 = arith.constant dense<0xFF800000> : vector<5xf32>
    %474 = vector.multi_reduction <maximumf>, %473, %cst_235 [1] : vector<5x5xf32> to vector<5xf32>
    %475 = vector.shape_cast %474 : vector<5xf32> to vector<5x1xf32>
    %476 = vector.broadcast %475 : vector<5x1xf32> to vector<5x5xf32>
    %477 = arith.subf %473, %476 : vector<5x5xf32>
    %478 = math.exp %477 : vector<5x5xf32>
    %cst_236 = arith.constant dense<0.000000e+00> : vector<5xf32>
    %479 = vector.multi_reduction <add>, %478, %cst_236 [1] : vector<5x5xf32> to vector<5xf32>
    %480 = vector.shape_cast %479 : vector<5xf32> to vector<5x1xf32>
    %481 = tpu.reciprocal %480 {approx = true} : vector<5x1xf32> -> vector<5x1xf32>
    %482 = vector.broadcast %481 : vector<5x1xf32> to vector<5x5xf32>
    %483 = arith.mulf %478, %482 : vector<5x5xf32>
    %484 = vector.extract_strided_slice %428 {offsets = [0, 16], sizes = [5, 8], strides = [1, 1]} : vector<5x32xf32> to vector<5x8xf32>
    %cst_237 = arith.constant dense<0.000000e+00> : vector<5x8xf32>
    %485 = tpu.matmul %483, %484, %cst_237 {dimension_numbers = #tpu.dot_dimension_numbers<[1], [0], [0], [1], [0, 0, 1, 1], [], []>} : vector<5x5xf32>, vector<5x8xf32>, vector<5x8xf32> -> vector<5x8xf32>
    %486 = vector.extract_strided_slice %426 {offsets = [0, 24], sizes = [5, 8], strides = [1, 1]} : vector<5x32xf32> to vector<5x8xf32>
    %487 = vector.extract_strided_slice %427 {offsets = [0, 24], sizes = [5, 8], strides = [1, 1]} : vector<5x32xf32> to vector<5x8xf32>
    %cst_238 = arith.constant dense<0.000000e+00> : vector<5x5xf32>
    %488 = tpu.matmul %486, %487, %cst_238 {dimension_numbers = #tpu.dot_dimension_numbers<[1], [1], [0], [0], [0, 0, 1, 0], [], []>} : vector<5x8xf32>, vector<5x8xf32>, vector<5x5xf32> -> vector<5x5xf32>
    %cst_239 = arith.constant 0.353553385 : f32
    %489 = vector.broadcast %cst_239 : f32 to vector<5x5xf32>
    %490 = arith.mulf %488, %489 : vector<5x5xf32>
    %cst_240 = arith.constant 0xFF800000 : f32
    %491 = vector.broadcast %cst_240 : f32 to vector<5x5xf32>
    %492 = arith.select %56, %491, %490 : vector<5x5xi1>, vector<5x5xf32>
    %cst_241 = arith.constant dense<0xFF800000> : vector<5xf32>
    %493 = vector.multi_reduction <maximumf>, %492, %cst_241 [1] : vector<5x5xf32> to vector<5xf32>
    %494 = vector.shape_cast %493 : vector<5xf32> to vector<5x1xf32>
    %495 = vector.broadcast %494 : vector<5x1xf32> to vector<5x5xf32>
    %496 = arith.subf %492, %495 : vector<5x5xf32>
    %497 = math.exp %496 : vector<5x5xf32>
    %cst_242 = arith.constant dense<0.000000e+00> : vector<5xf32>
    %498 = vector.multi_reduction <add>, %497, %cst_242 [1] : vector<5x5xf32> to vector<5xf32>
    %499 = vector.shape_cast %498 : vector<5xf32> to vector<5x1xf32>
    %500 = tpu.reciprocal %499 {approx = true} : vector<5x1xf32> -> vector<5x1xf32>
    %501 = vector.broadcast %500 : vector<5x1xf32> to vector<5x5xf32>
    %502 = arith.mulf %497, %501 : vector<5x5xf32>
    %503 = vector.extract_strided_slice %428 {offsets = [0, 24], sizes = [5, 8], strides = [1, 1]} : vector<5x32xf32> to vector<5x8xf32>
    %cst_243 = arith.constant dense<0.000000e+00> : vector<5x8xf32>
    %504 = tpu.matmul %502, %503, %cst_243 {dimension_numbers = #tpu.dot_dimension_numbers<[1], [0], [0], [1], [0, 0, 1, 1], [], []>} : vector<5x5xf32>, vector<5x8xf32>, vector<5x8xf32> -> vector<5x8xf32>
    %505 = vector.extract_strided_slice %447 {offsets = [0, 0], sizes = [1, 8], strides = [1, 1]} : vector<5x8xf32> to vector<1x8xf32>
    %506 = vector.extract_strided_slice %447 {offsets = [1, 0], sizes = [1, 8], strides = [1, 1]} : vector<5x8xf32> to vector<1x8xf32>
    %507 = vector.extract_strided_slice %447 {offsets = [2, 0], sizes = [1, 8], strides = [1, 1]} : vector<5x8xf32> to vector<1x8xf32>
    %508 = vector.extract_strided_slice %447 {offsets = [3, 0], sizes = [1, 8], strides = [1, 1]} : vector<5x8xf32> to vector<1x8xf32>
    %509 = tpu.concatenate %505, %506, %507, %508 in 1 : vector<1x8xf32>, vector<1x8xf32>, vector<1x8xf32>, vector<1x8xf32> -> vector<1x32xf32>
    %510 = vector.extract_strided_slice %447 {offsets = [4, 0], sizes = [1, 8], strides = [1, 1]} : vector<5x8xf32> to vector<1x8xf32>
    %511 = vector.extract_strided_slice %466 {offsets = [0, 0], sizes = [1, 8], strides = [1, 1]} : vector<5x8xf32> to vector<1x8xf32>
    %512 = vector.extract_strided_slice %466 {offsets = [1, 0], sizes = [1, 8], strides = [1, 1]} : vector<5x8xf32> to vector<1x8xf32>
    %513 = vector.extract_strided_slice %466 {offsets = [2, 0], sizes = [1, 8], strides = [1, 1]} : vector<5x8xf32> to vector<1x8xf32>
    %514 = tpu.concatenate %510, %511, %512, %513 in 1 : vector<1x8xf32>, vector<1x8xf32>, vector<1x8xf32>, vector<1x8xf32> -> vector<1x32xf32>
    %515 = vector.extract_strided_slice %466 {offsets = [3, 0], sizes = [1, 8], strides = [1, 1]} : vector<5x8xf32> to vector<1x8xf32>
    %516 = vector.extract_strided_slice %466 {offsets = [4, 0], sizes = [1, 8], strides = [1, 1]} : vector<5x8xf32> to vector<1x8xf32>
    %517 = vector.extract_strided_slice %485 {offsets = [0, 0], sizes = [1, 8], strides = [1, 1]} : vector<5x8xf32> to vector<1x8xf32>
    %518 = vector.extract_strided_slice %485 {offsets = [1, 0], sizes = [1, 8], strides = [1, 1]} : vector<5x8xf32> to vector<1x8xf32>
    %519 = tpu.concatenate %515, %516, %517, %518 in 1 : vector<1x8xf32>, vector<1x8xf32>, vector<1x8xf32>, vector<1x8xf32> -> vector<1x32xf32>
    %520 = vector.extract_strided_slice %485 {offsets = [2, 0], sizes = [1, 8], strides = [1, 1]} : vector<5x8xf32> to vector<1x8xf32>
    %521 = vector.extract_strided_slice %485 {offsets = [3, 0], sizes = [1, 8], strides = [1, 1]} : vector<5x8xf32> to vector<1x8xf32>
    %522 = vector.extract_strided_slice %485 {offsets = [4, 0], sizes = [1, 8], strides = [1, 1]} : vector<5x8xf32> to vector<1x8xf32>
    %523 = vector.extract_strided_slice %504 {offsets = [0, 0], sizes = [1, 8], strides = [1, 1]} : vector<5x8xf32> to vector<1x8xf32>
    %524 = tpu.concatenate %520, %521, %522, %523 in 1 : vector<1x8xf32>, vector<1x8xf32>, vector<1x8xf32>, vector<1x8xf32> -> vector<1x32xf32>
    %525 = vector.extract_strided_slice %504 {offsets = [1, 0], sizes = [1, 8], strides = [1, 1]} : vector<5x8xf32> to vector<1x8xf32>
    %526 = vector.extract_strided_slice %504 {offsets = [2, 0], sizes = [1, 8], strides = [1, 1]} : vector<5x8xf32> to vector<1x8xf32>
    %527 = vector.extract_strided_slice %504 {offsets = [3, 0], sizes = [1, 8], strides = [1, 1]} : vector<5x8xf32> to vector<1x8xf32>
    %528 = vector.extract_strided_slice %504 {offsets = [4, 0], sizes = [1, 8], strides = [1, 1]} : vector<5x8xf32> to vector<1x8xf32>
    %529 = tpu.concatenate %525, %526, %527, %528 in 1 : vector<1x8xf32>, vector<1x8xf32>, vector<1x8xf32>, vector<1x8xf32> -> vector<1x32xf32>
    %530 = tpu.concatenate %509, %514, %519, %524, %529 in 0 : vector<1x32xf32>, vector<1x32xf32>, vector<1x32xf32>, vector<1x32xf32>, vector<1x32xf32> -> vector<5x32xf32>
    %cst_244 = arith.constant dense<0.000000e+00> : vector<5x32xf32>
    %531 = tpu.matmul %530, %19, %cst_244 {dimension_numbers = #tpu.dot_dimension_numbers<[1], [0], [0], [1], [0, 0, 1, 1], [], []>} : vector<5x32xf32>, vector<32x32xf32>, vector<5x32xf32> -> vector<5x32xf32>
    %532 = vector.broadcast %17 : vector<1x32xf32> to vector<5x32xf32>
    %533 = arith.addf %531, %532 : vector<5x32xf32>
    %534 = arith.addf %422, %533 : vector<5x32xf32>
    %cst_245 = arith.constant dense<0.000000e+00> : vector<5xf32>
    %535 = vector.multi_reduction <add>, %534, %cst_245 [1] : vector<5x32xf32> to vector<5xf32>
    %536 = vector.shape_cast %535 : vector<5xf32> to vector<5x1xf32>
    %cst_246 = arith.constant 3.200000e+01 : f32
    %537 = vector.broadcast %cst_246 : f32 to vector<5x1xf32>
    %538 = arith.divf %536, %537 : vector<5x1xf32>
    %539 = vector.broadcast %538 : vector<5x1xf32> to vector<5x32xf32>
    %540 = arith.subf %534, %539 : vector<5x32xf32>
    %541 = arith.mulf %540, %540 : vector<5x32xf32>
    %cst_247 = arith.constant dense<0.000000e+00> : vector<5xf32>
    %542 = vector.multi_reduction <add>, %541, %cst_247 [1] : vector<5x32xf32> to vector<5xf32>
    %543 = vector.shape_cast %542 : vector<5xf32> to vector<5x1xf32>
    %cst_248 = arith.constant 3.200000e+01 : f32
    %544 = vector.broadcast %cst_248 : f32 to vector<5x1xf32>
    %545 = arith.divf %543, %544 : vector<5x1xf32>
    %cst_249 = arith.constant 9.99999974E-6 : f32
    %546 = vector.broadcast %cst_249 : f32 to vector<5x1xf32>
    %547 = arith.addf %545, %546 : vector<5x1xf32>
    %548 = math.rsqrt %547 : vector<5x1xf32>
    %549 = vector.broadcast %548 : vector<5x1xf32> to vector<5x32xf32>
    %550 = arith.mulf %540, %549 : vector<5x32xf32>
    %551 = vector.broadcast %12 : vector<1x32xf32> to vector<5x32xf32>
    %552 = arith.mulf %550, %551 : vector<5x32xf32>
    %553 = vector.broadcast %11 : vector<1x32xf32> to vector<5x32xf32>
    %554 = arith.addf %552, %553 : vector<5x32xf32>
    %555 = vector.extract_strided_slice %6 {offsets = [0, 0], sizes = [32, 32], strides = [1, 1]} : vector<32x96xf32> to vector<32x32xf32>
    %cst_250 = arith.constant dense<0.000000e+00> : vector<5x32xf32>
    %556 = tpu.matmul %554, %555, %cst_250 {dimension_numbers = #tpu.dot_dimension_numbers<[1], [0], [0], [1], [0, 0, 1, 1], [], []>} : vector<5x32xf32>, vector<32x32xf32>, vector<5x32xf32> -> vector<5x32xf32>
    %557 = vector.extract_strided_slice %4 {offsets = [0, 0], sizes = [1, 32], strides = [1, 1]} : vector<1x96xf32> to vector<1x32xf32>
    %558 = vector.broadcast %557 : vector<1x32xf32> to vector<5x32xf32>
    %559 = arith.addf %556, %558 : vector<5x32xf32>
    %560 = vector.extract_strided_slice %6 {offsets = [0, 32], sizes = [32, 64], strides = [1, 1]} : vector<32x96xf32> to vector<32x64xf32>
    %cst_251 = arith.constant dense<0.000000e+00> : vector<8x64xf32>
    %561 = tpu.matmul %416, %560, %cst_251 {dimension_numbers = #tpu.dot_dimension_numbers<[1], [0], [0], [1], [0, 0, 1, 1], [], []>} : vector<8x32xf32>, vector<32x64xf32>, vector<8x64xf32> -> vector<8x64xf32>
    %562 = vector.extract_strided_slice %4 {offsets = [0, 32], sizes = [1, 64], strides = [1, 1]} : vector<1x96xf32> to vector<1x64xf32>
    %563 = vector.broadcast %562 : vector<1x64xf32> to vector<8x64xf32>
    %564 = arith.addf %561, %563 : vector<8x64xf32>
    %565 = vector.extract_strided_slice %564 {offsets = [0, 0], sizes = [8, 32], strides = [1, 1]} : vector<8x64xf32> to vector<8x32xf32>
    %566 = vector.extract_strided_slice %564 {offsets = [0, 32], sizes = [8, 32], strides = [1, 1]} : vector<8x64xf32> to vector<8x32xf32>
    %567 = vector.extract_strided_slice %559 {offsets = [0, 0], sizes = [5, 8], strides = [1, 1]} : vector<5x32xf32> to vector<5x8xf32>
    %568 = vector.extract_strided_slice %565 {offsets = [0, 0], sizes = [8, 8], strides = [1, 1]} : vector<8x32xf32> to vector<8x8xf32>
    %cst_252 = arith.constant dense<0.000000e+00> : vector<5x8xf32>
    %569 = tpu.matmul %567, %568, %cst_252 {dimension_numbers = #tpu.dot_dimension_numbers<[1], [1], [0], [0], [0, 0, 1, 0], [], []>} : vector<5x8xf32>, vector<8x8xf32>, vector<5x8xf32> -> vector<5x8xf32>
    %cst_253 = arith.constant 0.353553385 : f32
    %570 = vector.broadcast %cst_253 : f32 to vector<5x8xf32>
    %571 = arith.mulf %569, %570 : vector<5x8xf32>
    %cst_254 = arith.constant dense<0xFF800000> : vector<5xf32>
    %572 = vector.multi_reduction <maximumf>, %571, %cst_254 [1] : vector<5x8xf32> to vector<5xf32>
    %573 = vector.shape_cast %572 : vector<5xf32> to vector<5x1xf32>
    %574 = vector.broadcast %573 : vector<5x1xf32> to vector<5x8xf32>
    %575 = arith.subf %571, %574 : vector<5x8xf32>
    %576 = math.exp %575 : vector<5x8xf32>
    %cst_255 = arith.constant dense<0.000000e+00> : vector<5xf32>
    %577 = vector.multi_reduction <add>, %576, %cst_255 [1] : vector<5x8xf32> to vector<5xf32>
    %578 = vector.shape_cast %577 : vector<5xf32> to vector<5x1xf32>
    %579 = tpu.reciprocal %578 {approx = true} : vector<5x1xf32> -> vector<5x1xf32>
    %580 = vector.broadcast %579 : vector<5x1xf32> to vector<5x8xf32>
    %581 = arith.mulf %576, %580 : vector<5x8xf32>
    %582 = vector.extract_strided_slice %566 {offsets = [0, 0], sizes = [8, 8], strides = [1, 1]} : vector<8x32xf32> to vector<8x8xf32>
    %cst_256 = arith.constant dense<0.000000e+00> : vector<5x8xf32>
    %583 = tpu.matmul %581, %582, %cst_256 {dimension_numbers = #tpu.dot_dimension_numbers<[1], [0], [0], [1], [0, 0, 1, 1], [], []>} : vector<5x8xf32>, vector<8x8xf32>, vector<5x8xf32> -> vector<5x8xf32>
    %584 = vector.extract_strided_slice %559 {offsets = [0, 8], sizes = [5, 8], strides = [1, 1]} : vector<5x32xf32> to vector<5x8xf32>
    %585 = vector.extract_strided_slice %565 {offsets = [0, 8], sizes = [8, 8], strides = [1, 1]} : vector<8x32xf32> to vector<8x8xf32>
    %cst_257 = arith.constant dense<0.000000e+00> : vector<5x8xf32>
    %586 = tpu.matmul %584, %585, %cst_257 {dimension_numbers = #tpu.dot_dimension_numbers<[1], [1], [0], [0], [0, 0, 1, 0], [], []>} : vector<5x8xf32>, vector<8x8xf32>, vector<5x8xf32> -> vector<5x8xf32>
    %cst_258 = arith.constant 0.353553385 : f32
    %587 = vector.broadcast %cst_258 : f32 to vector<5x8xf32>
    %588 = arith.mulf %586, %587 : vector<5x8xf32>
    %cst_259 = arith.constant dense<0xFF800000> : vector<5xf32>
    %589 = vector.multi_reduction <maximumf>, %588, %cst_259 [1] : vector<5x8xf32> to vector<5xf32>
    %590 = vector.shape_cast %589 : vector<5xf32> to vector<5x1xf32>
    %591 = vector.broadcast %590 : vector<5x1xf32> to vector<5x8xf32>
    %592 = arith.subf %588, %591 : vector<5x8xf32>
    %593 = math.exp %592 : vector<5x8xf32>
    %cst_260 = arith.constant dense<0.000000e+00> : vector<5xf32>
    %594 = vector.multi_reduction <add>, %593, %cst_260 [1] : vector<5x8xf32> to vector<5xf32>
    %595 = vector.shape_cast %594 : vector<5xf32> to vector<5x1xf32>
    %596 = tpu.reciprocal %595 {approx = true} : vector<5x1xf32> -> vector<5x1xf32>
    %597 = vector.broadcast %596 : vector<5x1xf32> to vector<5x8xf32>
    %598 = arith.mulf %593, %597 : vector<5x8xf32>
    %599 = vector.extract_strided_slice %566 {offsets = [0, 8], sizes = [8, 8], strides = [1, 1]} : vector<8x32xf32> to vector<8x8xf32>
    %cst_261 = arith.constant dense<0.000000e+00> : vector<5x8xf32>
    %600 = tpu.matmul %598, %599, %cst_261 {dimension_numbers = #tpu.dot_dimension_numbers<[1], [0], [0], [1], [0, 0, 1, 1], [], []>} : vector<5x8xf32>, vector<8x8xf32>, vector<5x8xf32> -> vector<5x8xf32>
    %601 = vector.extract_strided_slice %559 {offsets = [0, 16], sizes = [5, 8], strides = [1, 1]} : vector<5x32xf32> to vector<5x8xf32>
    %602 = vector.extract_strided_slice %565 {offsets = [0, 16], sizes = [8, 8], strides = [1, 1]} : vector<8x32xf32> to vector<8x8xf32>
    %cst_262 = arith.constant dense<0.000000e+00> : vector<5x8xf32>
    %603 = tpu.matmul %601, %602, %cst_262 {dimension_numbers = #tpu.dot_dimension_numbers<[1], [1], [0], [0], [0, 0, 1, 0], [], []>} : vector<5x8xf32>, vector<8x8xf32>, vector<5x8xf32> -> vector<5x8xf32>
    %cst_263 = arith.constant 0.353553385 : f32
    %604 = vector.broadcast %cst_263 : f32 to vector<5x8xf32>
    %605 = arith.mulf %603, %604 : vector<5x8xf32>
    %cst_264 = arith.constant dense<0xFF800000> : vector<5xf32>
    %606 = vector.multi_reduction <maximumf>, %605, %cst_264 [1] : vector<5x8xf32> to vector<5xf32>
    %607 = vector.shape_cast %606 : vector<5xf32> to vector<5x1xf32>
    %608 = vector.broadcast %607 : vector<5x1xf32> to vector<5x8xf32>
    %609 = arith.subf %605, %608 : vector<5x8xf32>
    %610 = math.exp %609 : vector<5x8xf32>
    %cst_265 = arith.constant dense<0.000000e+00> : vector<5xf32>
    %611 = vector.multi_reduction <add>, %610, %cst_265 [1] : vector<5x8xf32> to vector<5xf32>
    %612 = vector.shape_cast %611 : vector<5xf32> to vector<5x1xf32>
    %613 = tpu.reciprocal %612 {approx = true} : vector<5x1xf32> -> vector<5x1xf32>
    %614 = vector.broadcast %613 : vector<5x1xf32> to vector<5x8xf32>
    %615 = arith.mulf %610, %614 : vector<5x8xf32>
    %616 = vector.extract_strided_slice %566 {offsets = [0, 16], sizes = [8, 8], strides = [1, 1]} : vector<8x32xf32> to vector<8x8xf32>
    %cst_266 = arith.constant dense<0.000000e+00> : vector<5x8xf32>
    %617 = tpu.matmul %615, %616, %cst_266 {dimension_numbers = #tpu.dot_dimension_numbers<[1], [0], [0], [1], [0, 0, 1, 1], [], []>} : vector<5x8xf32>, vector<8x8xf32>, vector<5x8xf32> -> vector<5x8xf32>
    %618 = vector.extract_strided_slice %559 {offsets = [0, 24], sizes = [5, 8], strides = [1, 1]} : vector<5x32xf32> to vector<5x8xf32>
    %619 = vector.extract_strided_slice %565 {offsets = [0, 24], sizes = [8, 8], strides = [1, 1]} : vector<8x32xf32> to vector<8x8xf32>
    %cst_267 = arith.constant dense<0.000000e+00> : vector<5x8xf32>
    %620 = tpu.matmul %618, %619, %cst_267 {dimension_numbers = #tpu.dot_dimension_numbers<[1], [1], [0], [0], [0, 0, 1, 0], [], []>} : vector<5x8xf32>, vector<8x8xf32>, vector<5x8xf32> -> vector<5x8xf32>
    %cst_268 = arith.constant 0.353553385 : f32
    %621 = vector.broadcast %cst_268 : f32 to vector<5x8xf32>
    %622 = arith.mulf %620, %621 : vector<5x8xf32>
    %cst_269 = arith.constant dense<0xFF800000> : vector<5xf32>
    %623 = vector.multi_reduction <maximumf>, %622, %cst_269 [1] : vector<5x8xf32> to vector<5xf32>
    %624 = vector.shape_cast %623 : vector<5xf32> to vector<5x1xf32>
    %625 = vector.broadcast %624 : vector<5x1xf32> to vector<5x8xf32>
    %626 = arith.subf %622, %625 : vector<5x8xf32>
    %627 = math.exp %626 : vector<5x8xf32>
    %cst_270 = arith.constant dense<0.000000e+00> : vector<5xf32>
    %628 = vector.multi_reduction <add>, %627, %cst_270 [1] : vector<5x8xf32> to vector<5xf32>
    %629 = vector.shape_cast %628 : vector<5xf32> to vector<5x1xf32>
    %630 = tpu.reciprocal %629 {approx = true} : vector<5x1xf32> -> vector<5x1xf32>
    %631 = vector.broadcast %630 : vector<5x1xf32> to vector<5x8xf32>
    %632 = arith.mulf %627, %631 : vector<5x8xf32>
    %633 = vector.extract_strided_slice %566 {offsets = [0, 24], sizes = [8, 8], strides = [1, 1]} : vector<8x32xf32> to vector<8x8xf32>
    %cst_271 = arith.constant dense<0.000000e+00> : vector<5x8xf32>
    %634 = tpu.matmul %632, %633, %cst_271 {dimension_numbers = #tpu.dot_dimension_numbers<[1], [0], [0], [1], [0, 0, 1, 1], [], []>} : vector<5x8xf32>, vector<8x8xf32>, vector<5x8xf32> -> vector<5x8xf32>
    %635 = tpu.concatenate %583, %600, %617, %634 in 1 : vector<5x8xf32>, vector<5x8xf32>, vector<5x8xf32>, vector<5x8xf32> -> vector<5x32xf32>
    %cst_272 = arith.constant dense<0.000000e+00> : vector<5x32xf32>
    %636 = tpu.matmul %635, %5, %cst_272 {dimension_numbers = #tpu.dot_dimension_numbers<[1], [0], [0], [1], [0, 0, 1, 1], [], []>} : vector<5x32xf32>, vector<32x32xf32>, vector<5x32xf32> -> vector<5x32xf32>
    %637 = vector.broadcast %3 : vector<1x32xf32> to vector<5x32xf32>
    %638 = arith.addf %636, %637 : vector<5x32xf32>
    %639 = arith.addf %554, %638 : vector<5x32xf32>
    %cst_273 = arith.constant dense<0.000000e+00> : vector<5xf32>
    %640 = vector.multi_reduction <add>, %639, %cst_273 [1] : vector<5x32xf32> to vector<5xf32>
    %641 = vector.shape_cast %640 : vector<5xf32> to vector<5x1xf32>
    %cst_274 = arith.constant 3.200000e+01 : f32
    %642 = vector.broadcast %cst_274 : f32 to vector<5x1xf32>
    %643 = arith.divf %641, %642 : vector<5x1xf32>
    %644 = vector.broadcast %643 : vector<5x1xf32> to vector<5x32xf32>
    %645 = arith.subf %639, %644 : vector<5x32xf32>
    %646 = arith.mulf %645, %645 : vector<5x32xf32>
    %cst_275 = arith.constant dense<0.000000e+00> : vector<5xf32>
    %647 = vector.multi_reduction <add>, %646, %cst_275 [1] : vector<5x32xf32> to vector<5xf32>
    %648 = vector.shape_cast %647 : vector<5xf32> to vector<5x1xf32>
    %cst_276 = arith.constant 3.200000e+01 : f32
    %649 = vector.broadcast %cst_276 : f32 to vector<5x1xf32>
    %650 = arith.divf %648, %649 : vector<5x1xf32>
    %cst_277 = arith.constant 9.99999974E-6 : f32
    %651 = vector.broadcast %cst_277 : f32 to vector<5x1xf32>
    %652 = arith.addf %650, %651 : vector<5x1xf32>
    %653 = math.rsqrt %652 : vector<5x1xf32>
    %654 = vector.broadcast %653 : vector<5x1xf32> to vector<5x32xf32>
    %655 = arith.mulf %645, %654 : vector<5x32xf32>
    %656 = vector.broadcast %14 : vector<1x32xf32> to vector<5x32xf32>
    %657 = arith.mulf %655, %656 : vector<5x32xf32>
    %658 = vector.broadcast %13 : vector<1x32xf32> to vector<5x32xf32>
    %659 = arith.addf %657, %658 : vector<5x32xf32>
    %cst_278 = arith.constant dense<0.000000e+00> : vector<5x64xf32>
    %660 = tpu.matmul %659, %9, %cst_278 {dimension_numbers = #tpu.dot_dimension_numbers<[1], [0], [0], [1], [0, 0, 1, 1], [], []>} : vector<5x32xf32>, vector<32x64xf32>, vector<5x64xf32> -> vector<5x64xf32>
    %661 = vector.broadcast %7 : vector<1x64xf32> to vector<5x64xf32>
    %662 = arith.addf %660, %661 : vector<5x64xf32>
    %cst_279 = arith.constant 5.000000e-01 : f32
    %663 = vector.broadcast %cst_279 : f32 to vector<5x64xf32>
    %664 = arith.mulf %663, %662 : vector<5x64xf32>
    %cst_280 = arith.constant 0.707106769 : f32
    %665 = vector.broadcast %cst_280 : f32 to vector<5x64xf32>
    %666 = arith.mulf %662, %665 : vector<5x64xf32>
    %cst_281 = arith.constant 0.000000e+00 : f32
    %667 = vector.broadcast %cst_281 : f32 to vector<5x64xf32>
    %668 = arith.cmpf olt, %666, %667 : vector<5x64xf32>
    %cst_282 = arith.constant -1.000000e+00 : f32
    %cst_283 = arith.constant 1.000000e+00 : f32
    %669 = vector.broadcast %cst_282 : f32 to vector<5x64xf32>
    %670 = vector.broadcast %cst_283 : f32 to vector<5x64xf32>
    %671 = arith.select %668, %669, %670 : vector<5x64xi1>, vector<5x64xf32>
    %672 = math.absf %666 : vector<5x64xf32>
    %cst_284 = arith.constant 0.327591091 : f32
    %673 = vector.broadcast %cst_284 : f32 to vector<5x64xf32>
    %674 = arith.mulf %673, %672 : vector<5x64xf32>
    %cst_285 = arith.constant 1.000000e+00 : f32
    %675 = vector.broadcast %cst_285 : f32 to vector<5x64xf32>
    %676 = arith.addf %675, %674 : vector<5x64xf32>
    %cst_286 = arith.constant 1.000000e+00 : f32
    %677 = vector.broadcast %cst_286 : f32 to vector<5x64xf32>
    %678 = arith.divf %677, %676 : vector<5x64xf32>
    %cst_287 = arith.constant 1.06140542 : f32
    %679 = vector.broadcast %cst_287 : f32 to vector<5x64xf32>
    %680 = arith.mulf %679, %678 : vector<5x64xf32>
    %cst_288 = arith.constant -1.45315206 : f32
    %681 = vector.broadcast %cst_288 : f32 to vector<5x64xf32>
    %682 = arith.addf %680, %681 : vector<5x64xf32>
    %683 = arith.mulf %682, %678 : vector<5x64xf32>
    %cst_289 = arith.constant 1.42141378 : f32
    %684 = vector.broadcast %cst_289 : f32 to vector<5x64xf32>
    %685 = arith.addf %683, %684 : vector<5x64xf32>
    %686 = arith.mulf %685, %678 : vector<5x64xf32>
    %cst_290 = arith.constant -0.284496725 : f32
    %687 = vector.broadcast %cst_290 : f32 to vector<5x64xf32>
    %688 = arith.addf %686, %687 : vector<5x64xf32>
    %689 = arith.mulf %688, %678 : vector<5x64xf32>
    %cst_291 = arith.constant 0.254829586 : f32
    %690 = vector.broadcast %cst_291 : f32 to vector<5x64xf32>
    %691 = arith.addf %689, %690 : vector<5x64xf32>
    %692 = arith.mulf %691, %678 : vector<5x64xf32>
    %cst_292 = arith.constant 0.000000e+00 : f32
    %693 = vector.broadcast %cst_292 : f32 to vector<5x64xf32>
    %694 = arith.subf %693, %672 : vector<5x64xf32>
    %695 = arith.mulf %694, %672 : vector<5x64xf32>
    %696 = math.exp %695 : vector<5x64xf32>
    %697 = arith.mulf %692, %696 : vector<5x64xf32>
    %cst_293 = arith.constant 1.000000e+00 : f32
    %698 = vector.broadcast %cst_293 : f32 to vector<5x64xf32>
    %699 = arith.subf %698, %697 : vector<5x64xf32>
    %700 = arith.mulf %671, %699 : vector<5x64xf32>
    %cst_294 = arith.constant 1.000000e+00 : f32
    %701 = vector.broadcast %cst_294 : f32 to vector<5x64xf32>
    %702 = arith.addf %701, %700 : vector<5x64xf32>
    %703 = arith.mulf %664, %702 : vector<5x64xf32>
    %cst_295 = arith.constant dense<0.000000e+00> : vector<5x32xf32>
    %704 = tpu.matmul %703, %10, %cst_295 {dimension_numbers = #tpu.dot_dimension_numbers<[1], [0], [0], [1], [0, 0, 1, 1], [], []>} : vector<5x64xf32>, vector<64x32xf32>, vector<5x32xf32> -> vector<5x32xf32>
    %705 = vector.broadcast %8 : vector<1x32xf32> to vector<5x32xf32>
    %706 = arith.addf %704, %705 : vector<5x32xf32>
    %707 = arith.addf %659, %706 : vector<5x32xf32>
    %cst_296 = arith.constant dense<0.000000e+00> : vector<5xf32>
    %708 = vector.multi_reduction <add>, %707, %cst_296 [1] : vector<5x32xf32> to vector<5xf32>
    %709 = vector.shape_cast %708 : vector<5xf32> to vector<5x1xf32>
    %cst_297 = arith.constant 3.200000e+01 : f32
    %710 = vector.broadcast %cst_297 : f32 to vector<5x1xf32>
    %711 = arith.divf %709, %710 : vector<5x1xf32>
    %712 = vector.broadcast %711 : vector<5x1xf32> to vector<5x32xf32>
    %713 = arith.subf %707, %712 : vector<5x32xf32>
    %714 = arith.mulf %713, %713 : vector<5x32xf32>
    %cst_298 = arith.constant dense<0.000000e+00> : vector<5xf32>
    %715 = vector.multi_reduction <add>, %714, %cst_298 [1] : vector<5x32xf32> to vector<5xf32>
    %716 = vector.shape_cast %715 : vector<5xf32> to vector<5x1xf32>
    %cst_299 = arith.constant 3.200000e+01 : f32
    %717 = vector.broadcast %cst_299 : f32 to vector<5x1xf32>
    %718 = arith.divf %716, %717 : vector<5x1xf32>
    %cst_300 = arith.constant 9.99999974E-6 : f32
    %719 = vector.broadcast %cst_300 : f32 to vector<5x1xf32>
    %720 = arith.addf %718, %719 : vector<5x1xf32>
    %721 = math.rsqrt %720 : vector<5x1xf32>
    %722 = vector.broadcast %721 : vector<5x1xf32> to vector<5x32xf32>
    %723 = arith.mulf %713, %722 : vector<5x32xf32>
    %724 = vector.broadcast %16 : vector<1x32xf32> to vector<5x32xf32>
    %725 = arith.mulf %723, %724 : vector<5x32xf32>
    %726 = vector.broadcast %15 : vector<1x32xf32> to vector<5x32xf32>
    %727 = arith.addf %725, %726 : vector<5x32xf32>
    %cst_301 = arith.constant dense<0.000000e+00> : vector<5xf32>
    %728 = vector.multi_reduction <add>, %727, %cst_301 [1] : vector<5x32xf32> to vector<5xf32>
    %729 = vector.shape_cast %728 : vector<5xf32> to vector<5x1xf32>
    %cst_302 = arith.constant 3.200000e+01 : f32
    %730 = vector.broadcast %cst_302 : f32 to vector<5x1xf32>
    %731 = arith.divf %729, %730 : vector<5x1xf32>
    %732 = vector.broadcast %731 : vector<5x1xf32> to vector<5x32xf32>
    %733 = arith.subf %727, %732 : vector<5x32xf32>
    %734 = arith.mulf %733, %733 : vector<5x32xf32>
    %cst_303 = arith.constant dense<0.000000e+00> : vector<5xf32>
    %735 = vector.multi_reduction <add>, %734, %cst_303 [1] : vector<5x32xf32> to vector<5xf32>
    %736 = vector.shape_cast %735 : vector<5xf32> to vector<5x1xf32>
    %cst_304 = arith.constant 3.200000e+01 : f32
    %737 = vector.broadcast %cst_304 : f32 to vector<5x1xf32>
    %738 = arith.divf %736, %737 : vector<5x1xf32>
    %cst_305 = arith.constant 9.99999974E-6 : f32
    %739 = vector.broadcast %cst_305 : f32 to vector<5x1xf32>
    %740 = arith.addf %738, %739 : vector<5x1xf32>
    %741 = math.rsqrt %740 : vector<5x1xf32>
    %742 = vector.broadcast %741 : vector<5x1xf32> to vector<5x32xf32>
    %743 = arith.mulf %733, %742 : vector<5x32xf32>
    %744 = vector.broadcast %22 : vector<1x32xf32> to vector<5x32xf32>
    %745 = arith.mulf %743, %744 : vector<5x32xf32>
    %746 = vector.broadcast %21 : vector<1x32xf32> to vector<5x32xf32>
    %747 = arith.addf %745, %746 : vector<5x32xf32>
    %748 = vector.extract_strided_slice %747 {offsets = [4, 0], sizes = [1, 32], strides = [1, 1]} : vector<5x32xf32> to vector<1x32xf32>
    %cst_306 = arith.constant dense<0.000000e+00> : vector<1x1xf32>
    %749 = tpu.matmul %748, %53, %cst_306 {dimension_numbers = #tpu.dot_dimension_numbers<[1], [0], [0], [1], [0, 0, 1, 1], [], []>} : vector<1x32xf32>, vector<32x1xf32>, vector<1x1xf32> -> vector<1x1xf32>
    %750 = arith.addf %749, %52 : vector<1x1xf32>
    %c0_307 = arith.constant 0 : index
    %c0_308 = arith.constant 0 : index
    %c0_309 = arith.constant 0 : index
    %751 = vector.load %arg56[%c0_307, %c0_308, %c0_309] : memref<2x1x1xf32, #tpu.memory_space<vmem>>, vector<1x1x1xf32>
    %752 = vector.shape_cast %751 : vector<1x1x1xf32> to vector<1x1xf32>
    %753 = vector.shape_cast %750 : vector<1x1xf32> to vector<1x1x1xf32>
    tpu.vector_store %arg56[%c0_307, %c0_308, %c0_309], %753 {strides = array<i32>} : memref<2x1x1xf32, #tpu.memory_space<vmem>>, vector<1x1x1xf32>,
    %c1 = arith.constant 1 : index
    %c0_310 = arith.constant 0 : index
    %c0_311 = arith.constant 0 : index
    %754 = vector.load %arg0[%c1, %c0_310, %c0_311] : memref<2x8x4xf32, #tpu.memory_space<vmem>>, vector<1x8x4xf32>
    %755 = vector.shape_cast %754 : vector<1x8x4xf32> to vector<8x4xf32>
    %cst_312 = arith.constant dense<0.000000e+00> : vector<8x32xf32>
    %756 = tpu.matmul %755, %25, %cst_312 {dimension_numbers = #tpu.dot_dimension_numbers<[1], [0], [0], [1], [0, 0, 1, 1], [], []>} : vector<8x4xf32>, vector<4x32xf32>, vector<8x32xf32> -> vector<8x32xf32>
    %757 = vector.broadcast %23 : vector<1x32xf32> to vector<8x32xf32>
    %758 = arith.addf %756, %757 : vector<8x32xf32>
    %759 = arith.addf %758, %24 : vector<8x32xf32>
    %cst_313 = arith.constant dense<0.000000e+00> : vector<8x96xf32>
    %760 = tpu.matmul %759, %29, %cst_313 {dimension_numbers = #tpu.dot_dimension_numbers<[1], [0], [0], [1], [0, 0, 1, 1], [], []>} : vector<8x32xf32>, vector<32x96xf32>, vector<8x96xf32> -> vector<8x96xf32>
    %761 = vector.broadcast %27 : vector<1x96xf32> to vector<8x96xf32>
    %762 = arith.addf %760, %761 : vector<8x96xf32>
    %763 = vector.extract_strided_slice %762 {offsets = [0, 0], sizes = [8, 32], strides = [1, 1]} : vector<8x96xf32> to vector<8x32xf32>
    %764 = vector.extract_strided_slice %762 {offsets = [0, 32], sizes = [8, 32], strides = [1, 1]} : vector<8x96xf32> to vector<8x32xf32>
    %765 = vector.extract_strided_slice %762 {offsets = [0, 64], sizes = [8, 32], strides = [1, 1]} : vector<8x96xf32> to vector<8x32xf32>
    %766 = vector.extract_strided_slice %763 {offsets = [0, 0], sizes = [8, 8], strides = [1, 1]} : vector<8x32xf32> to vector<8x8xf32>
    %767 = vector.extract_strided_slice %764 {offsets = [0, 0], sizes = [8, 8], strides = [1, 1]} : vector<8x32xf32> to vector<8x8xf32>
    %cst_314 = arith.constant dense<0.000000e+00> : vector<8x8xf32>
    %768 = tpu.matmul %766, %767, %cst_314 {dimension_numbers = #tpu.dot_dimension_numbers<[1], [1], [0], [0], [0, 0, 1, 0], [], []>} : vector<8x8xf32>, vector<8x8xf32>, vector<8x8xf32> -> vector<8x8xf32>
    %cst_315 = arith.constant 0.353553385 : f32
    %769 = vector.broadcast %cst_315 : f32 to vector<8x8xf32>
    %770 = arith.mulf %768, %769 : vector<8x8xf32>
    %cst_316 = arith.constant dense<0xFF800000> : vector<8xf32>
    %771 = vector.multi_reduction <maximumf>, %770, %cst_316 [1] : vector<8x8xf32> to vector<8xf32>
    %772 = vector.shape_cast %771 : vector<8xf32> to vector<8x1xf32>
    %773 = vector.broadcast %772 : vector<8x1xf32> to vector<8x8xf32>
    %774 = arith.subf %770, %773 : vector<8x8xf32>
    %775 = math.exp %774 : vector<8x8xf32>
    %cst_317 = arith.constant dense<0.000000e+00> : vector<8xf32>
    %776 = vector.multi_reduction <add>, %775, %cst_317 [1] : vector<8x8xf32> to vector<8xf32>
    %777 = vector.shape_cast %776 : vector<8xf32> to vector<8x1xf32>
    %778 = tpu.reciprocal %777 {approx = true} : vector<8x1xf32> -> vector<8x1xf32>
    %779 = vector.broadcast %778 : vector<8x1xf32> to vector<8x8xf32>
    %780 = arith.mulf %775, %779 : vector<8x8xf32>
    %781 = vector.extract_strided_slice %765 {offsets = [0, 0], sizes = [8, 8], strides = [1, 1]} : vector<8x32xf32> to vector<8x8xf32>
    %cst_318 = arith.constant dense<0.000000e+00> : vector<8x8xf32>
    %782 = tpu.matmul %780, %781, %cst_318 {dimension_numbers = #tpu.dot_dimension_numbers<[1], [0], [0], [1], [0, 0, 1, 1], [], []>} : vector<8x8xf32>, vector<8x8xf32>, vector<8x8xf32> -> vector<8x8xf32>
    %783 = vector.extract_strided_slice %763 {offsets = [0, 8], sizes = [8, 8], strides = [1, 1]} : vector<8x32xf32> to vector<8x8xf32>
    %784 = vector.extract_strided_slice %764 {offsets = [0, 8], sizes = [8, 8], strides = [1, 1]} : vector<8x32xf32> to vector<8x8xf32>
    %cst_319 = arith.constant dense<0.000000e+00> : vector<8x8xf32>
    %785 = tpu.matmul %783, %784, %cst_319 {dimension_numbers = #tpu.dot_dimension_numbers<[1], [1], [0], [0], [0, 0, 1, 0], [], []>} : vector<8x8xf32>, vector<8x8xf32>, vector<8x8xf32> -> vector<8x8xf32>
    %cst_320 = arith.constant 0.353553385 : f32
    %786 = vector.broadcast %cst_320 : f32 to vector<8x8xf32>
    %787 = arith.mulf %785, %786 : vector<8x8xf32>
    %cst_321 = arith.constant dense<0xFF800000> : vector<8xf32>
    %788 = vector.multi_reduction <maximumf>, %787, %cst_321 [1] : vector<8x8xf32> to vector<8xf32>
    %789 = vector.shape_cast %788 : vector<8xf32> to vector<8x1xf32>
    %790 = vector.broadcast %789 : vector<8x1xf32> to vector<8x8xf32>
    %791 = arith.subf %787, %790 : vector<8x8xf32>
    %792 = math.exp %791 : vector<8x8xf32>
    %cst_322 = arith.constant dense<0.000000e+00> : vector<8xf32>
    %793 = vector.multi_reduction <add>, %792, %cst_322 [1] : vector<8x8xf32> to vector<8xf32>
    %794 = vector.shape_cast %793 : vector<8xf32> to vector<8x1xf32>
    %795 = tpu.reciprocal %794 {approx = true} : vector<8x1xf32> -> vector<8x1xf32>
    %796 = vector.broadcast %795 : vector<8x1xf32> to vector<8x8xf32>
    %797 = arith.mulf %792, %796 : vector<8x8xf32>
    %798 = vector.extract_strided_slice %765 {offsets = [0, 8], sizes = [8, 8], strides = [1, 1]} : vector<8x32xf32> to vector<8x8xf32>
    %cst_323 = arith.constant dense<0.000000e+00> : vector<8x8xf32>
    %799 = tpu.matmul %797, %798, %cst_323 {dimension_numbers = #tpu.dot_dimension_numbers<[1], [0], [0], [1], [0, 0, 1, 1], [], []>} : vector<8x8xf32>, vector<8x8xf32>, vector<8x8xf32> -> vector<8x8xf32>
    %800 = vector.extract_strided_slice %763 {offsets = [0, 16], sizes = [8, 8], strides = [1, 1]} : vector<8x32xf32> to vector<8x8xf32>
    %801 = vector.extract_strided_slice %764 {offsets = [0, 16], sizes = [8, 8], strides = [1, 1]} : vector<8x32xf32> to vector<8x8xf32>
    %cst_324 = arith.constant dense<0.000000e+00> : vector<8x8xf32>
    %802 = tpu.matmul %800, %801, %cst_324 {dimension_numbers = #tpu.dot_dimension_numbers<[1], [1], [0], [0], [0, 0, 1, 0], [], []>} : vector<8x8xf32>, vector<8x8xf32>, vector<8x8xf32> -> vector<8x8xf32>
    %cst_325 = arith.constant 0.353553385 : f32
    %803 = vector.broadcast %cst_325 : f32 to vector<8x8xf32>
    %804 = arith.mulf %802, %803 : vector<8x8xf32>
    %cst_326 = arith.constant dense<0xFF800000> : vector<8xf32>
    %805 = vector.multi_reduction <maximumf>, %804, %cst_326 [1] : vector<8x8xf32> to vector<8xf32>
    %806 = vector.shape_cast %805 : vector<8xf32> to vector<8x1xf32>
    %807 = vector.broadcast %806 : vector<8x1xf32> to vector<8x8xf32>
    %808 = arith.subf %804, %807 : vector<8x8xf32>
    %809 = math.exp %808 : vector<8x8xf32>
    %cst_327 = arith.constant dense<0.000000e+00> : vector<8xf32>
    %810 = vector.multi_reduction <add>, %809, %cst_327 [1] : vector<8x8xf32> to vector<8xf32>
    %811 = vector.shape_cast %810 : vector<8xf32> to vector<8x1xf32>
    %812 = tpu.reciprocal %811 {approx = true} : vector<8x1xf32> -> vector<8x1xf32>
    %813 = vector.broadcast %812 : vector<8x1xf32> to vector<8x8xf32>
    %814 = arith.mulf %809, %813 : vector<8x8xf32>
    %815 = vector.extract_strided_slice %765 {offsets = [0, 16], sizes = [8, 8], strides = [1, 1]} : vector<8x32xf32> to vector<8x8xf32>
    %cst_328 = arith.constant dense<0.000000e+00> : vector<8x8xf32>
    %816 = tpu.matmul %814, %815, %cst_328 {dimension_numbers = #tpu.dot_dimension_numbers<[1], [0], [0], [1], [0, 0, 1, 1], [], []>} : vector<8x8xf32>, vector<8x8xf32>, vector<8x8xf32> -> vector<8x8xf32>
    %817 = vector.extract_strided_slice %763 {offsets = [0, 24], sizes = [8, 8], strides = [1, 1]} : vector<8x32xf32> to vector<8x8xf32>
    %818 = vector.extract_strided_slice %764 {offsets = [0, 24], sizes = [8, 8], strides = [1, 1]} : vector<8x32xf32> to vector<8x8xf32>
    %cst_329 = arith.constant dense<0.000000e+00> : vector<8x8xf32>
    %819 = tpu.matmul %817, %818, %cst_329 {dimension_numbers = #tpu.dot_dimension_numbers<[1], [1], [0], [0], [0, 0, 1, 0], [], []>} : vector<8x8xf32>, vector<8x8xf32>, vector<8x8xf32> -> vector<8x8xf32>
    %cst_330 = arith.constant 0.353553385 : f32
    %820 = vector.broadcast %cst_330 : f32 to vector<8x8xf32>
    %821 = arith.mulf %819, %820 : vector<8x8xf32>
    %cst_331 = arith.constant dense<0xFF800000> : vector<8xf32>
    %822 = vector.multi_reduction <maximumf>, %821, %cst_331 [1] : vector<8x8xf32> to vector<8xf32>
    %823 = vector.shape_cast %822 : vector<8xf32> to vector<8x1xf32>
    %824 = vector.broadcast %823 : vector<8x1xf32> to vector<8x8xf32>
    %825 = arith.subf %821, %824 : vector<8x8xf32>
    %826 = math.exp %825 : vector<8x8xf32>
    %cst_332 = arith.constant dense<0.000000e+00> : vector<8xf32>
    %827 = vector.multi_reduction <add>, %826, %cst_332 [1] : vector<8x8xf32> to vector<8xf32>
    %828 = vector.shape_cast %827 : vector<8xf32> to vector<8x1xf32>
    %829 = tpu.reciprocal %828 {approx = true} : vector<8x1xf32> -> vector<8x1xf32>
    %830 = vector.broadcast %829 : vector<8x1xf32> to vector<8x8xf32>
    %831 = arith.mulf %826, %830 : vector<8x8xf32>
    %832 = vector.extract_strided_slice %765 {offsets = [0, 24], sizes = [8, 8], strides = [1, 1]} : vector<8x32xf32> to vector<8x8xf32>
    %cst_333 = arith.constant dense<0.000000e+00> : vector<8x8xf32>
    %833 = tpu.matmul %831, %832, %cst_333 {dimension_numbers = #tpu.dot_dimension_numbers<[1], [0], [0], [1], [0, 0, 1, 1], [], []>} : vector<8x8xf32>, vector<8x8xf32>, vector<8x8xf32> -> vector<8x8xf32>
    %834 = tpu.concatenate %782, %799, %816, %833 in 1 : vector<8x8xf32>, vector<8x8xf32>, vector<8x8xf32>, vector<8x8xf32> -> vector<8x32xf32>
    %cst_334 = arith.constant dense<0.000000e+00> : vector<8x32xf32>
    %835 = tpu.matmul %834, %28, %cst_334 {dimension_numbers = #tpu.dot_dimension_numbers<[1], [0], [0], [1], [0, 0, 1, 1], [], []>} : vector<8x32xf32>, vector<32x32xf32>, vector<8x32xf32> -> vector<8x32xf32>
    %836 = vector.broadcast %26 : vector<1x32xf32> to vector<8x32xf32>
    %837 = arith.addf %835, %836 : vector<8x32xf32>
    %838 = arith.addf %759, %837 : vector<8x32xf32>
    %cst_335 = arith.constant dense<0.000000e+00> : vector<8xf32>
    %839 = vector.multi_reduction <add>, %838, %cst_335 [1] : vector<8x32xf32> to vector<8xf32>
    %840 = vector.shape_cast %839 : vector<8xf32> to vector<8x1xf32>
    %cst_336 = arith.constant 3.200000e+01 : f32
    %841 = vector.broadcast %cst_336 : f32 to vector<8x1xf32>
    %842 = arith.divf %840, %841 : vector<8x1xf32>
    %843 = vector.broadcast %842 : vector<8x1xf32> to vector<8x32xf32>
    %844 = arith.subf %838, %843 : vector<8x32xf32>
    %845 = arith.mulf %844, %844 : vector<8x32xf32>
    %cst_337 = arith.constant dense<0.000000e+00> : vector<8xf32>
    %846 = vector.multi_reduction <add>, %845, %cst_337 [1] : vector<8x32xf32> to vector<8xf32>
    %847 = vector.shape_cast %846 : vector<8xf32> to vector<8x1xf32>
    %cst_338 = arith.constant 3.200000e+01 : f32
    %848 = vector.broadcast %cst_338 : f32 to vector<8x1xf32>
    %849 = arith.divf %847, %848 : vector<8x1xf32>
    %cst_339 = arith.constant 9.99999974E-6 : f32
    %850 = vector.broadcast %cst_339 : f32 to vector<8x1xf32>
    %851 = arith.addf %849, %850 : vector<8x1xf32>
    %852 = math.rsqrt %851 : vector<8x1xf32>
    %853 = vector.broadcast %852 : vector<8x1xf32> to vector<8x32xf32>
    %854 = arith.mulf %844, %853 : vector<8x32xf32>
    %855 = vector.broadcast %35 : vector<1x32xf32> to vector<8x32xf32>
    %856 = arith.mulf %854, %855 : vector<8x32xf32>
    %857 = vector.broadcast %34 : vector<1x32xf32> to vector<8x32xf32>
    %858 = arith.addf %856, %857 : vector<8x32xf32>
    %cst_340 = arith.constant dense<0.000000e+00> : vector<8x64xf32>
    %859 = tpu.matmul %858, %32, %cst_340 {dimension_numbers = #tpu.dot_dimension_numbers<[1], [0], [0], [1], [0, 0, 1, 1], [], []>} : vector<8x32xf32>, vector<32x64xf32>, vector<8x64xf32> -> vector<8x64xf32>
    %860 = vector.broadcast %30 : vector<1x64xf32> to vector<8x64xf32>
    %861 = arith.addf %859, %860 : vector<8x64xf32>
    %cst_341 = arith.constant 5.000000e-01 : f32
    %862 = vector.broadcast %cst_341 : f32 to vector<8x64xf32>
    %863 = arith.mulf %862, %861 : vector<8x64xf32>
    %cst_342 = arith.constant 0.707106769 : f32
    %864 = vector.broadcast %cst_342 : f32 to vector<8x64xf32>
    %865 = arith.mulf %861, %864 : vector<8x64xf32>
    %cst_343 = arith.constant 0.000000e+00 : f32
    %866 = vector.broadcast %cst_343 : f32 to vector<8x64xf32>
    %867 = arith.cmpf olt, %865, %866 : vector<8x64xf32>
    %cst_344 = arith.constant -1.000000e+00 : f32
    %cst_345 = arith.constant 1.000000e+00 : f32
    %868 = vector.broadcast %cst_344 : f32 to vector<8x64xf32>
    %869 = vector.broadcast %cst_345 : f32 to vector<8x64xf32>
    %870 = arith.select %867, %868, %869 : vector<8x64xi1>, vector<8x64xf32>
    %871 = math.absf %865 : vector<8x64xf32>
    %cst_346 = arith.constant 0.327591091 : f32
    %872 = vector.broadcast %cst_346 : f32 to vector<8x64xf32>
    %873 = arith.mulf %872, %871 : vector<8x64xf32>
    %cst_347 = arith.constant 1.000000e+00 : f32
    %874 = vector.broadcast %cst_347 : f32 to vector<8x64xf32>
    %875 = arith.addf %874, %873 : vector<8x64xf32>
    %cst_348 = arith.constant 1.000000e+00 : f32
    %876 = vector.broadcast %cst_348 : f32 to vector<8x64xf32>
    %877 = arith.divf %876, %875 : vector<8x64xf32>
    %cst_349 = arith.constant 1.06140542 : f32
    %878 = vector.broadcast %cst_349 : f32 to vector<8x64xf32>
    %879 = arith.mulf %878, %877 : vector<8x64xf32>
    %cst_350 = arith.constant -1.45315206 : f32
    %880 = vector.broadcast %cst_350 : f32 to vector<8x64xf32>
    %881 = arith.addf %879, %880 : vector<8x64xf32>
    %882 = arith.mulf %881, %877 : vector<8x64xf32>
    %cst_351 = arith.constant 1.42141378 : f32
    %883 = vector.broadcast %cst_351 : f32 to vector<8x64xf32>
    %884 = arith.addf %882, %883 : vector<8x64xf32>
    %885 = arith.mulf %884, %877 : vector<8x64xf32>
    %cst_352 = arith.constant -0.284496725 : f32
    %886 = vector.broadcast %cst_352 : f32 to vector<8x64xf32>
    %887 = arith.addf %885, %886 : vector<8x64xf32>
    %888 = arith.mulf %887, %877 : vector<8x64xf32>
    %cst_353 = arith.constant 0.254829586 : f32
    %889 = vector.broadcast %cst_353 : f32 to vector<8x64xf32>
    %890 = arith.addf %888, %889 : vector<8x64xf32>
    %891 = arith.mulf %890, %877 : vector<8x64xf32>
    %cst_354 = arith.constant 0.000000e+00 : f32
    %892 = vector.broadcast %cst_354 : f32 to vector<8x64xf32>
    %893 = arith.subf %892, %871 : vector<8x64xf32>
    %894 = arith.mulf %893, %871 : vector<8x64xf32>
    %895 = math.exp %894 : vector<8x64xf32>
    %896 = arith.mulf %891, %895 : vector<8x64xf32>
    %cst_355 = arith.constant 1.000000e+00 : f32
    %897 = vector.broadcast %cst_355 : f32 to vector<8x64xf32>
    %898 = arith.subf %897, %896 : vector<8x64xf32>
    %899 = arith.mulf %870, %898 : vector<8x64xf32>
    %cst_356 = arith.constant 1.000000e+00 : f32
    %900 = vector.broadcast %cst_356 : f32 to vector<8x64xf32>
    %901 = arith.addf %900, %899 : vector<8x64xf32>
    %902 = arith.mulf %863, %901 : vector<8x64xf32>
    %cst_357 = arith.constant dense<0.000000e+00> : vector<8x32xf32>
    %903 = tpu.matmul %902, %33, %cst_357 {dimension_numbers = #tpu.dot_dimension_numbers<[1], [0], [0], [1], [0, 0, 1, 1], [], []>} : vector<8x64xf32>, vector<64x32xf32>, vector<8x32xf32> -> vector<8x32xf32>
    %904 = vector.broadcast %31 : vector<1x32xf32> to vector<8x32xf32>
    %905 = arith.addf %903, %904 : vector<8x32xf32>
    %906 = arith.addf %858, %905 : vector<8x32xf32>
    %cst_358 = arith.constant dense<0.000000e+00> : vector<8xf32>
    %907 = vector.multi_reduction <add>, %906, %cst_358 [1] : vector<8x32xf32> to vector<8xf32>
    %908 = vector.shape_cast %907 : vector<8xf32> to vector<8x1xf32>
    %cst_359 = arith.constant 3.200000e+01 : f32
    %909 = vector.broadcast %cst_359 : f32 to vector<8x1xf32>
    %910 = arith.divf %908, %909 : vector<8x1xf32>
    %911 = vector.broadcast %910 : vector<8x1xf32> to vector<8x32xf32>
    %912 = arith.subf %906, %911 : vector<8x32xf32>
    %913 = arith.mulf %912, %912 : vector<8x32xf32>
    %cst_360 = arith.constant dense<0.000000e+00> : vector<8xf32>
    %914 = vector.multi_reduction <add>, %913, %cst_360 [1] : vector<8x32xf32> to vector<8xf32>
    %915 = vector.shape_cast %914 : vector<8xf32> to vector<8x1xf32>
    %cst_361 = arith.constant 3.200000e+01 : f32
    %916 = vector.broadcast %cst_361 : f32 to vector<8x1xf32>
    %917 = arith.divf %915, %916 : vector<8x1xf32>
    %cst_362 = arith.constant 9.99999974E-6 : f32
    %918 = vector.broadcast %cst_362 : f32 to vector<8x1xf32>
    %919 = arith.addf %917, %918 : vector<8x1xf32>
    %920 = math.rsqrt %919 : vector<8x1xf32>
    %921 = vector.broadcast %920 : vector<8x1xf32> to vector<8x32xf32>
    %922 = arith.mulf %912, %921 : vector<8x32xf32>
    %923 = vector.broadcast %37 : vector<1x32xf32> to vector<8x32xf32>
    %924 = arith.mulf %922, %923 : vector<8x32xf32>
    %925 = vector.broadcast %36 : vector<1x32xf32> to vector<8x32xf32>
    %926 = arith.addf %924, %925 : vector<8x32xf32>
    %cst_363 = arith.constant dense<0.000000e+00> : vector<8x96xf32>
    %927 = tpu.matmul %926, %41, %cst_363 {dimension_numbers = #tpu.dot_dimension_numbers<[1], [0], [0], [1], [0, 0, 1, 1], [], []>} : vector<8x32xf32>, vector<32x96xf32>, vector<8x96xf32> -> vector<8x96xf32>
    %928 = vector.broadcast %39 : vector<1x96xf32> to vector<8x96xf32>
    %929 = arith.addf %927, %928 : vector<8x96xf32>
    %930 = vector.extract_strided_slice %929 {offsets = [0, 0], sizes = [8, 32], strides = [1, 1]} : vector<8x96xf32> to vector<8x32xf32>
    %931 = vector.extract_strided_slice %929 {offsets = [0, 32], sizes = [8, 32], strides = [1, 1]} : vector<8x96xf32> to vector<8x32xf32>
    %932 = vector.extract_strided_slice %929 {offsets = [0, 64], sizes = [8, 32], strides = [1, 1]} : vector<8x96xf32> to vector<8x32xf32>
    %933 = vector.extract_strided_slice %930 {offsets = [0, 0], sizes = [8, 8], strides = [1, 1]} : vector<8x32xf32> to vector<8x8xf32>
    %934 = vector.extract_strided_slice %931 {offsets = [0, 0], sizes = [8, 8], strides = [1, 1]} : vector<8x32xf32> to vector<8x8xf32>
    %cst_364 = arith.constant dense<0.000000e+00> : vector<8x8xf32>
    %935 = tpu.matmul %933, %934, %cst_364 {dimension_numbers = #tpu.dot_dimension_numbers<[1], [1], [0], [0], [0, 0, 1, 0], [], []>} : vector<8x8xf32>, vector<8x8xf32>, vector<8x8xf32> -> vector<8x8xf32>
    %cst_365 = arith.constant 0.353553385 : f32
    %936 = vector.broadcast %cst_365 : f32 to vector<8x8xf32>
    %937 = arith.mulf %935, %936 : vector<8x8xf32>
    %cst_366 = arith.constant dense<0xFF800000> : vector<8xf32>
    %938 = vector.multi_reduction <maximumf>, %937, %cst_366 [1] : vector<8x8xf32> to vector<8xf32>
    %939 = vector.shape_cast %938 : vector<8xf32> to vector<8x1xf32>
    %940 = vector.broadcast %939 : vector<8x1xf32> to vector<8x8xf32>
    %941 = arith.subf %937, %940 : vector<8x8xf32>
    %942 = math.exp %941 : vector<8x8xf32>
    %cst_367 = arith.constant dense<0.000000e+00> : vector<8xf32>
    %943 = vector.multi_reduction <add>, %942, %cst_367 [1] : vector<8x8xf32> to vector<8xf32>
    %944 = vector.shape_cast %943 : vector<8xf32> to vector<8x1xf32>
    %945 = tpu.reciprocal %944 {approx = true} : vector<8x1xf32> -> vector<8x1xf32>
    %946 = vector.broadcast %945 : vector<8x1xf32> to vector<8x8xf32>
    %947 = arith.mulf %942, %946 : vector<8x8xf32>
    %948 = vector.extract_strided_slice %932 {offsets = [0, 0], sizes = [8, 8], strides = [1, 1]} : vector<8x32xf32> to vector<8x8xf32>
    %cst_368 = arith.constant dense<0.000000e+00> : vector<8x8xf32>
    %949 = tpu.matmul %947, %948, %cst_368 {dimension_numbers = #tpu.dot_dimension_numbers<[1], [0], [0], [1], [0, 0, 1, 1], [], []>} : vector<8x8xf32>, vector<8x8xf32>, vector<8x8xf32> -> vector<8x8xf32>
    %950 = vector.extract_strided_slice %930 {offsets = [0, 8], sizes = [8, 8], strides = [1, 1]} : vector<8x32xf32> to vector<8x8xf32>
    %951 = vector.extract_strided_slice %931 {offsets = [0, 8], sizes = [8, 8], strides = [1, 1]} : vector<8x32xf32> to vector<8x8xf32>
    %cst_369 = arith.constant dense<0.000000e+00> : vector<8x8xf32>
    %952 = tpu.matmul %950, %951, %cst_369 {dimension_numbers = #tpu.dot_dimension_numbers<[1], [1], [0], [0], [0, 0, 1, 0], [], []>} : vector<8x8xf32>, vector<8x8xf32>, vector<8x8xf32> -> vector<8x8xf32>
    %cst_370 = arith.constant 0.353553385 : f32
    %953 = vector.broadcast %cst_370 : f32 to vector<8x8xf32>
    %954 = arith.mulf %952, %953 : vector<8x8xf32>
    %cst_371 = arith.constant dense<0xFF800000> : vector<8xf32>
    %955 = vector.multi_reduction <maximumf>, %954, %cst_371 [1] : vector<8x8xf32> to vector<8xf32>
    %956 = vector.shape_cast %955 : vector<8xf32> to vector<8x1xf32>
    %957 = vector.broadcast %956 : vector<8x1xf32> to vector<8x8xf32>
    %958 = arith.subf %954, %957 : vector<8x8xf32>
    %959 = math.exp %958 : vector<8x8xf32>
    %cst_372 = arith.constant dense<0.000000e+00> : vector<8xf32>
    %960 = vector.multi_reduction <add>, %959, %cst_372 [1] : vector<8x8xf32> to vector<8xf32>
    %961 = vector.shape_cast %960 : vector<8xf32> to vector<8x1xf32>
    %962 = tpu.reciprocal %961 {approx = true} : vector<8x1xf32> -> vector<8x1xf32>
    %963 = vector.broadcast %962 : vector<8x1xf32> to vector<8x8xf32>
    %964 = arith.mulf %959, %963 : vector<8x8xf32>
    %965 = vector.extract_strided_slice %932 {offsets = [0, 8], sizes = [8, 8], strides = [1, 1]} : vector<8x32xf32> to vector<8x8xf32>
    %cst_373 = arith.constant dense<0.000000e+00> : vector<8x8xf32>
    %966 = tpu.matmul %964, %965, %cst_373 {dimension_numbers = #tpu.dot_dimension_numbers<[1], [0], [0], [1], [0, 0, 1, 1], [], []>} : vector<8x8xf32>, vector<8x8xf32>, vector<8x8xf32> -> vector<8x8xf32>
    %967 = vector.extract_strided_slice %930 {offsets = [0, 16], sizes = [8, 8], strides = [1, 1]} : vector<8x32xf32> to vector<8x8xf32>
    %968 = vector.extract_strided_slice %931 {offsets = [0, 16], sizes = [8, 8], strides = [1, 1]} : vector<8x32xf32> to vector<8x8xf32>
    %cst_374 = arith.constant dense<0.000000e+00> : vector<8x8xf32>
    %969 = tpu.matmul %967, %968, %cst_374 {dimension_numbers = #tpu.dot_dimension_numbers<[1], [1], [0], [0], [0, 0, 1, 0], [], []>} : vector<8x8xf32>, vector<8x8xf32>, vector<8x8xf32> -> vector<8x8xf32>
    %cst_375 = arith.constant 0.353553385 : f32
    %970 = vector.broadcast %cst_375 : f32 to vector<8x8xf32>
    %971 = arith.mulf %969, %970 : vector<8x8xf32>
    %cst_376 = arith.constant dense<0xFF800000> : vector<8xf32>
    %972 = vector.multi_reduction <maximumf>, %971, %cst_376 [1] : vector<8x8xf32> to vector<8xf32>
    %973 = vector.shape_cast %972 : vector<8xf32> to vector<8x1xf32>
    %974 = vector.broadcast %973 : vector<8x1xf32> to vector<8x8xf32>
    %975 = arith.subf %971, %974 : vector<8x8xf32>
    %976 = math.exp %975 : vector<8x8xf32>
    %cst_377 = arith.constant dense<0.000000e+00> : vector<8xf32>
    %977 = vector.multi_reduction <add>, %976, %cst_377 [1] : vector<8x8xf32> to vector<8xf32>
    %978 = vector.shape_cast %977 : vector<8xf32> to vector<8x1xf32>
    %979 = tpu.reciprocal %978 {approx = true} : vector<8x1xf32> -> vector<8x1xf32>
    %980 = vector.broadcast %979 : vector<8x1xf32> to vector<8x8xf32>
    %981 = arith.mulf %976, %980 : vector<8x8xf32>
    %982 = vector.extract_strided_slice %932 {offsets = [0, 16], sizes = [8, 8], strides = [1, 1]} : vector<8x32xf32> to vector<8x8xf32>
    %cst_378 = arith.constant dense<0.000000e+00> : vector<8x8xf32>
    %983 = tpu.matmul %981, %982, %cst_378 {dimension_numbers = #tpu.dot_dimension_numbers<[1], [0], [0], [1], [0, 0, 1, 1], [], []>} : vector<8x8xf32>, vector<8x8xf32>, vector<8x8xf32> -> vector<8x8xf32>
    %984 = vector.extract_strided_slice %930 {offsets = [0, 24], sizes = [8, 8], strides = [1, 1]} : vector<8x32xf32> to vector<8x8xf32>
    %985 = vector.extract_strided_slice %931 {offsets = [0, 24], sizes = [8, 8], strides = [1, 1]} : vector<8x32xf32> to vector<8x8xf32>
    %cst_379 = arith.constant dense<0.000000e+00> : vector<8x8xf32>
    %986 = tpu.matmul %984, %985, %cst_379 {dimension_numbers = #tpu.dot_dimension_numbers<[1], [1], [0], [0], [0, 0, 1, 0], [], []>} : vector<8x8xf32>, vector<8x8xf32>, vector<8x8xf32> -> vector<8x8xf32>
    %cst_380 = arith.constant 0.353553385 : f32
    %987 = vector.broadcast %cst_380 : f32 to vector<8x8xf32>
    %988 = arith.mulf %986, %987 : vector<8x8xf32>
    %cst_381 = arith.constant dense<0xFF800000> : vector<8xf32>
    %989 = vector.multi_reduction <maximumf>, %988, %cst_381 [1] : vector<8x8xf32> to vector<8xf32>
    %990 = vector.shape_cast %989 : vector<8xf32> to vector<8x1xf32>
    %991 = vector.broadcast %990 : vector<8x1xf32> to vector<8x8xf32>
    %992 = arith.subf %988, %991 : vector<8x8xf32>
    %993 = math.exp %992 : vector<8x8xf32>
    %cst_382 = arith.constant dense<0.000000e+00> : vector<8xf32>
    %994 = vector.multi_reduction <add>, %993, %cst_382 [1] : vector<8x8xf32> to vector<8xf32>
    %995 = vector.shape_cast %994 : vector<8xf32> to vector<8x1xf32>
    %996 = tpu.reciprocal %995 {approx = true} : vector<8x1xf32> -> vector<8x1xf32>
    %997 = vector.broadcast %996 : vector<8x1xf32> to vector<8x8xf32>
    %998 = arith.mulf %993, %997 : vector<8x8xf32>
    %999 = vector.extract_strided_slice %932 {offsets = [0, 24], sizes = [8, 8], strides = [1, 1]} : vector<8x32xf32> to vector<8x8xf32>
    %cst_383 = arith.constant dense<0.000000e+00> : vector<8x8xf32>
    %1000 = tpu.matmul %998, %999, %cst_383 {dimension_numbers = #tpu.dot_dimension_numbers<[1], [0], [0], [1], [0, 0, 1, 1], [], []>} : vector<8x8xf32>, vector<8x8xf32>, vector<8x8xf32> -> vector<8x8xf32>
    %1001 = tpu.concatenate %949, %966, %983, %1000 in 1 : vector<8x8xf32>, vector<8x8xf32>, vector<8x8xf32>, vector<8x8xf32> -> vector<8x32xf32>
    %cst_384 = arith.constant dense<0.000000e+00> : vector<8x32xf32>
    %1002 = tpu.matmul %1001, %40, %cst_384 {dimension_numbers = #tpu.dot_dimension_numbers<[1], [0], [0], [1], [0, 0, 1, 1], [], []>} : vector<8x32xf32>, vector<32x32xf32>, vector<8x32xf32> -> vector<8x32xf32>
    %1003 = vector.broadcast %38 : vector<1x32xf32> to vector<8x32xf32>
    %1004 = arith.addf %1002, %1003 : vector<8x32xf32>
    %1005 = arith.addf %926, %1004 : vector<8x32xf32>
    %cst_385 = arith.constant dense<0.000000e+00> : vector<8xf32>
    %1006 = vector.multi_reduction <add>, %1005, %cst_385 [1] : vector<8x32xf32> to vector<8xf32>
    %1007 = vector.shape_cast %1006 : vector<8xf32> to vector<8x1xf32>
    %cst_386 = arith.constant 3.200000e+01 : f32
    %1008 = vector.broadcast %cst_386 : f32 to vector<8x1xf32>
    %1009 = arith.divf %1007, %1008 : vector<8x1xf32>
    %1010 = vector.broadcast %1009 : vector<8x1xf32> to vector<8x32xf32>
    %1011 = arith.subf %1005, %1010 : vector<8x32xf32>
    %1012 = arith.mulf %1011, %1011 : vector<8x32xf32>
    %cst_387 = arith.constant dense<0.000000e+00> : vector<8xf32>
    %1013 = vector.multi_reduction <add>, %1012, %cst_387 [1] : vector<8x32xf32> to vector<8xf32>
    %1014 = vector.shape_cast %1013 : vector<8xf32> to vector<8x1xf32>
    %cst_388 = arith.constant 3.200000e+01 : f32
    %1015 = vector.broadcast %cst_388 : f32 to vector<8x1xf32>
    %1016 = arith.divf %1014, %1015 : vector<8x1xf32>
    %cst_389 = arith.constant 9.99999974E-6 : f32
    %1017 = vector.broadcast %cst_389 : f32 to vector<8x1xf32>
    %1018 = arith.addf %1016, %1017 : vector<8x1xf32>
    %1019 = math.rsqrt %1018 : vector<8x1xf32>
    %1020 = vector.broadcast %1019 : vector<8x1xf32> to vector<8x32xf32>
    %1021 = arith.mulf %1011, %1020 : vector<8x32xf32>
    %1022 = vector.broadcast %47 : vector<1x32xf32> to vector<8x32xf32>
    %1023 = arith.mulf %1021, %1022 : vector<8x32xf32>
    %1024 = vector.broadcast %46 : vector<1x32xf32> to vector<8x32xf32>
    %1025 = arith.addf %1023, %1024 : vector<8x32xf32>
    %cst_390 = arith.constant dense<0.000000e+00> : vector<8x64xf32>
    %1026 = tpu.matmul %1025, %44, %cst_390 {dimension_numbers = #tpu.dot_dimension_numbers<[1], [0], [0], [1], [0, 0, 1, 1], [], []>} : vector<8x32xf32>, vector<32x64xf32>, vector<8x64xf32> -> vector<8x64xf32>
    %1027 = vector.broadcast %42 : vector<1x64xf32> to vector<8x64xf32>
    %1028 = arith.addf %1026, %1027 : vector<8x64xf32>
    %cst_391 = arith.constant 5.000000e-01 : f32
    %1029 = vector.broadcast %cst_391 : f32 to vector<8x64xf32>
    %1030 = arith.mulf %1029, %1028 : vector<8x64xf32>
    %cst_392 = arith.constant 0.707106769 : f32
    %1031 = vector.broadcast %cst_392 : f32 to vector<8x64xf32>
    %1032 = arith.mulf %1028, %1031 : vector<8x64xf32>
    %cst_393 = arith.constant 0.000000e+00 : f32
    %1033 = vector.broadcast %cst_393 : f32 to vector<8x64xf32>
    %1034 = arith.cmpf olt, %1032, %1033 : vector<8x64xf32>
    %cst_394 = arith.constant -1.000000e+00 : f32
    %cst_395 = arith.constant 1.000000e+00 : f32
    %1035 = vector.broadcast %cst_394 : f32 to vector<8x64xf32>
    %1036 = vector.broadcast %cst_395 : f32 to vector<8x64xf32>
    %1037 = arith.select %1034, %1035, %1036 : vector<8x64xi1>, vector<8x64xf32>
    %1038 = math.absf %1032 : vector<8x64xf32>
    %cst_396 = arith.constant 0.327591091 : f32
    %1039 = vector.broadcast %cst_396 : f32 to vector<8x64xf32>
    %1040 = arith.mulf %1039, %1038 : vector<8x64xf32>
    %cst_397 = arith.constant 1.000000e+00 : f32
    %1041 = vector.broadcast %cst_397 : f32 to vector<8x64xf32>
    %1042 = arith.addf %1041, %1040 : vector<8x64xf32>
    %cst_398 = arith.constant 1.000000e+00 : f32
    %1043 = vector.broadcast %cst_398 : f32 to vector<8x64xf32>
    %1044 = arith.divf %1043, %1042 : vector<8x64xf32>
    %cst_399 = arith.constant 1.06140542 : f32
    %1045 = vector.broadcast %cst_399 : f32 to vector<8x64xf32>
    %1046 = arith.mulf %1045, %1044 : vector<8x64xf32>
    %cst_400 = arith.constant -1.45315206 : f32
    %1047 = vector.broadcast %cst_400 : f32 to vector<8x64xf32>
    %1048 = arith.addf %1046, %1047 : vector<8x64xf32>
    %1049 = arith.mulf %1048, %1044 : vector<8x64xf32>
    %cst_401 = arith.constant 1.42141378 : f32
    %1050 = vector.broadcast %cst_401 : f32 to vector<8x64xf32>
    %1051 = arith.addf %1049, %1050 : vector<8x64xf32>
    %1052 = arith.mulf %1051, %1044 : vector<8x64xf32>
    %cst_402 = arith.constant -0.284496725 : f32
    %1053 = vector.broadcast %cst_402 : f32 to vector<8x64xf32>
    %1054 = arith.addf %1052, %1053 : vector<8x64xf32>
    %1055 = arith.mulf %1054, %1044 : vector<8x64xf32>
    %cst_403 = arith.constant 0.254829586 : f32
    %1056 = vector.broadcast %cst_403 : f32 to vector<8x64xf32>
    %1057 = arith.addf %1055, %1056 : vector<8x64xf32>
    %1058 = arith.mulf %1057, %1044 : vector<8x64xf32>
    %cst_404 = arith.constant 0.000000e+00 : f32
    %1059 = vector.broadcast %cst_404 : f32 to vector<8x64xf32>
    %1060 = arith.subf %1059, %1038 : vector<8x64xf32>
    %1061 = arith.mulf %1060, %1038 : vector<8x64xf32>
    %1062 = math.exp %1061 : vector<8x64xf32>
    %1063 = arith.mulf %1058, %1062 : vector<8x64xf32>
    %cst_405 = arith.constant 1.000000e+00 : f32
    %1064 = vector.broadcast %cst_405 : f32 to vector<8x64xf32>
    %1065 = arith.subf %1064, %1063 : vector<8x64xf32>
    %1066 = arith.mulf %1037, %1065 : vector<8x64xf32>
    %cst_406 = arith.constant 1.000000e+00 : f32
    %1067 = vector.broadcast %cst_406 : f32 to vector<8x64xf32>
    %1068 = arith.addf %1067, %1066 : vector<8x64xf32>
    %1069 = arith.mulf %1030, %1068 : vector<8x64xf32>
    %cst_407 = arith.constant dense<0.000000e+00> : vector<8x32xf32>
    %1070 = tpu.matmul %1069, %45, %cst_407 {dimension_numbers = #tpu.dot_dimension_numbers<[1], [0], [0], [1], [0, 0, 1, 1], [], []>} : vector<8x64xf32>, vector<64x32xf32>, vector<8x32xf32> -> vector<8x32xf32>
    %1071 = vector.broadcast %43 : vector<1x32xf32> to vector<8x32xf32>
    %1072 = arith.addf %1070, %1071 : vector<8x32xf32>
    %1073 = arith.addf %1025, %1072 : vector<8x32xf32>
    %cst_408 = arith.constant dense<0.000000e+00> : vector<8xf32>
    %1074 = vector.multi_reduction <add>, %1073, %cst_408 [1] : vector<8x32xf32> to vector<8xf32>
    %1075 = vector.shape_cast %1074 : vector<8xf32> to vector<8x1xf32>
    %cst_409 = arith.constant 3.200000e+01 : f32
    %1076 = vector.broadcast %cst_409 : f32 to vector<8x1xf32>
    %1077 = arith.divf %1075, %1076 : vector<8x1xf32>
    %1078 = vector.broadcast %1077 : vector<8x1xf32> to vector<8x32xf32>
    %1079 = arith.subf %1073, %1078 : vector<8x32xf32>
    %1080 = arith.mulf %1079, %1079 : vector<8x32xf32>
    %cst_410 = arith.constant dense<0.000000e+00> : vector<8xf32>
    %1081 = vector.multi_reduction <add>, %1080, %cst_410 [1] : vector<8x32xf32> to vector<8xf32>
    %1082 = vector.shape_cast %1081 : vector<8xf32> to vector<8x1xf32>
    %cst_411 = arith.constant 3.200000e+01 : f32
    %1083 = vector.broadcast %cst_411 : f32 to vector<8x1xf32>
    %1084 = arith.divf %1082, %1083 : vector<8x1xf32>
    %cst_412 = arith.constant 9.99999974E-6 : f32
    %1085 = vector.broadcast %cst_412 : f32 to vector<8x1xf32>
    %1086 = arith.addf %1084, %1085 : vector<8x1xf32>
    %1087 = math.rsqrt %1086 : vector<8x1xf32>
    %1088 = vector.broadcast %1087 : vector<8x1xf32> to vector<8x32xf32>
    %1089 = arith.mulf %1079, %1088 : vector<8x32xf32>
    %1090 = vector.broadcast %49 : vector<1x32xf32> to vector<8x32xf32>
    %1091 = arith.mulf %1089, %1090 : vector<8x32xf32>
    %1092 = vector.broadcast %48 : vector<1x32xf32> to vector<8x32xf32>
    %1093 = arith.addf %1091, %1092 : vector<8x32xf32>
    %cst_413 = arith.constant dense<0.000000e+00> : vector<8xf32>
    %1094 = vector.multi_reduction <add>, %1093, %cst_413 [1] : vector<8x32xf32> to vector<8xf32>
    %1095 = vector.shape_cast %1094 : vector<8xf32> to vector<8x1xf32>
    %cst_414 = arith.constant 3.200000e+01 : f32
    %1096 = vector.broadcast %cst_414 : f32 to vector<8x1xf32>
    %1097 = arith.divf %1095, %1096 : vector<8x1xf32>
    %1098 = vector.broadcast %1097 : vector<8x1xf32> to vector<8x32xf32>
    %1099 = arith.subf %1093, %1098 : vector<8x32xf32>
    %1100 = arith.mulf %1099, %1099 : vector<8x32xf32>
    %cst_415 = arith.constant dense<0.000000e+00> : vector<8xf32>
    %1101 = vector.multi_reduction <add>, %1100, %cst_415 [1] : vector<8x32xf32> to vector<8xf32>
    %1102 = vector.shape_cast %1101 : vector<8xf32> to vector<8x1xf32>
    %cst_416 = arith.constant 3.200000e+01 : f32
    %1103 = vector.broadcast %cst_416 : f32 to vector<8x1xf32>
    %1104 = arith.divf %1102, %1103 : vector<8x1xf32>
    %cst_417 = arith.constant 9.99999974E-6 : f32
    %1105 = vector.broadcast %cst_417 : f32 to vector<8x1xf32>
    %1106 = arith.addf %1104, %1105 : vector<8x1xf32>
    %1107 = math.rsqrt %1106 : vector<8x1xf32>
    %1108 = vector.broadcast %1107 : vector<8x1xf32> to vector<8x32xf32>
    %1109 = arith.mulf %1099, %1108 : vector<8x32xf32>
    %1110 = vector.broadcast %51 : vector<1x32xf32> to vector<8x32xf32>
    %1111 = arith.mulf %1109, %1110 : vector<8x32xf32>
    %1112 = vector.broadcast %50 : vector<1x32xf32> to vector<8x32xf32>
    %1113 = arith.addf %1111, %1112 : vector<8x32xf32>
    %c1_418 = arith.constant 1 : index
    %c0_419 = arith.constant 0 : index
    %c0_420 = arith.constant 0 : index
    %1114 = vector.load %arg1[%c1_418, %c0_419, %c0_420] : memref<2x5x4xf32, #tpu.memory_space<vmem>>, vector<1x5x4xf32>
    %1115 = vector.shape_cast %1114 : vector<1x5x4xf32> to vector<5x4xf32>
    %cst_421 = arith.constant dense<0.000000e+00> : vector<5x32xf32>
    %1116 = tpu.matmul %1115, %2, %cst_421 {dimension_numbers = #tpu.dot_dimension_numbers<[1], [0], [0], [1], [0, 0, 1, 1], [], []>} : vector<5x4xf32>, vector<4x32xf32>, vector<5x32xf32> -> vector<5x32xf32>
    %1117 = vector.broadcast %0 : vector<1x32xf32> to vector<5x32xf32>
    %1118 = arith.addf %1116, %1117 : vector<5x32xf32>
    %1119 = arith.addf %1118, %1 : vector<5x32xf32>
    %cst_422 = arith.constant dense<0.000000e+00> : vector<5x96xf32>
    %1120 = tpu.matmul %1119, %20, %cst_422 {dimension_numbers = #tpu.dot_dimension_numbers<[1], [0], [0], [1], [0, 0, 1, 1], [], []>} : vector<5x32xf32>, vector<32x96xf32>, vector<5x96xf32> -> vector<5x96xf32>
    %1121 = vector.broadcast %18 : vector<1x96xf32> to vector<5x96xf32>
    %1122 = arith.addf %1120, %1121 : vector<5x96xf32>
    %1123 = vector.extract_strided_slice %1122 {offsets = [0, 0], sizes = [5, 32], strides = [1, 1]} : vector<5x96xf32> to vector<5x32xf32>
    %1124 = vector.extract_strided_slice %1122 {offsets = [0, 32], sizes = [5, 32], strides = [1, 1]} : vector<5x96xf32> to vector<5x32xf32>
    %1125 = vector.extract_strided_slice %1122 {offsets = [0, 64], sizes = [5, 32], strides = [1, 1]} : vector<5x96xf32> to vector<5x32xf32>
    %1126 = vector.extract_strided_slice %1123 {offsets = [0, 0], sizes = [5, 8], strides = [1, 1]} : vector<5x32xf32> to vector<5x8xf32>
    %1127 = vector.extract_strided_slice %1124 {offsets = [0, 0], sizes = [5, 8], strides = [1, 1]} : vector<5x32xf32> to vector<5x8xf32>
    %cst_423 = arith.constant dense<0.000000e+00> : vector<5x5xf32>
    %1128 = tpu.matmul %1126, %1127, %cst_423 {dimension_numbers = #tpu.dot_dimension_numbers<[1], [1], [0], [0], [0, 0, 1, 0], [], []>} : vector<5x8xf32>, vector<5x8xf32>, vector<5x5xf32> -> vector<5x5xf32>
    %cst_424 = arith.constant 0.353553385 : f32
    %1129 = vector.broadcast %cst_424 : f32 to vector<5x5xf32>
    %1130 = arith.mulf %1128, %1129 : vector<5x5xf32>
    %cst_425 = arith.constant 0xFF800000 : f32
    %1131 = vector.broadcast %cst_425 : f32 to vector<5x5xf32>
    %1132 = arith.select %56, %1131, %1130 : vector<5x5xi1>, vector<5x5xf32>
    %cst_426 = arith.constant dense<0xFF800000> : vector<5xf32>
    %1133 = vector.multi_reduction <maximumf>, %1132, %cst_426 [1] : vector<5x5xf32> to vector<5xf32>
    %1134 = vector.shape_cast %1133 : vector<5xf32> to vector<5x1xf32>
    %1135 = vector.broadcast %1134 : vector<5x1xf32> to vector<5x5xf32>
    %1136 = arith.subf %1132, %1135 : vector<5x5xf32>
    %1137 = math.exp %1136 : vector<5x5xf32>
    %cst_427 = arith.constant dense<0.000000e+00> : vector<5xf32>
    %1138 = vector.multi_reduction <add>, %1137, %cst_427 [1] : vector<5x5xf32> to vector<5xf32>
    %1139 = vector.shape_cast %1138 : vector<5xf32> to vector<5x1xf32>
    %1140 = tpu.reciprocal %1139 {approx = true} : vector<5x1xf32> -> vector<5x1xf32>
    %1141 = vector.broadcast %1140 : vector<5x1xf32> to vector<5x5xf32>
    %1142 = arith.mulf %1137, %1141 : vector<5x5xf32>
    %1143 = vector.extract_strided_slice %1125 {offsets = [0, 0], sizes = [5, 8], strides = [1, 1]} : vector<5x32xf32> to vector<5x8xf32>
    %cst_428 = arith.constant dense<0.000000e+00> : vector<5x8xf32>
    %1144 = tpu.matmul %1142, %1143, %cst_428 {dimension_numbers = #tpu.dot_dimension_numbers<[1], [0], [0], [1], [0, 0, 1, 1], [], []>} : vector<5x5xf32>, vector<5x8xf32>, vector<5x8xf32> -> vector<5x8xf32>
    %1145 = vector.extract_strided_slice %1123 {offsets = [0, 8], sizes = [5, 8], strides = [1, 1]} : vector<5x32xf32> to vector<5x8xf32>
    %1146 = vector.extract_strided_slice %1124 {offsets = [0, 8], sizes = [5, 8], strides = [1, 1]} : vector<5x32xf32> to vector<5x8xf32>
    %cst_429 = arith.constant dense<0.000000e+00> : vector<5x5xf32>
    %1147 = tpu.matmul %1145, %1146, %cst_429 {dimension_numbers = #tpu.dot_dimension_numbers<[1], [1], [0], [0], [0, 0, 1, 0], [], []>} : vector<5x8xf32>, vector<5x8xf32>, vector<5x5xf32> -> vector<5x5xf32>
    %cst_430 = arith.constant 0.353553385 : f32
    %1148 = vector.broadcast %cst_430 : f32 to vector<5x5xf32>
    %1149 = arith.mulf %1147, %1148 : vector<5x5xf32>
    %cst_431 = arith.constant 0xFF800000 : f32
    %1150 = vector.broadcast %cst_431 : f32 to vector<5x5xf32>
    %1151 = arith.select %56, %1150, %1149 : vector<5x5xi1>, vector<5x5xf32>
    %cst_432 = arith.constant dense<0xFF800000> : vector<5xf32>
    %1152 = vector.multi_reduction <maximumf>, %1151, %cst_432 [1] : vector<5x5xf32> to vector<5xf32>
    %1153 = vector.shape_cast %1152 : vector<5xf32> to vector<5x1xf32>
    %1154 = vector.broadcast %1153 : vector<5x1xf32> to vector<5x5xf32>
    %1155 = arith.subf %1151, %1154 : vector<5x5xf32>
    %1156 = math.exp %1155 : vector<5x5xf32>
    %cst_433 = arith.constant dense<0.000000e+00> : vector<5xf32>
    %1157 = vector.multi_reduction <add>, %1156, %cst_433 [1] : vector<5x5xf32> to vector<5xf32>
    %1158 = vector.shape_cast %1157 : vector<5xf32> to vector<5x1xf32>
    %1159 = tpu.reciprocal %1158 {approx = true} : vector<5x1xf32> -> vector<5x1xf32>
    %1160 = vector.broadcast %1159 : vector<5x1xf32> to vector<5x5xf32>
    %1161 = arith.mulf %1156, %1160 : vector<5x5xf32>
    %1162 = vector.extract_strided_slice %1125 {offsets = [0, 8], sizes = [5, 8], strides = [1, 1]} : vector<5x32xf32> to vector<5x8xf32>
    %cst_434 = arith.constant dense<0.000000e+00> : vector<5x8xf32>
    %1163 = tpu.matmul %1161, %1162, %cst_434 {dimension_numbers = #tpu.dot_dimension_numbers<[1], [0], [0], [1], [0, 0, 1, 1], [], []>} : vector<5x5xf32>, vector<5x8xf32>, vector<5x8xf32> -> vector<5x8xf32>
    %1164 = vector.extract_strided_slice %1123 {offsets = [0, 16], sizes = [5, 8], strides = [1, 1]} : vector<5x32xf32> to vector<5x8xf32>
    %1165 = vector.extract_strided_slice %1124 {offsets = [0, 16], sizes = [5, 8], strides = [1, 1]} : vector<5x32xf32> to vector<5x8xf32>
    %cst_435 = arith.constant dense<0.000000e+00> : vector<5x5xf32>
    %1166 = tpu.matmul %1164, %1165, %cst_435 {dimension_numbers = #tpu.dot_dimension_numbers<[1], [1], [0], [0], [0, 0, 1, 0], [], []>} : vector<5x8xf32>, vector<5x8xf32>, vector<5x5xf32> -> vector<5x5xf32>
    %cst_436 = arith.constant 0.353553385 : f32
    %1167 = vector.broadcast %cst_436 : f32 to vector<5x5xf32>
    %1168 = arith.mulf %1166, %1167 : vector<5x5xf32>
    %cst_437 = arith.constant 0xFF800000 : f32
    %1169 = vector.broadcast %cst_437 : f32 to vector<5x5xf32>
    %1170 = arith.select %56, %1169, %1168 : vector<5x5xi1>, vector<5x5xf32>
    %cst_438 = arith.constant dense<0xFF800000> : vector<5xf32>
    %1171 = vector.multi_reduction <maximumf>, %1170, %cst_438 [1] : vector<5x5xf32> to vector<5xf32>
    %1172 = vector.shape_cast %1171 : vector<5xf32> to vector<5x1xf32>
    %1173 = vector.broadcast %1172 : vector<5x1xf32> to vector<5x5xf32>
    %1174 = arith.subf %1170, %1173 : vector<5x5xf32>
    %1175 = math.exp %1174 : vector<5x5xf32>
    %cst_439 = arith.constant dense<0.000000e+00> : vector<5xf32>
    %1176 = vector.multi_reduction <add>, %1175, %cst_439 [1] : vector<5x5xf32> to vector<5xf32>
    %1177 = vector.shape_cast %1176 : vector<5xf32> to vector<5x1xf32>
    %1178 = tpu.reciprocal %1177 {approx = true} : vector<5x1xf32> -> vector<5x1xf32>
    %1179 = vector.broadcast %1178 : vector<5x1xf32> to vector<5x5xf32>
    %1180 = arith.mulf %1175, %1179 : vector<5x5xf32>
    %1181 = vector.extract_strided_slice %1125 {offsets = [0, 16], sizes = [5, 8], strides = [1, 1]} : vector<5x32xf32> to vector<5x8xf32>
    %cst_440 = arith.constant dense<0.000000e+00> : vector<5x8xf32>
    %1182 = tpu.matmul %1180, %1181, %cst_440 {dimension_numbers = #tpu.dot_dimension_numbers<[1], [0], [0], [1], [0, 0, 1, 1], [], []>} : vector<5x5xf32>, vector<5x8xf32>, vector<5x8xf32> -> vector<5x8xf32>
    %1183 = vector.extract_strided_slice %1123 {offsets = [0, 24], sizes = [5, 8], strides = [1, 1]} : vector<5x32xf32> to vector<5x8xf32>
    %1184 = vector.extract_strided_slice %1124 {offsets = [0, 24], sizes = [5, 8], strides = [1, 1]} : vector<5x32xf32> to vector<5x8xf32>
    %cst_441 = arith.constant dense<0.000000e+00> : vector<5x5xf32>
    %1185 = tpu.matmul %1183, %1184, %cst_441 {dimension_numbers = #tpu.dot_dimension_numbers<[1], [1], [0], [0], [0, 0, 1, 0], [], []>} : vector<5x8xf32>, vector<5x8xf32>, vector<5x5xf32> -> vector<5x5xf32>
    %cst_442 = arith.constant 0.353553385 : f32
    %1186 = vector.broadcast %cst_442 : f32 to vector<5x5xf32>
    %1187 = arith.mulf %1185, %1186 : vector<5x5xf32>
    %cst_443 = arith.constant 0xFF800000 : f32
    %1188 = vector.broadcast %cst_443 : f32 to vector<5x5xf32>
    %1189 = arith.select %56, %1188, %1187 : vector<5x5xi1>, vector<5x5xf32>
    %cst_444 = arith.constant dense<0xFF800000> : vector<5xf32>
    %1190 = vector.multi_reduction <maximumf>, %1189, %cst_444 [1] : vector<5x5xf32> to vector<5xf32>
    %1191 = vector.shape_cast %1190 : vector<5xf32> to vector<5x1xf32>
    %1192 = vector.broadcast %1191 : vector<5x1xf32> to vector<5x5xf32>
    %1193 = arith.subf %1189, %1192 : vector<5x5xf32>
    %1194 = math.exp %1193 : vector<5x5xf32>
    %cst_445 = arith.constant dense<0.000000e+00> : vector<5xf32>
    %1195 = vector.multi_reduction <add>, %1194, %cst_445 [1] : vector<5x5xf32> to vector<5xf32>
    %1196 = vector.shape_cast %1195 : vector<5xf32> to vector<5x1xf32>
    %1197 = tpu.reciprocal %1196 {approx = true} : vector<5x1xf32> -> vector<5x1xf32>
    %1198 = vector.broadcast %1197 : vector<5x1xf32> to vector<5x5xf32>
    %1199 = arith.mulf %1194, %1198 : vector<5x5xf32>
    %1200 = vector.extract_strided_slice %1125 {offsets = [0, 24], sizes = [5, 8], strides = [1, 1]} : vector<5x32xf32> to vector<5x8xf32>
    %cst_446 = arith.constant dense<0.000000e+00> : vector<5x8xf32>
    %1201 = tpu.matmul %1199, %1200, %cst_446 {dimension_numbers = #tpu.dot_dimension_numbers<[1], [0], [0], [1], [0, 0, 1, 1], [], []>} : vector<5x5xf32>, vector<5x8xf32>, vector<5x8xf32> -> vector<5x8xf32>
    %1202 = vector.extract_strided_slice %1144 {offsets = [0, 0], sizes = [1, 8], strides = [1, 1]} : vector<5x8xf32> to vector<1x8xf32>
    %1203 = vector.extract_strided_slice %1144 {offsets = [1, 0], sizes = [1, 8], strides = [1, 1]} : vector<5x8xf32> to vector<1x8xf32>
    %1204 = vector.extract_strided_slice %1144 {offsets = [2, 0], sizes = [1, 8], strides = [1, 1]} : vector<5x8xf32> to vector<1x8xf32>
    %1205 = vector.extract_strided_slice %1144 {offsets = [3, 0], sizes = [1, 8], strides = [1, 1]} : vector<5x8xf32> to vector<1x8xf32>
    %1206 = tpu.concatenate %1202, %1203, %1204, %1205 in 1 : vector<1x8xf32>, vector<1x8xf32>, vector<1x8xf32>, vector<1x8xf32> -> vector<1x32xf32>
    %1207 = vector.extract_strided_slice %1144 {offsets = [4, 0], sizes = [1, 8], strides = [1, 1]} : vector<5x8xf32> to vector<1x8xf32>
    %1208 = vector.extract_strided_slice %1163 {offsets = [0, 0], sizes = [1, 8], strides = [1, 1]} : vector<5x8xf32> to vector<1x8xf32>
    %1209 = vector.extract_strided_slice %1163 {offsets = [1, 0], sizes = [1, 8], strides = [1, 1]} : vector<5x8xf32> to vector<1x8xf32>
    %1210 = vector.extract_strided_slice %1163 {offsets = [2, 0], sizes = [1, 8], strides = [1, 1]} : vector<5x8xf32> to vector<1x8xf32>
    %1211 = tpu.concatenate %1207, %1208, %1209, %1210 in 1 : vector<1x8xf32>, vector<1x8xf32>, vector<1x8xf32>, vector<1x8xf32> -> vector<1x32xf32>
    %1212 = vector.extract_strided_slice %1163 {offsets = [3, 0], sizes = [1, 8], strides = [1, 1]} : vector<5x8xf32> to vector<1x8xf32>
    %1213 = vector.extract_strided_slice %1163 {offsets = [4, 0], sizes = [1, 8], strides = [1, 1]} : vector<5x8xf32> to vector<1x8xf32>
    %1214 = vector.extract_strided_slice %1182 {offsets = [0, 0], sizes = [1, 8], strides = [1, 1]} : vector<5x8xf32> to vector<1x8xf32>
    %1215 = vector.extract_strided_slice %1182 {offsets = [1, 0], sizes = [1, 8], strides = [1, 1]} : vector<5x8xf32> to vector<1x8xf32>
    %1216 = tpu.concatenate %1212, %1213, %1214, %1215 in 1 : vector<1x8xf32>, vector<1x8xf32>, vector<1x8xf32>, vector<1x8xf32> -> vector<1x32xf32>
    %1217 = vector.extract_strided_slice %1182 {offsets = [2, 0], sizes = [1, 8], strides = [1, 1]} : vector<5x8xf32> to vector<1x8xf32>
    %1218 = vector.extract_strided_slice %1182 {offsets = [3, 0], sizes = [1, 8], strides = [1, 1]} : vector<5x8xf32> to vector<1x8xf32>
    %1219 = vector.extract_strided_slice %1182 {offsets = [4, 0], sizes = [1, 8], strides = [1, 1]} : vector<5x8xf32> to vector<1x8xf32>
    %1220 = vector.extract_strided_slice %1201 {offsets = [0, 0], sizes = [1, 8], strides = [1, 1]} : vector<5x8xf32> to vector<1x8xf32>
    %1221 = tpu.concatenate %1217, %1218, %1219, %1220 in 1 : vector<1x8xf32>, vector<1x8xf32>, vector<1x8xf32>, vector<1x8xf32> -> vector<1x32xf32>
    %1222 = vector.extract_strided_slice %1201 {offsets = [1, 0], sizes = [1, 8], strides = [1, 1]} : vector<5x8xf32> to vector<1x8xf32>
    %1223 = vector.extract_strided_slice %1201 {offsets = [2, 0], sizes = [1, 8], strides = [1, 1]} : vector<5x8xf32> to vector<1x8xf32>
    %1224 = vector.extract_strided_slice %1201 {offsets = [3, 0], sizes = [1, 8], strides = [1, 1]} : vector<5x8xf32> to vector<1x8xf32>
    %1225 = vector.extract_strided_slice %1201 {offsets = [4, 0], sizes = [1, 8], strides = [1, 1]} : vector<5x8xf32> to vector<1x8xf32>
    %1226 = tpu.concatenate %1222, %1223, %1224, %1225 in 1 : vector<1x8xf32>, vector<1x8xf32>, vector<1x8xf32>, vector<1x8xf32> -> vector<1x32xf32>
    %1227 = tpu.concatenate %1206, %1211, %1216, %1221, %1226 in 0 : vector<1x32xf32>, vector<1x32xf32>, vector<1x32xf32>, vector<1x32xf32>, vector<1x32xf32> -> vector<5x32xf32>
    %cst_447 = arith.constant dense<0.000000e+00> : vector<5x32xf32>
    %1228 = tpu.matmul %1227, %19, %cst_447 {dimension_numbers = #tpu.dot_dimension_numbers<[1], [0], [0], [1], [0, 0, 1, 1], [], []>} : vector<5x32xf32>, vector<32x32xf32>, vector<5x32xf32> -> vector<5x32xf32>
    %1229 = vector.broadcast %17 : vector<1x32xf32> to vector<5x32xf32>
    %1230 = arith.addf %1228, %1229 : vector<5x32xf32>
    %1231 = arith.addf %1119, %1230 : vector<5x32xf32>
    %cst_448 = arith.constant dense<0.000000e+00> : vector<5xf32>
    %1232 = vector.multi_reduction <add>, %1231, %cst_448 [1] : vector<5x32xf32> to vector<5xf32>
    %1233 = vector.shape_cast %1232 : vector<5xf32> to vector<5x1xf32>
    %cst_449 = arith.constant 3.200000e+01 : f32
    %1234 = vector.broadcast %cst_449 : f32 to vector<5x1xf32>
    %1235 = arith.divf %1233, %1234 : vector<5x1xf32>
    %1236 = vector.broadcast %1235 : vector<5x1xf32> to vector<5x32xf32>
    %1237 = arith.subf %1231, %1236 : vector<5x32xf32>
    %1238 = arith.mulf %1237, %1237 : vector<5x32xf32>
    %cst_450 = arith.constant dense<0.000000e+00> : vector<5xf32>
    %1239 = vector.multi_reduction <add>, %1238, %cst_450 [1] : vector<5x32xf32> to vector<5xf32>
    %1240 = vector.shape_cast %1239 : vector<5xf32> to vector<5x1xf32>
    %cst_451 = arith.constant 3.200000e+01 : f32
    %1241 = vector.broadcast %cst_451 : f32 to vector<5x1xf32>
    %1242 = arith.divf %1240, %1241 : vector<5x1xf32>
    %cst_452 = arith.constant 9.99999974E-6 : f32
    %1243 = vector.broadcast %cst_452 : f32 to vector<5x1xf32>
    %1244 = arith.addf %1242, %1243 : vector<5x1xf32>
    %1245 = math.rsqrt %1244 : vector<5x1xf32>
    %1246 = vector.broadcast %1245 : vector<5x1xf32> to vector<5x32xf32>
    %1247 = arith.mulf %1237, %1246 : vector<5x32xf32>
    %1248 = vector.broadcast %12 : vector<1x32xf32> to vector<5x32xf32>
    %1249 = arith.mulf %1247, %1248 : vector<5x32xf32>
    %1250 = vector.broadcast %11 : vector<1x32xf32> to vector<5x32xf32>
    %1251 = arith.addf %1249, %1250 : vector<5x32xf32>
    %1252 = vector.extract_strided_slice %6 {offsets = [0, 0], sizes = [32, 32], strides = [1, 1]} : vector<32x96xf32> to vector<32x32xf32>
    %cst_453 = arith.constant dense<0.000000e+00> : vector<5x32xf32>
    %1253 = tpu.matmul %1251, %1252, %cst_453 {dimension_numbers = #tpu.dot_dimension_numbers<[1], [0], [0], [1], [0, 0, 1, 1], [], []>} : vector<5x32xf32>, vector<32x32xf32>, vector<5x32xf32> -> vector<5x32xf32>
    %1254 = vector.extract_strided_slice %4 {offsets = [0, 0], sizes = [1, 32], strides = [1, 1]} : vector<1x96xf32> to vector<1x32xf32>
    %1255 = vector.broadcast %1254 : vector<1x32xf32> to vector<5x32xf32>
    %1256 = arith.addf %1253, %1255 : vector<5x32xf32>
    %1257 = vector.extract_strided_slice %6 {offsets = [0, 32], sizes = [32, 64], strides = [1, 1]} : vector<32x96xf32> to vector<32x64xf32>
    %cst_454 = arith.constant dense<0.000000e+00> : vector<8x64xf32>
    %1258 = tpu.matmul %1113, %1257, %cst_454 {dimension_numbers = #tpu.dot_dimension_numbers<[1], [0], [0], [1], [0, 0, 1, 1], [], []>} : vector<8x32xf32>, vector<32x64xf32>, vector<8x64xf32> -> vector<8x64xf32>
    %1259 = vector.extract_strided_slice %4 {offsets = [0, 32], sizes = [1, 64], strides = [1, 1]} : vector<1x96xf32> to vector<1x64xf32>
    %1260 = vector.broadcast %1259 : vector<1x64xf32> to vector<8x64xf32>
    %1261 = arith.addf %1258, %1260 : vector<8x64xf32>
    %1262 = vector.extract_strided_slice %1261 {offsets = [0, 0], sizes = [8, 32], strides = [1, 1]} : vector<8x64xf32> to vector<8x32xf32>
    %1263 = vector.extract_strided_slice %1261 {offsets = [0, 32], sizes = [8, 32], strides = [1, 1]} : vector<8x64xf32> to vector<8x32xf32>
    %1264 = vector.extract_strided_slice %1256 {offsets = [0, 0], sizes = [5, 8], strides = [1, 1]} : vector<5x32xf32> to vector<5x8xf32>
    %1265 = vector.extract_strided_slice %1262 {offsets = [0, 0], sizes = [8, 8], strides = [1, 1]} : vector<8x32xf32> to vector<8x8xf32>
    %cst_455 = arith.constant dense<0.000000e+00> : vector<5x8xf32>
    %1266 = tpu.matmul %1264, %1265, %cst_455 {dimension_numbers = #tpu.dot_dimension_numbers<[1], [1], [0], [0], [0, 0, 1, 0], [], []>} : vector<5x8xf32>, vector<8x8xf32>, vector<5x8xf32> -> vector<5x8xf32>
    %cst_456 = arith.constant 0.353553385 : f32
    %1267 = vector.broadcast %cst_456 : f32 to vector<5x8xf32>
    %1268 = arith.mulf %1266, %1267 : vector<5x8xf32>
    %cst_457 = arith.constant dense<0xFF800000> : vector<5xf32>
    %1269 = vector.multi_reduction <maximumf>, %1268, %cst_457 [1] : vector<5x8xf32> to vector<5xf32>
    %1270 = vector.shape_cast %1269 : vector<5xf32> to vector<5x1xf32>
    %1271 = vector.broadcast %1270 : vector<5x1xf32> to vector<5x8xf32>
    %1272 = arith.subf %1268, %1271 : vector<5x8xf32>
    %1273 = math.exp %1272 : vector<5x8xf32>
    %cst_458 = arith.constant dense<0.000000e+00> : vector<5xf32>
    %1274 = vector.multi_reduction <add>, %1273, %cst_458 [1] : vector<5x8xf32> to vector<5xf32>
    %1275 = vector.shape_cast %1274 : vector<5xf32> to vector<5x1xf32>
    %1276 = tpu.reciprocal %1275 {approx = true} : vector<5x1xf32> -> vector<5x1xf32>
    %1277 = vector.broadcast %1276 : vector<5x1xf32> to vector<5x8xf32>
    %1278 = arith.mulf %1273, %1277 : vector<5x8xf32>
    %1279 = vector.extract_strided_slice %1263 {offsets = [0, 0], sizes = [8, 8], strides = [1, 1]} : vector<8x32xf32> to vector<8x8xf32>
    %cst_459 = arith.constant dense<0.000000e+00> : vector<5x8xf32>
    %1280 = tpu.matmul %1278, %1279, %cst_459 {dimension_numbers = #tpu.dot_dimension_numbers<[1], [0], [0], [1], [0, 0, 1, 1], [], []>} : vector<5x8xf32>, vector<8x8xf32>, vector<5x8xf32> -> vector<5x8xf32>
    %1281 = vector.extract_strided_slice %1256 {offsets = [0, 8], sizes = [5, 8], strides = [1, 1]} : vector<5x32xf32> to vector<5x8xf32>
    %1282 = vector.extract_strided_slice %1262 {offsets = [0, 8], sizes = [8, 8], strides = [1, 1]} : vector<8x32xf32> to vector<8x8xf32>
    %cst_460 = arith.constant dense<0.000000e+00> : vector<5x8xf32>
    %1283 = tpu.matmul %1281, %1282, %cst_460 {dimension_numbers = #tpu.dot_dimension_numbers<[1], [1], [0], [0], [0, 0, 1, 0], [], []>} : vector<5x8xf32>, vector<8x8xf32>, vector<5x8xf32> -> vector<5x8xf32>
    %cst_461 = arith.constant 0.353553385 : f32
    %1284 = vector.broadcast %cst_461 : f32 to vector<5x8xf32>
    %1285 = arith.mulf %1283, %1284 : vector<5x8xf32>
    %cst_462 = arith.constant dense<0xFF800000> : vector<5xf32>
    %1286 = vector.multi_reduction <maximumf>, %1285, %cst_462 [1] : vector<5x8xf32> to vector<5xf32>
    %1287 = vector.shape_cast %1286 : vector<5xf32> to vector<5x1xf32>
    %1288 = vector.broadcast %1287 : vector<5x1xf32> to vector<5x8xf32>
    %1289 = arith.subf %1285, %1288 : vector<5x8xf32>
    %1290 = math.exp %1289 : vector<5x8xf32>
    %cst_463 = arith.constant dense<0.000000e+00> : vector<5xf32>
    %1291 = vector.multi_reduction <add>, %1290, %cst_463 [1] : vector<5x8xf32> to vector<5xf32>
    %1292 = vector.shape_cast %1291 : vector<5xf32> to vector<5x1xf32>
    %1293 = tpu.reciprocal %1292 {approx = true} : vector<5x1xf32> -> vector<5x1xf32>
    %1294 = vector.broadcast %1293 : vector<5x1xf32> to vector<5x8xf32>
    %1295 = arith.mulf %1290, %1294 : vector<5x8xf32>
    %1296 = vector.extract_strided_slice %1263 {offsets = [0, 8], sizes = [8, 8], strides = [1, 1]} : vector<8x32xf32> to vector<8x8xf32>
    %cst_464 = arith.constant dense<0.000000e+00> : vector<5x8xf32>
    %1297 = tpu.matmul %1295, %1296, %cst_464 {dimension_numbers = #tpu.dot_dimension_numbers<[1], [0], [0], [1], [0, 0, 1, 1], [], []>} : vector<5x8xf32>, vector<8x8xf32>, vector<5x8xf32> -> vector<5x8xf32>
    %1298 = vector.extract_strided_slice %1256 {offsets = [0, 16], sizes = [5, 8], strides = [1, 1]} : vector<5x32xf32> to vector<5x8xf32>
    %1299 = vector.extract_strided_slice %1262 {offsets = [0, 16], sizes = [8, 8], strides = [1, 1]} : vector<8x32xf32> to vector<8x8xf32>
    %cst_465 = arith.constant dense<0.000000e+00> : vector<5x8xf32>
    %1300 = tpu.matmul %1298, %1299, %cst_465 {dimension_numbers = #tpu.dot_dimension_numbers<[1], [1], [0], [0], [0, 0, 1, 0], [], []>} : vector<5x8xf32>, vector<8x8xf32>, vector<5x8xf32> -> vector<5x8xf32>
    %cst_466 = arith.constant 0.353553385 : f32
    %1301 = vector.broadcast %cst_466 : f32 to vector<5x8xf32>
    %1302 = arith.mulf %1300, %1301 : vector<5x8xf32>
    %cst_467 = arith.constant dense<0xFF800000> : vector<5xf32>
    %1303 = vector.multi_reduction <maximumf>, %1302, %cst_467 [1] : vector<5x8xf32> to vector<5xf32>
    %1304 = vector.shape_cast %1303 : vector<5xf32> to vector<5x1xf32>
    %1305 = vector.broadcast %1304 : vector<5x1xf32> to vector<5x8xf32>
    %1306 = arith.subf %1302, %1305 : vector<5x8xf32>
    %1307 = math.exp %1306 : vector<5x8xf32>
    %cst_468 = arith.constant dense<0.000000e+00> : vector<5xf32>
    %1308 = vector.multi_reduction <add>, %1307, %cst_468 [1] : vector<5x8xf32> to vector<5xf32>
    %1309 = vector.shape_cast %1308 : vector<5xf32> to vector<5x1xf32>
    %1310 = tpu.reciprocal %1309 {approx = true} : vector<5x1xf32> -> vector<5x1xf32>
    %1311 = vector.broadcast %1310 : vector<5x1xf32> to vector<5x8xf32>
    %1312 = arith.mulf %1307, %1311 : vector<5x8xf32>
    %1313 = vector.extract_strided_slice %1263 {offsets = [0, 16], sizes = [8, 8], strides = [1, 1]} : vector<8x32xf32> to vector<8x8xf32>
    %cst_469 = arith.constant dense<0.000000e+00> : vector<5x8xf32>
    %1314 = tpu.matmul %1312, %1313, %cst_469 {dimension_numbers = #tpu.dot_dimension_numbers<[1], [0], [0], [1], [0, 0, 1, 1], [], []>} : vector<5x8xf32>, vector<8x8xf32>, vector<5x8xf32> -> vector<5x8xf32>
    %1315 = vector.extract_strided_slice %1256 {offsets = [0, 24], sizes = [5, 8], strides = [1, 1]} : vector<5x32xf32> to vector<5x8xf32>
    %1316 = vector.extract_strided_slice %1262 {offsets = [0, 24], sizes = [8, 8], strides = [1, 1]} : vector<8x32xf32> to vector<8x8xf32>
    %cst_470 = arith.constant dense<0.000000e+00> : vector<5x8xf32>
    %1317 = tpu.matmul %1315, %1316, %cst_470 {dimension_numbers = #tpu.dot_dimension_numbers<[1], [1], [0], [0], [0, 0, 1, 0], [], []>} : vector<5x8xf32>, vector<8x8xf32>, vector<5x8xf32> -> vector<5x8xf32>
    %cst_471 = arith.constant 0.353553385 : f32
    %1318 = vector.broadcast %cst_471 : f32 to vector<5x8xf32>
    %1319 = arith.mulf %1317, %1318 : vector<5x8xf32>
    %cst_472 = arith.constant dense<0xFF800000> : vector<5xf32>
    %1320 = vector.multi_reduction <maximumf>, %1319, %cst_472 [1] : vector<5x8xf32> to vector<5xf32>
    %1321 = vector.shape_cast %1320 : vector<5xf32> to vector<5x1xf32>
    %1322 = vector.broadcast %1321 : vector<5x1xf32> to vector<5x8xf32>
    %1323 = arith.subf %1319, %1322 : vector<5x8xf32>
    %1324 = math.exp %1323 : vector<5x8xf32>
    %cst_473 = arith.constant dense<0.000000e+00> : vector<5xf32>
    %1325 = vector.multi_reduction <add>, %1324, %cst_473 [1] : vector<5x8xf32> to vector<5xf32>
    %1326 = vector.shape_cast %1325 : vector<5xf32> to vector<5x1xf32>
    %1327 = tpu.reciprocal %1326 {approx = true} : vector<5x1xf32> -> vector<5x1xf32>
    %1328 = vector.broadcast %1327 : vector<5x1xf32> to vector<5x8xf32>
    %1329 = arith.mulf %1324, %1328 : vector<5x8xf32>
    %1330 = vector.extract_strided_slice %1263 {offsets = [0, 24], sizes = [8, 8], strides = [1, 1]} : vector<8x32xf32> to vector<8x8xf32>
    %cst_474 = arith.constant dense<0.000000e+00> : vector<5x8xf32>
    %1331 = tpu.matmul %1329, %1330, %cst_474 {dimension_numbers = #tpu.dot_dimension_numbers<[1], [0], [0], [1], [0, 0, 1, 1], [], []>} : vector<5x8xf32>, vector<8x8xf32>, vector<5x8xf32> -> vector<5x8xf32>
    %1332 = tpu.concatenate %1280, %1297, %1314, %1331 in 1 : vector<5x8xf32>, vector<5x8xf32>, vector<5x8xf32>, vector<5x8xf32> -> vector<5x32xf32>
    %cst_475 = arith.constant dense<0.000000e+00> : vector<5x32xf32>
    %1333 = tpu.matmul %1332, %5, %cst_475 {dimension_numbers = #tpu.dot_dimension_numbers<[1], [0], [0], [1], [0, 0, 1, 1], [], []>} : vector<5x32xf32>, vector<32x32xf32>, vector<5x32xf32> -> vector<5x32xf32>
    %1334 = vector.broadcast %3 : vector<1x32xf32> to vector<5x32xf32>
    %1335 = arith.addf %1333, %1334 : vector<5x32xf32>
    %1336 = arith.addf %1251, %1335 : vector<5x32xf32>
    %cst_476 = arith.constant dense<0.000000e+00> : vector<5xf32>
    %1337 = vector.multi_reduction <add>, %1336, %cst_476 [1] : vector<5x32xf32> to vector<5xf32>
    %1338 = vector.shape_cast %1337 : vector<5xf32> to vector<5x1xf32>
    %cst_477 = arith.constant 3.200000e+01 : f32
    %1339 = vector.broadcast %cst_477 : f32 to vector<5x1xf32>
    %1340 = arith.divf %1338, %1339 : vector<5x1xf32>
    %1341 = vector.broadcast %1340 : vector<5x1xf32> to vector<5x32xf32>
    %1342 = arith.subf %1336, %1341 : vector<5x32xf32>
    %1343 = arith.mulf %1342, %1342 : vector<5x32xf32>
    %cst_478 = arith.constant dense<0.000000e+00> : vector<5xf32>
    %1344 = vector.multi_reduction <add>, %1343, %cst_478 [1] : vector<5x32xf32> to vector<5xf32>
    %1345 = vector.shape_cast %1344 : vector<5xf32> to vector<5x1xf32>
    %cst_479 = arith.constant 3.200000e+01 : f32
    %1346 = vector.broadcast %cst_479 : f32 to vector<5x1xf32>
    %1347 = arith.divf %1345, %1346 : vector<5x1xf32>
    %cst_480 = arith.constant 9.99999974E-6 : f32
    %1348 = vector.broadcast %cst_480 : f32 to vector<5x1xf32>
    %1349 = arith.addf %1347, %1348 : vector<5x1xf32>
    %1350 = math.rsqrt %1349 : vector<5x1xf32>
    %1351 = vector.broadcast %1350 : vector<5x1xf32> to vector<5x32xf32>
    %1352 = arith.mulf %1342, %1351 : vector<5x32xf32>
    %1353 = vector.broadcast %14 : vector<1x32xf32> to vector<5x32xf32>
    %1354 = arith.mulf %1352, %1353 : vector<5x32xf32>
    %1355 = vector.broadcast %13 : vector<1x32xf32> to vector<5x32xf32>
    %1356 = arith.addf %1354, %1355 : vector<5x32xf32>
    %cst_481 = arith.constant dense<0.000000e+00> : vector<5x64xf32>
    %1357 = tpu.matmul %1356, %9, %cst_481 {dimension_numbers = #tpu.dot_dimension_numbers<[1], [0], [0], [1], [0, 0, 1, 1], [], []>} : vector<5x32xf32>, vector<32x64xf32>, vector<5x64xf32> -> vector<5x64xf32>
    %1358 = vector.broadcast %7 : vector<1x64xf32> to vector<5x64xf32>
    %1359 = arith.addf %1357, %1358 : vector<5x64xf32>
    %cst_482 = arith.constant 5.000000e-01 : f32
    %1360 = vector.broadcast %cst_482 : f32 to vector<5x64xf32>
    %1361 = arith.mulf %1360, %1359 : vector<5x64xf32>
    %cst_483 = arith.constant 0.707106769 : f32
    %1362 = vector.broadcast %cst_483 : f32 to vector<5x64xf32>
    %1363 = arith.mulf %1359, %1362 : vector<5x64xf32>
    %cst_484 = arith.constant 0.000000e+00 : f32
    %1364 = vector.broadcast %cst_484 : f32 to vector<5x64xf32>
    %1365 = arith.cmpf olt, %1363, %1364 : vector<5x64xf32>
    %cst_485 = arith.constant -1.000000e+00 : f32
    %cst_486 = arith.constant 1.000000e+00 : f32
    %1366 = vector.broadcast %cst_485 : f32 to vector<5x64xf32>
    %1367 = vector.broadcast %cst_486 : f32 to vector<5x64xf32>
    %1368 = arith.select %1365, %1366, %1367 : vector<5x64xi1>, vector<5x64xf32>
    %1369 = math.absf %1363 : vector<5x64xf32>
    %cst_487 = arith.constant 0.327591091 : f32
    %1370 = vector.broadcast %cst_487 : f32 to vector<5x64xf32>
    %1371 = arith.mulf %1370, %1369 : vector<5x64xf32>
    %cst_488 = arith.constant 1.000000e+00 : f32
    %1372 = vector.broadcast %cst_488 : f32 to vector<5x64xf32>
    %1373 = arith.addf %1372, %1371 : vector<5x64xf32>
    %cst_489 = arith.constant 1.000000e+00 : f32
    %1374 = vector.broadcast %cst_489 : f32 to vector<5x64xf32>
    %1375 = arith.divf %1374, %1373 : vector<5x64xf32>
    %cst_490 = arith.constant 1.06140542 : f32
    %1376 = vector.broadcast %cst_490 : f32 to vector<5x64xf32>
    %1377 = arith.mulf %1376, %1375 : vector<5x64xf32>
    %cst_491 = arith.constant -1.45315206 : f32
    %1378 = vector.broadcast %cst_491 : f32 to vector<5x64xf32>
    %1379 = arith.addf %1377, %1378 : vector<5x64xf32>
    %1380 = arith.mulf %1379, %1375 : vector<5x64xf32>
    %cst_492 = arith.constant 1.42141378 : f32
    %1381 = vector.broadcast %cst_492 : f32 to vector<5x64xf32>
    %1382 = arith.addf %1380, %1381 : vector<5x64xf32>
    %1383 = arith.mulf %1382, %1375 : vector<5x64xf32>
    %cst_493 = arith.constant -0.284496725 : f32
    %1384 = vector.broadcast %cst_493 : f32 to vector<5x64xf32>
    %1385 = arith.addf %1383, %1384 : vector<5x64xf32>
    %1386 = arith.mulf %1385, %1375 : vector<5x64xf32>
    %cst_494 = arith.constant 0.254829586 : f32
    %1387 = vector.broadcast %cst_494 : f32 to vector<5x64xf32>
    %1388 = arith.addf %1386, %1387 : vector<5x64xf32>
    %1389 = arith.mulf %1388, %1375 : vector<5x64xf32>
    %cst_495 = arith.constant 0.000000e+00 : f32
    %1390 = vector.broadcast %cst_495 : f32 to vector<5x64xf32>
    %1391 = arith.subf %1390, %1369 : vector<5x64xf32>
    %1392 = arith.mulf %1391, %1369 : vector<5x64xf32>
    %1393 = math.exp %1392 : vector<5x64xf32>
    %1394 = arith.mulf %1389, %1393 : vector<5x64xf32>
    %cst_496 = arith.constant 1.000000e+00 : f32
    %1395 = vector.broadcast %cst_496 : f32 to vector<5x64xf32>
    %1396 = arith.subf %1395, %1394 : vector<5x64xf32>
    %1397 = arith.mulf %1368, %1396 : vector<5x64xf32>
    %cst_497 = arith.constant 1.000000e+00 : f32
    %1398 = vector.broadcast %cst_497 : f32 to vector<5x64xf32>
    %1399 = arith.addf %1398, %1397 : vector<5x64xf32>
    %1400 = arith.mulf %1361, %1399 : vector<5x64xf32>
    %cst_498 = arith.constant dense<0.000000e+00> : vector<5x32xf32>
    %1401 = tpu.matmul %1400, %10, %cst_498 {dimension_numbers = #tpu.dot_dimension_numbers<[1], [0], [0], [1], [0, 0, 1, 1], [], []>} : vector<5x64xf32>, vector<64x32xf32>, vector<5x32xf32> -> vector<5x32xf32>
    %1402 = vector.broadcast %8 : vector<1x32xf32> to vector<5x32xf32>
    %1403 = arith.addf %1401, %1402 : vector<5x32xf32>
    %1404 = arith.addf %1356, %1403 : vector<5x32xf32>
    %cst_499 = arith.constant dense<0.000000e+00> : vector<5xf32>
    %1405 = vector.multi_reduction <add>, %1404, %cst_499 [1] : vector<5x32xf32> to vector<5xf32>
    %1406 = vector.shape_cast %1405 : vector<5xf32> to vector<5x1xf32>
    %cst_500 = arith.constant 3.200000e+01 : f32
    %1407 = vector.broadcast %cst_500 : f32 to vector<5x1xf32>
    %1408 = arith.divf %1406, %1407 : vector<5x1xf32>
    %1409 = vector.broadcast %1408 : vector<5x1xf32> to vector<5x32xf32>
    %1410 = arith.subf %1404, %1409 : vector<5x32xf32>
    %1411 = arith.mulf %1410, %1410 : vector<5x32xf32>
    %cst_501 = arith.constant dense<0.000000e+00> : vector<5xf32>
    %1412 = vector.multi_reduction <add>, %1411, %cst_501 [1] : vector<5x32xf32> to vector<5xf32>
    %1413 = vector.shape_cast %1412 : vector<5xf32> to vector<5x1xf32>
    %cst_502 = arith.constant 3.200000e+01 : f32
    %1414 = vector.broadcast %cst_502 : f32 to vector<5x1xf32>
    %1415 = arith.divf %1413, %1414 : vector<5x1xf32>
    %cst_503 = arith.constant 9.99999974E-6 : f32
    %1416 = vector.broadcast %cst_503 : f32 to vector<5x1xf32>
    %1417 = arith.addf %1415, %1416 : vector<5x1xf32>
    %1418 = math.rsqrt %1417 : vector<5x1xf32>
    %1419 = vector.broadcast %1418 : vector<5x1xf32> to vector<5x32xf32>
    %1420 = arith.mulf %1410, %1419 : vector<5x32xf32>
    %1421 = vector.broadcast %16 : vector<1x32xf32> to vector<5x32xf32>
    %1422 = arith.mulf %1420, %1421 : vector<5x32xf32>
    %1423 = vector.broadcast %15 : vector<1x32xf32> to vector<5x32xf32>
    %1424 = arith.addf %1422, %1423 : vector<5x32xf32>
    %cst_504 = arith.constant dense<0.000000e+00> : vector<5xf32>
    %1425 = vector.multi_reduction <add>, %1424, %cst_504 [1] : vector<5x32xf32> to vector<5xf32>
    %1426 = vector.shape_cast %1425 : vector<5xf32> to vector<5x1xf32>
    %cst_505 = arith.constant 3.200000e+01 : f32
    %1427 = vector.broadcast %cst_505 : f32 to vector<5x1xf32>
    %1428 = arith.divf %1426, %1427 : vector<5x1xf32>
    %1429 = vector.broadcast %1428 : vector<5x1xf32> to vector<5x32xf32>
    %1430 = arith.subf %1424, %1429 : vector<5x32xf32>
    %1431 = arith.mulf %1430, %1430 : vector<5x32xf32>
    %cst_506 = arith.constant dense<0.000000e+00> : vector<5xf32>
    %1432 = vector.multi_reduction <add>, %1431, %cst_506 [1] : vector<5x32xf32> to vector<5xf32>
    %1433 = vector.shape_cast %1432 : vector<5xf32> to vector<5x1xf32>
    %cst_507 = arith.constant 3.200000e+01 : f32
    %1434 = vector.broadcast %cst_507 : f32 to vector<5x1xf32>
    %1435 = arith.divf %1433, %1434 : vector<5x1xf32>
    %cst_508 = arith.constant 9.99999974E-6 : f32
    %1436 = vector.broadcast %cst_508 : f32 to vector<5x1xf32>
    %1437 = arith.addf %1435, %1436 : vector<5x1xf32>
    %1438 = math.rsqrt %1437 : vector<5x1xf32>
    %1439 = vector.broadcast %1438 : vector<5x1xf32> to vector<5x32xf32>
    %1440 = arith.mulf %1430, %1439 : vector<5x32xf32>
    %1441 = vector.broadcast %22 : vector<1x32xf32> to vector<5x32xf32>
    %1442 = arith.mulf %1440, %1441 : vector<5x32xf32>
    %1443 = vector.broadcast %21 : vector<1x32xf32> to vector<5x32xf32>
    %1444 = arith.addf %1442, %1443 : vector<5x32xf32>
    %1445 = vector.extract_strided_slice %1444 {offsets = [4, 0], sizes = [1, 32], strides = [1, 1]} : vector<5x32xf32> to vector<1x32xf32>
    %cst_509 = arith.constant dense<0.000000e+00> : vector<1x1xf32>
    %1446 = tpu.matmul %1445, %53, %cst_509 {dimension_numbers = #tpu.dot_dimension_numbers<[1], [0], [0], [1], [0, 0, 1, 1], [], []>} : vector<1x32xf32>, vector<32x1xf32>, vector<1x1xf32> -> vector<1x1xf32>
    %1447 = arith.addf %1446, %52 : vector<1x1xf32>
    %c1_510 = arith.constant 1 : index
    %c0_511 = arith.constant 0 : index
    %c0_512 = arith.constant 0 : index
    %1448 = vector.load %arg56[%c1_510, %c0_511, %c0_512] : memref<2x1x1xf32, #tpu.memory_space<vmem>>, vector<1x1x1xf32>
    %1449 = vector.shape_cast %1448 : vector<1x1x1xf32> to vector<1x1xf32>
    %1450 = vector.shape_cast %1447 : vector<1x1xf32> to vector<1x1x1xf32>
    tpu.vector_store %arg56[%c1_510, %c0_511, %c0_512], %1450 {strides = array<i32>} : memref<2x1x1xf32, #tpu.memory_space<vmem>>, vector<1x1x1xf32>,
    return
  }
}

</mosaic_0001>

<llo_original>
// kernel: informer_forward.1
$region0: #{informer_forward.1}
  #allocation0 [shape = 'u32[]', space=smem, size = 0x4, offset = 0x4, fixed_abs, tag = 'smem constant byte address 0x4 - core index']
  #allocation1 [shape = 'u32[72,128]{1,0:T(1,128)}', space=vmem, size = 0x9000, scoped, tag = 'internal scratch']
  #allocation2 [shape = 'f32[1,1]{1,0:T(1,128)S(1)}', space=vmem, size = 0x200, scoped, tag = 'scoped memory for informer_forward.1']
  %s0 = inlined_call_operand.smem [shape: u32[57], index: -1, kind: input, shape index: {}]
  %s1 = sld [smem:[%s0]]
  %s2 = scalar_lea.smem %s0, 1
  %s3 = sld [smem:[%s2]]
  %s4 = scalar_lea.smem %s0, 2
  %s5 = sld [smem:[%s4]]
  %s6 = scalar_lea.smem %s0, 3
  %s7 = sld [smem:[%s6]]
  %s8 = scalar_lea.smem %s0, 4
  %s9 = sld [smem:[%s8]]
  %s10 = scalar_lea.smem %s0, 5
  %s11 = sld [smem:[%s10]]
  %s12 = scalar_lea.smem %s0, 6
  %s13 = sld [smem:[%s12]]
  %s14 = scalar_lea.smem %s0, 7
  %s15 = sld [smem:[%s14]]
  %s16 = scalar_lea.smem %s0, 8
  %s17 = sld [smem:[%s16]]
  %s18 = scalar_lea.smem %s0, 9
  %s19 = sld [smem:[%s18]]
  %s20 = scalar_lea.smem %s0, 10
  %s21 = sld [smem:[%s20]]
  %s22 = scalar_lea.smem %s0, 11
  %s23 = sld [smem:[%s22]]
  %s24 = scalar_lea.smem %s0, 12
  %s25 = sld [smem:[%s24]]
  %s26 = scalar_lea.smem %s0, 13
  %s27 = sld [smem:[%s26]]
  %s28 = scalar_lea.smem %s0, 14
  %s29 = sld [smem:[%s28]]
  %s30 = scalar_lea.smem %s0, 15
  %s31 = sld [smem:[%s30]]
  %s32 = scalar_lea.smem %s0, 16
  %s33 = sld [smem:[%s32]]
  %s34 = scalar_lea.smem %s0, 17
  %s35 = sld [smem:[%s34]]
  %s36 = scalar_lea.smem %s0, 18
  %s37 = sld [smem:[%s36]]
  %s38 = scalar_lea.smem %s0, 19
  %s39 = sld [smem:[%s38]]
  %s40 = scalar_lea.smem %s0, 20
  %s41 = sld [smem:[%s40]]
  %s42 = scalar_lea.smem %s0, 21
  %s43 = sld [smem:[%s42]]
  %s44 = scalar_lea.smem %s0, 22
  %s45 = sld [smem:[%s44]]
  %s46 = scalar_lea.smem %s0, 23
  %s47 = sld [smem:[%s46]]
  %s48 = scalar_lea.smem %s0, 24
  %s49 = sld [smem:[%s48]]
  %s50 = scalar_lea.smem %s0, 25
  %s51 = sld [smem:[%s50]]
  %s52 = scalar_lea.smem %s0, 26
  %s53 = sld [smem:[%s52]]
  %s54 = scalar_lea.smem %s0, 27
  %s55 = sld [smem:[%s54]]
  %s56 = scalar_lea.smem %s0, 28
  %s57 = sld [smem:[%s56]]
  %s58 = scalar_lea.smem %s0, 29
  %s59 = sld [smem:[%s58]]
  %s60 = scalar_lea.smem %s0, 30
  %s61 = sld [smem:[%s60]]
  %s62 = scalar_lea.smem %s0, 31
  %s63 = sld [smem:[%s62]]
  %s64 = scalar_lea.smem %s0, 32
  %s65 = sld [smem:[%s64]]
  %s66 = scalar_lea.smem %s0, 33
  %s67 = sld [smem:[%s66]]
  %s68 = scalar_lea.smem %s0, 34
  %s69 = sld [smem:[%s68]]
  %s70 = scalar_lea.smem %s0, 35
  %s71 = sld [smem:[%s70]]
  %s72 = scalar_lea.smem %s0, 36
  %s73 = sld [smem:[%s72]]
  %s74 = scalar_lea.smem %s0, 37
  %s75 = sld [smem:[%s74]]
  %s76 = scalar_lea.smem %s0, 38
  %s77 = sld [smem:[%s76]]
  %s78 = scalar_lea.smem %s0, 39
  %s79 = sld [smem:[%s78]]
  %s80 = scalar_lea.smem %s0, 40
  %s81 = sld [smem:[%s80]]
  %s82 = scalar_lea.smem %s0, 41
  %s83 = sld [smem:[%s82]]
  %s84 = scalar_lea.smem %s0, 42
  %s85 = sld [smem:[%s84]]
  %s86 = scalar_lea.smem %s0, 43
  %s87 = sld [smem:[%s86]]
  %s88 = scalar_lea.smem %s0, 44
  %s89 = sld [smem:[%s88]]
  %s90 = scalar_lea.smem %s0, 45
  %s91 = sld [smem:[%s90]]
  %s92 = scalar_lea.smem %s0, 46
  %s93 = sld [smem:[%s92]]
  %s94 = scalar_lea.smem %s0, 47
  %s95 = sld [smem:[%s94]]
  %s96 = scalar_lea.smem %s0, 48
  %s97 = sld [smem:[%s96]]
  %s98 = scalar_lea.smem %s0, 49
  %s99 = sld [smem:[%s98]]
  %s100 = scalar_lea.smem %s0, 50
  %s101 = sld [smem:[%s100]]
  %s102 = scalar_lea.smem %s0, 51
  %s103 = sld [smem:[%s102]]
  %s104 = scalar_lea.smem %s0, 52
  %s105 = sld [smem:[%s104]]
  %s106 = scalar_lea.smem %s0, 53
  %s107 = sld [smem:[%s106]]
  %s108 = scalar_lea.smem %s0, 54
  %s109 = sld [smem:[%s108]]
  %s110 = scalar_lea.smem %s0, 55
  %s111 = sld [smem:[%s110]]
  %s112 = scalar_lea.smem %s0, 56
  %s113 = sld [smem:[%s112]]
  %s114 = sld [smem:[#allocation0]]
  $region362: #{informer_forward.1} parent=0
    _
  %s116 = ssub.s32 1, %s114
  %s117 = scalar_select 0, %s116, %s114
  %v118 = vstv %s109
  %119 = vst [vmem:[#allocation2] sm:$0x1] %v118
  $region1: #{informer_forward.1} parent=0
    #allocation3 [shape = 'u8[512]{0}', space=vmem, size = 0x400, scoped, tag = 'input window, operand 2, single buffered']
    #allocation4 [shape = 's32[1]{0}', space=sflag, size = 0x4, scoped, tag = 'scoped memory for informer_forward.1']
    #allocation5 [shape = 'u8[2048]{0}', space=vmem, size = 0x800, scoped, tag = 'input window, operand 4, single buffered']
    #allocation6 [shape = 's32[1]{0}', space=sflag, size = 0x4, scoped, tag = 'scoped memory for informer_forward.1']
    #allocation7 [shape = 'u8[512]{0}', space=vmem, size = 0x400, scoped, tag = 'input window, operand 10, single buffered']
    #allocation8 [shape = 'u8[512]{0}', space=vmem, size = 0x400, scoped, tag = 'input window, operand 13, single buffered']
    #allocation9 [shape = 's32[1]{0}', space=sflag, size = 0x4, scoped, tag = 'scoped memory for informer_forward.1']
    #allocation10 [shape = 'u8[512]{0}', space=vmem, size = 0x400, scoped, tag = 'input window, operand 14, single buffered']
    #allocation11 [shape = 'u8[512]{0}', space=vmem, size = 0x400, scoped, tag = 'input window, operand 15, single buffered']
    #allocation12 [shape = 's32[1]{0}', space=sflag, size = 0x4, scoped, tag = 'scoped memory for informer_forward.1']
    #allocation13 [shape = 'u8[512]{0}', space=vmem, size = 0x400, scoped, tag = 'input window, operand 16, single buffered']
    #allocation14 [shape = 'u8[512]{0}', space=vmem, size = 0x400, scoped, tag = 'input window, operand 17, single buffered']
    #allocation15 [shape = 's32[1]{0}', space=sflag, size = 0x4, scoped, tag = 'scoped memory for informer_forward.1']
    #allocation16 [shape = 'u8[512]{0}', space=vmem, size = 0x400, scoped, tag = 'input window, operand 18, single buffered']
    #allocation17 [shape = 'u8[512]{0}', space=vmem, size = 0x400, scoped, tag = 'input window, operand 19, single buffered']
    #allocation18 [shape = 's32[1]{0}', space=sflag, size = 0x4, scoped, tag = 'scoped memory for informer_forward.1']
    #allocation19 [shape = 'u8[512]{0}', space=vmem, size = 0x400, scoped, tag = 'input window, operand 20, single buffered']
    #allocation20 [shape = 'u8[512]{0}', space=vmem, size = 0x400, scoped, tag = 'input window, operand 23, single buffered']
    #allocation21 [shape = 's32[1]{0}', space=sflag, size = 0x4, scoped, tag = 'scoped memory for informer_forward.1']
    #allocation22 [shape = 'u8[512]{0}', space=vmem, size = 0x400, scoped, tag = 'input window, operand 24, single buffered']
    #allocation23 [shape = 'u8[512]{0}', space=vmem, size = 0x400, scoped, tag = 'input window, operand 25, single buffered']
    #allocation24 [shape = 's32[1]{0}', space=sflag, size = 0x4, scoped, tag = 'scoped memory for informer_forward.1']
    #allocation25 [shape = 'u8[4096]{0}', space=vmem, size = 0x1000, scoped, tag = 'input window, operand 26, single buffered']
    #allocation26 [shape = 'u8[2048]{0}', space=vmem, size = 0x800, scoped, tag = 'input window, operand 27, single buffered']
    #allocation27 [shape = 's32[1]{0}', space=sflag, size = 0x4, scoped, tag = 'scoped memory for informer_forward.1']
    #allocation28 [shape = 'u8[512]{0}', space=vmem, size = 0x400, scoped, tag = 'input window, operand 28, single buffered']
    #allocation29 [shape = 'u8[512]{0}', space=vmem, size = 0x400, scoped, tag = 'input window, operand 29, single buffered']
    #allocation30 [shape = 's32[1]{0}', space=sflag, size = 0x4, scoped, tag = 'scoped memory for informer_forward.1']
    #allocation31 [shape = 'u8[512]{0}', space=vmem, size = 0x400, scoped, tag = 'input window, operand 32, single buffered']
    #allocation32 [shape = 'u8[512]{0}', space=vmem, size = 0x400, scoped, tag = 'input window, operand 33, single buffered']
    #allocation33 [shape = 's32[1]{0}', space=sflag, size = 0x4, scoped, tag = 'scoped memory for informer_forward.1']
    #allocation34 [shape = 'u8[512]{0}', space=vmem, size = 0x400, scoped, tag = 'input window, operand 36, single buffered']
    #allocation35 [shape = 'u8[512]{0}', space=vmem, size = 0x400, scoped, tag = 'input window, operand 37, single buffered']
    #allocation36 [shape = 's32[1]{0}', space=sflag, size = 0x4, scoped, tag = 'scoped memory for informer_forward.1']
    #allocation37 [shape = 'u8[512]{0}', space=vmem, size = 0x400, scoped, tag = 'input window, operand 38, single buffered']
    #allocation38 [shape = 'u8[512]{0}', space=vmem, size = 0x400, scoped, tag = 'input window, operand 39, single buffered']
    #allocation39 [shape = 's32[1]{0}', space=sflag, size = 0x4, scoped, tag = 'scoped memory for informer_forward.1']
    #allocation40 [shape = 'u8[512]{0}', space=vmem, size = 0x400, scoped, tag = 'input window, operand 40, single buffered']
    #allocation41 [shape = 'u8[512]{0}', space=vmem, size = 0x400, scoped, tag = 'input window, operand 41, single buffered']
    #allocation42 [shape = 's32[1]{0}', space=sflag, size = 0x4, scoped, tag = 'scoped memory for informer_forward.1']
    #allocation43 [shape = 'u8[16384]{0}', space=vmem, size = 0x4000, scoped, tag = 'input window, operand 42, single buffered']
    #allocation44 [shape = 'u8[16384]{0}', space=vmem, size = 0x4000, scoped, tag = 'input window, operand 43, single buffered']
    #allocation45 [shape = 's32[1]{0}', space=sflag, size = 0x4, scoped, tag = 'scoped memory for informer_forward.1']
    #allocation46 [shape = 'u8[512]{0}', space=vmem, size = 0x400, scoped, tag = 'input window, operand 44, single buffered']
    #allocation47 [shape = 'u8[512]{0}', space=vmem, size = 0x400, scoped, tag = 'input window, operand 45, single buffered']
    #allocation48 [shape = 's32[1]{0}', space=sflag, size = 0x4, scoped, tag = 'scoped memory for informer_forward.1']
    #allocation49 [shape = 'u8[512]{0}', space=vmem, size = 0x400, scoped, tag = 'input window, operand 48, single buffered']
    #allocation50 [shape = 'u8[512]{0}', space=vmem, size = 0x400, scoped, tag = 'input window, operand 49, single buffered']
    #allocation51 [shape = 's32[1]{0}', space=sflag, size = 0x4, scoped, tag = 'scoped memory for informer_forward.1']
    %120 = vsyncpa [#allocation4], 0
    %121 = vsyncpa [#allocation6], 0
    %122 = vsyncpa [#allocation9], 0
    %123 = vsyncpa [#allocation12], 0
    %124 = vsyncpa [#allocation15], 0
    %125 = vsyncpa [#allocation18], 0
    %126 = vsyncpa [#allocation21], 0
    %127 = vsyncpa [#allocation24], 0
    %128 = vsyncpa [#allocation27], 0
    %129 = vsyncpa [#allocation30], 0
    %130 = vsyncpa [#allocation33], 0
    %131 = vsyncpa [#allocation36], 0
    %132 = vsyncpa [#allocation39], 0
    %133 = vsyncpa [#allocation42], 0
    %134 = vsyncpa [#allocation45], 0
    %135 = vsyncpa [#allocation48], 0
    %136 = vsyncpa [#allocation51], 0
    // Predicated region
    $region2: #{informer_forward.1} parent=1 // pred_check
      _
    $region3: #{informer_forward.1} parent=1 // pred_check_branch
      %138 = sbr.rel (0) target = $region5
    $region4: #{informer_forward.1} parent=1 // pred_region
      _
    $region5: #{informer_forward.1} parent=1 // pred_fallthru
      _
    // Predicated region
    $region6: #{informer_forward.1} parent=1 // pred_check
      _
    $region7: #{informer_forward.1} parent=1 // pred_check_branch
      %140 = sbr.rel (0) target = $region9
    $region8: #{informer_forward.1} parent=1 // pred_region
      _
    $region9: #{informer_forward.1} parent=1 // pred_fallthru
      _
    // Predicated region
    $region10: #{informer_forward.1} parent=1 // pred_check
      _
    $region11: #{informer_forward.1} parent=1 // pred_check_branch
      %142 = sbr.rel (0) target = $region13
    $region12: #{informer_forward.1} parent=1 // pred_region
      %144 = vsyncadd [#allocation4], 0
      %s146 = sshll.u32 %s5, 4
      %s147 = int_to_ptr.hbm [resolvable:$true] %s146
      %s148 = sshll.u32 [#allocation3], 4
      %s149 = int_to_ptr.vmem [resolvable:$true] %s148
      %151 = dma.hbm_to_vmem [thread:$0]  %s147, 16, %s149, [#allocation4]
    $region13: #{informer_forward.1} parent=1 // pred_fallthru
      _
    // Predicated region
    $region14: #{informer_forward.1} parent=1 // pred_check
      _
    $region15: #{informer_forward.1} parent=1 // pred_check_branch
      %153 = sbr.rel (0) target = $region17
    $region16: #{informer_forward.1} parent=1 // pred_region
      _
    $region17: #{informer_forward.1} parent=1 // pred_fallthru
      _
    // Predicated region
    $region18: #{informer_forward.1} parent=1 // pred_check
      _
    $region19: #{informer_forward.1} parent=1 // pred_check_branch
      %155 = sbr.rel (0) target = $region21
    $region20: #{informer_forward.1} parent=1 // pred_region
      %157 = vsyncadd [#allocation6], 0
      %s159 = sshll.u32 %s9, 4
      %s160 = int_to_ptr.hbm [resolvable:$true] %s159
      %s161 = sshll.u32 [#allocation5], 4
      %s162 = int_to_ptr.vmem [resolvable:$true] %s161
      %164 = dma.hbm_to_vmem [thread:$0]  %s160, 64, %s162, [#allocation6]
    $region21: #{informer_forward.1} parent=1 // pred_fallthru
      _
    // Predicated region
    $region22: #{informer_forward.1} parent=1 // pred_check
      _
    $region23: #{informer_forward.1} parent=1 // pred_check_branch
      %166 = sbr.rel (0) target = $region25
    $region24: #{informer_forward.1} parent=1 // pred_region
      _
    $region25: #{informer_forward.1} parent=1 // pred_fallthru
      _
    // Predicated region
    $region26: #{informer_forward.1} parent=1 // pred_check
      _
    $region27: #{informer_forward.1} parent=1 // pred_check_branch
      %168 = sbr.rel (0) target = $region29
    $region28: #{informer_forward.1} parent=1 // pred_region
      _
    $region29: #{informer_forward.1} parent=1 // pred_fallthru
      _
    // Predicated region
    $region30: #{informer_forward.1} parent=1 // pred_check
      _
    $region31: #{informer_forward.1} parent=1 // pred_check_branch
      %170 = sbr.rel (0) target = $region33
    $region32: #{informer_forward.1} parent=1 // pred_region
      _
    $region33: #{informer_forward.1} parent=1 // pred_fallthru
      _
    // Predicated region
    $region34: #{informer_forward.1} parent=1 // pred_check
      _
    $region35: #{informer_forward.1} parent=1 // pred_check_branch
      %172 = sbr.rel (0) target = $region37
    $region36: #{informer_forward.1} parent=1 // pred_region
      _
    $region37: #{informer_forward.1} parent=1 // pred_fallthru
      _
    // Predicated region
    $region38: #{informer_forward.1} parent=1 // pred_check
      _
    $region39: #{informer_forward.1} parent=1 // pred_check_branch
      %174 = sbr.rel (0) target = $region41
    $region40: #{informer_forward.1} parent=1 // pred_region
      _
    $region41: #{informer_forward.1} parent=1 // pred_fallthru
      _
    // Predicated region
    $region42: #{informer_forward.1} parent=1 // pred_check
      _
    $region43: #{informer_forward.1} parent=1 // pred_check_branch
      %176 = sbr.rel (0) target = $region45
    $region44: #{informer_forward.1} parent=1 // pred_region
      %178 = vsyncadd [#allocation6], 0
      %s180 = sshll.u32 %s21, 4
      %s181 = int_to_ptr.hbm [resolvable:$true] %s180
      %s182 = sshll.u32 [#allocation7], 4
      %s183 = int_to_ptr.vmem [resolvable:$true] %s182
      %185 = dma.hbm_to_vmem [thread:$0]  %s181, 16, %s183, [#allocation6]
    $region45: #{informer_forward.1} parent=1 // pred_fallthru
      _
    // Predicated region
    $region46: #{informer_forward.1} parent=1 // pred_check
      _
    $region47: #{informer_forward.1} parent=1 // pred_check_branch
      %187 = sbr.rel (0) target = $region49
    $region48: #{informer_forward.1} parent=1 // pred_region
      _
    $region49: #{informer_forward.1} parent=1 // pred_fallthru
      _
    // Predicated region
    $region50: #{informer_forward.1} parent=1 // pred_check
      _
    $region51: #{informer_forward.1} parent=1 // pred_check_branch
      %189 = sbr.rel (0) target = $region53
    $region52: #{informer_forward.1} parent=1 // pred_region
      _
    $region53: #{informer_forward.1} parent=1 // pred_fallthru
      _
    // Predicated region
    $region54: #{informer_forward.1} parent=1 // pred_check
      _
    $region55: #{informer_forward.1} parent=1 // pred_check_branch
      %191 = sbr.rel (0) target = $region57
    $region56: #{informer_forward.1} parent=1 // pred_region
      %193 = vsyncadd [#allocation9], 0
      %s195 = sshll.u32 %s27, 4
      %s196 = int_to_ptr.hbm [resolvable:$true] %s195
      %s197 = sshll.u32 [#allocation8], 4
      %s198 = int_to_ptr.vmem [resolvable:$true] %s197
      %200 = dma.hbm_to_vmem [thread:$0]  %s196, 16, %s198, [#allocation9]
    $region57: #{informer_forward.1} parent=1 // pred_fallthru
      _
    // Predicated region
    $region58: #{informer_forward.1} parent=1 // pred_check
      _
    $region59: #{informer_forward.1} parent=1 // pred_check_branch
      %202 = sbr.rel (0) target = $region61
    $region60: #{informer_forward.1} parent=1 // pred_region
      %204 = vsyncadd [#allocation9], 0
      %s206 = sshll.u32 %s29, 4
      %s207 = int_to_ptr.hbm [resolvable:$true] %s206
      %s208 = sshll.u32 [#allocation10], 4
      %s209 = int_to_ptr.vmem [resolvable:$true] %s208
      %211 = dma.hbm_to_vmem [thread:$0]  %s207, 16, %s209, [#allocation9]
    $region61: #{informer_forward.1} parent=1 // pred_fallthru
      _
    // Predicated region
    $region62: #{informer_forward.1} parent=1 // pred_check
      _
    $region63: #{informer_forward.1} parent=1 // pred_check_branch
      %213 = sbr.rel (0) target = $region65
    $region64: #{informer_forward.1} parent=1 // pred_region
      %215 = vsyncadd [#allocation12], 0
      %s217 = sshll.u32 %s31, 4
      %s218 = int_to_ptr.hbm [resolvable:$true] %s217
      %s219 = sshll.u32 [#allocation11], 4
      %s220 = int_to_ptr.vmem [resolvable:$true] %s219
      %222 = dma.hbm_to_vmem [thread:$0]  %s218, 16, %s220, [#allocation12]
    $region65: #{informer_forward.1} parent=1 // pred_fallthru
      _
    // Predicated region
    $region66: #{informer_forward.1} parent=1 // pred_check
      _
    $region67: #{informer_forward.1} parent=1 // pred_check_branch
      %224 = sbr.rel (0) target = $region69
    $region68: #{informer_forward.1} parent=1 // pred_region
      %226 = vsyncadd [#allocation12], 0
      %s228 = sshll.u32 %s33, 4
      %s229 = int_to_ptr.hbm [resolvable:$true] %s228
      %s230 = sshll.u32 [#allocation13], 4
      %s231 = int_to_ptr.vmem [resolvable:$true] %s230
      %233 = dma.hbm_to_vmem [thread:$0]  %s229, 16, %s231, [#allocation12]
    $region69: #{informer_forward.1} parent=1 // pred_fallthru
      _
    // Predicated region
    $region70: #{informer_forward.1} parent=1 // pred_check
      _
    $region71: #{informer_forward.1} parent=1 // pred_check_branch
      %235 = sbr.rel (0) target = $region73
    $region72: #{informer_forward.1} parent=1 // pred_region
      %237 = vsyncadd [#allocation15], 0
      %s239 = sshll.u32 %s35, 4
      %s240 = int_to_ptr.hbm [resolvable:$true] %s239
      %s241 = sshll.u32 [#allocation14], 4
      %s242 = int_to_ptr.vmem [resolvable:$true] %s241
      %244 = dma.hbm_to_vmem [thread:$0]  %s240, 16, %s242, [#allocation15]
    $region73: #{informer_forward.1} parent=1 // pred_fallthru
      _
    // Predicated region
    $region74: #{informer_forward.1} parent=1 // pred_check
      _
    $region75: #{informer_forward.1} parent=1 // pred_check_branch
      %246 = sbr.rel (0) target = $region77
    $region76: #{informer_forward.1} parent=1 // pred_region
      %248 = vsyncadd [#allocation15], 0
      %s250 = sshll.u32 %s37, 4
      %s251 = int_to_ptr.hbm [resolvable:$true] %s250
      %s252 = sshll.u32 [#allocation16], 4
      %s253 = int_to_ptr.vmem [resolvable:$true] %s252
      %255 = dma.hbm_to_vmem [thread:$0]  %s251, 16, %s253, [#allocation15]
    $region77: #{informer_forward.1} parent=1 // pred_fallthru
      _
    // Predicated region
    $region78: #{informer_forward.1} parent=1 // pred_check
      _
    $region79: #{informer_forward.1} parent=1 // pred_check_branch
      %257 = sbr.rel (0) target = $region81
    $region80: #{informer_forward.1} parent=1 // pred_region
      %259 = vsyncadd [#allocation18], 0
      %s261 = sshll.u32 %s39, 4
      %s262 = int_to_ptr.hbm [resolvable:$true] %s261
      %s263 = sshll.u32 [#allocation17], 4
      %s264 = int_to_ptr.vmem [resolvable:$true] %s263
      %266 = dma.hbm_to_vmem [thread:$0]  %s262, 16, %s264, [#allocation18]
    $region81: #{informer_forward.1} parent=1 // pred_fallthru
      _
    // Predicated region
    $region82: #{informer_forward.1} parent=1 // pred_check
      _
    $region83: #{informer_forward.1} parent=1 // pred_check_branch
      %268 = sbr.rel (0) target = $region85
    $region84: #{informer_forward.1} parent=1 // pred_region
      %270 = vsyncadd [#allocation18], 0
      %s272 = sshll.u32 %s41, 4
      %s273 = int_to_ptr.hbm [resolvable:$true] %s272
      %s274 = sshll.u32 [#allocation19], 4
      %s275 = int_to_ptr.vmem [resolvable:$true] %s274
      %277 = dma.hbm_to_vmem [thread:$0]  %s273, 16, %s275, [#allocation18]
    $region85: #{informer_forward.1} parent=1 // pred_fallthru
      _
    // Predicated region
    $region86: #{informer_forward.1} parent=1 // pred_check
      _
    $region87: #{informer_forward.1} parent=1 // pred_check_branch
      %279 = sbr.rel (0) target = $region89
    $region88: #{informer_forward.1} parent=1 // pred_region
      _
    $region89: #{informer_forward.1} parent=1 // pred_fallthru
      _
    // Predicated region
    $region90: #{informer_forward.1} parent=1 // pred_check
      _
    $region91: #{informer_forward.1} parent=1 // pred_check_branch
      %281 = sbr.rel (0) target = $region93
    $region92: #{informer_forward.1} parent=1 // pred_region
      _
    $region93: #{informer_forward.1} parent=1 // pred_fallthru
      _
    // Predicated region
    $region94: #{informer_forward.1} parent=1 // pred_check
      _
    $region95: #{informer_forward.1} parent=1 // pred_check_branch
      %283 = sbr.rel (0) target = $region97
    $region96: #{informer_forward.1} parent=1 // pred_region
      %285 = vsyncadd [#allocation21], 0
      %s287 = sshll.u32 %s47, 4
      %s288 = int_to_ptr.hbm [resolvable:$true] %s287
      %s289 = sshll.u32 [#allocation20], 4
      %s290 = int_to_ptr.vmem [resolvable:$true] %s289
      %292 = dma.hbm_to_vmem [thread:$0]  %s288, 16, %s290, [#allocation21]
    $region97: #{informer_forward.1} parent=1 // pred_fallthru
      _
    // Predicated region
    $region98: #{informer_forward.1} parent=1 // pred_check
      _
    $region99: #{informer_forward.1} parent=1 // pred_check_branch
      %294 = sbr.rel (0) target = $region101
    $region100: #{informer_forward.1} parent=1 // pred_region
      %296 = vsyncadd [#allocation21], 0
      %s298 = sshll.u32 %s49, 4
      %s299 = int_to_ptr.hbm [resolvable:$true] %s298
      %s300 = sshll.u32 [#allocation22], 4
      %s301 = int_to_ptr.vmem [resolvable:$true] %s300
      %303 = dma.hbm_to_vmem [thread:$0]  %s299, 16, %s301, [#allocation21]
    $region101: #{informer_forward.1} parent=1 // pred_fallthru
      _
    // Predicated region
    $region102: #{informer_forward.1} parent=1 // pred_check
      _
    $region103: #{informer_forward.1} parent=1 // pred_check_branch
      %305 = sbr.rel (0) target = $region105
    $region104: #{informer_forward.1} parent=1 // pred_region
      %307 = vsyncadd [#allocation24], 0
      %s309 = sshll.u32 %s51, 4
      %s310 = int_to_ptr.hbm [resolvable:$true] %s309
      %s311 = sshll.u32 [#allocation23], 4
      %s312 = int_to_ptr.vmem [resolvable:$true] %s311
      %314 = dma.hbm_to_vmem [thread:$0]  %s310, 16, %s312, [#allocation24]
    $region105: #{informer_forward.1} parent=1 // pred_fallthru
      _
    // Predicated region
    $region106: #{informer_forward.1} parent=1 // pred_check
      _
    $region107: #{informer_forward.1} parent=1 // pred_check_branch
      %316 = sbr.rel (0) target = $region109
    $region108: #{informer_forward.1} parent=1 // pred_region
      %318 = vsyncadd [#allocation24], 0
      %s320 = sshll.u32 %s53, 4
      %s321 = int_to_ptr.hbm [resolvable:$true] %s320
      %s322 = sshll.u32 [#allocation25], 4
      %s323 = int_to_ptr.vmem [resolvable:$true] %s322
      %325 = dma.hbm_to_vmem [thread:$0]  %s321, 128, %s323, [#allocation24]
    $region109: #{informer_forward.1} parent=1 // pred_fallthru
      _
    // Predicated region
    $region110: #{informer_forward.1} parent=1 // pred_check
      _
    $region111: #{informer_forward.1} parent=1 // pred_check_branch
      %327 = sbr.rel (0) target = $region113
    $region112: #{informer_forward.1} parent=1 // pred_region
      %329 = vsyncadd [#allocation27], 0
      %s331 = sshll.u32 %s55, 4
      %s332 = int_to_ptr.hbm [resolvable:$true] %s331
      %s333 = sshll.u32 [#allocation26], 4
      %s334 = int_to_ptr.vmem [resolvable:$true] %s333
      %336 = dma.hbm_to_vmem [thread:$0]  %s332, 64, %s334, [#allocation27]
    $region113: #{informer_forward.1} parent=1 // pred_fallthru
      _
    // Predicated region
    $region114: #{informer_forward.1} parent=1 // pred_check
      _
    $region115: #{informer_forward.1} parent=1 // pred_check_branch
      %338 = sbr.rel (0) target = $region117
    $region116: #{informer_forward.1} parent=1 // pred_region
      %340 = vsyncadd [#allocation27], 0
      %s342 = sshll.u32 %s57, 4
      %s343 = int_to_ptr.hbm [resolvable:$true] %s342
      %s344 = sshll.u32 [#allocation28], 4
      %s345 = int_to_ptr.vmem [resolvable:$true] %s344
      %347 = dma.hbm_to_vmem [thread:$0]  %s343, 16, %s345, [#allocation27]
    $region117: #{informer_forward.1} parent=1 // pred_fallthru
      _
    // Predicated region
    $region118: #{informer_forward.1} parent=1 // pred_check
      _
    $region119: #{informer_forward.1} parent=1 // pred_check_branch
      %349 = sbr.rel (0) target = $region121
    $region120: #{informer_forward.1} parent=1 // pred_region
      %351 = vsyncadd [#allocation30], 0
      %s353 = sshll.u32 %s59, 4
      %s354 = int_to_ptr.hbm [resolvable:$true] %s353
      %s355 = sshll.u32 [#allocation29], 4
      %s356 = int_to_ptr.vmem [resolvable:$true] %s355
      %358 = dma.hbm_to_vmem [thread:$0]  %s354, 16, %s356, [#allocation30]
    $region121: #{informer_forward.1} parent=1 // pred_fallthru
      _
    // Predicated region
    $region122: #{informer_forward.1} parent=1 // pred_check
      _
    $region123: #{informer_forward.1} parent=1 // pred_check_branch
      %360 = sbr.rel (0) target = $region125
    $region124: #{informer_forward.1} parent=1 // pred_region
      _
    $region125: #{informer_forward.1} parent=1 // pred_fallthru
      _
    // Predicated region
    $region126: #{informer_forward.1} parent=1 // pred_check
      _
    $region127: #{informer_forward.1} parent=1 // pred_check_branch
      %362 = sbr.rel (0) target = $region129
    $region128: #{informer_forward.1} parent=1 // pred_region
      _
    $region129: #{informer_forward.1} parent=1 // pred_fallthru
      _
    // Predicated region
    $region130: #{informer_forward.1} parent=1 // pred_check
      _
    $region131: #{informer_forward.1} parent=1 // pred_check_branch
      %364 = sbr.rel (0) target = $region133
    $region132: #{informer_forward.1} parent=1 // pred_region
      %366 = vsyncadd [#allocation30], 0
      %s368 = sshll.u32 %s65, 4
      %s369 = int_to_ptr.hbm [resolvable:$true] %s368
      %s370 = sshll.u32 [#allocation31], 4
      %s371 = int_to_ptr.vmem [resolvable:$true] %s370
      %373 = dma.hbm_to_vmem [thread:$0]  %s369, 16, %s371, [#allocation30]
    $region133: #{informer_forward.1} parent=1 // pred_fallthru
      _
    // Predicated region
    $region134: #{informer_forward.1} parent=1 // pred_check
      _
    $region135: #{informer_forward.1} parent=1 // pred_check_branch
      %375 = sbr.rel (0) target = $region137
    $region136: #{informer_forward.1} parent=1 // pred_region
      %377 = vsyncadd [#allocation33], 0
      %s379 = sshll.u32 %s67, 4
      %s380 = int_to_ptr.hbm [resolvable:$true] %s379
      %s381 = sshll.u32 [#allocation32], 4
      %s382 = int_to_ptr.vmem [resolvable:$true] %s381
      %384 = dma.hbm_to_vmem [thread:$0]  %s380, 16, %s382, [#allocation33]
    $region137: #{informer_forward.1} parent=1 // pred_fallthru
      _
    // Predicated region
    $region138: #{informer_forward.1} parent=1 // pred_check
      _
    $region139: #{informer_forward.1} parent=1 // pred_check_branch
      %386 = sbr.rel (0) target = $region141
    $region140: #{informer_forward.1} parent=1 // pred_region
      _
    $region141: #{informer_forward.1} parent=1 // pred_fallthru
      _
    // Predicated region
    $region142: #{informer_forward.1} parent=1 // pred_check
      _
    $region143: #{informer_forward.1} parent=1 // pred_check_branch
      %388 = sbr.rel (0) target = $region145
    $region144: #{informer_forward.1} parent=1 // pred_region
      _
    $region145: #{informer_forward.1} parent=1 // pred_fallthru
      _
    // Predicated region
    $region146: #{informer_forward.1} parent=1 // pred_check
      _
    $region147: #{informer_forward.1} parent=1 // pred_check_branch
      %390 = sbr.rel (0) target = $region149
    $region148: #{informer_forward.1} parent=1 // pred_region
      %392 = vsyncadd [#allocation33], 0
      %s394 = sshll.u32 %s73, 4
      %s395 = int_to_ptr.hbm [resolvable:$true] %s394
      %s396 = sshll.u32 [#allocation34], 4
      %s397 = int_to_ptr.vmem [resolvable:$true] %s396
      %399 = dma.hbm_to_vmem [thread:$0]  %s395, 16, %s397, [#allocation33]
    $region149: #{informer_forward.1} parent=1 // pred_fallthru
      _
    // Predicated region
    $region150: #{informer_forward.1} parent=1 // pred_check
      _
    $region151: #{informer_forward.1} parent=1 // pred_check_branch
      %401 = sbr.rel (0) target = $region153
    $region152: #{informer_forward.1} parent=1 // pred_region
      %403 = vsyncadd [#allocation36], 0
      %s405 = sshll.u32 %s75, 4
      %s406 = int_to_ptr.hbm [resolvable:$true] %s405
      %s407 = sshll.u32 [#allocation35], 4
      %s408 = int_to_ptr.vmem [resolvable:$true] %s407
      %410 = dma.hbm_to_vmem [thread:$0]  %s406, 16, %s408, [#allocation36]
    $region153: #{informer_forward.1} parent=1 // pred_fallthru
      _
    // Predicated region
    $region154: #{informer_forward.1} parent=1 // pred_check
      _
    $region155: #{informer_forward.1} parent=1 // pred_check_branch
      %412 = sbr.rel (0) target = $region157
    $region156: #{informer_forward.1} parent=1 // pred_region
      %414 = vsyncadd [#allocation36], 0
      %s416 = sshll.u32 %s77, 4
      %s417 = int_to_ptr.hbm [resolvable:$true] %s416
      %s418 = sshll.u32 [#allocation37], 4
      %s419 = int_to_ptr.vmem [resolvable:$true] %s418
      %421 = dma.hbm_to_vmem [thread:$0]  %s417, 16, %s419, [#allocation36]
    $region157: #{informer_forward.1} parent=1 // pred_fallthru
      _
    // Predicated region
    $region158: #{informer_forward.1} parent=1 // pred_check
      _
    $region159: #{informer_forward.1} parent=1 // pred_check_branch
      %423 = sbr.rel (0) target = $region161
    $region160: #{informer_forward.1} parent=1 // pred_region
      %425 = vsyncadd [#allocation39], 0
      %s427 = sshll.u32 %s79, 4
      %s428 = int_to_ptr.hbm [resolvable:$true] %s427
      %s429 = sshll.u32 [#allocation38], 4
      %s430 = int_to_ptr.vmem [resolvable:$true] %s429
      %432 = dma.hbm_to_vmem [thread:$0]  %s428, 16, %s430, [#allocation39]
    $region161: #{informer_forward.1} parent=1 // pred_fallthru
      _
    // Predicated region
    $region162: #{informer_forward.1} parent=1 // pred_check
      _
    $region163: #{informer_forward.1} parent=1 // pred_check_branch
      %434 = sbr.rel (0) target = $region165
    $region164: #{informer_forward.1} parent=1 // pred_region
      %436 = vsyncadd [#allocation39], 0
      %s438 = sshll.u32 %s81, 4
      %s439 = int_to_ptr.hbm [resolvable:$true] %s438
      %s440 = sshll.u32 [#allocation40], 4
      %s441 = int_to_ptr.vmem [resolvable:$true] %s440
      %443 = dma.hbm_to_vmem [thread:$0]  %s439, 16, %s441, [#allocation39]
    $region165: #{informer_forward.1} parent=1 // pred_fallthru
      _
    // Predicated region
    $region166: #{informer_forward.1} parent=1 // pred_check
      _
    $region167: #{informer_forward.1} parent=1 // pred_check_branch
      %445 = sbr.rel (0) target = $region169
    $region168: #{informer_forward.1} parent=1 // pred_region
      %447 = vsyncadd [#allocation42], 0
      %s449 = sshll.u32 %s83, 4
      %s450 = int_to_ptr.hbm [resolvable:$true] %s449
      %s451 = sshll.u32 [#allocation41], 4
      %s452 = int_to_ptr.vmem [resolvable:$true] %s451
      %454 = dma.hbm_to_vmem [thread:$0]  %s450, 16, %s452, [#allocation42]
    $region169: #{informer_forward.1} parent=1 // pred_fallthru
      _
    // Predicated region
    $region170: #{informer_forward.1} parent=1 // pred_check
      _
    $region171: #{informer_forward.1} parent=1 // pred_check_branch
      %456 = sbr.rel (0) target = $region173
    $region172: #{informer_forward.1} parent=1 // pred_region
      %458 = vsyncadd [#allocation42], 0
      %s459 = sshll.u32 %s85, 4
      %s460 = int_to_ptr.hbm [resolvable:$true] %s459
      %s461 = sshll.u32 [#allocation43], 4
      %s462 = int_to_ptr.vmem [resolvable:$true] %s461
      %467 = dma.hbm_to_vmem [thread:$0]  %s460, 512, %s462, [#allocation42], 128, 128, 8
    $region173: #{informer_forward.1} parent=1 // pred_fallthru
      _
    // Predicated region
    $region174: #{informer_forward.1} parent=1 // pred_check
      _
    $region175: #{informer_forward.1} parent=1 // pred_check_branch
      %469 = sbr.rel (0) target = $region177
    $region176: #{informer_forward.1} parent=1 // pred_region
      %471 = vsyncadd [#allocation45], 0
      %s472 = sshll.u32 %s87, 4
      %s473 = int_to_ptr.hbm [resolvable:$true] %s472
      %s474 = sshll.u32 [#allocation44], 4
      %s475 = int_to_ptr.vmem [resolvable:$true] %s474
      %480 = dma.hbm_to_vmem [thread:$0]  %s473, 512, %s475, [#allocation45], 128, 128, 8
    $region177: #{informer_forward.1} parent=1 // pred_fallthru
      _
    // Predicated region
    $region178: #{informer_forward.1} parent=1 // pred_check
      _
    $region179: #{informer_forward.1} parent=1 // pred_check_branch
      %482 = sbr.rel (0) target = $region181
    $region180: #{informer_forward.1} parent=1 // pred_region
      %484 = vsyncadd [#allocation45], 0
      %s486 = sshll.u32 %s89, 4
      %s487 = int_to_ptr.hbm [resolvable:$true] %s486
      %s488 = sshll.u32 [#allocation46], 4
      %s489 = int_to_ptr.vmem [resolvable:$true] %s488
      %491 = dma.hbm_to_vmem [thread:$0]  %s487, 16, %s489, [#allocation45]
    $region181: #{informer_forward.1} parent=1 // pred_fallthru
      _
    // Predicated region
    $region182: #{informer_forward.1} parent=1 // pred_check
      _
    $region183: #{informer_forward.1} parent=1 // pred_check_branch
      %493 = sbr.rel (0) target = $region185
    $region184: #{informer_forward.1} parent=1 // pred_region
      %495 = vsyncadd [#allocation48], 0
      %s497 = sshll.u32 %s91, 4
      %s498 = int_to_ptr.hbm [resolvable:$true] %s497
      %s499 = sshll.u32 [#allocation47], 4
      %s500 = int_to_ptr.vmem [resolvable:$true] %s499
      %502 = dma.hbm_to_vmem [thread:$0]  %s498, 16, %s500, [#allocation48]
    $region185: #{informer_forward.1} parent=1 // pred_fallthru
      _
    // Predicated region
    $region186: #{informer_forward.1} parent=1 // pred_check
      _
    $region187: #{informer_forward.1} parent=1 // pred_check_branch
      %504 = sbr.rel (0) target = $region189
    $region188: #{informer_forward.1} parent=1 // pred_region
      _
    $region189: #{informer_forward.1} parent=1 // pred_fallthru
      _
    // Predicated region
    $region190: #{informer_forward.1} parent=1 // pred_check
      _
    $region191: #{informer_forward.1} parent=1 // pred_check_branch
      %506 = sbr.rel (0) target = $region193
    $region192: #{informer_forward.1} parent=1 // pred_region
      _
    $region193: #{informer_forward.1} parent=1 // pred_fallthru
      _
    // Predicated region
    $region194: #{informer_forward.1} parent=1 // pred_check
      _
    $region195: #{informer_forward.1} parent=1 // pred_check_branch
      %508 = sbr.rel (0) target = $region197
    $region196: #{informer_forward.1} parent=1 // pred_region
      %510 = vsyncadd [#allocation48], 0
      %s512 = sshll.u32 %s97, 4
      %s513 = int_to_ptr.hbm [resolvable:$true] %s512
      %s514 = sshll.u32 [#allocation49], 4
      %s515 = int_to_ptr.vmem [resolvable:$true] %s514
      %517 = dma.hbm_to_vmem [thread:$0]  %s513, 16, %s515, [#allocation48]
    $region197: #{informer_forward.1} parent=1 // pred_fallthru
      _
    // Predicated region
    $region198: #{informer_forward.1} parent=1 // pred_check
      _
    $region199: #{informer_forward.1} parent=1 // pred_check_branch
      %519 = sbr.rel (0) target = $region201
    $region200: #{informer_forward.1} parent=1 // pred_region
      %521 = vsyncadd [#allocation51], 0
      %s523 = sshll.u32 %s99, 4
      %s524 = int_to_ptr.hbm [resolvable:$true] %s523
      %s525 = sshll.u32 [#allocation50], 4
      %s526 = int_to_ptr.vmem [resolvable:$true] %s525
      %528 = dma.hbm_to_vmem [thread:$0]  %s524, 16, %s526, [#allocation51]
    $region201: #{informer_forward.1} parent=1 // pred_fallthru
      _
    // Predicated region
    $region202: #{informer_forward.1} parent=1 // pred_check
      _
    $region203: #{informer_forward.1} parent=1 // pred_check_branch
      %530 = sbr.rel (0) target = $region205
    $region204: #{informer_forward.1} parent=1 // pred_region
      _
    $region205: #{informer_forward.1} parent=1 // pred_fallthru
      _
    // Predicated region
    $region206: #{informer_forward.1} parent=1 // pred_check
      _
    $region207: #{informer_forward.1} parent=1 // pred_check_branch
      %532 = sbr.rel (0) target = $region209
    $region208: #{informer_forward.1} parent=1 // pred_region
      _
    $region209: #{informer_forward.1} parent=1 // pred_fallthru
      _
    // Predicated region
    $region210: #{informer_forward.1} parent=1 // pred_check
      _
    $region211: #{informer_forward.1} parent=1 // pred_check_branch
      %534 = sbr.rel (0) target = $region213
    $region212: #{informer_forward.1} parent=1 // pred_region
      _
    $region213: #{informer_forward.1} parent=1 // pred_fallthru
      _
    // Predicated region
    $region214: #{informer_forward.1} parent=1 // pred_check
      _
    $region215: #{informer_forward.1} parent=1 // pred_check_branch
      %536 = sbr.rel (0) target = $region217
    $region216: #{informer_forward.1} parent=1 // pred_region
      _
    $region217: #{informer_forward.1} parent=1 // pred_fallthru
      _
    // Predicated region
    $region218: #{informer_forward.1} parent=1 // pred_check
      _
    $region219: #{informer_forward.1} parent=1 // pred_check_branch
      %538 = sbr.rel (0) target = $region221
    $region220: #{informer_forward.1} parent=1 // pred_region
      _
    $region221: #{informer_forward.1} parent=1 // pred_fallthru
      _
    // Predicated region
    $region222: #{informer_forward.1} parent=1 // pred_check
      _
    $region223: #{informer_forward.1} parent=1 // pred_check_branch
      %540 = sbr.rel (0) target = $region225
    $region224: #{informer_forward.1} parent=1 // pred_region
      _
    $region225: #{informer_forward.1} parent=1 // pred_fallthru
      _
    // Predicated region
    $region226: #{informer_forward.1} parent=1 // pred_check
      _
    $region227: #{informer_forward.1} parent=1 // pred_check_branch
      %542 = sbr.rel (0) target = $region229
    $region228: #{informer_forward.1} parent=1 // pred_region
      %544 = dma.done [#allocation4], 16
    $region229: #{informer_forward.1} parent=1 // pred_fallthru
      _
    // Predicated region
    $region230: #{informer_forward.1} parent=1 // pred_check
      _
    $region231: #{informer_forward.1} parent=1 // pred_check_branch
      %546 = sbr.rel (0) target = $region233
    $region232: #{informer_forward.1} parent=1 // pred_region
      %548 = dma.done [#allocation6], 64
    $region233: #{informer_forward.1} parent=1 // pred_fallthru
      _
    // Predicated region
    $region234: #{informer_forward.1} parent=1 // pred_check
      _
    $region235: #{informer_forward.1} parent=1 // pred_check_branch
      %550 = sbr.rel (0) target = $region237
    $region236: #{informer_forward.1} parent=1 // pred_region
      %552 = dma.done [#allocation6], 16
    $region237: #{informer_forward.1} parent=1 // pred_fallthru
      _
    // Predicated region
    $region238: #{informer_forward.1} parent=1 // pred_check
      _
    $region239: #{informer_forward.1} parent=1 // pred_check_branch
      %554 = sbr.rel (0) target = $region241
    $region240: #{informer_forward.1} parent=1 // pred_region
      %556 = dma.done [#allocation9], 16
    $region241: #{informer_forward.1} parent=1 // pred_fallthru
      _
    // Predicated region
    $region242: #{informer_forward.1} parent=1 // pred_check
      _
    $region243: #{informer_forward.1} parent=1 // pred_check_branch
      %558 = sbr.rel (0) target = $region245
    $region244: #{informer_forward.1} parent=1 // pred_region
      %560 = dma.done [#allocation9], 16
    $region245: #{informer_forward.1} parent=1 // pred_fallthru
      _
    // Predicated region
    $region246: #{informer_forward.1} parent=1 // pred_check
      _
    $region247: #{informer_forward.1} parent=1 // pred_check_branch
      %562 = sbr.rel (0) target = $region249
    $region248: #{informer_forward.1} parent=1 // pred_region
      %564 = dma.done [#allocation12], 16
    $region249: #{informer_forward.1} parent=1 // pred_fallthru
      _
    // Predicated region
    $region250: #{informer_forward.1} parent=1 // pred_check
      _
    $region251: #{informer_forward.1} parent=1 // pred_check_branch
      %566 = sbr.rel (0) target = $region253
    $region252: #{informer_forward.1} parent=1 // pred_region
      %568 = dma.done [#allocation12], 16
    $region253: #{informer_forward.1} parent=1 // pred_fallthru
      _
    // Predicated region
    $region254: #{informer_forward.1} parent=1 // pred_check
      _
    $region255: #{informer_forward.1} parent=1 // pred_check_branch
      %570 = sbr.rel (0) target = $region257
    $region256: #{informer_forward.1} parent=1 // pred_region
      %572 = dma.done [#allocation15], 16
    $region257: #{informer_forward.1} parent=1 // pred_fallthru
      _
    // Predicated region
    $region258: #{informer_forward.1} parent=1 // pred_check
      _
    $region259: #{informer_forward.1} parent=1 // pred_check_branch
      %574 = sbr.rel (0) target = $region261
    $region260: #{informer_forward.1} parent=1 // pred_region
      %576 = dma.done [#allocation15], 16
    $region261: #{informer_forward.1} parent=1 // pred_fallthru
      _
    // Predicated region
    $region262: #{informer_forward.1} parent=1 // pred_check
      _
    $region263: #{informer_forward.1} parent=1 // pred_check_branch
      %578 = sbr.rel (0) target = $region265
    $region264: #{informer_forward.1} parent=1 // pred_region
      %580 = dma.done [#allocation18], 16
    $region265: #{informer_forward.1} parent=1 // pred_fallthru
      _
    // Predicated region
    $region266: #{informer_forward.1} parent=1 // pred_check
      _
    $region267: #{informer_forward.1} parent=1 // pred_check_branch
      %582 = sbr.rel (0) target = $region269
    $region268: #{informer_forward.1} parent=1 // pred_region
      %584 = dma.done [#allocation18], 16
    $region269: #{informer_forward.1} parent=1 // pred_fallthru
      _
    // Predicated region
    $region270: #{informer_forward.1} parent=1 // pred_check
      _
    $region271: #{informer_forward.1} parent=1 // pred_check_branch
      %586 = sbr.rel (0) target = $region273
    $region272: #{informer_forward.1} parent=1 // pred_region
      %588 = dma.done [#allocation21], 16
    $region273: #{informer_forward.1} parent=1 // pred_fallthru
      _
    // Predicated region
    $region274: #{informer_forward.1} parent=1 // pred_check
      _
    $region275: #{informer_forward.1} parent=1 // pred_check_branch
      %590 = sbr.rel (0) target = $region277
    $region276: #{informer_forward.1} parent=1 // pred_region
      %592 = dma.done [#allocation21], 16
    $region277: #{informer_forward.1} parent=1 // pred_fallthru
      _
    // Predicated region
    $region278: #{informer_forward.1} parent=1 // pred_check
      _
    $region279: #{informer_forward.1} parent=1 // pred_check_branch
      %594 = sbr.rel (0) target = $region281
    $region280: #{informer_forward.1} parent=1 // pred_region
      %596 = dma.done [#allocation24], 16
    $region281: #{informer_forward.1} parent=1 // pred_fallthru
      _
    // Predicated region
    $region282: #{informer_forward.1} parent=1 // pred_check
      _
    $region283: #{informer_forward.1} parent=1 // pred_check_branch
      %598 = sbr.rel (0) target = $region285
    $region284: #{informer_forward.1} parent=1 // pred_region
      %600 = dma.done [#allocation24], 128
    $region285: #{informer_forward.1} parent=1 // pred_fallthru
      _
    // Predicated region
    $region286: #{informer_forward.1} parent=1 // pred_check
      _
    $region287: #{informer_forward.1} parent=1 // pred_check_branch
      %602 = sbr.rel (0) target = $region289
    $region288: #{informer_forward.1} parent=1 // pred_region
      %604 = dma.done [#allocation27], 64
    $region289: #{informer_forward.1} parent=1 // pred_fallthru
      _
    // Predicated region
    $region290: #{informer_forward.1} parent=1 // pred_check
      _
    $region291: #{informer_forward.1} parent=1 // pred_check_branch
      %606 = sbr.rel (0) target = $region293
    $region292: #{informer_forward.1} parent=1 // pred_region
      %608 = dma.done [#allocation27], 16
    $region293: #{informer_forward.1} parent=1 // pred_fallthru
      _
    // Predicated region
    $region294: #{informer_forward.1} parent=1 // pred_check
      _
    $region295: #{informer_forward.1} parent=1 // pred_check_branch
      %610 = sbr.rel (0) target = $region297
    $region296: #{informer_forward.1} parent=1 // pred_region
      %612 = dma.done [#allocation30], 16
    $region297: #{informer_forward.1} parent=1 // pred_fallthru
      _
    // Predicated region
    $region298: #{informer_forward.1} parent=1 // pred_check
      _
    $region299: #{informer_forward.1} parent=1 // pred_check_branch
      %614 = sbr.rel (0) target = $region301
    $region300: #{informer_forward.1} parent=1 // pred_region
      %616 = dma.done [#allocation30], 16
    $region301: #{informer_forward.1} parent=1 // pred_fallthru
      _
    // Predicated region
    $region302: #{informer_forward.1} parent=1 // pred_check
      _
    $region303: #{informer_forward.1} parent=1 // pred_check_branch
      %618 = sbr.rel (0) target = $region305
    $region304: #{informer_forward.1} parent=1 // pred_region
      %620 = dma.done [#allocation33], 16
    $region305: #{informer_forward.1} parent=1 // pred_fallthru
      _
    // Predicated region
    $region306: #{informer_forward.1} parent=1 // pred_check
      _
    $region307: #{informer_forward.1} parent=1 // pred_check_branch
      %622 = sbr.rel (0) target = $region309
    $region308: #{informer_forward.1} parent=1 // pred_region
      %624 = dma.done [#allocation33], 16
    $region309: #{informer_forward.1} parent=1 // pred_fallthru
      _
    // Predicated region
    $region310: #{informer_forward.1} parent=1 // pred_check
      _
    $region311: #{informer_forward.1} parent=1 // pred_check_branch
      %626 = sbr.rel (0) target = $region313
    $region312: #{informer_forward.1} parent=1 // pred_region
      %628 = dma.done [#allocation36], 16
    $region313: #{informer_forward.1} parent=1 // pred_fallthru
      _
    // Predicated region
    $region314: #{informer_forward.1} parent=1 // pred_check
      _
    $region315: #{informer_forward.1} parent=1 // pred_check_branch
      %630 = sbr.rel (0) target = $region317
    $region316: #{informer_forward.1} parent=1 // pred_region
      %632 = dma.done [#allocation36], 16
    $region317: #{informer_forward.1} parent=1 // pred_fallthru
      _
    // Predicated region
    $region318: #{informer_forward.1} parent=1 // pred_check
      _
    $region319: #{informer_forward.1} parent=1 // pred_check_branch
      %634 = sbr.rel (0) target = $region321
    $region320: #{informer_forward.1} parent=1 // pred_region
      %636 = dma.done [#allocation39], 16
    $region321: #{informer_forward.1} parent=1 // pred_fallthru
      _
    // Predicated region
    $region322: #{informer_forward.1} parent=1 // pred_check
      _
    $region323: #{informer_forward.1} parent=1 // pred_check_branch
      %638 = sbr.rel (0) target = $region325
    $region324: #{informer_forward.1} parent=1 // pred_region
      %640 = dma.done [#allocation39], 16
    $region325: #{informer_forward.1} parent=1 // pred_fallthru
      _
    // Predicated region
    $region326: #{informer_forward.1} parent=1 // pred_check
      _
    $region327: #{informer_forward.1} parent=1 // pred_check_branch
      %642 = sbr.rel (0) target = $region329
    $region328: #{informer_forward.1} parent=1 // pred_region
      %644 = dma.done [#allocation42], 16
    $region329: #{informer_forward.1} parent=1 // pred_fallthru
      _
    // Predicated region
    $region330: #{informer_forward.1} parent=1 // pred_check
      _
    $region331: #{informer_forward.1} parent=1 // pred_check_branch
      %646 = sbr.rel (0) target = $region333
    $region332: #{informer_forward.1} parent=1 // pred_region
      %648 = dma.done [#allocation42], 512
    $region333: #{informer_forward.1} parent=1 // pred_fallthru
      _
    // Predicated region
    $region334: #{informer_forward.1} parent=1 // pred_check
      _
    $region335: #{informer_forward.1} parent=1 // pred_check_branch
      %650 = sbr.rel (0) target = $region337
    $region336: #{informer_forward.1} parent=1 // pred_region
      %652 = dma.done [#allocation45], 512
    $region337: #{informer_forward.1} parent=1 // pred_fallthru
      _
    // Predicated region
    $region338: #{informer_forward.1} parent=1 // pred_check
      _
    $region339: #{informer_forward.1} parent=1 // pred_check_branch
      %654 = sbr.rel (0) target = $region341
    $region340: #{informer_forward.1} parent=1 // pred_region
      %656 = dma.done [#allocation45], 16
    $region341: #{informer_forward.1} parent=1 // pred_fallthru
      _
    // Predicated region
    $region342: #{informer_forward.1} parent=1 // pred_check
      _
    $region343: #{informer_forward.1} parent=1 // pred_check_branch
      %658 = sbr.rel (0) target = $region345
    $region344: #{informer_forward.1} parent=1 // pred_region
      %660 = dma.done [#allocation48], 16
    $region345: #{informer_forward.1} parent=1 // pred_fallthru
      _
    // Predicated region
    $region346: #{informer_forward.1} parent=1 // pred_check
      _
    $region347: #{informer_forward.1} parent=1 // pred_check_branch
      %662 = sbr.rel (0) target = $region349
    $region348: #{informer_forward.1} parent=1 // pred_region
      %664 = dma.done [#allocation48], 16
    $region349: #{informer_forward.1} parent=1 // pred_fallthru
      _
    // Predicated region
    $region350: #{informer_forward.1} parent=1 // pred_check
      _
    $region351: #{informer_forward.1} parent=1 // pred_check_branch
      %666 = sbr.rel (0) target = $region353
    $region352: #{informer_forward.1} parent=1 // pred_region
      %668 = dma.done [#allocation51], 16
    $region353: #{informer_forward.1} parent=1 // pred_fallthru
      _
    %v669 = vld [vmem:[#allocation3] sm:$0x1]
    %v670 = vld [vmem:[%s7] sm:$0x1f]
    %v671 = vld [vmem:[#allocation5] sm:$0xf]
    %v672 = vld [vmem:[%s11] sm:$0x1]
    %v673 = vld [vmem:[%s13] sm:$0x1]
    %v674 = vld [vmem:[%s15] sm:$0xff]
    %v675 = vld [vmem:[%s15 + $0x8] sm:$0xff]
    %v676 = vld [vmem:[%s15 + $0x10] sm:$0xff]
    %v677 = vld [vmem:[%s15 + $0x18] sm:$0xff]
    %v678 = vld [vmem:[%s17] sm:$0xff]
    %v679 = vld [vmem:[%s17 + $0x8] sm:$0xff]
    %v680 = vld [vmem:[%s17 + $0x10] sm:$0xff]
    %v681 = vld [vmem:[%s17 + $0x18] sm:$0xff]
    %v682 = vld [vmem:[%s19] sm:$0x1]
    %v683 = vld [vmem:[#allocation7] sm:$0x1]
    %v684 = vld [vmem:[%s23] sm:$0xff]
    %v685 = vld [vmem:[%s23 + $0x8] sm:$0xff]
    %v686 = vld [vmem:[%s23 + $0x10] sm:$0xff]
    %v687 = vld [vmem:[%s23 + $0x18] sm:$0xff]
    %v688 = vld [vmem:[%s25] sm:$0xff]
    %v689 = vld [vmem:[%s25 + $0x8] sm:$0xff]
    %v690 = vld [vmem:[%s25 + $0x10] sm:$0xff]
    %v691 = vld [vmem:[%s25 + $0x18] sm:$0xff]
    %v692 = vld [vmem:[%s25 + $0x20] sm:$0xff]
    %v693 = vld [vmem:[%s25 + $0x28] sm:$0xff]
    %v694 = vld [vmem:[%s25 + $0x30] sm:$0xff]
    %v695 = vld [vmem:[%s25 + $0x38] sm:$0xff]
    %v696 = vld [vmem:[#allocation8] sm:$0x1]
    %v697 = vld [vmem:[#allocation10] sm:$0x1]
    %v698 = vld [vmem:[#allocation11] sm:$0x1]
    %v699 = vld [vmem:[#allocation13] sm:$0x1]
    %v700 = vld [vmem:[#allocation14] sm:$0x1]
    %v701 = vld [vmem:[#allocation16] sm:$0x1]
    %v702 = vld [vmem:[#allocation17] sm:$0x1]
    %v703 = vld [vmem:[#allocation19] sm:$0x1]
    %v704 = vld [vmem:[%s43] sm:$0xff]
    %v705 = vld [vmem:[%s43 + $0x8] sm:$0xff]
    %v706 = vld [vmem:[%s43 + $0x10] sm:$0xff]
    %v707 = vld [vmem:[%s43 + $0x18] sm:$0xff]
    %v708 = vld [vmem:[%s45] sm:$0xff]
    %v709 = vld [vmem:[%s45 + $0x8] sm:$0xff]
    %v710 = vld [vmem:[%s45 + $0x10] sm:$0xff]
    %v711 = vld [vmem:[%s45 + $0x18] sm:$0xff]
    %v712 = vld [vmem:[#allocation20] sm:$0x1]
    %v713 = vld [vmem:[#allocation22] sm:$0x1]
    %v714 = vld [vmem:[#allocation23] sm:$0x1]
    %v715 = vld [vmem:[#allocation25] sm:$0xff]
    %v716 = vld [vmem:[#allocation26] sm:$0xf]
    %v717 = vld [vmem:[#allocation28] sm:$0x1]
    %v718 = vld [vmem:[#allocation29] sm:$0x1]
    %v719 = vld [vmem:[%s61] sm:$0xff]
    %v720 = vld [vmem:[%s61 + $0x8] sm:$0xff]
    %v721 = vld [vmem:[%s61 + $0x10] sm:$0xff]
    %v722 = vld [vmem:[%s61 + $0x18] sm:$0xff]
    %v723 = vld [vmem:[%s63] sm:$0xff]
    %v724 = vld [vmem:[%s63 + $0x8] sm:$0xff]
    %v725 = vld [vmem:[%s63 + $0x10] sm:$0xff]
    %v726 = vld [vmem:[%s63 + $0x18] sm:$0xff]
    %v727 = vld [vmem:[#allocation31] sm:$0x1]
    %v728 = vld [vmem:[#allocation32] sm:$0x1]
    %v729 = vld [vmem:[%s69] sm:$0xff]
    %v730 = vld [vmem:[%s69 + $0x8] sm:$0xff]
    %v731 = vld [vmem:[%s69 + $0x10] sm:$0xff]
    %v732 = vld [vmem:[%s69 + $0x18] sm:$0xff]
    %v733 = vld [vmem:[%s71] sm:$0xff]
    %v734 = vld [vmem:[%s71 + $0x8] sm:$0xff]
    %v735 = vld [vmem:[%s71 + $0x10] sm:$0xff]
    %v736 = vld [vmem:[%s71 + $0x18] sm:$0xff]
    %v737 = vld [vmem:[%s71 + $0x20] sm:$0xff]
    %v738 = vld [vmem:[%s71 + $0x28] sm:$0xff]
    %v739 = vld [vmem:[%s71 + $0x30] sm:$0xff]
    %v740 = vld [vmem:[%s71 + $0x38] sm:$0xff]
    %v741 = vld [vmem:[#allocation34] sm:$0x1]
    %v742 = vld [vmem:[#allocation35] sm:$0x1]
    %v743 = vld [vmem:[#allocation37] sm:$0x1]
    %v744 = vld [vmem:[#allocation38] sm:$0x1]
    %v745 = vld [vmem:[#allocation40] sm:$0x1]
    %v746 = vld [vmem:[#allocation41] sm:$0x1]
    %v747 = vld [vmem:[#allocation43] sm:$0xff]
    %v748 = vld [vmem:[#allocation43 + $0x8] sm:$0xff]
    %v749 = vld [vmem:[#allocation43 + $0x10] sm:$0xff]
    %v750 = vld [vmem:[#allocation43 + $0x18] sm:$0xff]
    %v751 = vld [vmem:[#allocation44] sm:$0xff]
    %v752 = vld [vmem:[#allocation44 + $0x8] sm:$0xff]
    %v753 = vld [vmem:[#allocation44 + $0x10] sm:$0xff]
    %v754 = vld [vmem:[#allocation44 + $0x18] sm:$0xff]
    %v755 = vld [vmem:[#allocation46] sm:$0x1]
    %v756 = vld [vmem:[#allocation47] sm:$0x1]
    %v757 = vld [vmem:[%s93] sm:$0xff]
    %v758 = vld [vmem:[%s93 + $0x8] sm:$0xff]
    %v759 = vld [vmem:[%s93 + $0x10] sm:$0xff]
    %v760 = vld [vmem:[%s93 + $0x18] sm:$0xff]
    %v761 = vld [vmem:[%s95] sm:$0xff]
    %v762 = vld [vmem:[%s95 + $0x8] sm:$0xff]
    %v763 = vld [vmem:[%s95 + $0x10] sm:$0xff]
    %v764 = vld [vmem:[%s95 + $0x18] sm:$0xff]
    %v765 = vld [vmem:[%s95 + $0x20] sm:$0xff]
    %v766 = vld [vmem:[%s95 + $0x28] sm:$0xff]
    %v767 = vld [vmem:[%s95 + $0x30] sm:$0xff]
    %v768 = vld [vmem:[%s95 + $0x38] sm:$0xff]
    %v769 = vld [vmem:[#allocation49] sm:$0x1]
    %v770 = vld [vmem:[#allocation50] sm:$0x1]
    %v771 = vld [vmem:[%s101] sm:$0x1]
    %v772 = vld [vmem:[%s103] sm:$0x1]
    %v773 = vld [vmem:[%s105] sm:$0x1]
    %v774 = vld [vmem:[%s107] sm:$0x1]
    %v775 = vld [vmem:[#allocation2] sm:$0x1]
    %v776 = vld [vmem:[%s111] sm:$0xff]
    %v777 = vld [vmem:[%s111 + $0x8] sm:$0xff]
    %v778 = vld [vmem:[%s111 + $0x10] sm:$0xff]
    %v779 = vld [vmem:[%s111 + $0x18] sm:$0xff]
    %v780 = vlaneseq
    %v781 = vshrl.u32 %v780, 7
    %v782 = vlaneseq
    %v783 = vand.u32 %v782, 127
    %vm784 = vcmp.gt.s32.totalorder %v783, %v781
    %v785 = vld [vmem:[%s1] sm:$0xff]
    %v787 = vperm.slane %v714, 0
    %vm789 = vcmask 31744
    %v791 = vsel %vm789, %v785, 0
    %vm793 = vcmask 1043456
    %v795 = vsel %vm793, %v716, 0
    %797 = vmatpush.msra.mxu0 0.0
    %798 = vmatpush.msra.mxu0 0.0
    %799 = vmatpush.msra.mxu0 0.0
    %800 = vmatpush.msra.mxu0 0.0
    %801 = vmatpush.msra.mxu0 0.0
    %802 = vmatpush.msra.mxu0 0.0
    %803 = vmatpush.msra.mxu0 0.0
    %804 = vmatpush.msra.mxu0 0.0
    %805 = vmatpush.msra.mxu0 0.0
    %806 = vmatpush.msra.mxu0 0.0
    %807 = vmatpush.msra.mxu0 0.0
    %808 = vmatpush.msra.mxu0 0.0
    %809 = vmatpush.msra.mxu0 0.0
    %810 = vmatpush.msra.mxu0 0.0
    %811 = vmatpush.msra.mxu0 0.0
    %812 = vmatpush.msra.mxu0 %v795
    %813 = vmatmul.f32.gmra.mxu0 %v791
    %v814 = vpop.f32.mrf.mxu0
    %v815 = vadd.f32 %v787, %v814
    %816 = vdwg.mxu0
    %v817 = vadd.f32 %v815, %v715
    %v819 = vperm.slane %v718, 0
    %vm821 = vcmask 261120
    %v823 = vsel %vm821, %v817, 0
    %825 = vmatpush.msra.mxu0 0.0
    %826 = vmatpush.msra.mxu0 0.0
    %827 = vmatpush.msra.mxu0 0.0
    %828 = vmatpush.msra.mxu0 0.0
    %829 = vmatpush.msra.mxu0 0.0
    %830 = vmatpush.msra.mxu0 0.0
    %831 = vmatpush.msra.mxu0 0.0
    %832 = vmatpush.msra.mxu0 0.0
    %833 = vmatpush.msra.mxu0 0.0
    %834 = vmatpush.msra.mxu0 0.0
    %835 = vmatpush.msra.mxu0 0.0
    %836 = vmatpush.msra.mxu0 0.0
    %837 = vmatpush.msra.mxu0 %v726
    %838 = vmatpush.msra.mxu0 %v725
    %839 = vmatpush.msra.mxu0 %v724
    %840 = vmatpush.msra.mxu0 %v723
    %841 = vmatmul.f32.gmra.mxu0 %v823
    %v842 = vpop.f32.mrf.mxu0
    %v843 = vadd.f32 %v819, %v842
    %844 = vdwg.mxu0
    %846 = vrot.lane.b32.xlu0 %v843, 96
    %v847 = vpop.permute.xlu0 %846
    %vm848 = vcmask 64512
    %v849 = vsel %vm848, %v843, 0
    %v851 = vsel %vm848, %v847, 0
    %853 = vmatpush.xpose.msra.mxu0 0.0
    %854 = vmatpush.xpose.msra.mxu0 0.0
    %855 = vmatpush.xpose.msra.mxu0 0.0
    %856 = vmatpush.xpose.msra.mxu0 0.0
    %857 = vmatpush.xpose.msra.mxu0 0.0
    %858 = vmatpush.xpose.msra.mxu0 0.0
    %859 = vmatpush.xpose.msra.mxu0 0.0
    %860 = vmatpush.xpose.msra.mxu0 0.0
    %861 = vmatpush.xpose.msra.mxu0 0.0
    %862 = vmatpush.xpose.msra.mxu0 0.0
    %863 = vmatpush.xpose.msra.mxu0 0.0
    %864 = vmatpush.xpose.msra.mxu0 0.0
    %865 = vmatpush.xpose.msra.mxu0 0.0
    %866 = vmatpush.xpose.msra.mxu0 0.0
    %867 = vmatpush.xpose.msra.mxu0 0.0
    %868 = vmatpush.xpose.msra.mxu0 %v851
    %869 = vmatmul.f32.gmra.mxu0 %v849
    %v870 = vpop.f32.mrf.mxu0
    %v871 = vadd.f32 0.0, %v870
    %872 = vdwg.mxu0
    %v873 = vmul.f32 %v871, 0.35355338
    %v874 = vsel %vm848, %v873, -inf
    %875 = vmax.xlane.f32.xlu0 %v874
    %v876 = vpop.xlane.xlu0 %875
    %v877 = vsub.f32 %v873, %v876
    %v878 = vmul.f32 %v877, 1.442695
    %v879 = vpow.pop %v878
    %v880 = vsel %vm848, %v879, 0.0
    %881 = vadd.xlane.f32.xlu0 %v880
    %v882 = vpop.xlane.xlu0 %881
    %v883 = vrcp.pop %v882
    %v884 = vmul.f32 %v879, %v883
    %885 = vrot.lane.b32.xlu0 %v843, 64
    %v886 = vpop.permute.xlu0 %885
    %v889 = vsel %vm848, %v884, 0
    %891 = vmatpush.msra.mxu0 0.0
    %892 = vmatpush.msra.mxu0 0.0
    %893 = vmatpush.msra.mxu0 0.0
    %894 = vmatpush.msra.mxu0 0.0
    %895 = vmatpush.msra.mxu0 0.0
    %896 = vmatpush.msra.mxu0 0.0
    %897 = vmatpush.msra.mxu0 0.0
    %898 = vmatpush.msra.mxu0 0.0
    %899 = vmatpush.msra.mxu0 0.0
    %900 = vmatpush.msra.mxu0 0.0
    %901 = vmatpush.msra.mxu0 0.0
    %902 = vmatpush.msra.mxu0 0.0
    %903 = vmatpush.msra.mxu0 0.0
    %904 = vmatpush.msra.mxu0 0.0
    %905 = vmatpush.msra.mxu0 0.0
    %906 = vmatpush.msra.mxu0 %v886
    %907 = vmatmul.f32.gmra.mxu0 %v889
    %v908 = vpop.f32.mrf.mxu0
    %v909 = vadd.f32 0.0, %v908
    %910 = vdwg.mxu0
    %911 = vrot.lane.b32.xlu0 %v843, 120
    %v912 = vpop.permute.xlu0 %911
    %913 = vrot.lane.b32.xlu0 %v843, 88
    %v914 = vpop.permute.xlu0 %913
    %v915 = vsel %vm848, %v912, 0
    %v917 = vsel %vm848, %v914, 0
    %919 = vmatpush.xpose.msra.mxu0 0.0
    %920 = vmatpush.xpose.msra.mxu0 0.0
    %921 = vmatpush.xpose.msra.mxu0 0.0
    %922 = vmatpush.xpose.msra.mxu0 0.0
    %923 = vmatpush.xpose.msra.mxu0 0.0
    %924 = vmatpush.xpose.msra.mxu0 0.0
    %925 = vmatpush.xpose.msra.mxu0 0.0
    %926 = vmatpush.xpose.msra.mxu0 0.0
    %927 = vmatpush.xpose.msra.mxu0 0.0
    %928 = vmatpush.xpose.msra.mxu0 0.0
    %929 = vmatpush.xpose.msra.mxu0 0.0
    %930 = vmatpush.xpose.msra.mxu0 0.0
    %931 = vmatpush.xpose.msra.mxu0 0.0
    %932 = vmatpush.xpose.msra.mxu0 0.0
    %933 = vmatpush.xpose.msra.mxu0 0.0
    %934 = vmatpush.xpose.msra.mxu0 %v917
    %935 = vmatmul.f32.gmra.mxu0 %v915
    %v936 = vpop.f32.mrf.mxu0
    %v937 = vadd.f32 0.0, %v936
    %938 = vdwg.mxu0
    %v939 = vmul.f32 %v937, 0.35355338
    %v940 = vsel %vm848, %v939, -inf
    %941 = vmax.xlane.f32.xlu0 %v940
    %v942 = vpop.xlane.xlu0 %941
    %v943 = vsub.f32 %v939, %v942
    %v944 = vmul.f32 %v943, 1.442695
    %v945 = vpow.pop %v944
    %v946 = vsel %vm848, %v945, 0.0
    %947 = vadd.xlane.f32.xlu0 %v946
    %v948 = vpop.xlane.xlu0 %947
    %v949 = vrcp.pop %v948
    %v950 = vmul.f32 %v945, %v949
    %951 = vrot.lane.b32.xlu0 %v843, 56
    %v952 = vpop.permute.xlu0 %951
    %v955 = vsel %vm848, %v950, 0
    %957 = vmatpush.msra.mxu0 0.0
    %958 = vmatpush.msra.mxu0 0.0
    %959 = vmatpush.msra.mxu0 0.0
    %960 = vmatpush.msra.mxu0 0.0
    %961 = vmatpush.msra.mxu0 0.0
    %962 = vmatpush.msra.mxu0 0.0
    %963 = vmatpush.msra.mxu0 0.0
    %964 = vmatpush.msra.mxu0 0.0
    %965 = vmatpush.msra.mxu0 0.0
    %966 = vmatpush.msra.mxu0 0.0
    %967 = vmatpush.msra.mxu0 0.0
    %968 = vmatpush.msra.mxu0 0.0
    %969 = vmatpush.msra.mxu0 0.0
    %970 = vmatpush.msra.mxu0 0.0
    %971 = vmatpush.msra.mxu0 0.0
    %972 = vmatpush.msra.mxu0 %v952
    %973 = vmatmul.f32.gmra.mxu0 %v955
    %v974 = vpop.f32.mrf.mxu0
    %v975 = vadd.f32 0.0, %v974
    %976 = vdwg.mxu0
    %977 = vrot.lane.b32.xlu0 %v843, 112
    %v978 = vpop.permute.xlu0 %977
    %979 = vrot.lane.b32.xlu0 %v843, 80
    %v980 = vpop.permute.xlu0 %979
    %v981 = vsel %vm848, %v978, 0
    %v983 = vsel %vm848, %v980, 0
    %985 = vmatpush.xpose.msra.mxu0 0.0
    %986 = vmatpush.xpose.msra.mxu0 0.0
    %987 = vmatpush.xpose.msra.mxu0 0.0
    %988 = vmatpush.xpose.msra.mxu0 0.0
    %989 = vmatpush.xpose.msra.mxu0 0.0
    %990 = vmatpush.xpose.msra.mxu0 0.0
    %991 = vmatpush.xpose.msra.mxu0 0.0
    %992 = vmatpush.xpose.msra.mxu0 0.0
    %993 = vmatpush.xpose.msra.mxu0 0.0
    %994 = vmatpush.xpose.msra.mxu0 0.0
    %995 = vmatpush.xpose.msra.mxu0 0.0
    %996 = vmatpush.xpose.msra.mxu0 0.0
    %997 = vmatpush.xpose.msra.mxu0 0.0
    %998 = vmatpush.xpose.msra.mxu0 0.0
    %999 = vmatpush.xpose.msra.mxu0 0.0
    %1000 = vmatpush.xpose.msra.mxu0 %v983
    %1001 = vmatmul.f32.gmra.mxu0 %v981
    %v1002 = vpop.f32.mrf.mxu0
    %v1003 = vadd.f32 0.0, %v1002
    %1004 = vdwg.mxu0
    %v1005 = vmul.f32 %v1003, 0.35355338
    %v1006 = vsel %vm848, %v1005, -inf
    %1007 = vmax.xlane.f32.xlu0 %v1006
    %v1008 = vpop.xlane.xlu0 %1007
    %v1009 = vsub.f32 %v1005, %v1008
    %v1010 = vmul.f32 %v1009, 1.442695
    %v1011 = vpow.pop %v1010
    %v1012 = vsel %vm848, %v1011, 0.0
    %1013 = vadd.xlane.f32.xlu0 %v1012
    %v1014 = vpop.xlane.xlu0 %1013
    %v1015 = vrcp.pop %v1014
    %v1016 = vmul.f32 %v1011, %v1015
    %1017 = vrot.lane.b32.xlu0 %v843, 48
    %v1018 = vpop.permute.xlu0 %1017
    %v1021 = vsel %vm848, %v1016, 0
    %1023 = vmatpush.msra.mxu0 0.0
    %1024 = vmatpush.msra.mxu0 0.0
    %1025 = vmatpush.msra.mxu0 0.0
    %1026 = vmatpush.msra.mxu0 0.0
    %1027 = vmatpush.msra.mxu0 0.0
    %1028 = vmatpush.msra.mxu0 0.0
    %1029 = vmatpush.msra.mxu0 0.0
    %1030 = vmatpush.msra.mxu0 0.0
    %1031 = vmatpush.msra.mxu0 0.0
    %1032 = vmatpush.msra.mxu0 0.0
    %1033 = vmatpush.msra.mxu0 0.0
    %1034 = vmatpush.msra.mxu0 0.0
    %1035 = vmatpush.msra.mxu0 0.0
    %1036 = vmatpush.msra.mxu0 0.0
    %1037 = vmatpush.msra.mxu0 0.0
    %1038 = vmatpush.msra.mxu0 %v1018
    %1039 = vmatmul.f32.gmra.mxu0 %v1021
    %v1040 = vpop.f32.mrf.mxu0
    %v1041 = vadd.f32 0.0, %v1040
    %1042 = vdwg.mxu0
    %1043 = vrot.lane.b32.xlu0 %v843, 104
    %v1044 = vpop.permute.xlu0 %1043
    %1045 = vrot.lane.b32.xlu0 %v843, 72
    %v1046 = vpop.permute.xlu0 %1045
    %v1047 = vsel %vm848, %v1044, 0
    %v1049 = vsel %vm848, %v1046, 0
    %1051 = vmatpush.xpose.msra.mxu0 0.0
    %1052 = vmatpush.xpose.msra.mxu0 0.0
    %1053 = vmatpush.xpose.msra.mxu0 0.0
    %1054 = vmatpush.xpose.msra.mxu0 0.0
    %1055 = vmatpush.xpose.msra.mxu0 0.0
    %1056 = vmatpush.xpose.msra.mxu0 0.0
    %1057 = vmatpush.xpose.msra.mxu0 0.0
    %1058 = vmatpush.xpose.msra.mxu0 0.0
    %1059 = vmatpush.xpose.msra.mxu0 0.0
    %1060 = vmatpush.xpose.msra.mxu0 0.0
    %1061 = vmatpush.xpose.msra.mxu0 0.0
    %1062 = vmatpush.xpose.msra.mxu0 0.0
    %1063 = vmatpush.xpose.msra.mxu0 0.0
    %1064 = vmatpush.xpose.msra.mxu0 0.0
    %1065 = vmatpush.xpose.msra.mxu0 0.0
    %1066 = vmatpush.xpose.msra.mxu0 %v1049
    %1067 = vmatmul.f32.gmra.mxu0 %v1047
    %v1068 = vpop.f32.mrf.mxu0
    %v1069 = vadd.f32 0.0, %v1068
    %1070 = vdwg.mxu0
    %v1071 = vmul.f32 %v1069, 0.35355338
    %v1072 = vsel %vm848, %v1071, -inf
    %1073 = vmax.xlane.f32.xlu0 %v1072
    %v1074 = vpop.xlane.xlu0 %1073
    %v1075 = vsub.f32 %v1071, %v1074
    %v1076 = vmul.f32 %v1075, 1.442695
    %v1077 = vpow.pop %v1076
    %v1078 = vsel %vm848, %v1077, 0.0
    %1079 = vadd.xlane.f32.xlu0 %v1078
    %v1080 = vpop.xlane.xlu0 %1079
    %v1081 = vrcp.pop %v1080
    %v1082 = vmul.f32 %v1077, %v1081
    %1083 = vrot.lane.b32.xlu0 %v843, 40
    %v1084 = vpop.permute.xlu0 %1083
    %v1087 = vsel %vm848, %v1082, 0
    %1089 = vmatpush.msra.mxu0 0.0
    %1090 = vmatpush.msra.mxu0 0.0
    %1091 = vmatpush.msra.mxu0 0.0
    %1092 = vmatpush.msra.mxu0 0.0
    %1093 = vmatpush.msra.mxu0 0.0
    %1094 = vmatpush.msra.mxu0 0.0
    %1095 = vmatpush.msra.mxu0 0.0
    %1096 = vmatpush.msra.mxu0 0.0
    %1097 = vmatpush.msra.mxu0 0.0
    %1098 = vmatpush.msra.mxu0 0.0
    %1099 = vmatpush.msra.mxu0 0.0
    %1100 = vmatpush.msra.mxu0 0.0
    %1101 = vmatpush.msra.mxu0 0.0
    %1102 = vmatpush.msra.mxu0 0.0
    %1103 = vmatpush.msra.mxu0 0.0
    %1104 = vmatpush.msra.mxu0 %v1084
    %1105 = vmatmul.f32.gmra.mxu0 %v1087
    %v1106 = vpop.f32.mrf.mxu0
    %v1107 = vadd.f32 0.0, %v1106
    %1108 = vdwg.mxu0
    %1110 = vrot.lane.b32.xlu0 %v975, 8
    %v1111 = vpop.permute.xlu0 %1110
    %1114 = vrot.lane.b32.xlu0 %v1041, 16
    %v1115 = vpop.permute.xlu0 %1114
    %1118 = vrot.lane.b32.xlu0 %v1107, 24
    %v1119 = vpop.permute.xlu0 %1118
    %v1121 = vsel %vm848, %v909, %v1111
    %vm1122 = vcmask 130048
    %v1123 = vsel %vm1122, %v1121, %v1115
    %vm1124 = vcmask 195584
    %v1125 = vsel %vm1124, %v1123, %v1119
    %v1127 = vperm.slane %v717, 0
    %v1130 = vsel %vm821, %v1125, 0
    %1132 = vmatpush.msra.mxu0 0.0
    %1133 = vmatpush.msra.mxu0 0.0
    %1134 = vmatpush.msra.mxu0 0.0
    %1135 = vmatpush.msra.mxu0 0.0
    %1136 = vmatpush.msra.mxu0 0.0
    %1137 = vmatpush.msra.mxu0 0.0
    %1138 = vmatpush.msra.mxu0 0.0
    %1139 = vmatpush.msra.mxu0 0.0
    %1140 = vmatpush.msra.mxu0 0.0
    %1141 = vmatpush.msra.mxu0 0.0
    %1142 = vmatpush.msra.mxu0 0.0
    %1143 = vmatpush.msra.mxu0 0.0
    %1144 = vmatpush.msra.mxu0 %v722
    %1145 = vmatpush.msra.mxu0 %v721
    %1146 = vmatpush.msra.mxu0 %v720
    %1147 = vmatpush.msra.mxu0 %v719
    %1148 = vmatmul.f32.gmra.mxu0 %v1130
    %v1149 = vpop.f32.mrf.mxu0
    %v1150 = vadd.f32 %v1127, %v1149
    %1151 = vdwg.mxu0
    %v1152 = vadd.f32 %v817, %v1150
    %v1153 = vsel %vm821, %v1152, 0.0
    %1154 = vadd.xlane.f32.xlu0 %v1153
    %v1155 = vpop.xlane.xlu0 %1154
    %v1156 = vrcp.pop 32.0
    %v1157 = vmul.f32 32.0, %v1156
    %v1158 = vsub.f32 1.0, %v1157
    %v1159 = vmul.f32 %v1156, %v1158
    %v1160 = vadd.f32 %v1156, %v1159
    %vm1161 = vweird.f32 %v1156
    %v1162 = vsel %vm1161, %v1156, %v1160
    %v1163 = vmul.f32 %v1155, %v1162
    %v1164 = vsub.f32 %v1152, %v1163
    %v1165 = vmul.f32 %v1164, %v1164
    %v1166 = vsel %vm821, %v1165, 0.0
    %1167 = vadd.xlane.f32.xlu0 %v1166
    %v1168 = vpop.xlane.xlu0 %1167
    %v1169 = vmul.f32 %v1168, %v1162
    %v1170 = vadd.f32 %v1169, 1e-05
    %v1171 = vrsqrt.pop %v1170
    %v1172 = vmul.f32 %v1171, %v1170
    %v1173 = vmul.f32 %v1172, %v1171
    %v1174 = vmul.f32 0.5, %v1173
    %v1175 = vsub.f32 1.5, %v1174
    %v1176 = vmul.f32 %v1171, %v1175
    %vm1177 = vweird.f32 %v1170
    %vm1178 = vweird.f32 %v1171
    %vm1179 = vmor %vm1177, %vm1178
    %v1180 = vsel %vm1179, %v1171, %v1176
    %v1181 = vmul.f32 %v1164, %v1180
    %v1183 = vperm.slane %v742, 0
    %v1185 = vmul.f32 %v1181, %v1183
    %v1187 = vperm.slane %v741, 0
    %v1189 = vadd.f32 %v1185, %v1187
    %v1191 = vperm.slane %v727, 0
    %v1194 = vsel %vm821, %v1189, 0
    %1196 = vmatpush.msra.mxu0 0.0
    %1197 = vmatpush.msra.mxu0 0.0
    %1198 = vmatpush.msra.mxu0 0.0
    %1199 = vmatpush.msra.mxu0 0.0
    %1200 = vmatpush.msra.mxu0 0.0
    %1201 = vmatpush.msra.mxu0 0.0
    %1202 = vmatpush.msra.mxu0 0.0
    %1203 = vmatpush.msra.mxu0 0.0
    %1204 = vmatpush.msra.mxu0 0.0
    %1205 = vmatpush.msra.mxu0 0.0
    %1206 = vmatpush.msra.mxu0 0.0
    %1207 = vmatpush.msra.mxu0 0.0
    %1208 = vmatpush.msra.mxu0 %v732
    %1209 = vmatpush.msra.mxu0 %v731
    %1210 = vmatpush.msra.mxu0 %v730
    %1211 = vmatpush.msra.mxu0 %v729
    %1212 = vmatmul.f32.gmra.mxu0 %v1194
    %v1213 = vpop.f32.mrf.mxu0
    %v1214 = vadd.f32 %v1191, %v1213
    %1215 = vdwg.mxu0
    %v1216 = vmul.f32 %v1214, 0.5
    %v1217 = vmul.f32 %v1214, 0.70710677
    %vm1218 = vcmp.lt.f32.partialorder %v1217, 0.0
    %v1219 = vsel %vm1218, -1.0, 1.0
    %v1220 = vand.u32 2147483647, %v1217
    %v1221 = vmul.f32 %v1220, 0.3275911
    %v1222 = vadd.f32 %v1221, 1.0
    %v1223 = vrcp.pop %v1222
    %v1224 = vmul.f32 %v1222, %v1223
    %v1225 = vsub.f32 1.0, %v1224
    %v1226 = vmul.f32 %v1223, %v1225
    %v1227 = vadd.f32 %v1223, %v1226
    %vm1228 = vweird.f32 %v1222
    %vm1229 = vweird.f32 %v1223
    %vm1230 = vmor %vm1228, %vm1229
    %v1231 = vsel %vm1230, %v1223, %v1227
    %v1232 = vand.u32 2147483647, %v1222
    %vm1233 = vcmp.eq.f32.partialorder %v1232, 8.507059e+37
    %v1234 = vand.u32 %v1222, 2147483648
    %v1235 = vor.u32 1.1754944e-38, %v1234
    %v1236 = vsel %vm1233, %v1235, %v1231
    %v1237 = vmul.f32 1.0, %v1236
    %v1238 = vmul.f32 %v1237, 1.0614054
    %v1239 = vadd.f32 %v1238, -1.4531521
    %v1240 = vmul.f32 %v1239, %v1237
    %v1241 = vadd.f32 %v1240, 1.4214138
    %v1242 = vmul.f32 %v1241, %v1237
    %v1243 = vadd.f32 %v1242, -0.28449672
    %v1244 = vmul.f32 %v1243, %v1237
    %v1245 = vadd.f32 %v1244, 0.2548296
    %v1246 = vmul.f32 %v1245, %v1237
    %v1247 = vsub.f32 0.0, %v1220
    %v1248 = vmul.f32 %v1247, %v1220
    %v1249 = vmul.f32 %v1248, 1.442695
    %v1250 = vpow.pop %v1249
    %v1251 = vmul.f32 %v1246, %v1250
    %v1252 = vsub.f32 1.0, %v1251
    %v1253 = vmul.f32 %v1219, %v1252
    %v1254 = vadd.f32 %v1253, 1.0
    %v1255 = vmul.f32 %v1216, %v1254
    %v1257 = vperm.slane %v728, 0
    %vm1259 = vcmask 523264
    %v1261 = vsel %vm1259, %v1255, 0
    %1263 = vmatpush.msra.mxu0 0.0
    %1264 = vmatpush.msra.mxu0 0.0
    %1265 = vmatpush.msra.mxu0 0.0
    %1266 = vmatpush.msra.mxu0 0.0
    %1267 = vmatpush.msra.mxu0 0.0
    %1268 = vmatpush.msra.mxu0 0.0
    %1269 = vmatpush.msra.mxu0 0.0
    %1270 = vmatpush.msra.mxu0 0.0
    %1271 = vmatpush.msra.mxu0 %v740
    %1272 = vmatpush.msra.mxu0 %v739
    %1273 = vmatpush.msra.mxu0 %v738
    %1274 = vmatpush.msra.mxu0 %v737
    %1275 = vmatpush.msra.mxu0 %v736
    %1276 = vmatpush.msra.mxu0 %v735
    %1277 = vmatpush.msra.mxu0 %v734
    %1278 = vmatpush.msra.mxu0 %v733
    %1279 = vmatmul.f32.gmra.mxu0 %v1261
    %v1280 = vpop.f32.mrf.mxu0
    %v1281 = vadd.f32 %v1257, %v1280
    %1282 = vdwg.mxu0
    %v1283 = vadd.f32 %v1189, %v1281
    %v1284 = vsel %vm821, %v1283, 0.0
    %1285 = vadd.xlane.f32.xlu0 %v1284
    %v1286 = vpop.xlane.xlu0 %1285
    %v1287 = vmul.f32 %v1286, %v1162
    %v1288 = vsub.f32 %v1283, %v1287
    %v1289 = vmul.f32 %v1288, %v1288
    %v1290 = vsel %vm821, %v1289, 0.0
    %1291 = vadd.xlane.f32.xlu0 %v1290
    %v1292 = vpop.xlane.xlu0 %1291
    %v1293 = vmul.f32 %v1292, %v1162
    %v1294 = vadd.f32 %v1293, 1e-05
    %v1295 = vrsqrt.pop %v1294
    %v1296 = vmul.f32 %v1295, %v1294
    %v1297 = vmul.f32 %v1296, %v1295
    %v1298 = vmul.f32 0.5, %v1297
    %v1299 = vsub.f32 1.5, %v1298
    %v1300 = vmul.f32 %v1295, %v1299
    %vm1301 = vweird.f32 %v1294
    %vm1302 = vweird.f32 %v1295
    %vm1303 = vmor %vm1301, %vm1302
    %v1304 = vsel %vm1303, %v1295, %v1300
    %v1305 = vmul.f32 %v1288, %v1304
    %v1307 = vperm.slane %v744, 0
    %v1309 = vmul.f32 %v1305, %v1307
    %v1311 = vperm.slane %v743, 0
    %v1313 = vadd.f32 %v1309, %v1311
    %v1315 = vperm.slane %v746, 0
    %v1318 = vsel %vm821, %v1313, 0
    %1320 = vmatpush.msra.mxu0 0.0
    %1321 = vmatpush.msra.mxu0 0.0
    %1322 = vmatpush.msra.mxu0 0.0
    %1323 = vmatpush.msra.mxu0 0.0
    %1324 = vmatpush.msra.mxu0 0.0
    %1325 = vmatpush.msra.mxu0 0.0
    %1326 = vmatpush.msra.mxu0 0.0
    %1327 = vmatpush.msra.mxu0 0.0
    %1328 = vmatpush.msra.mxu0 0.0
    %1329 = vmatpush.msra.mxu0 0.0
    %1330 = vmatpush.msra.mxu0 0.0
    %1331 = vmatpush.msra.mxu0 0.0
    %1332 = vmatpush.msra.mxu0 %v754
    %1333 = vmatpush.msra.mxu0 %v753
    %1334 = vmatpush.msra.mxu0 %v752
    %1335 = vmatpush.msra.mxu0 %v751
    %1336 = vmatmul.f32.gmra.mxu0 %v1318
    %v1337 = vpop.f32.mrf.mxu0
    %v1338 = vadd.f32 %v1315, %v1337
    %1339 = vdwg.mxu0
    %1341 = vrot.lane.b32.xlu0 %v1338, 96
    %v1342 = vpop.permute.xlu0 %1341
    %v1343 = vsel %vm848, %v1338, 0
    %v1345 = vsel %vm848, %v1342, 0
    %1347 = vmatpush.xpose.msra.mxu0 0.0
    %1348 = vmatpush.xpose.msra.mxu0 0.0
    %1349 = vmatpush.xpose.msra.mxu0 0.0
    %1350 = vmatpush.xpose.msra.mxu0 0.0
    %1351 = vmatpush.xpose.msra.mxu0 0.0
    %1352 = vmatpush.xpose.msra.mxu0 0.0
    %1353 = vmatpush.xpose.msra.mxu0 0.0
    %1354 = vmatpush.xpose.msra.mxu0 0.0
    %1355 = vmatpush.xpose.msra.mxu0 0.0
    %1356 = vmatpush.xpose.msra.mxu0 0.0
    %1357 = vmatpush.xpose.msra.mxu0 0.0
    %1358 = vmatpush.xpose.msra.mxu0 0.0
    %1359 = vmatpush.xpose.msra.mxu0 0.0
    %1360 = vmatpush.xpose.msra.mxu0 0.0
    %1361 = vmatpush.xpose.msra.mxu0 0.0
    %1362 = vmatpush.xpose.msra.mxu0 %v1345
    %1363 = vmatmul.f32.gmra.mxu0 %v1343
    %v1364 = vpop.f32.mrf.mxu0
    %v1365 = vadd.f32 0.0, %v1364
    %1366 = vdwg.mxu0
    %v1367 = vmul.f32 %v1365, 0.35355338
    %v1368 = vsel %vm848, %v1367, -inf
    %1369 = vmax.xlane.f32.xlu0 %v1368
    %v1370 = vpop.xlane.xlu0 %1369
    %v1371 = vsub.f32 %v1367, %v1370
    %v1372 = vmul.f32 %v1371, 1.442695
    %v1373 = vpow.pop %v1372
    %v1374 = vsel %vm848, %v1373, 0.0
    %1375 = vadd.xlane.f32.xlu0 %v1374
    %v1376 = vpop.xlane.xlu0 %1375
    %v1377 = vrcp.pop %v1376
    %v1378 = vmul.f32 %v1373, %v1377
    %1379 = vrot.lane.b32.xlu0 %v1338, 64
    %v1380 = vpop.permute.xlu0 %1379
    %v1383 = vsel %vm848, %v1378, 0
    %1385 = vmatpush.msra.mxu0 0.0
    %1386 = vmatpush.msra.mxu0 0.0
    %1387 = vmatpush.msra.mxu0 0.0
    %1388 = vmatpush.msra.mxu0 0.0
    %1389 = vmatpush.msra.mxu0 0.0
    %1390 = vmatpush.msra.mxu0 0.0
    %1391 = vmatpush.msra.mxu0 0.0
    %1392 = vmatpush.msra.mxu0 0.0
    %1393 = vmatpush.msra.mxu0 0.0
    %1394 = vmatpush.msra.mxu0 0.0
    %1395 = vmatpush.msra.mxu0 0.0
    %1396 = vmatpush.msra.mxu0 0.0
    %1397 = vmatpush.msra.mxu0 0.0
    %1398 = vmatpush.msra.mxu0 0.0
    %1399 = vmatpush.msra.mxu0 0.0
    %1400 = vmatpush.msra.mxu0 %v1380
    %1401 = vmatmul.f32.gmra.mxu0 %v1383
    %v1402 = vpop.f32.mrf.mxu0
    %v1403 = vadd.f32 0.0, %v1402
    %1404 = vdwg.mxu0
    %1405 = vrot.lane.b32.xlu0 %v1338, 120
    %v1406 = vpop.permute.xlu0 %1405
    %1407 = vrot.lane.b32.xlu0 %v1338, 88
    %v1408 = vpop.permute.xlu0 %1407
    %v1409 = vsel %vm848, %v1406, 0
    %v1411 = vsel %vm848, %v1408, 0
    %1413 = vmatpush.xpose.msra.mxu0 0.0
    %1414 = vmatpush.xpose.msra.mxu0 0.0
    %1415 = vmatpush.xpose.msra.mxu0 0.0
    %1416 = vmatpush.xpose.msra.mxu0 0.0
    %1417 = vmatpush.xpose.msra.mxu0 0.0
    %1418 = vmatpush.xpose.msra.mxu0 0.0
    %1419 = vmatpush.xpose.msra.mxu0 0.0
    %1420 = vmatpush.xpose.msra.mxu0 0.0
    %1421 = vmatpush.xpose.msra.mxu0 0.0
    %1422 = vmatpush.xpose.msra.mxu0 0.0
    %1423 = vmatpush.xpose.msra.mxu0 0.0
    %1424 = vmatpush.xpose.msra.mxu0 0.0
    %1425 = vmatpush.xpose.msra.mxu0 0.0
    %1426 = vmatpush.xpose.msra.mxu0 0.0
    %1427 = vmatpush.xpose.msra.mxu0 0.0
    %1428 = vmatpush.xpose.msra.mxu0 %v1411
    %1429 = vmatmul.f32.gmra.mxu0 %v1409
    %v1430 = vpop.f32.mrf.mxu0
    %v1431 = vadd.f32 0.0, %v1430
    %1432 = vdwg.mxu0
    %v1433 = vmul.f32 %v1431, 0.35355338
    %v1434 = vsel %vm848, %v1433, -inf
    %1435 = vmax.xlane.f32.xlu0 %v1434
    %v1436 = vpop.xlane.xlu0 %1435
    %v1437 = vsub.f32 %v1433, %v1436
    %v1438 = vmul.f32 %v1437, 1.442695
    %v1439 = vpow.pop %v1438
    %v1440 = vsel %vm848, %v1439, 0.0
    %1441 = vadd.xlane.f32.xlu0 %v1440
    %v1442 = vpop.xlane.xlu0 %1441
    %v1443 = vrcp.pop %v1442
    %v1444 = vmul.f32 %v1439, %v1443
    %1445 = vrot.lane.b32.xlu0 %v1338, 56
    %v1446 = vpop.permute.xlu0 %1445
    %v1449 = vsel %vm848, %v1444, 0
    %1451 = vmatpush.msra.mxu0 0.0
    %1452 = vmatpush.msra.mxu0 0.0
    %1453 = vmatpush.msra.mxu0 0.0
    %1454 = vmatpush.msra.mxu0 0.0
    %1455 = vmatpush.msra.mxu0 0.0
    %1456 = vmatpush.msra.mxu0 0.0
    %1457 = vmatpush.msra.mxu0 0.0
    %1458 = vmatpush.msra.mxu0 0.0
    %1459 = vmatpush.msra.mxu0 0.0
    %1460 = vmatpush.msra.mxu0 0.0
    %1461 = vmatpush.msra.mxu0 0.0
    %1462 = vmatpush.msra.mxu0 0.0
    %1463 = vmatpush.msra.mxu0 0.0
    %1464 = vmatpush.msra.mxu0 0.0
    %1465 = vmatpush.msra.mxu0 0.0
    %1466 = vmatpush.msra.mxu0 %v1446
    %1467 = vmatmul.f32.gmra.mxu0 %v1449
    %v1468 = vpop.f32.mrf.mxu0
    %v1469 = vadd.f32 0.0, %v1468
    %1470 = vdwg.mxu0
    %1471 = vrot.lane.b32.xlu0 %v1338, 112
    %v1472 = vpop.permute.xlu0 %1471
    %1473 = vrot.lane.b32.xlu0 %v1338, 80
    %v1474 = vpop.permute.xlu0 %1473
    %v1475 = vsel %vm848, %v1472, 0
    %v1477 = vsel %vm848, %v1474, 0
    %1479 = vmatpush.xpose.msra.mxu0 0.0
    %1480 = vmatpush.xpose.msra.mxu0 0.0
    %1481 = vmatpush.xpose.msra.mxu0 0.0
    %1482 = vmatpush.xpose.msra.mxu0 0.0
    %1483 = vmatpush.xpose.msra.mxu0 0.0
    %1484 = vmatpush.xpose.msra.mxu0 0.0
    %1485 = vmatpush.xpose.msra.mxu0 0.0
    %1486 = vmatpush.xpose.msra.mxu0 0.0
    %1487 = vmatpush.xpose.msra.mxu0 0.0
    %1488 = vmatpush.xpose.msra.mxu0 0.0
    %1489 = vmatpush.xpose.msra.mxu0 0.0
    %1490 = vmatpush.xpose.msra.mxu0 0.0
    %1491 = vmatpush.xpose.msra.mxu0 0.0
    %1492 = vmatpush.xpose.msra.mxu0 0.0
    %1493 = vmatpush.xpose.msra.mxu0 0.0
    %1494 = vmatpush.xpose.msra.mxu0 %v1477
    %1495 = vmatmul.f32.gmra.mxu0 %v1475
    %v1496 = vpop.f32.mrf.mxu0
    %v1497 = vadd.f32 0.0, %v1496
    %1498 = vdwg.mxu0
    %v1499 = vmul.f32 %v1497, 0.35355338
    %v1500 = vsel %vm848, %v1499, -inf
    %1501 = vmax.xlane.f32.xlu0 %v1500
    %v1502 = vpop.xlane.xlu0 %1501
    %v1503 = vsub.f32 %v1499, %v1502
    %v1504 = vmul.f32 %v1503, 1.442695
    %v1505 = vpow.pop %v1504
    %v1506 = vsel %vm848, %v1505, 0.0
    %1507 = vadd.xlane.f32.xlu0 %v1506
    %v1508 = vpop.xlane.xlu0 %1507
    %v1509 = vrcp.pop %v1508
    %v1510 = vmul.f32 %v1505, %v1509
    %1511 = vrot.lane.b32.xlu0 %v1338, 48
    %v1512 = vpop.permute.xlu0 %1511
    %v1515 = vsel %vm848, %v1510, 0
    %1517 = vmatpush.msra.mxu0 0.0
    %1518 = vmatpush.msra.mxu0 0.0
    %1519 = vmatpush.msra.mxu0 0.0
    %1520 = vmatpush.msra.mxu0 0.0
    %1521 = vmatpush.msra.mxu0 0.0
    %1522 = vmatpush.msra.mxu0 0.0
    %1523 = vmatpush.msra.mxu0 0.0
    %1524 = vmatpush.msra.mxu0 0.0
    %1525 = vmatpush.msra.mxu0 0.0
    %1526 = vmatpush.msra.mxu0 0.0
    %1527 = vmatpush.msra.mxu0 0.0
    %1528 = vmatpush.msra.mxu0 0.0
    %1529 = vmatpush.msra.mxu0 0.0
    %1530 = vmatpush.msra.mxu0 0.0
    %1531 = vmatpush.msra.mxu0 0.0
    %1532 = vmatpush.msra.mxu0 %v1512
    %1533 = vmatmul.f32.gmra.mxu0 %v1515
    %v1534 = vpop.f32.mrf.mxu0
    %v1535 = vadd.f32 0.0, %v1534
    %1536 = vdwg.mxu0
    %1537 = vrot.lane.b32.xlu0 %v1338, 104
    %v1538 = vpop.permute.xlu0 %1537
    %1539 = vrot.lane.b32.xlu0 %v1338, 72
    %v1540 = vpop.permute.xlu0 %1539
    %v1541 = vsel %vm848, %v1538, 0
    %v1543 = vsel %vm848, %v1540, 0
    %1545 = vmatpush.xpose.msra.mxu0 0.0
    %1546 = vmatpush.xpose.msra.mxu0 0.0
    %1547 = vmatpush.xpose.msra.mxu0 0.0
    %1548 = vmatpush.xpose.msra.mxu0 0.0
    %1549 = vmatpush.xpose.msra.mxu0 0.0
    %1550 = vmatpush.xpose.msra.mxu0 0.0
    %1551 = vmatpush.xpose.msra.mxu0 0.0
    %1552 = vmatpush.xpose.msra.mxu0 0.0
    %1553 = vmatpush.xpose.msra.mxu0 0.0
    %1554 = vmatpush.xpose.msra.mxu0 0.0
    %1555 = vmatpush.xpose.msra.mxu0 0.0
    %1556 = vmatpush.xpose.msra.mxu0 0.0
    %1557 = vmatpush.xpose.msra.mxu0 0.0
    %1558 = vmatpush.xpose.msra.mxu0 0.0
    %1559 = vmatpush.xpose.msra.mxu0 0.0
    %1560 = vmatpush.xpose.msra.mxu0 %v1543
    %1561 = vmatmul.f32.gmra.mxu0 %v1541
    %v1562 = vpop.f32.mrf.mxu0
    %v1563 = vadd.f32 0.0, %v1562
    %1564 = vdwg.mxu0
    %v1565 = vmul.f32 %v1563, 0.35355338
    %v1566 = vsel %vm848, %v1565, -inf
    %1567 = vmax.xlane.f32.xlu0 %v1566
    %v1568 = vpop.xlane.xlu0 %1567
    %v1569 = vsub.f32 %v1565, %v1568
    %v1570 = vmul.f32 %v1569, 1.442695
    %v1571 = vpow.pop %v1570
    %v1572 = vsel %vm848, %v1571, 0.0
    %1573 = vadd.xlane.f32.xlu0 %v1572
    %v1574 = vpop.xlane.xlu0 %1573
    %v1575 = vrcp.pop %v1574
    %v1576 = vmul.f32 %v1571, %v1575
    %1577 = vrot.lane.b32.xlu0 %v1338, 40
    %v1578 = vpop.permute.xlu0 %1577
    %v1581 = vsel %vm848, %v1576, 0
    %1583 = vmatpush.msra.mxu0 0.0
    %1584 = vmatpush.msra.mxu0 0.0
    %1585 = vmatpush.msra.mxu0 0.0
    %1586 = vmatpush.msra.mxu0 0.0
    %1587 = vmatpush.msra.mxu0 0.0
    %1588 = vmatpush.msra.mxu0 0.0
    %1589 = vmatpush.msra.mxu0 0.0
    %1590 = vmatpush.msra.mxu0 0.0
    %1591 = vmatpush.msra.mxu0 0.0
    %1592 = vmatpush.msra.mxu0 0.0
    %1593 = vmatpush.msra.mxu0 0.0
    %1594 = vmatpush.msra.mxu0 0.0
    %1595 = vmatpush.msra.mxu0 0.0
    %1596 = vmatpush.msra.mxu0 0.0
    %1597 = vmatpush.msra.mxu0 0.0
    %1598 = vmatpush.msra.mxu0 %v1578
    %1599 = vmatmul.f32.gmra.mxu0 %v1581
    %v1600 = vpop.f32.mrf.mxu0
    %v1601 = vadd.f32 0.0, %v1600
    %1602 = vdwg.mxu0
    %1604 = vrot.lane.b32.xlu0 %v1469, 8
    %v1605 = vpop.permute.xlu0 %1604
    %1608 = vrot.lane.b32.xlu0 %v1535, 16
    %v1609 = vpop.permute.xlu0 %1608
    %1612 = vrot.lane.b32.xlu0 %v1601, 24
    %v1613 = vpop.permute.xlu0 %1612
    %v1615 = vsel %vm848, %v1403, %v1605
    %v1616 = vsel %vm1122, %v1615, %v1609
    %v1617 = vsel %vm1124, %v1616, %v1613
    %v1619 = vperm.slane %v745, 0
    %v1622 = vsel %vm821, %v1617, 0
    %1624 = vmatpush.msra.mxu0 0.0
    %1625 = vmatpush.msra.mxu0 0.0
    %1626 = vmatpush.msra.mxu0 0.0
    %1627 = vmatpush.msra.mxu0 0.0
    %1628 = vmatpush.msra.mxu0 0.0
    %1629 = vmatpush.msra.mxu0 0.0
    %1630 = vmatpush.msra.mxu0 0.0
    %1631 = vmatpush.msra.mxu0 0.0
    %1632 = vmatpush.msra.mxu0 0.0
    %1633 = vmatpush.msra.mxu0 0.0
    %1634 = vmatpush.msra.mxu0 0.0
    %1635 = vmatpush.msra.mxu0 0.0
    %1636 = vmatpush.msra.mxu0 %v750
    %1637 = vmatpush.msra.mxu0 %v749
    %1638 = vmatpush.msra.mxu0 %v748
    %1639 = vmatpush.msra.mxu0 %v747
    %1640 = vmatmul.f32.gmra.mxu0 %v1622
    %v1641 = vpop.f32.mrf.mxu0
    %v1642 = vadd.f32 %v1619, %v1641
    %1643 = vdwg.mxu0
    %v1644 = vadd.f32 %v1313, %v1642
    %v1645 = vsel %vm821, %v1644, 0.0
    %1646 = vadd.xlane.f32.xlu0 %v1645
    %v1647 = vpop.xlane.xlu0 %1646
    %v1648 = vmul.f32 %v1647, %v1162
    %v1649 = vsub.f32 %v1644, %v1648
    %v1650 = vmul.f32 %v1649, %v1649
    %v1651 = vsel %vm821, %v1650, 0.0
    %1652 = vadd.xlane.f32.xlu0 %v1651
    %v1653 = vpop.xlane.xlu0 %1652
    %v1654 = vmul.f32 %v1653, %v1162
    %v1655 = vadd.f32 %v1654, 1e-05
    %v1656 = vrsqrt.pop %v1655
    %v1657 = vmul.f32 %v1656, %v1655
    %v1658 = vmul.f32 %v1657, %v1656
    %v1659 = vmul.f32 0.5, %v1658
    %v1660 = vsub.f32 1.5, %v1659
    %v1661 = vmul.f32 %v1656, %v1660
    %vm1662 = vweird.f32 %v1655
    %vm1663 = vweird.f32 %v1656
    %vm1664 = vmor %vm1662, %vm1663
    %v1665 = vsel %vm1664, %v1656, %v1661
    %v1666 = vmul.f32 %v1649, %v1665
    %v1668 = vperm.slane %v770, 0
    %v1670 = vmul.f32 %v1666, %v1668
    %v1672 = vperm.slane %v769, 0
    %v1674 = vadd.f32 %v1670, %v1672
    %v1676 = vperm.slane %v755, 0
    %v1679 = vsel %vm821, %v1674, 0
    %1681 = vmatpush.msra.mxu0 0.0
    %1682 = vmatpush.msra.mxu0 0.0
    %1683 = vmatpush.msra.mxu0 0.0
    %1684 = vmatpush.msra.mxu0 0.0
    %1685 = vmatpush.msra.mxu0 0.0
    %1686 = vmatpush.msra.mxu0 0.0
    %1687 = vmatpush.msra.mxu0 0.0
    %1688 = vmatpush.msra.mxu0 0.0
    %1689 = vmatpush.msra.mxu0 0.0
    %1690 = vmatpush.msra.mxu0 0.0
    %1691 = vmatpush.msra.mxu0 0.0
    %1692 = vmatpush.msra.mxu0 0.0
    %1693 = vmatpush.msra.mxu0 %v760
    %1694 = vmatpush.msra.mxu0 %v759
    %1695 = vmatpush.msra.mxu0 %v758
    %1696 = vmatpush.msra.mxu0 %v757
    %1697 = vmatmul.f32.gmra.mxu0 %v1679
    %v1698 = vpop.f32.mrf.mxu0
    %v1699 = vadd.f32 %v1676, %v1698
    %1700 = vdwg.mxu0
    %v1701 = vmul.f32 %v1699, 0.5
    %v1702 = vmul.f32 %v1699, 0.70710677
    %vm1703 = vcmp.lt.f32.partialorder %v1702, 0.0
    %v1704 = vsel %vm1703, -1.0, 1.0
    %v1705 = vand.u32 2147483647, %v1702
    %v1706 = vmul.f32 %v1705, 0.3275911
    %v1707 = vadd.f32 %v1706, 1.0
    %v1708 = vrcp.pop %v1707
    %v1709 = vmul.f32 %v1707, %v1708
    %v1710 = vsub.f32 1.0, %v1709
    %v1711 = vmul.f32 %v1708, %v1710
    %v1712 = vadd.f32 %v1708, %v1711
    %vm1713 = vweird.f32 %v1707
    %vm1714 = vweird.f32 %v1708
    %vm1715 = vmor %vm1713, %vm1714
    %v1716 = vsel %vm1715, %v1708, %v1712
    %v1717 = vand.u32 2147483647, %v1707
    %vm1718 = vcmp.eq.f32.partialorder %v1717, 8.507059e+37
    %v1719 = vand.u32 %v1707, 2147483648
    %v1720 = vor.u32 1.1754944e-38, %v1719
    %v1721 = vsel %vm1718, %v1720, %v1716
    %v1722 = vmul.f32 1.0, %v1721
    %v1723 = vmul.f32 %v1722, 1.0614054
    %v1724 = vadd.f32 %v1723, -1.4531521
    %v1725 = vmul.f32 %v1724, %v1722
    %v1726 = vadd.f32 %v1725, 1.4214138
    %v1727 = vmul.f32 %v1726, %v1722
    %v1728 = vadd.f32 %v1727, -0.28449672
    %v1729 = vmul.f32 %v1728, %v1722
    %v1730 = vadd.f32 %v1729, 0.2548296
    %v1731 = vmul.f32 %v1730, %v1722
    %v1732 = vsub.f32 0.0, %v1705
    %v1733 = vmul.f32 %v1732, %v1705
    %v1734 = vmul.f32 %v1733, 1.442695
    %v1735 = vpow.pop %v1734
    %v1736 = vmul.f32 %v1731, %v1735
    %v1737 = vsub.f32 1.0, %v1736
    %v1738 = vmul.f32 %v1704, %v1737
    %v1739 = vadd.f32 %v1738, 1.0
    %v1740 = vmul.f32 %v1701, %v1739
    %v1742 = vperm.slane %v756, 0
    %v1745 = vsel %vm1259, %v1740, 0
    %1747 = vmatpush.msra.mxu0 0.0
    %1748 = vmatpush.msra.mxu0 0.0
    %1749 = vmatpush.msra.mxu0 0.0
    %1750 = vmatpush.msra.mxu0 0.0
    %1751 = vmatpush.msra.mxu0 0.0
    %1752 = vmatpush.msra.mxu0 0.0
    %1753 = vmatpush.msra.mxu0 0.0
    %1754 = vmatpush.msra.mxu0 0.0
    %1755 = vmatpush.msra.mxu0 %v768
    %1756 = vmatpush.msra.mxu0 %v767
    %1757 = vmatpush.msra.mxu0 %v766
    %1758 = vmatpush.msra.mxu0 %v765
    %1759 = vmatpush.msra.mxu0 %v764
    %1760 = vmatpush.msra.mxu0 %v763
    %1761 = vmatpush.msra.mxu0 %v762
    %1762 = vmatpush.msra.mxu0 %v761
    %1763 = vmatmul.f32.gmra.mxu0 %v1745
    %v1764 = vpop.f32.mrf.mxu0
    %v1765 = vadd.f32 %v1742, %v1764
    %1766 = vdwg.mxu0
    %v1767 = vadd.f32 %v1674, %v1765
    %v1768 = vsel %vm821, %v1767, 0.0
    %1769 = vadd.xlane.f32.xlu0 %v1768
    %v1770 = vpop.xlane.xlu0 %1769
    %v1771 = vmul.f32 %v1770, %v1162
    %v1772 = vsub.f32 %v1767, %v1771
    %v1773 = vmul.f32 %v1772, %v1772
    %v1774 = vsel %vm821, %v1773, 0.0
    %1775 = vadd.xlane.f32.xlu0 %v1774
    %v1776 = vpop.xlane.xlu0 %1775
    %v1777 = vmul.f32 %v1776, %v1162
    %v1778 = vadd.f32 %v1777, 1e-05
    %v1779 = vrsqrt.pop %v1778
    %v1780 = vmul.f32 %v1779, %v1778
    %v1781 = vmul.f32 %v1780, %v1779
    %v1782 = vmul.f32 0.5, %v1781
    %v1783 = vsub.f32 1.5, %v1782
    %v1784 = vmul.f32 %v1779, %v1783
    %vm1785 = vweird.f32 %v1778
    %vm1786 = vweird.f32 %v1779
    %vm1787 = vmor %vm1785, %vm1786
    %v1788 = vsel %vm1787, %v1779, %v1784
    %v1789 = vmul.f32 %v1772, %v1788
    %v1791 = vperm.slane %v772, 0
    %v1793 = vmul.f32 %v1789, %v1791
    %v1795 = vperm.slane %v771, 0
    %v1797 = vadd.f32 %v1793, %v1795
    %v1798 = vsel %vm821, %v1797, 0.0
    %1799 = vadd.xlane.f32.xlu0 %v1798
    %v1800 = vpop.xlane.xlu0 %1799
    %v1801 = vmul.f32 %v1800, %v1162
    %v1802 = vsub.f32 %v1797, %v1801
    %v1803 = vmul.f32 %v1802, %v1802
    %v1804 = vsel %vm821, %v1803, 0.0
    %1805 = vadd.xlane.f32.xlu0 %v1804
    %v1806 = vpop.xlane.xlu0 %1805
    %v1807 = vmul.f32 %v1806, %v1162
    %v1808 = vadd.f32 %v1807, 1e-05
    %v1809 = vrsqrt.pop %v1808
    %v1810 = vmul.f32 %v1809, %v1808
    %v1811 = vmul.f32 %v1810, %v1809
    %v1812 = vmul.f32 0.5, %v1811
    %v1813 = vsub.f32 1.5, %v1812
    %v1814 = vmul.f32 %v1809, %v1813
    %vm1815 = vweird.f32 %v1808
    %vm1816 = vweird.f32 %v1809
    %vm1817 = vmor %vm1815, %vm1816
    %v1818 = vsel %vm1817, %v1809, %v1814
    %v1819 = vmul.f32 %v1802, %v1818
    %v1821 = vperm.slane %v774, 0
    %v1823 = vmul.f32 %v1819, %v1821
    %v1825 = vperm.slane %v773, 0
    %v1827 = vadd.f32 %v1823, %v1825
    %v1828 = vld [vmem:[%s3] sm:$0x1f]
    %v1830 = vperm.slane %v669, 0
    %v1833 = vsel %vm789, %v1828, 0
    %v1836 = vsel %vm793, %v671, 0
    %1838 = vmatpush.msra.mxu0 0.0
    %1839 = vmatpush.msra.mxu0 0.0
    %1840 = vmatpush.msra.mxu0 0.0
    %1841 = vmatpush.msra.mxu0 0.0
    %1842 = vmatpush.msra.mxu0 0.0
    %1843 = vmatpush.msra.mxu0 0.0
    %1844 = vmatpush.msra.mxu0 0.0
    %1845 = vmatpush.msra.mxu0 0.0
    %1846 = vmatpush.msra.mxu0 0.0
    %1847 = vmatpush.msra.mxu0 0.0
    %1848 = vmatpush.msra.mxu0 0.0
    %1849 = vmatpush.msra.mxu0 0.0
    %1850 = vmatpush.msra.mxu0 0.0
    %1851 = vmatpush.msra.mxu0 0.0
    %1852 = vmatpush.msra.mxu0 0.0
    %1853 = vmatpush.msra.mxu0 %v1836
    %1854 = vmatmul.f32.gmra.mxu0 %v1833
    %v1855 = vpop.f32.mrf.mxu0
    %v1856 = vadd.f32 %v1830, %v1855
    %1857 = vdwg.mxu0
    %v1858 = vadd.f32 %v1856, %v670
    %v1860 = vperm.slane %v703, 0
    %v1863 = vsel %vm821, %v1858, 0
    %1865 = vmatpush.msra.mxu0 0.0
    %1866 = vmatpush.msra.mxu0 0.0
    %1867 = vmatpush.msra.mxu0 0.0
    %1868 = vmatpush.msra.mxu0 0.0
    %1869 = vmatpush.msra.mxu0 0.0
    %1870 = vmatpush.msra.mxu0 0.0
    %1871 = vmatpush.msra.mxu0 0.0
    %1872 = vmatpush.msra.mxu0 0.0
    %1873 = vmatpush.msra.mxu0 0.0
    %1874 = vmatpush.msra.mxu0 0.0
    %1875 = vmatpush.msra.mxu0 0.0
    %1876 = vmatpush.msra.mxu0 0.0
    %1877 = vmatpush.msra.mxu0 %v711
    %1878 = vmatpush.msra.mxu0 %v710
    %1879 = vmatpush.msra.mxu0 %v709
    %1880 = vmatpush.msra.mxu0 %v708
    %1881 = vmatmul.f32.gmra.mxu0 %v1863
    %v1882 = vpop.f32.mrf.mxu0
    %v1883 = vadd.f32 %v1860, %v1882
    %1884 = vdwg.mxu0
    %1886 = vrot.lane.b32.xlu0 %v1883, 96
    %v1887 = vpop.permute.xlu0 %1886
    %v1888 = vsel %vm848, %v1883, 0
    %v1890 = vsel %vm848, %v1887, 0
    %1892 = vmatpush.xpose.msra.mxu0 0.0
    %1893 = vmatpush.xpose.msra.mxu0 0.0
    %1894 = vmatpush.xpose.msra.mxu0 0.0
    %1895 = vmatpush.xpose.msra.mxu0 0.0
    %1896 = vmatpush.xpose.msra.mxu0 0.0
    %1897 = vmatpush.xpose.msra.mxu0 0.0
    %1898 = vmatpush.xpose.msra.mxu0 0.0
    %1899 = vmatpush.xpose.msra.mxu0 0.0
    %1900 = vmatpush.xpose.msra.mxu0 0.0
    %1901 = vmatpush.xpose.msra.mxu0 0.0
    %1902 = vmatpush.xpose.msra.mxu0 0.0
    %1903 = vmatpush.xpose.msra.mxu0 0.0
    %1904 = vmatpush.xpose.msra.mxu0 0.0
    %1905 = vmatpush.xpose.msra.mxu0 0.0
    %1906 = vmatpush.xpose.msra.mxu0 0.0
    %1907 = vmatpush.xpose.msra.mxu0 %v1890
    %1908 = vmatmul.f32.gmra.mxu0 %v1888
    %v1909 = vpop.f32.mrf.mxu0
    %v1910 = vadd.f32 0.0, %v1909
    %1911 = vdwg.mxu0
    %v1912 = vmul.f32 %v1910, 0.35355338
    %v1913 = vsel %vm784, -inf, %v1912
    %vm1914 = vcmask 36864
    %v1915 = vsel %vm1914, %v1913, -inf
    %1916 = vmax.xlane.f32.xlu0 %v1915
    %v1917 = vpop.xlane.xlu0 %1916
    %v1918 = vsub.f32 %v1913, %v1917
    %v1919 = vmul.f32 %v1918, 1.442695
    %v1920 = vpow.pop %v1919
    %v1921 = vsel %vm1914, %v1920, 0.0
    %1922 = vadd.xlane.f32.xlu0 %v1921
    %v1923 = vpop.xlane.xlu0 %1922
    %v1924 = vrcp.pop %v1923
    %v1925 = vmul.f32 %v1920, %v1924
    %1926 = vrot.lane.b32.xlu0 %v1883, 64
    %v1927 = vpop.permute.xlu0 %1926
    %vm1928 = vcmask 39936
    %v1930 = vsel %vm1928, %v1925, 0
    %vm1932 = vcmask 1044480
    %v1933 = vsel %vm1932, %v1927, 0
    %1935 = vmatpush.msra.mxu0 0.0
    %1936 = vmatpush.msra.mxu0 0.0
    %1937 = vmatpush.msra.mxu0 0.0
    %1938 = vmatpush.msra.mxu0 0.0
    %1939 = vmatpush.msra.mxu0 0.0
    %1940 = vmatpush.msra.mxu0 0.0
    %1941 = vmatpush.msra.mxu0 0.0
    %1942 = vmatpush.msra.mxu0 0.0
    %1943 = vmatpush.msra.mxu0 0.0
    %1944 = vmatpush.msra.mxu0 0.0
    %1945 = vmatpush.msra.mxu0 0.0
    %1946 = vmatpush.msra.mxu0 0.0
    %1947 = vmatpush.msra.mxu0 0.0
    %1948 = vmatpush.msra.mxu0 0.0
    %1949 = vmatpush.msra.mxu0 0.0
    %1950 = vmatpush.msra.mxu0 %v1933
    %1951 = vmatmul.f32.gmra.mxu0 %v1930
    %v1952 = vpop.f32.mrf.mxu0
    %v1953 = vadd.f32 0.0, %v1952
    %1954 = vdwg.mxu0
    %1955 = vrot.lane.b32.xlu0 %v1883, 120
    %v1956 = vpop.permute.xlu0 %1955
    %1957 = vrot.lane.b32.xlu0 %v1883, 88
    %v1958 = vpop.permute.xlu0 %1957
    %v1959 = vsel %vm848, %v1956, 0
    %v1961 = vsel %vm848, %v1958, 0
    %1963 = vmatpush.xpose.msra.mxu0 0.0
    %1964 = vmatpush.xpose.msra.mxu0 0.0
    %1965 = vmatpush.xpose.msra.mxu0 0.0
    %1966 = vmatpush.xpose.msra.mxu0 0.0
    %1967 = vmatpush.xpose.msra.mxu0 0.0
    %1968 = vmatpush.xpose.msra.mxu0 0.0
    %1969 = vmatpush.xpose.msra.mxu0 0.0
    %1970 = vmatpush.xpose.msra.mxu0 0.0
    %1971 = vmatpush.xpose.msra.mxu0 0.0
    %1972 = vmatpush.xpose.msra.mxu0 0.0
    %1973 = vmatpush.xpose.msra.mxu0 0.0
    %1974 = vmatpush.xpose.msra.mxu0 0.0
    %1975 = vmatpush.xpose.msra.mxu0 0.0
    %1976 = vmatpush.xpose.msra.mxu0 0.0
    %1977 = vmatpush.xpose.msra.mxu0 0.0
    %1978 = vmatpush.xpose.msra.mxu0 %v1961
    %1979 = vmatmul.f32.gmra.mxu0 %v1959
    %v1980 = vpop.f32.mrf.mxu0
    %v1981 = vadd.f32 0.0, %v1980
    %1982 = vdwg.mxu0
    %v1983 = vmul.f32 %v1981, 0.35355338
    %v1984 = vsel %vm784, -inf, %v1983
    %v1985 = vsel %vm1914, %v1984, -inf
    %1986 = vmax.xlane.f32.xlu0 %v1985
    %v1987 = vpop.xlane.xlu0 %1986
    %v1988 = vsub.f32 %v1984, %v1987
    %v1989 = vmul.f32 %v1988, 1.442695
    %v1990 = vpow.pop %v1989
    %v1991 = vsel %vm1914, %v1990, 0.0
    %1992 = vadd.xlane.f32.xlu0 %v1991
    %v1993 = vpop.xlane.xlu0 %1992
    %v1994 = vrcp.pop %v1993
    %v1995 = vmul.f32 %v1990, %v1994
    %1996 = vrot.lane.b32.xlu0 %v1883, 56
    %v1997 = vpop.permute.xlu0 %1996
    %v1999 = vsel %vm1928, %v1995, 0
    %v2001 = vsel %vm1932, %v1997, 0
    %2003 = vmatpush.msra.mxu0 0.0
    %2004 = vmatpush.msra.mxu0 0.0
    %2005 = vmatpush.msra.mxu0 0.0
    %2006 = vmatpush.msra.mxu0 0.0
    %2007 = vmatpush.msra.mxu0 0.0
    %2008 = vmatpush.msra.mxu0 0.0
    %2009 = vmatpush.msra.mxu0 0.0
    %2010 = vmatpush.msra.mxu0 0.0
    %2011 = vmatpush.msra.mxu0 0.0
    %2012 = vmatpush.msra.mxu0 0.0
    %2013 = vmatpush.msra.mxu0 0.0
    %2014 = vmatpush.msra.mxu0 0.0
    %2015 = vmatpush.msra.mxu0 0.0
    %2016 = vmatpush.msra.mxu0 0.0
    %2017 = vmatpush.msra.mxu0 0.0
    %2018 = vmatpush.msra.mxu0 %v2001
    %2019 = vmatmul.f32.gmra.mxu0 %v1999
    %v2020 = vpop.f32.mrf.mxu0
    %v2021 = vadd.f32 0.0, %v2020
    %2022 = vdwg.mxu0
    %2023 = vrot.lane.b32.xlu0 %v1883, 112
    %v2024 = vpop.permute.xlu0 %2023
    %2025 = vrot.lane.b32.xlu0 %v1883, 80
    %v2026 = vpop.permute.xlu0 %2025
    %v2027 = vsel %vm848, %v2024, 0
    %v2029 = vsel %vm848, %v2026, 0
    %2031 = vmatpush.xpose.msra.mxu0 0.0
    %2032 = vmatpush.xpose.msra.mxu0 0.0
    %2033 = vmatpush.xpose.msra.mxu0 0.0
    %2034 = vmatpush.xpose.msra.mxu0 0.0
    %2035 = vmatpush.xpose.msra.mxu0 0.0
    %2036 = vmatpush.xpose.msra.mxu0 0.0
    %2037 = vmatpush.xpose.msra.mxu0 0.0
    %2038 = vmatpush.xpose.msra.mxu0 0.0
    %2039 = vmatpush.xpose.msra.mxu0 0.0
    %2040 = vmatpush.xpose.msra.mxu0 0.0
    %2041 = vmatpush.xpose.msra.mxu0 0.0
    %2042 = vmatpush.xpose.msra.mxu0 0.0
    %2043 = vmatpush.xpose.msra.mxu0 0.0
    %2044 = vmatpush.xpose.msra.mxu0 0.0
    %2045 = vmatpush.xpose.msra.mxu0 0.0
    %2046 = vmatpush.xpose.msra.mxu0 %v2029
    %2047 = vmatmul.f32.gmra.mxu0 %v2027
    %v2048 = vpop.f32.mrf.mxu0
    %v2049 = vadd.f32 0.0, %v2048
    %2050 = vdwg.mxu0
    %v2051 = vmul.f32 %v2049, 0.35355338
    %v2052 = vsel %vm784, -inf, %v2051
    %v2053 = vsel %vm1914, %v2052, -inf
    %2054 = vmax.xlane.f32.xlu0 %v2053
    %v2055 = vpop.xlane.xlu0 %2054
    %v2056 = vsub.f32 %v2052, %v2055
    %v2057 = vmul.f32 %v2056, 1.442695
    %v2058 = vpow.pop %v2057
    %v2059 = vsel %vm1914, %v2058, 0.0
    %2060 = vadd.xlane.f32.xlu0 %v2059
    %v2061 = vpop.xlane.xlu0 %2060
    %v2062 = vrcp.pop %v2061
    %v2063 = vmul.f32 %v2058, %v2062
    %2064 = vrot.lane.b32.xlu0 %v1883, 48
    %v2065 = vpop.permute.xlu0 %2064
    %v2067 = vsel %vm1928, %v2063, 0
    %v2069 = vsel %vm1932, %v2065, 0
    %2071 = vmatpush.msra.mxu0 0.0
    %2072 = vmatpush.msra.mxu0 0.0
    %2073 = vmatpush.msra.mxu0 0.0
    %2074 = vmatpush.msra.mxu0 0.0
    %2075 = vmatpush.msra.mxu0 0.0
    %2076 = vmatpush.msra.mxu0 0.0
    %2077 = vmatpush.msra.mxu0 0.0
    %2078 = vmatpush.msra.mxu0 0.0
    %2079 = vmatpush.msra.mxu0 0.0
    %2080 = vmatpush.msra.mxu0 0.0
    %2081 = vmatpush.msra.mxu0 0.0
    %2082 = vmatpush.msra.mxu0 0.0
    %2083 = vmatpush.msra.mxu0 0.0
    %2084 = vmatpush.msra.mxu0 0.0
    %2085 = vmatpush.msra.mxu0 0.0
    %2086 = vmatpush.msra.mxu0 %v2069
    %2087 = vmatmul.f32.gmra.mxu0 %v2067
    %v2088 = vpop.f32.mrf.mxu0
    %v2089 = vadd.f32 0.0, %v2088
    %2090 = vdwg.mxu0
    %2091 = vrot.lane.b32.xlu0 %v1883, 104
    %v2092 = vpop.permute.xlu0 %2091
    %2093 = vrot.lane.b32.xlu0 %v1883, 72
    %v2094 = vpop.permute.xlu0 %2093
    %v2095 = vsel %vm848, %v2092, 0
    %v2097 = vsel %vm848, %v2094, 0
    %2099 = vmatpush.xpose.msra.mxu0 0.0
    %2100 = vmatpush.xpose.msra.mxu0 0.0
    %2101 = vmatpush.xpose.msra.mxu0 0.0
    %2102 = vmatpush.xpose.msra.mxu0 0.0
    %2103 = vmatpush.xpose.msra.mxu0 0.0
    %2104 = vmatpush.xpose.msra.mxu0 0.0
    %2105 = vmatpush.xpose.msra.mxu0 0.0
    %2106 = vmatpush.xpose.msra.mxu0 0.0
    %2107 = vmatpush.xpose.msra.mxu0 0.0
    %2108 = vmatpush.xpose.msra.mxu0 0.0
    %2109 = vmatpush.xpose.msra.mxu0 0.0
    %2110 = vmatpush.xpose.msra.mxu0 0.0
    %2111 = vmatpush.xpose.msra.mxu0 0.0
    %2112 = vmatpush.xpose.msra.mxu0 0.0
    %2113 = vmatpush.xpose.msra.mxu0 0.0
    %2114 = vmatpush.xpose.msra.mxu0 %v2097
    %2115 = vmatmul.f32.gmra.mxu0 %v2095
    %v2116 = vpop.f32.mrf.mxu0
    %v2117 = vadd.f32 0.0, %v2116
    %2118 = vdwg.mxu0
    %v2119 = vmul.f32 %v2117, 0.35355338
    %v2120 = vsel %vm784, -inf, %v2119
    %v2121 = vsel %vm1914, %v2120, -inf
    %2122 = vmax.xlane.f32.xlu0 %v2121
    %v2123 = vpop.xlane.xlu0 %2122
    %v2124 = vsub.f32 %v2120, %v2123
    %v2125 = vmul.f32 %v2124, 1.442695
    %v2126 = vpow.pop %v2125
    %v2127 = vsel %vm1914, %v2126, 0.0
    %2128 = vadd.xlane.f32.xlu0 %v2127
    %v2129 = vpop.xlane.xlu0 %2128
    %v2130 = vrcp.pop %v2129
    %v2131 = vmul.f32 %v2126, %v2130
    %2132 = vrot.lane.b32.xlu0 %v1883, 40
    %v2133 = vpop.permute.xlu0 %2132
    %v2135 = vsel %vm1928, %v2131, 0
    %v2137 = vsel %vm1932, %v2133, 0
    %2139 = vmatpush.msra.mxu0 0.0
    %2140 = vmatpush.msra.mxu0 0.0
    %2141 = vmatpush.msra.mxu0 0.0
    %2142 = vmatpush.msra.mxu0 0.0
    %2143 = vmatpush.msra.mxu0 0.0
    %2144 = vmatpush.msra.mxu0 0.0
    %2145 = vmatpush.msra.mxu0 0.0
    %2146 = vmatpush.msra.mxu0 0.0
    %2147 = vmatpush.msra.mxu0 0.0
    %2148 = vmatpush.msra.mxu0 0.0
    %2149 = vmatpush.msra.mxu0 0.0
    %2150 = vmatpush.msra.mxu0 0.0
    %2151 = vmatpush.msra.mxu0 0.0
    %2152 = vmatpush.msra.mxu0 0.0
    %2153 = vmatpush.msra.mxu0 0.0
    %2154 = vmatpush.msra.mxu0 %v2137
    %2155 = vmatmul.f32.gmra.mxu0 %v2135
    %v2156 = vpop.f32.mrf.mxu0
    %v2157 = vadd.f32 0.0, %v2156
    %2158 = vdwg.mxu0
    %v2160 = vrot.slane %v1953, 1
    %2161 = vrot.lane.b32.xlu0 %v2160, 8
    %v2162 = vpop.permute.xlu0 %2161
    %v2164 = vrot.slane %v1953, 2
    %2165 = vrot.lane.b32.xlu0 %v2164, 16
    %v2166 = vpop.permute.xlu0 %2165
    %v2168 = vrot.slane %v1953, 3
    %2169 = vrot.lane.b32.xlu0 %v2168, 24
    %v2170 = vpop.permute.xlu0 %2169
    %v2172 = vsel %vm848, %v1953, %v2162
    %v2173 = vsel %vm1122, %v2172, %v2166
    %v2174 = vsel %vm1124, %v2173, %v2170
    %v2176 = vrot.slane %v2021, 4
    %2177 = vrot.lane.b32.xlu0 %v2176, 8
    %v2178 = vpop.permute.xlu0 %2177
    %v2180 = vrot.slane %v2021, 5
    %2181 = vrot.lane.b32.xlu0 %v2180, 16
    %v2182 = vpop.permute.xlu0 %2181
    %v2184 = vrot.slane %v2021, 6
    %2185 = vrot.lane.b32.xlu0 %v2184, 24
    %v2186 = vpop.permute.xlu0 %2185
    %v2188 = vsel %vm848, %v1953, %v2178
    %v2189 = vsel %vm1122, %v2188, %v2182
    %v2190 = vsel %vm1124, %v2189, %v2186
    %v2191 = vrot.slane %v2021, 1
    %2192 = vrot.lane.b32.xlu0 %v2191, 8
    %v2193 = vpop.permute.xlu0 %2192
    %v2196 = vrot.slane %v2089, 5
    %2197 = vrot.lane.b32.xlu0 %v2196, 16
    %v2198 = vpop.permute.xlu0 %2197
    %v2200 = vrot.slane %v2089, 6
    %2201 = vrot.lane.b32.xlu0 %v2200, 24
    %v2202 = vpop.permute.xlu0 %2201
    %v2204 = vsel %vm848, %v2021, %v2193
    %v2205 = vsel %vm1122, %v2204, %v2198
    %v2206 = vsel %vm1124, %v2205, %v2202
    %v2207 = vrot.slane %v2089, 1
    %2208 = vrot.lane.b32.xlu0 %v2207, 8
    %v2209 = vpop.permute.xlu0 %2208
    %v2211 = vrot.slane %v2089, 2
    %2212 = vrot.lane.b32.xlu0 %v2211, 16
    %v2213 = vpop.permute.xlu0 %2212
    %v2216 = vrot.slane %v2157, 6
    %2217 = vrot.lane.b32.xlu0 %v2216, 24
    %v2218 = vpop.permute.xlu0 %2217
    %v2220 = vsel %vm848, %v2089, %v2209
    %v2221 = vsel %vm1122, %v2220, %v2213
    %v2222 = vsel %vm1124, %v2221, %v2218
    %v2223 = vrot.slane %v2157, 1
    %2224 = vrot.lane.b32.xlu0 %v2223, 8
    %v2225 = vpop.permute.xlu0 %2224
    %v2227 = vrot.slane %v2157, 2
    %2228 = vrot.lane.b32.xlu0 %v2227, 16
    %v2229 = vpop.permute.xlu0 %2228
    %v2231 = vrot.slane %v2157, 3
    %2232 = vrot.lane.b32.xlu0 %v2231, 24
    %v2233 = vpop.permute.xlu0 %2232
    %v2235 = vsel %vm848, %v2157, %v2225
    %v2236 = vsel %vm1122, %v2235, %v2229
    %v2237 = vsel %vm1124, %v2236, %v2233
    %v2239 = vrot.slane %v2190, 3
    %v2242 = vrot.slane %v2206, 1
    %v2245 = vrot.slane %v2222, 7
    %v2248 = vrot.slane %v2237, 5
    %vm2250 = vcmask 1040384
    %v2251 = vsel %vm2250, %v2174, %v2239
    %vm2252 = vcmask 1041408
    %v2253 = vsel %vm2252, %v2251, %v2242
    %vm2254 = vcmask 1042432
    %v2255 = vsel %vm2254, %v2253, %v2245
    %v2256 = vsel %vm793, %v2255, %v2248
    %v2258 = vperm.slane %v702, 0
    %v2261 = vsel %vm821, %v2256, 0
    %2263 = vmatpush.msra.mxu0 0.0
    %2264 = vmatpush.msra.mxu0 0.0
    %2265 = vmatpush.msra.mxu0 0.0
    %2266 = vmatpush.msra.mxu0 0.0
    %2267 = vmatpush.msra.mxu0 0.0
    %2268 = vmatpush.msra.mxu0 0.0
    %2269 = vmatpush.msra.mxu0 0.0
    %2270 = vmatpush.msra.mxu0 0.0
    %2271 = vmatpush.msra.mxu0 0.0
    %2272 = vmatpush.msra.mxu0 0.0
    %2273 = vmatpush.msra.mxu0 0.0
    %2274 = vmatpush.msra.mxu0 0.0
    %2275 = vmatpush.msra.mxu0 %v707
    %2276 = vmatpush.msra.mxu0 %v706
    %2277 = vmatpush.msra.mxu0 %v705
    %2278 = vmatpush.msra.mxu0 %v704
    %2279 = vmatmul.f32.gmra.mxu0 %v2261
    %v2280 = vpop.f32.mrf.mxu0
    %v2281 = vadd.f32 %v2258, %v2280
    %2282 = vdwg.mxu0
    %v2283 = vadd.f32 %v1858, %v2281
    %vm2284 = vcmask 258048
    %v2285 = vsel %vm2284, %v2283, 0.0
    %2286 = vadd.xlane.f32.xlu0 %v2285
    %v2287 = vpop.xlane.xlu0 %2286
    %v2288 = vmul.f32 %v2287, %v1162
    %v2289 = vsub.f32 %v2283, %v2288
    %v2290 = vmul.f32 %v2289, %v2289
    %v2291 = vsel %vm2284, %v2290, 0.0
    %2292 = vadd.xlane.f32.xlu0 %v2291
    %v2293 = vpop.xlane.xlu0 %2292
    %v2294 = vmul.f32 %v2293, %v1162
    %v2295 = vadd.f32 %v2294, 1e-05
    %v2296 = vrsqrt.pop %v2295
    %v2297 = vmul.f32 %v2296, %v2295
    %v2298 = vmul.f32 %v2297, %v2296
    %v2299 = vmul.f32 0.5, %v2298
    %v2300 = vsub.f32 1.5, %v2299
    %v2301 = vmul.f32 %v2296, %v2300
    %vm2302 = vweird.f32 %v2295
    %vm2303 = vweird.f32 %v2296
    %vm2304 = vmor %vm2302, %vm2303
    %v2305 = vsel %vm2304, %v2296, %v2301
    %v2306 = vmul.f32 %v2289, %v2305
    %v2308 = vperm.slane %v697, 0
    %v2310 = vmul.f32 %v2306, %v2308
    %v2312 = vperm.slane %v696, 0
    %v2314 = vadd.f32 %v2310, %v2312
    %v2316 = vperm.slane %v673, 0
    %v2319 = vsel %vm821, %v2314, 0
    %2321 = vmatpush.msra.mxu0 0.0
    %2322 = vmatpush.msra.mxu0 0.0
    %2323 = vmatpush.msra.mxu0 0.0
    %2324 = vmatpush.msra.mxu0 0.0
    %2325 = vmatpush.msra.mxu0 0.0
    %2326 = vmatpush.msra.mxu0 0.0
    %2327 = vmatpush.msra.mxu0 0.0
    %2328 = vmatpush.msra.mxu0 0.0
    %2329 = vmatpush.msra.mxu0 0.0
    %2330 = vmatpush.msra.mxu0 0.0
    %2331 = vmatpush.msra.mxu0 0.0
    %2332 = vmatpush.msra.mxu0 0.0
    %2333 = vmatpush.msra.mxu0 %v681
    %2334 = vmatpush.msra.mxu0 %v680
    %2335 = vmatpush.msra.mxu0 %v679
    %2336 = vmatpush.msra.mxu0 %v678
    %2337 = vmatmul.f32.gmra.mxu0 %v2319
    %v2338 = vpop.f32.mrf.mxu0
    %v2339 = vadd.f32 %v2316, %v2338
    %2340 = vdwg.mxu0
    %2345 = vrot.lane.b32.xlu0 %v678, 96
    %v2346 = vpop.permute.xlu0 %2345
    %2347 = vrot.lane.b32.xlu0 %v679, 96
    %v2348 = vpop.permute.xlu0 %2347
    %2349 = vrot.lane.b32.xlu0 %v680, 96
    %v2350 = vpop.permute.xlu0 %2349
    %2351 = vrot.lane.b32.xlu0 %v681, 96
    %v2352 = vpop.permute.xlu0 %2351
    %2357 = vrot.lane.b32.xlu0 %v2316, 96
    %v2358 = vpop.permute.xlu0 %2357
    %v2361 = vsel %vm821, %v1827, 0
    %2363 = vmatpush.msra.mxu0 0.0
    %2364 = vmatpush.msra.mxu0 0.0
    %2365 = vmatpush.msra.mxu0 0.0
    %2366 = vmatpush.msra.mxu0 0.0
    %2367 = vmatpush.msra.mxu0 0.0
    %2368 = vmatpush.msra.mxu0 0.0
    %2369 = vmatpush.msra.mxu0 0.0
    %2370 = vmatpush.msra.mxu0 0.0
    %2371 = vmatpush.msra.mxu0 0.0
    %2372 = vmatpush.msra.mxu0 0.0
    %2373 = vmatpush.msra.mxu0 0.0
    %2374 = vmatpush.msra.mxu0 0.0
    %2375 = vmatpush.msra.mxu0 %v2352
    %2376 = vmatpush.msra.mxu0 %v2350
    %2377 = vmatpush.msra.mxu0 %v2348
    %2378 = vmatpush.msra.mxu0 %v2346
    %2379 = vmatmul.f32.gmra.mxu0 %v2361
    %v2380 = vpop.f32.mrf.mxu0
    %v2381 = vadd.f32 %v2358, %v2380
    %2382 = vdwg.mxu0
    %v2384 = vsel %vm848, %v2339, 0
    %v2387 = vsel %vm848, %v2381, 0
    %2389 = vmatpush.xpose.msra.mxu0 0.0
    %2390 = vmatpush.xpose.msra.mxu0 0.0
    %2391 = vmatpush.xpose.msra.mxu0 0.0
    %2392 = vmatpush.xpose.msra.mxu0 0.0
    %2393 = vmatpush.xpose.msra.mxu0 0.0
    %2394 = vmatpush.xpose.msra.mxu0 0.0
    %2395 = vmatpush.xpose.msra.mxu0 0.0
    %2396 = vmatpush.xpose.msra.mxu0 0.0
    %2397 = vmatpush.xpose.msra.mxu0 0.0
    %2398 = vmatpush.xpose.msra.mxu0 0.0
    %2399 = vmatpush.xpose.msra.mxu0 0.0
    %2400 = vmatpush.xpose.msra.mxu0 0.0
    %2401 = vmatpush.xpose.msra.mxu0 0.0
    %2402 = vmatpush.xpose.msra.mxu0 0.0
    %2403 = vmatpush.xpose.msra.mxu0 0.0
    %2404 = vmatpush.xpose.msra.mxu0 %v2387
    %2405 = vmatmul.f32.gmra.mxu0 %v2384
    %v2406 = vpop.f32.mrf.mxu0
    %v2407 = vadd.f32 0.0, %v2406
    %2408 = vdwg.mxu0
    %v2409 = vmul.f32 %v2407, 0.35355338
    %vm2410 = vcmask 61440
    %v2411 = vsel %vm2410, %v2409, -inf
    %2412 = vmax.xlane.f32.xlu0 %v2411
    %v2413 = vpop.xlane.xlu0 %2412
    %v2414 = vsub.f32 %v2409, %v2413
    %v2415 = vmul.f32 %v2414, 1.442695
    %v2416 = vpow.pop %v2415
    %v2417 = vsel %vm2410, %v2416, 0.0
    %2418 = vadd.xlane.f32.xlu0 %v2417
    %v2419 = vpop.xlane.xlu0 %2418
    %v2420 = vrcp.pop %v2419
    %v2421 = vmul.f32 %v2416, %v2420
    %2422 = vrot.lane.b32.xlu0 %v2381, 96
    %v2423 = vpop.permute.xlu0 %2422
    %v2426 = vsel %vm848, %v2421, 0
    %2428 = vmatpush.msra.mxu0 0.0
    %2429 = vmatpush.msra.mxu0 0.0
    %2430 = vmatpush.msra.mxu0 0.0
    %2431 = vmatpush.msra.mxu0 0.0
    %2432 = vmatpush.msra.mxu0 0.0
    %2433 = vmatpush.msra.mxu0 0.0
    %2434 = vmatpush.msra.mxu0 0.0
    %2435 = vmatpush.msra.mxu0 0.0
    %2436 = vmatpush.msra.mxu0 0.0
    %2437 = vmatpush.msra.mxu0 0.0
    %2438 = vmatpush.msra.mxu0 0.0
    %2439 = vmatpush.msra.mxu0 0.0
    %2440 = vmatpush.msra.mxu0 0.0
    %2441 = vmatpush.msra.mxu0 0.0
    %2442 = vmatpush.msra.mxu0 0.0
    %2443 = vmatpush.msra.mxu0 %v2423
    %2444 = vmatmul.f32.gmra.mxu0 %v2426
    %v2445 = vpop.f32.mrf.mxu0
    %v2446 = vadd.f32 0.0, %v2445
    %2447 = vdwg.mxu0
    %2448 = vrot.lane.b32.xlu0 %v2339, 120
    %v2449 = vpop.permute.xlu0 %2448
    %2450 = vrot.lane.b32.xlu0 %v2381, 120
    %v2451 = vpop.permute.xlu0 %2450
    %v2452 = vsel %vm848, %v2449, 0
    %v2454 = vsel %vm848, %v2451, 0
    %2456 = vmatpush.xpose.msra.mxu0 0.0
    %2457 = vmatpush.xpose.msra.mxu0 0.0
    %2458 = vmatpush.xpose.msra.mxu0 0.0
    %2459 = vmatpush.xpose.msra.mxu0 0.0
    %2460 = vmatpush.xpose.msra.mxu0 0.0
    %2461 = vmatpush.xpose.msra.mxu0 0.0
    %2462 = vmatpush.xpose.msra.mxu0 0.0
    %2463 = vmatpush.xpose.msra.mxu0 0.0
    %2464 = vmatpush.xpose.msra.mxu0 0.0
    %2465 = vmatpush.xpose.msra.mxu0 0.0
    %2466 = vmatpush.xpose.msra.mxu0 0.0
    %2467 = vmatpush.xpose.msra.mxu0 0.0
    %2468 = vmatpush.xpose.msra.mxu0 0.0
    %2469 = vmatpush.xpose.msra.mxu0 0.0
    %2470 = vmatpush.xpose.msra.mxu0 0.0
    %2471 = vmatpush.xpose.msra.mxu0 %v2454
    %2472 = vmatmul.f32.gmra.mxu0 %v2452
    %v2473 = vpop.f32.mrf.mxu0
    %v2474 = vadd.f32 0.0, %v2473
    %2475 = vdwg.mxu0
    %v2476 = vmul.f32 %v2474, 0.35355338
    %v2477 = vsel %vm2410, %v2476, -inf
    %2478 = vmax.xlane.f32.xlu0 %v2477
    %v2479 = vpop.xlane.xlu0 %2478
    %v2480 = vsub.f32 %v2476, %v2479
    %v2481 = vmul.f32 %v2480, 1.442695
    %v2482 = vpow.pop %v2481
    %v2483 = vsel %vm2410, %v2482, 0.0
    %2484 = vadd.xlane.f32.xlu0 %v2483
    %v2485 = vpop.xlane.xlu0 %2484
    %v2486 = vrcp.pop %v2485
    %v2487 = vmul.f32 %v2482, %v2486
    %2488 = vrot.lane.b32.xlu0 %v2381, 88
    %v2489 = vpop.permute.xlu0 %2488
    %v2492 = vsel %vm848, %v2487, 0
    %2494 = vmatpush.msra.mxu0 0.0
    %2495 = vmatpush.msra.mxu0 0.0
    %2496 = vmatpush.msra.mxu0 0.0
    %2497 = vmatpush.msra.mxu0 0.0
    %2498 = vmatpush.msra.mxu0 0.0
    %2499 = vmatpush.msra.mxu0 0.0
    %2500 = vmatpush.msra.mxu0 0.0
    %2501 = vmatpush.msra.mxu0 0.0
    %2502 = vmatpush.msra.mxu0 0.0
    %2503 = vmatpush.msra.mxu0 0.0
    %2504 = vmatpush.msra.mxu0 0.0
    %2505 = vmatpush.msra.mxu0 0.0
    %2506 = vmatpush.msra.mxu0 0.0
    %2507 = vmatpush.msra.mxu0 0.0
    %2508 = vmatpush.msra.mxu0 0.0
    %2509 = vmatpush.msra.mxu0 %v2489
    %2510 = vmatmul.f32.gmra.mxu0 %v2492
    %v2511 = vpop.f32.mrf.mxu0
    %v2512 = vadd.f32 0.0, %v2511
    %2513 = vdwg.mxu0
    %2514 = vrot.lane.b32.xlu0 %v2339, 112
    %v2515 = vpop.permute.xlu0 %2514
    %2516 = vrot.lane.b32.xlu0 %v2381, 112
    %v2517 = vpop.permute.xlu0 %2516
    %v2518 = vsel %vm848, %v2515, 0
    %v2520 = vsel %vm848, %v2517, 0
    %2522 = vmatpush.xpose.msra.mxu0 0.0
    %2523 = vmatpush.xpose.msra.mxu0 0.0
    %2524 = vmatpush.xpose.msra.mxu0 0.0
    %2525 = vmatpush.xpose.msra.mxu0 0.0
    %2526 = vmatpush.xpose.msra.mxu0 0.0
    %2527 = vmatpush.xpose.msra.mxu0 0.0
    %2528 = vmatpush.xpose.msra.mxu0 0.0
    %2529 = vmatpush.xpose.msra.mxu0 0.0
    %2530 = vmatpush.xpose.msra.mxu0 0.0
    %2531 = vmatpush.xpose.msra.mxu0 0.0
    %2532 = vmatpush.xpose.msra.mxu0 0.0
    %2533 = vmatpush.xpose.msra.mxu0 0.0
    %2534 = vmatpush.xpose.msra.mxu0 0.0
    %2535 = vmatpush.xpose.msra.mxu0 0.0
    %2536 = vmatpush.xpose.msra.mxu0 0.0
    %2537 = vmatpush.xpose.msra.mxu0 %v2520
    %2538 = vmatmul.f32.gmra.mxu0 %v2518
    %v2539 = vpop.f32.mrf.mxu0
    %v2540 = vadd.f32 0.0, %v2539
    %2541 = vdwg.mxu0
    %v2542 = vmul.f32 %v2540, 0.35355338
    %v2543 = vsel %vm2410, %v2542, -inf
    %2544 = vmax.xlane.f32.xlu0 %v2543
    %v2545 = vpop.xlane.xlu0 %2544
    %v2546 = vsub.f32 %v2542, %v2545
    %v2547 = vmul.f32 %v2546, 1.442695
    %v2548 = vpow.pop %v2547
    %v2549 = vsel %vm2410, %v2548, 0.0
    %2550 = vadd.xlane.f32.xlu0 %v2549
    %v2551 = vpop.xlane.xlu0 %2550
    %v2552 = vrcp.pop %v2551
    %v2553 = vmul.f32 %v2548, %v2552
    %2554 = vrot.lane.b32.xlu0 %v2381, 80
    %v2555 = vpop.permute.xlu0 %2554
    %v2558 = vsel %vm848, %v2553, 0
    %2560 = vmatpush.msra.mxu0 0.0
    %2561 = vmatpush.msra.mxu0 0.0
    %2562 = vmatpush.msra.mxu0 0.0
    %2563 = vmatpush.msra.mxu0 0.0
    %2564 = vmatpush.msra.mxu0 0.0
    %2565 = vmatpush.msra.mxu0 0.0
    %2566 = vmatpush.msra.mxu0 0.0
    %2567 = vmatpush.msra.mxu0 0.0
    %2568 = vmatpush.msra.mxu0 0.0
    %2569 = vmatpush.msra.mxu0 0.0
    %2570 = vmatpush.msra.mxu0 0.0
    %2571 = vmatpush.msra.mxu0 0.0
    %2572 = vmatpush.msra.mxu0 0.0
    %2573 = vmatpush.msra.mxu0 0.0
    %2574 = vmatpush.msra.mxu0 0.0
    %2575 = vmatpush.msra.mxu0 %v2555
    %2576 = vmatmul.f32.gmra.mxu0 %v2558
    %v2577 = vpop.f32.mrf.mxu0
    %v2578 = vadd.f32 0.0, %v2577
    %2579 = vdwg.mxu0
    %2580 = vrot.lane.b32.xlu0 %v2339, 104
    %v2581 = vpop.permute.xlu0 %2580
    %2582 = vrot.lane.b32.xlu0 %v2381, 104
    %v2583 = vpop.permute.xlu0 %2582
    %v2584 = vsel %vm848, %v2581, 0
    %v2586 = vsel %vm848, %v2583, 0
    %2588 = vmatpush.xpose.msra.mxu0 0.0
    %2589 = vmatpush.xpose.msra.mxu0 0.0
    %2590 = vmatpush.xpose.msra.mxu0 0.0
    %2591 = vmatpush.xpose.msra.mxu0 0.0
    %2592 = vmatpush.xpose.msra.mxu0 0.0
    %2593 = vmatpush.xpose.msra.mxu0 0.0
    %2594 = vmatpush.xpose.msra.mxu0 0.0
    %2595 = vmatpush.xpose.msra.mxu0 0.0
    %2596 = vmatpush.xpose.msra.mxu0 0.0
    %2597 = vmatpush.xpose.msra.mxu0 0.0
    %2598 = vmatpush.xpose.msra.mxu0 0.0
    %2599 = vmatpush.xpose.msra.mxu0 0.0
    %2600 = vmatpush.xpose.msra.mxu0 0.0
    %2601 = vmatpush.xpose.msra.mxu0 0.0
    %2602 = vmatpush.xpose.msra.mxu0 0.0
    %2603 = vmatpush.xpose.msra.mxu0 %v2586
    %2604 = vmatmul.f32.gmra.mxu0 %v2584
    %v2605 = vpop.f32.mrf.mxu0
    %v2606 = vadd.f32 0.0, %v2605
    %2607 = vdwg.mxu0
    %v2608 = vmul.f32 %v2606, 0.35355338
    %v2609 = vsel %vm2410, %v2608, -inf
    %2610 = vmax.xlane.f32.xlu0 %v2609
    %v2611 = vpop.xlane.xlu0 %2610
    %v2612 = vsub.f32 %v2608, %v2611
    %v2613 = vmul.f32 %v2612, 1.442695
    %v2614 = vpow.pop %v2613
    %v2615 = vsel %vm2410, %v2614, 0.0
    %2616 = vadd.xlane.f32.xlu0 %v2615
    %v2617 = vpop.xlane.xlu0 %2616
    %v2618 = vrcp.pop %v2617
    %v2619 = vmul.f32 %v2614, %v2618
    %2620 = vrot.lane.b32.xlu0 %v2381, 72
    %v2621 = vpop.permute.xlu0 %2620
    %v2624 = vsel %vm848, %v2619, 0
    %2626 = vmatpush.msra.mxu0 0.0
    %2627 = vmatpush.msra.mxu0 0.0
    %2628 = vmatpush.msra.mxu0 0.0
    %2629 = vmatpush.msra.mxu0 0.0
    %2630 = vmatpush.msra.mxu0 0.0
    %2631 = vmatpush.msra.mxu0 0.0
    %2632 = vmatpush.msra.mxu0 0.0
    %2633 = vmatpush.msra.mxu0 0.0
    %2634 = vmatpush.msra.mxu0 0.0
    %2635 = vmatpush.msra.mxu0 0.0
    %2636 = vmatpush.msra.mxu0 0.0
    %2637 = vmatpush.msra.mxu0 0.0
    %2638 = vmatpush.msra.mxu0 0.0
    %2639 = vmatpush.msra.mxu0 0.0
    %2640 = vmatpush.msra.mxu0 0.0
    %2641 = vmatpush.msra.mxu0 %v2621
    %2642 = vmatmul.f32.gmra.mxu0 %v2624
    %v2643 = vpop.f32.mrf.mxu0
    %v2644 = vadd.f32 0.0, %v2643
    %2645 = vdwg.mxu0
    %2647 = vrot.lane.b32.xlu0 %v2512, 8
    %v2648 = vpop.permute.xlu0 %2647
    %2651 = vrot.lane.b32.xlu0 %v2578, 16
    %v2652 = vpop.permute.xlu0 %2651
    %2655 = vrot.lane.b32.xlu0 %v2644, 24
    %v2656 = vpop.permute.xlu0 %2655
    %v2658 = vsel %vm848, %v2446, %v2648
    %v2659 = vsel %vm1122, %v2658, %v2652
    %v2660 = vsel %vm1124, %v2659, %v2656
    %v2662 = vperm.slane %v672, 0
    %v2665 = vsel %vm821, %v2660, 0
    %2667 = vmatpush.msra.mxu0 0.0
    %2668 = vmatpush.msra.mxu0 0.0
    %2669 = vmatpush.msra.mxu0 0.0
    %2670 = vmatpush.msra.mxu0 0.0
    %2671 = vmatpush.msra.mxu0 0.0
    %2672 = vmatpush.msra.mxu0 0.0
    %2673 = vmatpush.msra.mxu0 0.0
    %2674 = vmatpush.msra.mxu0 0.0
    %2675 = vmatpush.msra.mxu0 0.0
    %2676 = vmatpush.msra.mxu0 0.0
    %2677 = vmatpush.msra.mxu0 0.0
    %2678 = vmatpush.msra.mxu0 0.0
    %2679 = vmatpush.msra.mxu0 %v677
    %2680 = vmatpush.msra.mxu0 %v676
    %2681 = vmatpush.msra.mxu0 %v675
    %2682 = vmatpush.msra.mxu0 %v674
    %2683 = vmatmul.f32.gmra.mxu0 %v2665
    %v2684 = vpop.f32.mrf.mxu0
    %v2685 = vadd.f32 %v2662, %v2684
    %2686 = vdwg.mxu0
    %v2687 = vadd.f32 %v2314, %v2685
    %v2688 = vsel %vm2284, %v2687, 0.0
    %2689 = vadd.xlane.f32.xlu0 %v2688
    %v2690 = vpop.xlane.xlu0 %2689
    %v2691 = vmul.f32 %v2690, %v1162
    %v2692 = vsub.f32 %v2687, %v2691
    %v2693 = vmul.f32 %v2692, %v2692
    %v2694 = vsel %vm2284, %v2693, 0.0
    %2695 = vadd.xlane.f32.xlu0 %v2694
    %v2696 = vpop.xlane.xlu0 %2695
    %v2697 = vmul.f32 %v2696, %v1162
    %v2698 = vadd.f32 %v2697, 1e-05
    %v2699 = vrsqrt.pop %v2698
    %v2700 = vmul.f32 %v2699, %v2698
    %v2701 = vmul.f32 %v2700, %v2699
    %v2702 = vmul.f32 0.5, %v2701
    %v2703 = vsub.f32 1.5, %v2702
    %v2704 = vmul.f32 %v2699, %v2703
    %vm2705 = vweird.f32 %v2698
    %vm2706 = vweird.f32 %v2699
    %vm2707 = vmor %vm2705, %vm2706
    %v2708 = vsel %vm2707, %v2699, %v2704
    %v2709 = vmul.f32 %v2692, %v2708
    %v2711 = vperm.slane %v699, 0
    %v2713 = vmul.f32 %v2709, %v2711
    %v2715 = vperm.slane %v698, 0
    %v2717 = vadd.f32 %v2713, %v2715
    %v2719 = vperm.slane %v682, 0
    %v2722 = vsel %vm821, %v2717, 0
    %2724 = vmatpush.msra.mxu0 0.0
    %2725 = vmatpush.msra.mxu0 0.0
    %2726 = vmatpush.msra.mxu0 0.0
    %2727 = vmatpush.msra.mxu0 0.0
    %2728 = vmatpush.msra.mxu0 0.0
    %2729 = vmatpush.msra.mxu0 0.0
    %2730 = vmatpush.msra.mxu0 0.0
    %2731 = vmatpush.msra.mxu0 0.0
    %2732 = vmatpush.msra.mxu0 0.0
    %2733 = vmatpush.msra.mxu0 0.0
    %2734 = vmatpush.msra.mxu0 0.0
    %2735 = vmatpush.msra.mxu0 0.0
    %2736 = vmatpush.msra.mxu0 %v687
    %2737 = vmatpush.msra.mxu0 %v686
    %2738 = vmatpush.msra.mxu0 %v685
    %2739 = vmatpush.msra.mxu0 %v684
    %2740 = vmatmul.f32.gmra.mxu0 %v2722
    %v2741 = vpop.f32.mrf.mxu0
    %v2742 = vadd.f32 %v2719, %v2741
    %2743 = vdwg.mxu0
    %v2744 = vmul.f32 %v2742, 0.5
    %v2745 = vmul.f32 %v2742, 0.70710677
    %vm2746 = vcmp.lt.f32.partialorder %v2745, 0.0
    %v2747 = vsel %vm2746, -1.0, 1.0
    %v2748 = vand.u32 2147483647, %v2745
    %v2749 = vmul.f32 %v2748, 0.3275911
    %v2750 = vadd.f32 %v2749, 1.0
    %v2751 = vrcp.pop %v2750
    %v2752 = vmul.f32 %v2750, %v2751
    %v2753 = vsub.f32 1.0, %v2752
    %v2754 = vmul.f32 %v2751, %v2753
    %v2755 = vadd.f32 %v2751, %v2754
    %vm2756 = vweird.f32 %v2750
    %vm2757 = vweird.f32 %v2751
    %vm2758 = vmor %vm2756, %vm2757
    %v2759 = vsel %vm2758, %v2751, %v2755
    %v2760 = vand.u32 2147483647, %v2750
    %vm2761 = vcmp.eq.f32.partialorder %v2760, 8.507059e+37
    %v2762 = vand.u32 %v2750, 2147483648
    %v2763 = vor.u32 1.1754944e-38, %v2762
    %v2764 = vsel %vm2761, %v2763, %v2759
    %v2765 = vmul.f32 1.0, %v2764
    %v2766 = vmul.f32 %v2765, 1.0614054
    %v2767 = vadd.f32 %v2766, -1.4531521
    %v2768 = vmul.f32 %v2767, %v2765
    %v2769 = vadd.f32 %v2768, 1.4214138
    %v2770 = vmul.f32 %v2769, %v2765
    %v2771 = vadd.f32 %v2770, -0.28449672
    %v2772 = vmul.f32 %v2771, %v2765
    %v2773 = vadd.f32 %v2772, 0.2548296
    %v2774 = vmul.f32 %v2773, %v2765
    %v2775 = vsub.f32 0.0, %v2748
    %v2776 = vmul.f32 %v2775, %v2748
    %v2777 = vmul.f32 %v2776, 1.442695
    %v2778 = vpow.pop %v2777
    %v2779 = vmul.f32 %v2774, %v2778
    %v2780 = vsub.f32 1.0, %v2779
    %v2781 = vmul.f32 %v2747, %v2780
    %v2782 = vadd.f32 %v2781, 1.0
    %v2783 = vmul.f32 %v2744, %v2782
    %v2785 = vperm.slane %v683, 0
    %v2788 = vsel %vm1259, %v2783, 0
    %2790 = vmatpush.msra.mxu0 0.0
    %2791 = vmatpush.msra.mxu0 0.0
    %2792 = vmatpush.msra.mxu0 0.0
    %2793 = vmatpush.msra.mxu0 0.0
    %2794 = vmatpush.msra.mxu0 0.0
    %2795 = vmatpush.msra.mxu0 0.0
    %2796 = vmatpush.msra.mxu0 0.0
    %2797 = vmatpush.msra.mxu0 0.0
    %2798 = vmatpush.msra.mxu0 %v695
    %2799 = vmatpush.msra.mxu0 %v694
    %2800 = vmatpush.msra.mxu0 %v693
    %2801 = vmatpush.msra.mxu0 %v692
    %2802 = vmatpush.msra.mxu0 %v691
    %2803 = vmatpush.msra.mxu0 %v690
    %2804 = vmatpush.msra.mxu0 %v689
    %2805 = vmatpush.msra.mxu0 %v688
    %2806 = vmatmul.f32.gmra.mxu0 %v2788
    %v2807 = vpop.f32.mrf.mxu0
    %v2808 = vadd.f32 %v2785, %v2807
    %2809 = vdwg.mxu0
    %v2810 = vadd.f32 %v2717, %v2808
    %v2811 = vsel %vm2284, %v2810, 0.0
    %2812 = vadd.xlane.f32.xlu0 %v2811
    %v2813 = vpop.xlane.xlu0 %2812
    %v2814 = vmul.f32 %v2813, %v1162
    %v2815 = vsub.f32 %v2810, %v2814
    %v2816 = vmul.f32 %v2815, %v2815
    %v2817 = vsel %vm2284, %v2816, 0.0
    %2818 = vadd.xlane.f32.xlu0 %v2817
    %v2819 = vpop.xlane.xlu0 %2818
    %v2820 = vmul.f32 %v2819, %v1162
    %v2821 = vadd.f32 %v2820, 1e-05
    %v2822 = vrsqrt.pop %v2821
    %v2823 = vmul.f32 %v2822, %v2821
    %v2824 = vmul.f32 %v2823, %v2822
    %v2825 = vmul.f32 0.5, %v2824
    %v2826 = vsub.f32 1.5, %v2825
    %v2827 = vmul.f32 %v2822, %v2826
    %vm2828 = vweird.f32 %v2821
    %vm2829 = vweird.f32 %v2822
    %vm2830 = vmor %vm2828, %vm2829
    %v2831 = vsel %vm2830, %v2822, %v2827
    %v2832 = vmul.f32 %v2815, %v2831
    %v2834 = vperm.slane %v701, 0
    %v2836 = vmul.f32 %v2832, %v2834
    %v2838 = vperm.slane %v700, 0
    %v2840 = vadd.f32 %v2836, %v2838
    %v2841 = vsel %vm2284, %v2840, 0.0
    %2842 = vadd.xlane.f32.xlu0 %v2841
    %v2843 = vpop.xlane.xlu0 %2842
    %v2844 = vmul.f32 %v2843, %v1162
    %v2845 = vsub.f32 %v2840, %v2844
    %v2846 = vmul.f32 %v2845, %v2845
    %v2847 = vsel %vm2284, %v2846, 0.0
    %2848 = vadd.xlane.f32.xlu0 %v2847
    %v2849 = vpop.xlane.xlu0 %2848
    %v2850 = vmul.f32 %v2849, %v1162
    %v2851 = vadd.f32 %v2850, 1e-05
    %v2852 = vrsqrt.pop %v2851
    %v2853 = vmul.f32 %v2852, %v2851
    %v2854 = vmul.f32 %v2853, %v2852
    %v2855 = vmul.f32 0.5, %v2854
    %v2856 = vsub.f32 1.5, %v2855
    %v2857 = vmul.f32 %v2852, %v2856
    %vm2858 = vweird.f32 %v2851
    %vm2859 = vweird.f32 %v2852
    %vm2860 = vmor %vm2858, %vm2859
    %v2861 = vsel %vm2860, %v2852, %v2857
    %v2862 = vmul.f32 %v2845, %v2861
    %v2864 = vperm.slane %v713, 0
    %v2866 = vmul.f32 %v2862, %v2864
    %v2868 = vperm.slane %v712, 0
    %v2870 = vadd.f32 %v2866, %v2868
    %v2872 = vrot.slane %v2870, 4
    %v2873 = vsel %vm821, %v2872, 0
    %2875 = vmatpush.msra.mxu0 0.0
    %2876 = vmatpush.msra.mxu0 0.0
    %2877 = vmatpush.msra.mxu0 0.0
    %2878 = vmatpush.msra.mxu0 0.0
    %2879 = vmatpush.msra.mxu0 0.0
    %2880 = vmatpush.msra.mxu0 0.0
    %2881 = vmatpush.msra.mxu0 0.0
    %2882 = vmatpush.msra.mxu0 0.0
    %2883 = vmatpush.msra.mxu0 0.0
    %2884 = vmatpush.msra.mxu0 0.0
    %2885 = vmatpush.msra.mxu0 0.0
    %2886 = vmatpush.msra.mxu0 0.0
    %2887 = vmatpush.msra.mxu0 %v779
    %2888 = vmatpush.msra.mxu0 %v778
    %2889 = vmatpush.msra.mxu0 %v777
    %2890 = vmatpush.msra.mxu0 %v776
    %2891 = vmatmul.f32.gmra.mxu0 %v2873
    %v2892 = vpop.f32.mrf.mxu0
    %v2893 = vadd.f32 %v775, %v2892
    %2894 = vdwg.mxu0
    %vm2895 = vcmask 0
    %2896 = vst.msk [vmem:[%s113] sm:$0x1] %vm2895, %v2893
    %s2897 = scalar_lea.vmem %s1, 8
    %v2898 = vld [vmem:[%s2897] sm:$0xff]
    %v2900 = vsel %vm789, %v2898, 0
    %2902 = vmatpush.msra.mxu0 0.0
    %2903 = vmatpush.msra.mxu0 0.0
    %2904 = vmatpush.msra.mxu0 0.0
    %2905 = vmatpush.msra.mxu0 0.0
    %2906 = vmatpush.msra.mxu0 0.0
    %2907 = vmatpush.msra.mxu0 0.0
    %2908 = vmatpush.msra.mxu0 0.0
    %2909 = vmatpush.msra.mxu0 0.0
    %2910 = vmatpush.msra.mxu0 0.0
    %2911 = vmatpush.msra.mxu0 0.0
    %2912 = vmatpush.msra.mxu0 0.0
    %2913 = vmatpush.msra.mxu0 0.0
    %2914 = vmatpush.msra.mxu0 0.0
    %2915 = vmatpush.msra.mxu0 0.0
    %2916 = vmatpush.msra.mxu0 0.0
    %2917 = vmatpush.msra.mxu0 %v795
    %2918 = vmatmul.f32.gmra.mxu0 %v2900
    %v2919 = vpop.f32.mrf.mxu0
    %v2920 = vadd.f32 %v787, %v2919
    %2921 = vdwg.mxu0
    %v2922 = vadd.f32 %v2920, %v715
    %v2924 = vsel %vm821, %v2922, 0
    %2926 = vmatpush.msra.mxu0 0.0
    %2927 = vmatpush.msra.mxu0 0.0
    %2928 = vmatpush.msra.mxu0 0.0
    %2929 = vmatpush.msra.mxu0 0.0
    %2930 = vmatpush.msra.mxu0 0.0
    %2931 = vmatpush.msra.mxu0 0.0
    %2932 = vmatpush.msra.mxu0 0.0
    %2933 = vmatpush.msra.mxu0 0.0
    %2934 = vmatpush.msra.mxu0 0.0
    %2935 = vmatpush.msra.mxu0 0.0
    %2936 = vmatpush.msra.mxu0 0.0
    %2937 = vmatpush.msra.mxu0 0.0
    %2938 = vmatpush.msra.mxu0 %v726
    %2939 = vmatpush.msra.mxu0 %v725
    %2940 = vmatpush.msra.mxu0 %v724
    %2941 = vmatpush.msra.mxu0 %v723
    %2942 = vmatmul.f32.gmra.mxu0 %v2924
    %v2943 = vpop.f32.mrf.mxu0
    %v2944 = vadd.f32 %v819, %v2943
    %2945 = vdwg.mxu0
    %2947 = vrot.lane.b32.xlu0 %v2944, 96
    %v2948 = vpop.permute.xlu0 %2947
    %v2949 = vsel %vm848, %v2944, 0
    %v2951 = vsel %vm848, %v2948, 0
    %2953 = vmatpush.xpose.msra.mxu0 0.0
    %2954 = vmatpush.xpose.msra.mxu0 0.0
    %2955 = vmatpush.xpose.msra.mxu0 0.0
    %2956 = vmatpush.xpose.msra.mxu0 0.0
    %2957 = vmatpush.xpose.msra.mxu0 0.0
    %2958 = vmatpush.xpose.msra.mxu0 0.0
    %2959 = vmatpush.xpose.msra.mxu0 0.0
    %2960 = vmatpush.xpose.msra.mxu0 0.0
    %2961 = vmatpush.xpose.msra.mxu0 0.0
    %2962 = vmatpush.xpose.msra.mxu0 0.0
    %2963 = vmatpush.xpose.msra.mxu0 0.0
    %2964 = vmatpush.xpose.msra.mxu0 0.0
    %2965 = vmatpush.xpose.msra.mxu0 0.0
    %2966 = vmatpush.xpose.msra.mxu0 0.0
    %2967 = vmatpush.xpose.msra.mxu0 0.0
    %2968 = vmatpush.xpose.msra.mxu0 %v2951
    %2969 = vmatmul.f32.gmra.mxu0 %v2949
    %v2970 = vpop.f32.mrf.mxu0
    %v2971 = vadd.f32 0.0, %v2970
    %2972 = vdwg.mxu0
    %v2973 = vmul.f32 %v2971, 0.35355338
    %v2974 = vsel %vm848, %v2973, -inf
    %2975 = vmax.xlane.f32.xlu0 %v2974
    %v2976 = vpop.xlane.xlu0 %2975
    %v2977 = vsub.f32 %v2973, %v2976
    %v2978 = vmul.f32 %v2977, 1.442695
    %v2979 = vpow.pop %v2978
    %v2980 = vsel %vm848, %v2979, 0.0
    %2981 = vadd.xlane.f32.xlu0 %v2980
    %v2982 = vpop.xlane.xlu0 %2981
    %v2983 = vrcp.pop %v2982
    %v2984 = vmul.f32 %v2979, %v2983
    %2985 = vrot.lane.b32.xlu0 %v2944, 64
    %v2986 = vpop.permute.xlu0 %2985
    %v2989 = vsel %vm848, %v2984, 0
    %2991 = vmatpush.msra.mxu0 0.0
    %2992 = vmatpush.msra.mxu0 0.0
    %2993 = vmatpush.msra.mxu0 0.0
    %2994 = vmatpush.msra.mxu0 0.0
    %2995 = vmatpush.msra.mxu0 0.0
    %2996 = vmatpush.msra.mxu0 0.0
    %2997 = vmatpush.msra.mxu0 0.0
    %2998 = vmatpush.msra.mxu0 0.0
    %2999 = vmatpush.msra.mxu0 0.0
    %3000 = vmatpush.msra.mxu0 0.0
    %3001 = vmatpush.msra.mxu0 0.0
    %3002 = vmatpush.msra.mxu0 0.0
    %3003 = vmatpush.msra.mxu0 0.0
    %3004 = vmatpush.msra.mxu0 0.0
    %3005 = vmatpush.msra.mxu0 0.0
    %3006 = vmatpush.msra.mxu0 %v2986
    %3007 = vmatmul.f32.gmra.mxu0 %v2989
    %v3008 = vpop.f32.mrf.mxu0
    %v3009 = vadd.f32 0.0, %v3008
    %3010 = vdwg.mxu0
    %3011 = vrot.lane.b32.xlu0 %v2944, 120
    %v3012 = vpop.permute.xlu0 %3011
    %3013 = vrot.lane.b32.xlu0 %v2944, 88
    %v3014 = vpop.permute.xlu0 %3013
    %v3015 = vsel %vm848, %v3012, 0
    %v3017 = vsel %vm848, %v3014, 0
    %3019 = vmatpush.xpose.msra.mxu0 0.0
    %3020 = vmatpush.xpose.msra.mxu0 0.0
    %3021 = vmatpush.xpose.msra.mxu0 0.0
    %3022 = vmatpush.xpose.msra.mxu0 0.0
    %3023 = vmatpush.xpose.msra.mxu0 0.0
    %3024 = vmatpush.xpose.msra.mxu0 0.0
    %3025 = vmatpush.xpose.msra.mxu0 0.0
    %3026 = vmatpush.xpose.msra.mxu0 0.0
    %3027 = vmatpush.xpose.msra.mxu0 0.0
    %3028 = vmatpush.xpose.msra.mxu0 0.0
    %3029 = vmatpush.xpose.msra.mxu0 0.0
    %3030 = vmatpush.xpose.msra.mxu0 0.0
    %3031 = vmatpush.xpose.msra.mxu0 0.0
    %3032 = vmatpush.xpose.msra.mxu0 0.0
    %3033 = vmatpush.xpose.msra.mxu0 0.0
    %3034 = vmatpush.xpose.msra.mxu0 %v3017
    %3035 = vmatmul.f32.gmra.mxu0 %v3015
    %v3036 = vpop.f32.mrf.mxu0
    %v3037 = vadd.f32 0.0, %v3036
    %3038 = vdwg.mxu0
    %v3039 = vmul.f32 %v3037, 0.35355338
    %v3040 = vsel %vm848, %v3039, -inf
    %3041 = vmax.xlane.f32.xlu0 %v3040
    %v3042 = vpop.xlane.xlu0 %3041
    %v3043 = vsub.f32 %v3039, %v3042
    %v3044 = vmul.f32 %v3043, 1.442695
    %v3045 = vpow.pop %v3044
    %v3046 = vsel %vm848, %v3045, 0.0
    %3047 = vadd.xlane.f32.xlu0 %v3046
    %v3048 = vpop.xlane.xlu0 %3047
    %v3049 = vrcp.pop %v3048
    %v3050 = vmul.f32 %v3045, %v3049
    %3051 = vrot.lane.b32.xlu0 %v2944, 56
    %v3052 = vpop.permute.xlu0 %3051
    %v3055 = vsel %vm848, %v3050, 0
    %3057 = vmatpush.msra.mxu0 0.0
    %3058 = vmatpush.msra.mxu0 0.0
    %3059 = vmatpush.msra.mxu0 0.0
    %3060 = vmatpush.msra.mxu0 0.0
    %3061 = vmatpush.msra.mxu0 0.0
    %3062 = vmatpush.msra.mxu0 0.0
    %3063 = vmatpush.msra.mxu0 0.0
    %3064 = vmatpush.msra.mxu0 0.0
    %3065 = vmatpush.msra.mxu0 0.0
    %3066 = vmatpush.msra.mxu0 0.0
    %3067 = vmatpush.msra.mxu0 0.0
    %3068 = vmatpush.msra.mxu0 0.0
    %3069 = vmatpush.msra.mxu0 0.0
    %3070 = vmatpush.msra.mxu0 0.0
    %3071 = vmatpush.msra.mxu0 0.0
    %3072 = vmatpush.msra.mxu0 %v3052
    %3073 = vmatmul.f32.gmra.mxu0 %v3055
    %v3074 = vpop.f32.mrf.mxu0
    %v3075 = vadd.f32 0.0, %v3074
    %3076 = vdwg.mxu0
    %3077 = vrot.lane.b32.xlu0 %v2944, 112
    %v3078 = vpop.permute.xlu0 %3077
    %3079 = vrot.lane.b32.xlu0 %v2944, 80
    %v3080 = vpop.permute.xlu0 %3079
    %v3081 = vsel %vm848, %v3078, 0
    %v3083 = vsel %vm848, %v3080, 0
    %3085 = vmatpush.xpose.msra.mxu0 0.0
    %3086 = vmatpush.xpose.msra.mxu0 0.0
    %3087 = vmatpush.xpose.msra.mxu0 0.0
    %3088 = vmatpush.xpose.msra.mxu0 0.0
    %3089 = vmatpush.xpose.msra.mxu0 0.0
    %3090 = vmatpush.xpose.msra.mxu0 0.0
    %3091 = vmatpush.xpose.msra.mxu0 0.0
    %3092 = vmatpush.xpose.msra.mxu0 0.0
    %3093 = vmatpush.xpose.msra.mxu0 0.0
    %3094 = vmatpush.xpose.msra.mxu0 0.0
    %3095 = vmatpush.xpose.msra.mxu0 0.0
    %3096 = vmatpush.xpose.msra.mxu0 0.0
    %3097 = vmatpush.xpose.msra.mxu0 0.0
    %3098 = vmatpush.xpose.msra.mxu0 0.0
    %3099 = vmatpush.xpose.msra.mxu0 0.0
    %3100 = vmatpush.xpose.msra.mxu0 %v3083
    %3101 = vmatmul.f32.gmra.mxu0 %v3081
    %v3102 = vpop.f32.mrf.mxu0
    %v3103 = vadd.f32 0.0, %v3102
    %3104 = vdwg.mxu0
    %v3105 = vmul.f32 %v3103, 0.35355338
    %v3106 = vsel %vm848, %v3105, -inf
    %3107 = vmax.xlane.f32.xlu0 %v3106
    %v3108 = vpop.xlane.xlu0 %3107
    %v3109 = vsub.f32 %v3105, %v3108
    %v3110 = vmul.f32 %v3109, 1.442695
    %v3111 = vpow.pop %v3110
    %v3112 = vsel %vm848, %v3111, 0.0
    %3113 = vadd.xlane.f32.xlu0 %v3112
    %v3114 = vpop.xlane.xlu0 %3113
    %v3115 = vrcp.pop %v3114
    %v3116 = vmul.f32 %v3111, %v3115
    %3117 = vrot.lane.b32.xlu0 %v2944, 48
    %v3118 = vpop.permute.xlu0 %3117
    %v3121 = vsel %vm848, %v3116, 0
    %3123 = vmatpush.msra.mxu0 0.0
    %3124 = vmatpush.msra.mxu0 0.0
    %3125 = vmatpush.msra.mxu0 0.0
    %3126 = vmatpush.msra.mxu0 0.0
    %3127 = vmatpush.msra.mxu0 0.0
    %3128 = vmatpush.msra.mxu0 0.0
    %3129 = vmatpush.msra.mxu0 0.0
    %3130 = vmatpush.msra.mxu0 0.0
    %3131 = vmatpush.msra.mxu0 0.0
    %3132 = vmatpush.msra.mxu0 0.0
    %3133 = vmatpush.msra.mxu0 0.0
    %3134 = vmatpush.msra.mxu0 0.0
    %3135 = vmatpush.msra.mxu0 0.0
    %3136 = vmatpush.msra.mxu0 0.0
    %3137 = vmatpush.msra.mxu0 0.0
    %3138 = vmatpush.msra.mxu0 %v3118
    %3139 = vmatmul.f32.gmra.mxu0 %v3121
    %v3140 = vpop.f32.mrf.mxu0
    %v3141 = vadd.f32 0.0, %v3140
    %3142 = vdwg.mxu0
    %3143 = vrot.lane.b32.xlu0 %v2944, 104
    %v3144 = vpop.permute.xlu0 %3143
    %3145 = vrot.lane.b32.xlu0 %v2944, 72
    %v3146 = vpop.permute.xlu0 %3145
    %v3147 = vsel %vm848, %v3144, 0
    %v3149 = vsel %vm848, %v3146, 0
    %3151 = vmatpush.xpose.msra.mxu0 0.0
    %3152 = vmatpush.xpose.msra.mxu0 0.0
    %3153 = vmatpush.xpose.msra.mxu0 0.0
    %3154 = vmatpush.xpose.msra.mxu0 0.0
    %3155 = vmatpush.xpose.msra.mxu0 0.0
    %3156 = vmatpush.xpose.msra.mxu0 0.0
    %3157 = vmatpush.xpose.msra.mxu0 0.0
    %3158 = vmatpush.xpose.msra.mxu0 0.0
    %3159 = vmatpush.xpose.msra.mxu0 0.0
    %3160 = vmatpush.xpose.msra.mxu0 0.0
    %3161 = vmatpush.xpose.msra.mxu0 0.0
    %3162 = vmatpush.xpose.msra.mxu0 0.0
    %3163 = vmatpush.xpose.msra.mxu0 0.0
    %3164 = vmatpush.xpose.msra.mxu0 0.0
    %3165 = vmatpush.xpose.msra.mxu0 0.0
    %3166 = vmatpush.xpose.msra.mxu0 %v3149
    %3167 = vmatmul.f32.gmra.mxu0 %v3147
    %v3168 = vpop.f32.mrf.mxu0
    %v3169 = vadd.f32 0.0, %v3168
    %3170 = vdwg.mxu0
    %v3171 = vmul.f32 %v3169, 0.35355338
    %v3172 = vsel %vm848, %v3171, -inf
    %3173 = vmax.xlane.f32.xlu0 %v3172
    %v3174 = vpop.xlane.xlu0 %3173
    %v3175 = vsub.f32 %v3171, %v3174
    %v3176 = vmul.f32 %v3175, 1.442695
    %v3177 = vpow.pop %v3176
    %v3178 = vsel %vm848, %v3177, 0.0
    %3179 = vadd.xlane.f32.xlu0 %v3178
    %v3180 = vpop.xlane.xlu0 %3179
    %v3181 = vrcp.pop %v3180
    %v3182 = vmul.f32 %v3177, %v3181
    %3183 = vrot.lane.b32.xlu0 %v2944, 40
    %v3184 = vpop.permute.xlu0 %3183
    %v3187 = vsel %vm848, %v3182, 0
    %3189 = vmatpush.msra.mxu0 0.0
    %3190 = vmatpush.msra.mxu0 0.0
    %3191 = vmatpush.msra.mxu0 0.0
    %3192 = vmatpush.msra.mxu0 0.0
    %3193 = vmatpush.msra.mxu0 0.0
    %3194 = vmatpush.msra.mxu0 0.0
    %3195 = vmatpush.msra.mxu0 0.0
    %3196 = vmatpush.msra.mxu0 0.0
    %3197 = vmatpush.msra.mxu0 0.0
    %3198 = vmatpush.msra.mxu0 0.0
    %3199 = vmatpush.msra.mxu0 0.0
    %3200 = vmatpush.msra.mxu0 0.0
    %3201 = vmatpush.msra.mxu0 0.0
    %3202 = vmatpush.msra.mxu0 0.0
    %3203 = vmatpush.msra.mxu0 0.0
    %3204 = vmatpush.msra.mxu0 %v3184
    %3205 = vmatmul.f32.gmra.mxu0 %v3187
    %v3206 = vpop.f32.mrf.mxu0
    %v3207 = vadd.f32 0.0, %v3206
    %3208 = vdwg.mxu0
    %3210 = vrot.lane.b32.xlu0 %v3075, 8
    %v3211 = vpop.permute.xlu0 %3210
    %3214 = vrot.lane.b32.xlu0 %v3141, 16
    %v3215 = vpop.permute.xlu0 %3214
    %3218 = vrot.lane.b32.xlu0 %v3207, 24
    %v3219 = vpop.permute.xlu0 %3218
    %v3221 = vsel %vm848, %v3009, %v3211
    %v3222 = vsel %vm1122, %v3221, %v3215
    %v3223 = vsel %vm1124, %v3222, %v3219
    %v3225 = vsel %vm821, %v3223, 0
    %3227 = vmatpush.msra.mxu0 0.0
    %3228 = vmatpush.msra.mxu0 0.0
    %3229 = vmatpush.msra.mxu0 0.0
    %3230 = vmatpush.msra.mxu0 0.0
    %3231 = vmatpush.msra.mxu0 0.0
    %3232 = vmatpush.msra.mxu0 0.0
    %3233 = vmatpush.msra.mxu0 0.0
    %3234 = vmatpush.msra.mxu0 0.0
    %3235 = vmatpush.msra.mxu0 0.0
    %3236 = vmatpush.msra.mxu0 0.0
    %3237 = vmatpush.msra.mxu0 0.0
    %3238 = vmatpush.msra.mxu0 0.0
    %3239 = vmatpush.msra.mxu0 %v722
    %3240 = vmatpush.msra.mxu0 %v721
    %3241 = vmatpush.msra.mxu0 %v720
    %3242 = vmatpush.msra.mxu0 %v719
    %3243 = vmatmul.f32.gmra.mxu0 %v3225
    %v3244 = vpop.f32.mrf.mxu0
    %v3245 = vadd.f32 %v1127, %v3244
    %3246 = vdwg.mxu0
    %v3247 = vadd.f32 %v2922, %v3245
    %v3248 = vsel %vm821, %v3247, 0.0
    %3249 = vadd.xlane.f32.xlu0 %v3248
    %v3250 = vpop.xlane.xlu0 %3249
    %v3251 = vmul.f32 %v3250, %v1162
    %v3252 = vsub.f32 %v3247, %v3251
    %v3253 = vmul.f32 %v3252, %v3252
    %v3254 = vsel %vm821, %v3253, 0.0
    %3255 = vadd.xlane.f32.xlu0 %v3254
    %v3256 = vpop.xlane.xlu0 %3255
    %v3257 = vmul.f32 %v3256, %v1162
    %v3258 = vadd.f32 %v3257, 1e-05
    %v3259 = vrsqrt.pop %v3258
    %v3260 = vmul.f32 %v3259, %v3258
    %v3261 = vmul.f32 %v3260, %v3259
    %v3262 = vmul.f32 0.5, %v3261
    %v3263 = vsub.f32 1.5, %v3262
    %v3264 = vmul.f32 %v3259, %v3263
    %vm3265 = vweird.f32 %v3258
    %vm3266 = vweird.f32 %v3259
    %vm3267 = vmor %vm3265, %vm3266
    %v3268 = vsel %vm3267, %v3259, %v3264
    %v3269 = vmul.f32 %v3252, %v3268
    %v3270 = vmul.f32 %v3269, %v1183
    %v3271 = vadd.f32 %v3270, %v1187
    %v3273 = vsel %vm821, %v3271, 0
    %3275 = vmatpush.msra.mxu0 0.0
    %3276 = vmatpush.msra.mxu0 0.0
    %3277 = vmatpush.msra.mxu0 0.0
    %3278 = vmatpush.msra.mxu0 0.0
    %3279 = vmatpush.msra.mxu0 0.0
    %3280 = vmatpush.msra.mxu0 0.0
    %3281 = vmatpush.msra.mxu0 0.0
    %3282 = vmatpush.msra.mxu0 0.0
    %3283 = vmatpush.msra.mxu0 0.0
    %3284 = vmatpush.msra.mxu0 0.0
    %3285 = vmatpush.msra.mxu0 0.0
    %3286 = vmatpush.msra.mxu0 0.0
    %3287 = vmatpush.msra.mxu0 %v732
    %3288 = vmatpush.msra.mxu0 %v731
    %3289 = vmatpush.msra.mxu0 %v730
    %3290 = vmatpush.msra.mxu0 %v729
    %3291 = vmatmul.f32.gmra.mxu0 %v3273
    %v3292 = vpop.f32.mrf.mxu0
    %v3293 = vadd.f32 %v1191, %v3292
    %3294 = vdwg.mxu0
    %v3295 = vmul.f32 %v3293, 0.5
    %v3296 = vmul.f32 %v3293, 0.70710677
    %vm3297 = vcmp.lt.f32.partialorder %v3296, 0.0
    %v3298 = vsel %vm3297, -1.0, 1.0
    %v3299 = vand.u32 2147483647, %v3296
    %v3300 = vmul.f32 %v3299, 0.3275911
    %v3301 = vadd.f32 %v3300, 1.0
    %v3302 = vrcp.pop %v3301
    %v3303 = vmul.f32 %v3301, %v3302
    %v3304 = vsub.f32 1.0, %v3303
    %v3305 = vmul.f32 %v3302, %v3304
    %v3306 = vadd.f32 %v3302, %v3305
    %vm3307 = vweird.f32 %v3301
    %vm3308 = vweird.f32 %v3302
    %vm3309 = vmor %vm3307, %vm3308
    %v3310 = vsel %vm3309, %v3302, %v3306
    %v3311 = vand.u32 2147483647, %v3301
    %vm3312 = vcmp.eq.f32.partialorder %v3311, 8.507059e+37
    %v3313 = vand.u32 %v3301, 2147483648
    %v3314 = vor.u32 1.1754944e-38, %v3313
    %v3315 = vsel %vm3312, %v3314, %v3310
    %v3316 = vmul.f32 1.0, %v3315
    %v3317 = vmul.f32 %v3316, 1.0614054
    %v3318 = vadd.f32 %v3317, -1.4531521
    %v3319 = vmul.f32 %v3318, %v3316
    %v3320 = vadd.f32 %v3319, 1.4214138
    %v3321 = vmul.f32 %v3320, %v3316
    %v3322 = vadd.f32 %v3321, -0.28449672
    %v3323 = vmul.f32 %v3322, %v3316
    %v3324 = vadd.f32 %v3323, 0.2548296
    %v3325 = vmul.f32 %v3324, %v3316
    %v3326 = vsub.f32 0.0, %v3299
    %v3327 = vmul.f32 %v3326, %v3299
    %v3328 = vmul.f32 %v3327, 1.442695
    %v3329 = vpow.pop %v3328
    %v3330 = vmul.f32 %v3325, %v3329
    %v3331 = vsub.f32 1.0, %v3330
    %v3332 = vmul.f32 %v3298, %v3331
    %v3333 = vadd.f32 %v3332, 1.0
    %v3334 = vmul.f32 %v3295, %v3333
    %v3336 = vsel %vm1259, %v3334, 0
    %3338 = vmatpush.msra.mxu0 0.0
    %3339 = vmatpush.msra.mxu0 0.0
    %3340 = vmatpush.msra.mxu0 0.0
    %3341 = vmatpush.msra.mxu0 0.0
    %3342 = vmatpush.msra.mxu0 0.0
    %3343 = vmatpush.msra.mxu0 0.0
    %3344 = vmatpush.msra.mxu0 0.0
    %3345 = vmatpush.msra.mxu0 0.0
    %3346 = vmatpush.msra.mxu0 %v740
    %3347 = vmatpush.msra.mxu0 %v739
    %3348 = vmatpush.msra.mxu0 %v738
    %3349 = vmatpush.msra.mxu0 %v737
    %3350 = vmatpush.msra.mxu0 %v736
    %3351 = vmatpush.msra.mxu0 %v735
    %3352 = vmatpush.msra.mxu0 %v734
    %3353 = vmatpush.msra.mxu0 %v733
    %3354 = vmatmul.f32.gmra.mxu0 %v3336
    %v3355 = vpop.f32.mrf.mxu0
    %v3356 = vadd.f32 %v1257, %v3355
    %3357 = vdwg.mxu0
    %v3358 = vadd.f32 %v3271, %v3356
    %v3359 = vsel %vm821, %v3358, 0.0
    %3360 = vadd.xlane.f32.xlu0 %v3359
    %v3361 = vpop.xlane.xlu0 %3360
    %v3362 = vmul.f32 %v3361, %v1162
    %v3363 = vsub.f32 %v3358, %v3362
    %v3364 = vmul.f32 %v3363, %v3363
    %v3365 = vsel %vm821, %v3364, 0.0
    %3366 = vadd.xlane.f32.xlu0 %v3365
    %v3367 = vpop.xlane.xlu0 %3366
    %v3368 = vmul.f32 %v3367, %v1162
    %v3369 = vadd.f32 %v3368, 1e-05
    %v3370 = vrsqrt.pop %v3369
    %v3371 = vmul.f32 %v3370, %v3369
    %v3372 = vmul.f32 %v3371, %v3370
    %v3373 = vmul.f32 0.5, %v3372
    %v3374 = vsub.f32 1.5, %v3373
    %v3375 = vmul.f32 %v3370, %v3374
    %vm3376 = vweird.f32 %v3369
    %vm3377 = vweird.f32 %v3370
    %vm3378 = vmor %vm3376, %vm3377
    %v3379 = vsel %vm3378, %v3370, %v3375
    %v3380 = vmul.f32 %v3363, %v3379
    %v3381 = vmul.f32 %v3380, %v1307
    %v3382 = vadd.f32 %v3381, %v1311
    %v3384 = vsel %vm821, %v3382, 0
    %3386 = vmatpush.msra.mxu0 0.0
    %3387 = vmatpush.msra.mxu0 0.0
    %3388 = vmatpush.msra.mxu0 0.0
    %3389 = vmatpush.msra.mxu0 0.0
    %3390 = vmatpush.msra.mxu0 0.0
    %3391 = vmatpush.msra.mxu0 0.0
    %3392 = vmatpush.msra.mxu0 0.0
    %3393 = vmatpush.msra.mxu0 0.0
    %3394 = vmatpush.msra.mxu0 0.0
    %3395 = vmatpush.msra.mxu0 0.0
    %3396 = vmatpush.msra.mxu0 0.0
    %3397 = vmatpush.msra.mxu0 0.0
    %3398 = vmatpush.msra.mxu0 %v754
    %3399 = vmatpush.msra.mxu0 %v753
    %3400 = vmatpush.msra.mxu0 %v752
    %3401 = vmatpush.msra.mxu0 %v751
    %3402 = vmatmul.f32.gmra.mxu0 %v3384
    %v3403 = vpop.f32.mrf.mxu0
    %v3404 = vadd.f32 %v1315, %v3403
    %3405 = vdwg.mxu0
    %3407 = vrot.lane.b32.xlu0 %v3404, 96
    %v3408 = vpop.permute.xlu0 %3407
    %v3409 = vsel %vm848, %v3404, 0
    %v3411 = vsel %vm848, %v3408, 0
    %3413 = vmatpush.xpose.msra.mxu0 0.0
    %3414 = vmatpush.xpose.msra.mxu0 0.0
    %3415 = vmatpush.xpose.msra.mxu0 0.0
    %3416 = vmatpush.xpose.msra.mxu0 0.0
    %3417 = vmatpush.xpose.msra.mxu0 0.0
    %3418 = vmatpush.xpose.msra.mxu0 0.0
    %3419 = vmatpush.xpose.msra.mxu0 0.0
    %3420 = vmatpush.xpose.msra.mxu0 0.0
    %3421 = vmatpush.xpose.msra.mxu0 0.0
    %3422 = vmatpush.xpose.msra.mxu0 0.0
    %3423 = vmatpush.xpose.msra.mxu0 0.0
    %3424 = vmatpush.xpose.msra.mxu0 0.0
    %3425 = vmatpush.xpose.msra.mxu0 0.0
    %3426 = vmatpush.xpose.msra.mxu0 0.0
    %3427 = vmatpush.xpose.msra.mxu0 0.0
    %3428 = vmatpush.xpose.msra.mxu0 %v3411
    %3429 = vmatmul.f32.gmra.mxu0 %v3409
    %v3430 = vpop.f32.mrf.mxu0
    %v3431 = vadd.f32 0.0, %v3430
    %3432 = vdwg.mxu0
    %v3433 = vmul.f32 %v3431, 0.35355338
    %v3434 = vsel %vm848, %v3433, -inf
    %3435 = vmax.xlane.f32.xlu0 %v3434
    %v3436 = vpop.xlane.xlu0 %3435
    %v3437 = vsub.f32 %v3433, %v3436
    %v3438 = vmul.f32 %v3437, 1.442695
    %v3439 = vpow.pop %v3438
    %v3440 = vsel %vm848, %v3439, 0.0
    %3441 = vadd.xlane.f32.xlu0 %v3440
    %v3442 = vpop.xlane.xlu0 %3441
    %v3443 = vrcp.pop %v3442
    %v3444 = vmul.f32 %v3439, %v3443
    %3445 = vrot.lane.b32.xlu0 %v3404, 64
    %v3446 = vpop.permute.xlu0 %3445
    %v3449 = vsel %vm848, %v3444, 0
    %3451 = vmatpush.msra.mxu0 0.0
    %3452 = vmatpush.msra.mxu0 0.0
    %3453 = vmatpush.msra.mxu0 0.0
    %3454 = vmatpush.msra.mxu0 0.0
    %3455 = vmatpush.msra.mxu0 0.0
    %3456 = vmatpush.msra.mxu0 0.0
    %3457 = vmatpush.msra.mxu0 0.0
    %3458 = vmatpush.msra.mxu0 0.0
    %3459 = vmatpush.msra.mxu0 0.0
    %3460 = vmatpush.msra.mxu0 0.0
    %3461 = vmatpush.msra.mxu0 0.0
    %3462 = vmatpush.msra.mxu0 0.0
    %3463 = vmatpush.msra.mxu0 0.0
    %3464 = vmatpush.msra.mxu0 0.0
    %3465 = vmatpush.msra.mxu0 0.0
    %3466 = vmatpush.msra.mxu0 %v3446
    %3467 = vmatmul.f32.gmra.mxu0 %v3449
    %v3468 = vpop.f32.mrf.mxu0
    %v3469 = vadd.f32 0.0, %v3468
    %3470 = vdwg.mxu0
    %3471 = vrot.lane.b32.xlu0 %v3404, 120
    %v3472 = vpop.permute.xlu0 %3471
    %3473 = vrot.lane.b32.xlu0 %v3404, 88
    %v3474 = vpop.permute.xlu0 %3473
    %v3475 = vsel %vm848, %v3472, 0
    %v3477 = vsel %vm848, %v3474, 0
    %3479 = vmatpush.xpose.msra.mxu0 0.0
    %3480 = vmatpush.xpose.msra.mxu0 0.0
    %3481 = vmatpush.xpose.msra.mxu0 0.0
    %3482 = vmatpush.xpose.msra.mxu0 0.0
    %3483 = vmatpush.xpose.msra.mxu0 0.0
    %3484 = vmatpush.xpose.msra.mxu0 0.0
    %3485 = vmatpush.xpose.msra.mxu0 0.0
    %3486 = vmatpush.xpose.msra.mxu0 0.0
    %3487 = vmatpush.xpose.msra.mxu0 0.0
    %3488 = vmatpush.xpose.msra.mxu0 0.0
    %3489 = vmatpush.xpose.msra.mxu0 0.0
    %3490 = vmatpush.xpose.msra.mxu0 0.0
    %3491 = vmatpush.xpose.msra.mxu0 0.0
    %3492 = vmatpush.xpose.msra.mxu0 0.0
    %3493 = vmatpush.xpose.msra.mxu0 0.0
    %3494 = vmatpush.xpose.msra.mxu0 %v3477
    %3495 = vmatmul.f32.gmra.mxu0 %v3475
    %v3496 = vpop.f32.mrf.mxu0
    %v3497 = vadd.f32 0.0, %v3496
    %3498 = vdwg.mxu0
    %v3499 = vmul.f32 %v3497, 0.35355338
    %v3500 = vsel %vm848, %v3499, -inf
    %3501 = vmax.xlane.f32.xlu0 %v3500
    %v3502 = vpop.xlane.xlu0 %3501
    %v3503 = vsub.f32 %v3499, %v3502
    %v3504 = vmul.f32 %v3503, 1.442695
    %v3505 = vpow.pop %v3504
    %v3506 = vsel %vm848, %v3505, 0.0
    %3507 = vadd.xlane.f32.xlu0 %v3506
    %v3508 = vpop.xlane.xlu0 %3507
    %v3509 = vrcp.pop %v3508
    %v3510 = vmul.f32 %v3505, %v3509
    %3511 = vrot.lane.b32.xlu0 %v3404, 56
    %v3512 = vpop.permute.xlu0 %3511
    %v3515 = vsel %vm848, %v3510, 0
    %3517 = vmatpush.msra.mxu0 0.0
    %3518 = vmatpush.msra.mxu0 0.0
    %3519 = vmatpush.msra.mxu0 0.0
    %3520 = vmatpush.msra.mxu0 0.0
    %3521 = vmatpush.msra.mxu0 0.0
    %3522 = vmatpush.msra.mxu0 0.0
    %3523 = vmatpush.msra.mxu0 0.0
    %3524 = vmatpush.msra.mxu0 0.0
    %3525 = vmatpush.msra.mxu0 0.0
    %3526 = vmatpush.msra.mxu0 0.0
    %3527 = vmatpush.msra.mxu0 0.0
    %3528 = vmatpush.msra.mxu0 0.0
    %3529 = vmatpush.msra.mxu0 0.0
    %3530 = vmatpush.msra.mxu0 0.0
    %3531 = vmatpush.msra.mxu0 0.0
    %3532 = vmatpush.msra.mxu0 %v3512
    %3533 = vmatmul.f32.gmra.mxu0 %v3515
    %v3534 = vpop.f32.mrf.mxu0
    %v3535 = vadd.f32 0.0, %v3534
    %3536 = vdwg.mxu0
    %3537 = vrot.lane.b32.xlu0 %v3404, 112
    %v3538 = vpop.permute.xlu0 %3537
    %3539 = vrot.lane.b32.xlu0 %v3404, 80
    %v3540 = vpop.permute.xlu0 %3539
    %v3541 = vsel %vm848, %v3538, 0
    %v3543 = vsel %vm848, %v3540, 0
    %3545 = vmatpush.xpose.msra.mxu0 0.0
    %3546 = vmatpush.xpose.msra.mxu0 0.0
    %3547 = vmatpush.xpose.msra.mxu0 0.0
    %3548 = vmatpush.xpose.msra.mxu0 0.0
    %3549 = vmatpush.xpose.msra.mxu0 0.0
    %3550 = vmatpush.xpose.msra.mxu0 0.0
    %3551 = vmatpush.xpose.msra.mxu0 0.0
    %3552 = vmatpush.xpose.msra.mxu0 0.0
    %3553 = vmatpush.xpose.msra.mxu0 0.0
    %3554 = vmatpush.xpose.msra.mxu0 0.0
    %3555 = vmatpush.xpose.msra.mxu0 0.0
    %3556 = vmatpush.xpose.msra.mxu0 0.0
    %3557 = vmatpush.xpose.msra.mxu0 0.0
    %3558 = vmatpush.xpose.msra.mxu0 0.0
    %3559 = vmatpush.xpose.msra.mxu0 0.0
    %3560 = vmatpush.xpose.msra.mxu0 %v3543
    %3561 = vmatmul.f32.gmra.mxu0 %v3541
    %v3562 = vpop.f32.mrf.mxu0
    %v3563 = vadd.f32 0.0, %v3562
    %3564 = vdwg.mxu0
    %v3565 = vmul.f32 %v3563, 0.35355338
    %v3566 = vsel %vm848, %v3565, -inf
    %3567 = vmax.xlane.f32.xlu0 %v3566
    %v3568 = vpop.xlane.xlu0 %3567
    %v3569 = vsub.f32 %v3565, %v3568
    %v3570 = vmul.f32 %v3569, 1.442695
    %v3571 = vpow.pop %v3570
    %v3572 = vsel %vm848, %v3571, 0.0
    %3573 = vadd.xlane.f32.xlu0 %v3572
    %v3574 = vpop.xlane.xlu0 %3573
    %v3575 = vrcp.pop %v3574
    %v3576 = vmul.f32 %v3571, %v3575
    %3577 = vrot.lane.b32.xlu0 %v3404, 48
    %v3578 = vpop.permute.xlu0 %3577
    %v3581 = vsel %vm848, %v3576, 0
    %3583 = vmatpush.msra.mxu0 0.0
    %3584 = vmatpush.msra.mxu0 0.0
    %3585 = vmatpush.msra.mxu0 0.0
    %3586 = vmatpush.msra.mxu0 0.0
    %3587 = vmatpush.msra.mxu0 0.0
    %3588 = vmatpush.msra.mxu0 0.0
    %3589 = vmatpush.msra.mxu0 0.0
    %3590 = vmatpush.msra.mxu0 0.0
    %3591 = vmatpush.msra.mxu0 0.0
    %3592 = vmatpush.msra.mxu0 0.0
    %3593 = vmatpush.msra.mxu0 0.0
    %3594 = vmatpush.msra.mxu0 0.0
    %3595 = vmatpush.msra.mxu0 0.0
    %3596 = vmatpush.msra.mxu0 0.0
    %3597 = vmatpush.msra.mxu0 0.0
    %3598 = vmatpush.msra.mxu0 %v3578
    %3599 = vmatmul.f32.gmra.mxu0 %v3581
    %v3600 = vpop.f32.mrf.mxu0
    %v3601 = vadd.f32 0.0, %v3600
    %3602 = vdwg.mxu0
    %3603 = vrot.lane.b32.xlu0 %v3404, 104
    %v3604 = vpop.permute.xlu0 %3603
    %3605 = vrot.lane.b32.xlu0 %v3404, 72
    %v3606 = vpop.permute.xlu0 %3605
    %v3607 = vsel %vm848, %v3604, 0
    %v3609 = vsel %vm848, %v3606, 0
    %3611 = vmatpush.xpose.msra.mxu0 0.0
    %3612 = vmatpush.xpose.msra.mxu0 0.0
    %3613 = vmatpush.xpose.msra.mxu0 0.0
    %3614 = vmatpush.xpose.msra.mxu0 0.0
    %3615 = vmatpush.xpose.msra.mxu0 0.0
    %3616 = vmatpush.xpose.msra.mxu0 0.0
    %3617 = vmatpush.xpose.msra.mxu0 0.0
    %3618 = vmatpush.xpose.msra.mxu0 0.0
    %3619 = vmatpush.xpose.msra.mxu0 0.0
    %3620 = vmatpush.xpose.msra.mxu0 0.0
    %3621 = vmatpush.xpose.msra.mxu0 0.0
    %3622 = vmatpush.xpose.msra.mxu0 0.0
    %3623 = vmatpush.xpose.msra.mxu0 0.0
    %3624 = vmatpush.xpose.msra.mxu0 0.0
    %3625 = vmatpush.xpose.msra.mxu0 0.0
    %3626 = vmatpush.xpose.msra.mxu0 %v3609
    %3627 = vmatmul.f32.gmra.mxu0 %v3607
    %v3628 = vpop.f32.mrf.mxu0
    %v3629 = vadd.f32 0.0, %v3628
    %3630 = vdwg.mxu0
    %v3631 = vmul.f32 %v3629, 0.35355338
    %v3632 = vsel %vm848, %v3631, -inf
    %3633 = vmax.xlane.f32.xlu0 %v3632
    %v3634 = vpop.xlane.xlu0 %3633
    %v3635 = vsub.f32 %v3631, %v3634
    %v3636 = vmul.f32 %v3635, 1.442695
    %v3637 = vpow.pop %v3636
    %v3638 = vsel %vm848, %v3637, 0.0
    %3639 = vadd.xlane.f32.xlu0 %v3638
    %v3640 = vpop.xlane.xlu0 %3639
    %v3641 = vrcp.pop %v3640
    %v3642 = vmul.f32 %v3637, %v3641
    %3643 = vrot.lane.b32.xlu0 %v3404, 40
    %v3644 = vpop.permute.xlu0 %3643
    %v3647 = vsel %vm848, %v3642, 0
    %3649 = vmatpush.msra.mxu0 0.0
    %3650 = vmatpush.msra.mxu0 0.0
    %3651 = vmatpush.msra.mxu0 0.0
    %3652 = vmatpush.msra.mxu0 0.0
    %3653 = vmatpush.msra.mxu0 0.0
    %3654 = vmatpush.msra.mxu0 0.0
    %3655 = vmatpush.msra.mxu0 0.0
    %3656 = vmatpush.msra.mxu0 0.0
    %3657 = vmatpush.msra.mxu0 0.0
    %3658 = vmatpush.msra.mxu0 0.0
    %3659 = vmatpush.msra.mxu0 0.0
    %3660 = vmatpush.msra.mxu0 0.0
    %3661 = vmatpush.msra.mxu0 0.0
    %3662 = vmatpush.msra.mxu0 0.0
    %3663 = vmatpush.msra.mxu0 0.0
    %3664 = vmatpush.msra.mxu0 %v3644
    %3665 = vmatmul.f32.gmra.mxu0 %v3647
    %v3666 = vpop.f32.mrf.mxu0
    %v3667 = vadd.f32 0.0, %v3666
    %3668 = vdwg.mxu0
    %3670 = vrot.lane.b32.xlu0 %v3535, 8
    %v3671 = vpop.permute.xlu0 %3670
    %3674 = vrot.lane.b32.xlu0 %v3601, 16
    %v3675 = vpop.permute.xlu0 %3674
    %3678 = vrot.lane.b32.xlu0 %v3667, 24
    %v3679 = vpop.permute.xlu0 %3678
    %v3681 = vsel %vm848, %v3469, %v3671
    %v3682 = vsel %vm1122, %v3681, %v3675
    %v3683 = vsel %vm1124, %v3682, %v3679
    %v3685 = vsel %vm821, %v3683, 0
    %3687 = vmatpush.msra.mxu0 0.0
    %3688 = vmatpush.msra.mxu0 0.0
    %3689 = vmatpush.msra.mxu0 0.0
    %3690 = vmatpush.msra.mxu0 0.0
    %3691 = vmatpush.msra.mxu0 0.0
    %3692 = vmatpush.msra.mxu0 0.0
    %3693 = vmatpush.msra.mxu0 0.0
    %3694 = vmatpush.msra.mxu0 0.0
    %3695 = vmatpush.msra.mxu0 0.0
    %3696 = vmatpush.msra.mxu0 0.0
    %3697 = vmatpush.msra.mxu0 0.0
    %3698 = vmatpush.msra.mxu0 0.0
    %3699 = vmatpush.msra.mxu0 %v750
    %3700 = vmatpush.msra.mxu0 %v749
    %3701 = vmatpush.msra.mxu0 %v748
    %3702 = vmatpush.msra.mxu0 %v747
    %3703 = vmatmul.f32.gmra.mxu0 %v3685
    %v3704 = vpop.f32.mrf.mxu0
    %v3705 = vadd.f32 %v1619, %v3704
    %3706 = vdwg.mxu0
    %v3707 = vadd.f32 %v3382, %v3705
    %v3708 = vsel %vm821, %v3707, 0.0
    %3709 = vadd.xlane.f32.xlu0 %v3708
    %v3710 = vpop.xlane.xlu0 %3709
    %v3711 = vmul.f32 %v3710, %v1162
    %v3712 = vsub.f32 %v3707, %v3711
    %v3713 = vmul.f32 %v3712, %v3712
    %v3714 = vsel %vm821, %v3713, 0.0
    %3715 = vadd.xlane.f32.xlu0 %v3714
    %v3716 = vpop.xlane.xlu0 %3715
    %v3717 = vmul.f32 %v3716, %v1162
    %v3718 = vadd.f32 %v3717, 1e-05
    %v3719 = vrsqrt.pop %v3718
    %v3720 = vmul.f32 %v3719, %v3718
    %v3721 = vmul.f32 %v3720, %v3719
    %v3722 = vmul.f32 0.5, %v3721
    %v3723 = vsub.f32 1.5, %v3722
    %v3724 = vmul.f32 %v3719, %v3723
    %vm3725 = vweird.f32 %v3718
    %vm3726 = vweird.f32 %v3719
    %vm3727 = vmor %vm3725, %vm3726
    %v3728 = vsel %vm3727, %v3719, %v3724
    %v3729 = vmul.f32 %v3712, %v3728
    %v3730 = vmul.f32 %v3729, %v1668
    %v3731 = vadd.f32 %v3730, %v1672
    %v3733 = vsel %vm821, %v3731, 0
    %3735 = vmatpush.msra.mxu0 0.0
    %3736 = vmatpush.msra.mxu0 0.0
    %3737 = vmatpush.msra.mxu0 0.0
    %3738 = vmatpush.msra.mxu0 0.0
    %3739 = vmatpush.msra.mxu0 0.0
    %3740 = vmatpush.msra.mxu0 0.0
    %3741 = vmatpush.msra.mxu0 0.0
    %3742 = vmatpush.msra.mxu0 0.0
    %3743 = vmatpush.msra.mxu0 0.0
    %3744 = vmatpush.msra.mxu0 0.0
    %3745 = vmatpush.msra.mxu0 0.0
    %3746 = vmatpush.msra.mxu0 0.0
    %3747 = vmatpush.msra.mxu0 %v760
    %3748 = vmatpush.msra.mxu0 %v759
    %3749 = vmatpush.msra.mxu0 %v758
    %3750 = vmatpush.msra.mxu0 %v757
    %3751 = vmatmul.f32.gmra.mxu0 %v3733
    %v3752 = vpop.f32.mrf.mxu0
    %v3753 = vadd.f32 %v1676, %v3752
    %3754 = vdwg.mxu0
    %v3755 = vmul.f32 %v3753, 0.5
    %v3756 = vmul.f32 %v3753, 0.70710677
    %vm3757 = vcmp.lt.f32.partialorder %v3756, 0.0
    %v3758 = vsel %vm3757, -1.0, 1.0
    %v3759 = vand.u32 2147483647, %v3756
    %v3760 = vmul.f32 %v3759, 0.3275911
    %v3761 = vadd.f32 %v3760, 1.0
    %v3762 = vrcp.pop %v3761
    %v3763 = vmul.f32 %v3761, %v3762
    %v3764 = vsub.f32 1.0, %v3763
    %v3765 = vmul.f32 %v3762, %v3764
    %v3766 = vadd.f32 %v3762, %v3765
    %vm3767 = vweird.f32 %v3761
    %vm3768 = vweird.f32 %v3762
    %vm3769 = vmor %vm3767, %vm3768
    %v3770 = vsel %vm3769, %v3762, %v3766
    %v3771 = vand.u32 2147483647, %v3761
    %vm3772 = vcmp.eq.f32.partialorder %v3771, 8.507059e+37
    %v3773 = vand.u32 %v3761, 2147483648
    %v3774 = vor.u32 1.1754944e-38, %v3773
    %v3775 = vsel %vm3772, %v3774, %v3770
    %v3776 = vmul.f32 1.0, %v3775
    %v3777 = vmul.f32 %v3776, 1.0614054
    %v3778 = vadd.f32 %v3777, -1.4531521
    %v3779 = vmul.f32 %v3778, %v3776
    %v3780 = vadd.f32 %v3779, 1.4214138
    %v3781 = vmul.f32 %v3780, %v3776
    %v3782 = vadd.f32 %v3781, -0.28449672
    %v3783 = vmul.f32 %v3782, %v3776
    %v3784 = vadd.f32 %v3783, 0.2548296
    %v3785 = vmul.f32 %v3784, %v3776
    %v3786 = vsub.f32 0.0, %v3759
    %v3787 = vmul.f32 %v3786, %v3759
    %v3788 = vmul.f32 %v3787, 1.442695
    %v3789 = vpow.pop %v3788
    %v3790 = vmul.f32 %v3785, %v3789
    %v3791 = vsub.f32 1.0, %v3790
    %v3792 = vmul.f32 %v3758, %v3791
    %v3793 = vadd.f32 %v3792, 1.0
    %v3794 = vmul.f32 %v3755, %v3793
    %v3796 = vsel %vm1259, %v3794, 0
    %3798 = vmatpush.msra.mxu0 0.0
    %3799 = vmatpush.msra.mxu0 0.0
    %3800 = vmatpush.msra.mxu0 0.0
    %3801 = vmatpush.msra.mxu0 0.0
    %3802 = vmatpush.msra.mxu0 0.0
    %3803 = vmatpush.msra.mxu0 0.0
    %3804 = vmatpush.msra.mxu0 0.0
    %3805 = vmatpush.msra.mxu0 0.0
    %3806 = vmatpush.msra.mxu0 %v768
    %3807 = vmatpush.msra.mxu0 %v767
    %3808 = vmatpush.msra.mxu0 %v766
    %3809 = vmatpush.msra.mxu0 %v765
    %3810 = vmatpush.msra.mxu0 %v764
    %3811 = vmatpush.msra.mxu0 %v763
    %3812 = vmatpush.msra.mxu0 %v762
    %3813 = vmatpush.msra.mxu0 %v761
    %3814 = vmatmul.f32.gmra.mxu0 %v3796
    %v3815 = vpop.f32.mrf.mxu0
    %v3816 = vadd.f32 %v1742, %v3815
    %3817 = vdwg.mxu0
    %v3818 = vadd.f32 %v3731, %v3816
    %v3819 = vsel %vm821, %v3818, 0.0
    %3820 = vadd.xlane.f32.xlu0 %v3819
    %v3821 = vpop.xlane.xlu0 %3820
    %v3822 = vmul.f32 %v3821, %v1162
    %v3823 = vsub.f32 %v3818, %v3822
    %v3824 = vmul.f32 %v3823, %v3823
    %v3825 = vsel %vm821, %v3824, 0.0
    %3826 = vadd.xlane.f32.xlu0 %v3825
    %v3827 = vpop.xlane.xlu0 %3826
    %v3828 = vmul.f32 %v3827, %v1162
    %v3829 = vadd.f32 %v3828, 1e-05
    %v3830 = vrsqrt.pop %v3829
    %v3831 = vmul.f32 %v3830, %v3829
    %v3832 = vmul.f32 %v3831, %v3830
    %v3833 = vmul.f32 0.5, %v3832
    %v3834 = vsub.f32 1.5, %v3833
    %v3835 = vmul.f32 %v3830, %v3834
    %vm3836 = vweird.f32 %v3829
    %vm3837 = vweird.f32 %v3830
    %vm3838 = vmor %vm3836, %vm3837
    %v3839 = vsel %vm3838, %v3830, %v3835
    %v3840 = vmul.f32 %v3823, %v3839
    %v3841 = vmul.f32 %v3840, %v1791
    %v3842 = vadd.f32 %v3841, %v1795
    %v3843 = vsel %vm821, %v3842, 0.0
    %3844 = vadd.xlane.f32.xlu0 %v3843
    %v3845 = vpop.xlane.xlu0 %3844
    %v3846 = vmul.f32 %v3845, %v1162
    %v3847 = vsub.f32 %v3842, %v3846
    %v3848 = vmul.f32 %v3847, %v3847
    %v3849 = vsel %vm821, %v3848, 0.0
    %3850 = vadd.xlane.f32.xlu0 %v3849
    %v3851 = vpop.xlane.xlu0 %3850
    %v3852 = vmul.f32 %v3851, %v1162
    %v3853 = vadd.f32 %v3852, 1e-05
    %v3854 = vrsqrt.pop %v3853
    %v3855 = vmul.f32 %v3854, %v3853
    %v3856 = vmul.f32 %v3855, %v3854
    %v3857 = vmul.f32 0.5, %v3856
    %v3858 = vsub.f32 1.5, %v3857
    %v3859 = vmul.f32 %v3854, %v3858
    %vm3860 = vweird.f32 %v3853
    %vm3861 = vweird.f32 %v3854
    %vm3862 = vmor %vm3860, %vm3861
    %v3863 = vsel %vm3862, %v3854, %v3859
    %v3864 = vmul.f32 %v3847, %v3863
    %v3865 = vmul.f32 %v3864, %v1821
    %v3866 = vadd.f32 %v3865, %v1825
    %s3867 = scalar_lea.vmem %s3, 8
    %v3868 = vld [vmem:[%s3867] sm:$0x1f]
    %v3870 = vsel %vm789, %v3868, 0
    %3872 = vmatpush.msra.mxu0 0.0
    %3873 = vmatpush.msra.mxu0 0.0
    %3874 = vmatpush.msra.mxu0 0.0
    %3875 = vmatpush.msra.mxu0 0.0
    %3876 = vmatpush.msra.mxu0 0.0
    %3877 = vmatpush.msra.mxu0 0.0
    %3878 = vmatpush.msra.mxu0 0.0
    %3879 = vmatpush.msra.mxu0 0.0
    %3880 = vmatpush.msra.mxu0 0.0
    %3881 = vmatpush.msra.mxu0 0.0
    %3882 = vmatpush.msra.mxu0 0.0
    %3883 = vmatpush.msra.mxu0 0.0
    %3884 = vmatpush.msra.mxu0 0.0
    %3885 = vmatpush.msra.mxu0 0.0
    %3886 = vmatpush.msra.mxu0 0.0
    %3887 = vmatpush.msra.mxu0 %v1836
    %3888 = vmatmul.f32.gmra.mxu0 %v3870
    %v3889 = vpop.f32.mrf.mxu0
    %v3890 = vadd.f32 %v1830, %v3889
    %3891 = vdwg.mxu0
    %v3892 = vadd.f32 %v3890, %v670
    %v3894 = vsel %vm821, %v3892, 0
    %3896 = vmatpush.msra.mxu0 0.0
    %3897 = vmatpush.msra.mxu0 0.0
    %3898 = vmatpush.msra.mxu0 0.0
    %3899 = vmatpush.msra.mxu0 0.0
    %3900 = vmatpush.msra.mxu0 0.0
    %3901 = vmatpush.msra.mxu0 0.0
    %3902 = vmatpush.msra.mxu0 0.0
    %3903 = vmatpush.msra.mxu0 0.0
    %3904 = vmatpush.msra.mxu0 0.0
    %3905 = vmatpush.msra.mxu0 0.0
    %3906 = vmatpush.msra.mxu0 0.0
    %3907 = vmatpush.msra.mxu0 0.0
    %3908 = vmatpush.msra.mxu0 %v711
    %3909 = vmatpush.msra.mxu0 %v710
    %3910 = vmatpush.msra.mxu0 %v709
    %3911 = vmatpush.msra.mxu0 %v708
    %3912 = vmatmul.f32.gmra.mxu0 %v3894
    %v3913 = vpop.f32.mrf.mxu0
    %v3914 = vadd.f32 %v1860, %v3913
    %3915 = vdwg.mxu0
    %3917 = vrot.lane.b32.xlu0 %v3914, 96
    %v3918 = vpop.permute.xlu0 %3917
    %v3919 = vsel %vm848, %v3914, 0
    %v3921 = vsel %vm848, %v3918, 0
    %3923 = vmatpush.xpose.msra.mxu0 0.0
    %3924 = vmatpush.xpose.msra.mxu0 0.0
    %3925 = vmatpush.xpose.msra.mxu0 0.0
    %3926 = vmatpush.xpose.msra.mxu0 0.0
    %3927 = vmatpush.xpose.msra.mxu0 0.0
    %3928 = vmatpush.xpose.msra.mxu0 0.0
    %3929 = vmatpush.xpose.msra.mxu0 0.0
    %3930 = vmatpush.xpose.msra.mxu0 0.0
    %3931 = vmatpush.xpose.msra.mxu0 0.0
    %3932 = vmatpush.xpose.msra.mxu0 0.0
    %3933 = vmatpush.xpose.msra.mxu0 0.0
    %3934 = vmatpush.xpose.msra.mxu0 0.0
    %3935 = vmatpush.xpose.msra.mxu0 0.0
    %3936 = vmatpush.xpose.msra.mxu0 0.0
    %3937 = vmatpush.xpose.msra.mxu0 0.0
    %3938 = vmatpush.xpose.msra.mxu0 %v3921
    %3939 = vmatmul.f32.gmra.mxu0 %v3919
    %v3940 = vpop.f32.mrf.mxu0
    %v3941 = vadd.f32 0.0, %v3940
    %3942 = vdwg.mxu0
    %v3943 = vmul.f32 %v3941, 0.35355338
    %v3944 = vsel %vm784, -inf, %v3943
    %v3945 = vsel %vm1914, %v3944, -inf
    %3946 = vmax.xlane.f32.xlu0 %v3945
    %v3947 = vpop.xlane.xlu0 %3946
    %v3948 = vsub.f32 %v3944, %v3947
    %v3949 = vmul.f32 %v3948, 1.442695
    %v3950 = vpow.pop %v3949
    %v3951 = vsel %vm1914, %v3950, 0.0
    %3952 = vadd.xlane.f32.xlu0 %v3951
    %v3953 = vpop.xlane.xlu0 %3952
    %v3954 = vrcp.pop %v3953
    %v3955 = vmul.f32 %v3950, %v3954
    %3956 = vrot.lane.b32.xlu0 %v3914, 64
    %v3957 = vpop.permute.xlu0 %3956
    %v3959 = vsel %vm1928, %v3955, 0
    %v3961 = vsel %vm1932, %v3957, 0
    %3963 = vmatpush.msra.mxu0 0.0
    %3964 = vmatpush.msra.mxu0 0.0
    %3965 = vmatpush.msra.mxu0 0.0
    %3966 = vmatpush.msra.mxu0 0.0
    %3967 = vmatpush.msra.mxu0 0.0
    %3968 = vmatpush.msra.mxu0 0.0
    %3969 = vmatpush.msra.mxu0 0.0
    %3970 = vmatpush.msra.mxu0 0.0
    %3971 = vmatpush.msra.mxu0 0.0
    %3972 = vmatpush.msra.mxu0 0.0
    %3973 = vmatpush.msra.mxu0 0.0
    %3974 = vmatpush.msra.mxu0 0.0
    %3975 = vmatpush.msra.mxu0 0.0
    %3976 = vmatpush.msra.mxu0 0.0
    %3977 = vmatpush.msra.mxu0 0.0
    %3978 = vmatpush.msra.mxu0 %v3961
    %3979 = vmatmul.f32.gmra.mxu0 %v3959
    %v3980 = vpop.f32.mrf.mxu0
    %v3981 = vadd.f32 0.0, %v3980
    %3982 = vdwg.mxu0
    %3983 = vrot.lane.b32.xlu0 %v3914, 120
    %v3984 = vpop.permute.xlu0 %3983
    %3985 = vrot.lane.b32.xlu0 %v3914, 88
    %v3986 = vpop.permute.xlu0 %3985
    %v3987 = vsel %vm848, %v3984, 0
    %v3989 = vsel %vm848, %v3986, 0
    %3991 = vmatpush.xpose.msra.mxu0 0.0
    %3992 = vmatpush.xpose.msra.mxu0 0.0
    %3993 = vmatpush.xpose.msra.mxu0 0.0
    %3994 = vmatpush.xpose.msra.mxu0 0.0
    %3995 = vmatpush.xpose.msra.mxu0 0.0
    %3996 = vmatpush.xpose.msra.mxu0 0.0
    %3997 = vmatpush.xpose.msra.mxu0 0.0
    %3998 = vmatpush.xpose.msra.mxu0 0.0
    %3999 = vmatpush.xpose.msra.mxu0 0.0
    %4000 = vmatpush.xpose.msra.mxu0 0.0
    %4001 = vmatpush.xpose.msra.mxu0 0.0
    %4002 = vmatpush.xpose.msra.mxu0 0.0
    %4003 = vmatpush.xpose.msra.mxu0 0.0
    %4004 = vmatpush.xpose.msra.mxu0 0.0
    %4005 = vmatpush.xpose.msra.mxu0 0.0
    %4006 = vmatpush.xpose.msra.mxu0 %v3989
    %4007 = vmatmul.f32.gmra.mxu0 %v3987
    %v4008 = vpop.f32.mrf.mxu0
    %v4009 = vadd.f32 0.0, %v4008
    %4010 = vdwg.mxu0
    %v4011 = vmul.f32 %v4009, 0.35355338
    %v4012 = vsel %vm784, -inf, %v4011
    %v4013 = vsel %vm1914, %v4012, -inf
    %4014 = vmax.xlane.f32.xlu0 %v4013
    %v4015 = vpop.xlane.xlu0 %4014
    %v4016 = vsub.f32 %v4012, %v4015
    %v4017 = vmul.f32 %v4016, 1.442695
    %v4018 = vpow.pop %v4017
    %v4019 = vsel %vm1914, %v4018, 0.0
    %4020 = vadd.xlane.f32.xlu0 %v4019
    %v4021 = vpop.xlane.xlu0 %4020
    %v4022 = vrcp.pop %v4021
    %v4023 = vmul.f32 %v4018, %v4022
    %4024 = vrot.lane.b32.xlu0 %v3914, 56
    %v4025 = vpop.permute.xlu0 %4024
    %v4027 = vsel %vm1928, %v4023, 0
    %v4029 = vsel %vm1932, %v4025, 0
    %4031 = vmatpush.msra.mxu0 0.0
    %4032 = vmatpush.msra.mxu0 0.0
    %4033 = vmatpush.msra.mxu0 0.0
    %4034 = vmatpush.msra.mxu0 0.0
    %4035 = vmatpush.msra.mxu0 0.0
    %4036 = vmatpush.msra.mxu0 0.0
    %4037 = vmatpush.msra.mxu0 0.0
    %4038 = vmatpush.msra.mxu0 0.0
    %4039 = vmatpush.msra.mxu0 0.0
    %4040 = vmatpush.msra.mxu0 0.0
    %4041 = vmatpush.msra.mxu0 0.0
    %4042 = vmatpush.msra.mxu0 0.0
    %4043 = vmatpush.msra.mxu0 0.0
    %4044 = vmatpush.msra.mxu0 0.0
    %4045 = vmatpush.msra.mxu0 0.0
    %4046 = vmatpush.msra.mxu0 %v4029
    %4047 = vmatmul.f32.gmra.mxu0 %v4027
    %v4048 = vpop.f32.mrf.mxu0
    %v4049 = vadd.f32 0.0, %v4048
    %4050 = vdwg.mxu0
    %4051 = vrot.lane.b32.xlu0 %v3914, 112
    %v4052 = vpop.permute.xlu0 %4051
    %4053 = vrot.lane.b32.xlu0 %v3914, 80
    %v4054 = vpop.permute.xlu0 %4053
    %v4055 = vsel %vm848, %v4052, 0
    %v4057 = vsel %vm848, %v4054, 0
    %4059 = vmatpush.xpose.msra.mxu0 0.0
    %4060 = vmatpush.xpose.msra.mxu0 0.0
    %4061 = vmatpush.xpose.msra.mxu0 0.0
    %4062 = vmatpush.xpose.msra.mxu0 0.0
    %4063 = vmatpush.xpose.msra.mxu0 0.0
    %4064 = vmatpush.xpose.msra.mxu0 0.0
    %4065 = vmatpush.xpose.msra.mxu0 0.0
    %4066 = vmatpush.xpose.msra.mxu0 0.0
    %4067 = vmatpush.xpose.msra.mxu0 0.0
    %4068 = vmatpush.xpose.msra.mxu0 0.0
    %4069 = vmatpush.xpose.msra.mxu0 0.0
    %4070 = vmatpush.xpose.msra.mxu0 0.0
    %4071 = vmatpush.xpose.msra.mxu0 0.0
    %4072 = vmatpush.xpose.msra.mxu0 0.0
    %4073 = vmatpush.xpose.msra.mxu0 0.0
    %4074 = vmatpush.xpose.msra.mxu0 %v4057
    %4075 = vmatmul.f32.gmra.mxu0 %v4055
    %v4076 = vpop.f32.mrf.mxu0
    %v4077 = vadd.f32 0.0, %v4076
    %4078 = vdwg.mxu0
    %v4079 = vmul.f32 %v4077, 0.35355338
    %v4080 = vsel %vm784, -inf, %v4079
    %v4081 = vsel %vm1914, %v4080, -inf
    %4082 = vmax.xlane.f32.xlu0 %v4081
    %v4083 = vpop.xlane.xlu0 %4082
    %v4084 = vsub.f32 %v4080, %v4083
    %v4085 = vmul.f32 %v4084, 1.442695
    %v4086 = vpow.pop %v4085
    %v4087 = vsel %vm1914, %v4086, 0.0
    %4088 = vadd.xlane.f32.xlu0 %v4087
    %v4089 = vpop.xlane.xlu0 %4088
    %v4090 = vrcp.pop %v4089
    %v4091 = vmul.f32 %v4086, %v4090
    %4092 = vrot.lane.b32.xlu0 %v3914, 48
    %v4093 = vpop.permute.xlu0 %4092
    %v4095 = vsel %vm1928, %v4091, 0
    %v4097 = vsel %vm1932, %v4093, 0
    %4099 = vmatpush.msra.mxu0 0.0
    %4100 = vmatpush.msra.mxu0 0.0
    %4101 = vmatpush.msra.mxu0 0.0
    %4102 = vmatpush.msra.mxu0 0.0
    %4103 = vmatpush.msra.mxu0 0.0
    %4104 = vmatpush.msra.mxu0 0.0
    %4105 = vmatpush.msra.mxu0 0.0
    %4106 = vmatpush.msra.mxu0 0.0
    %4107 = vmatpush.msra.mxu0 0.0
    %4108 = vmatpush.msra.mxu0 0.0
    %4109 = vmatpush.msra.mxu0 0.0
    %4110 = vmatpush.msra.mxu0 0.0
    %4111 = vmatpush.msra.mxu0 0.0
    %4112 = vmatpush.msra.mxu0 0.0
    %4113 = vmatpush.msra.mxu0 0.0
    %4114 = vmatpush.msra.mxu0 %v4097
    %4115 = vmatmul.f32.gmra.mxu0 %v4095
    %v4116 = vpop.f32.mrf.mxu0
    %v4117 = vadd.f32 0.0, %v4116
    %4118 = vdwg.mxu0
    %4119 = vrot.lane.b32.xlu0 %v3914, 104
    %v4120 = vpop.permute.xlu0 %4119
    %4121 = vrot.lane.b32.xlu0 %v3914, 72
    %v4122 = vpop.permute.xlu0 %4121
    %v4123 = vsel %vm848, %v4120, 0
    %v4125 = vsel %vm848, %v4122, 0
    %4127 = vmatpush.xpose.msra.mxu0 0.0
    %4128 = vmatpush.xpose.msra.mxu0 0.0
    %4129 = vmatpush.xpose.msra.mxu0 0.0
    %4130 = vmatpush.xpose.msra.mxu0 0.0
    %4131 = vmatpush.xpose.msra.mxu0 0.0
    %4132 = vmatpush.xpose.msra.mxu0 0.0
    %4133 = vmatpush.xpose.msra.mxu0 0.0
    %4134 = vmatpush.xpose.msra.mxu0 0.0
    %4135 = vmatpush.xpose.msra.mxu0 0.0
    %4136 = vmatpush.xpose.msra.mxu0 0.0
    %4137 = vmatpush.xpose.msra.mxu0 0.0
    %4138 = vmatpush.xpose.msra.mxu0 0.0
    %4139 = vmatpush.xpose.msra.mxu0 0.0
    %4140 = vmatpush.xpose.msra.mxu0 0.0
    %4141 = vmatpush.xpose.msra.mxu0 0.0
    %4142 = vmatpush.xpose.msra.mxu0 %v4125
    %4143 = vmatmul.f32.gmra.mxu0 %v4123
    %v4144 = vpop.f32.mrf.mxu0
    %v4145 = vadd.f32 0.0, %v4144
    %4146 = vdwg.mxu0
    %v4147 = vmul.f32 %v4145, 0.35355338
    %v4148 = vsel %vm784, -inf, %v4147
    %v4149 = vsel %vm1914, %v4148, -inf
    %4150 = vmax.xlane.f32.xlu0 %v4149
    %v4151 = vpop.xlane.xlu0 %4150
    %v4152 = vsub.f32 %v4148, %v4151
    %v4153 = vmul.f32 %v4152, 1.442695
    %v4154 = vpow.pop %v4153
    %v4155 = vsel %vm1914, %v4154, 0.0
    %4156 = vadd.xlane.f32.xlu0 %v4155
    %v4157 = vpop.xlane.xlu0 %4156
    %v4158 = vrcp.pop %v4157
    %v4159 = vmul.f32 %v4154, %v4158
    %4160 = vrot.lane.b32.xlu0 %v3914, 40
    %v4161 = vpop.permute.xlu0 %4160
    %v4163 = vsel %vm1928, %v4159, 0
    %v4165 = vsel %vm1932, %v4161, 0
    %4167 = vmatpush.msra.mxu0 0.0
    %4168 = vmatpush.msra.mxu0 0.0
    %4169 = vmatpush.msra.mxu0 0.0
    %4170 = vmatpush.msra.mxu0 0.0
    %4171 = vmatpush.msra.mxu0 0.0
    %4172 = vmatpush.msra.mxu0 0.0
    %4173 = vmatpush.msra.mxu0 0.0
    %4174 = vmatpush.msra.mxu0 0.0
    %4175 = vmatpush.msra.mxu0 0.0
    %4176 = vmatpush.msra.mxu0 0.0
    %4177 = vmatpush.msra.mxu0 0.0
    %4178 = vmatpush.msra.mxu0 0.0
    %4179 = vmatpush.msra.mxu0 0.0
    %4180 = vmatpush.msra.mxu0 0.0
    %4181 = vmatpush.msra.mxu0 0.0
    %4182 = vmatpush.msra.mxu0 %v4165
    %4183 = vmatmul.f32.gmra.mxu0 %v4163
    %v4184 = vpop.f32.mrf.mxu0
    %v4185 = vadd.f32 0.0, %v4184
    %4186 = vdwg.mxu0
    %v4188 = vrot.slane %v3981, 1
    %4189 = vrot.lane.b32.xlu0 %v4188, 8
    %v4190 = vpop.permute.xlu0 %4189
    %v4192 = vrot.slane %v3981, 2
    %4193 = vrot.lane.b32.xlu0 %v4192, 16
    %v4194 = vpop.permute.xlu0 %4193
    %v4196 = vrot.slane %v3981, 3
    %4197 = vrot.lane.b32.xlu0 %v4196, 24
    %v4198 = vpop.permute.xlu0 %4197
    %v4200 = vsel %vm848, %v3981, %v4190
    %v4201 = vsel %vm1122, %v4200, %v4194
    %v4202 = vsel %vm1124, %v4201, %v4198
    %v4204 = vrot.slane %v4049, 4
    %4205 = vrot.lane.b32.xlu0 %v4204, 8
    %v4206 = vpop.permute.xlu0 %4205
    %v4208 = vrot.slane %v4049, 5
    %4209 = vrot.lane.b32.xlu0 %v4208, 16
    %v4210 = vpop.permute.xlu0 %4209
    %v4212 = vrot.slane %v4049, 6
    %4213 = vrot.lane.b32.xlu0 %v4212, 24
    %v4214 = vpop.permute.xlu0 %4213
    %v4216 = vsel %vm848, %v3981, %v4206
    %v4217 = vsel %vm1122, %v4216, %v4210
    %v4218 = vsel %vm1124, %v4217, %v4214
    %v4219 = vrot.slane %v4049, 1
    %4220 = vrot.lane.b32.xlu0 %v4219, 8
    %v4221 = vpop.permute.xlu0 %4220
    %v4224 = vrot.slane %v4117, 5
    %4225 = vrot.lane.b32.xlu0 %v4224, 16
    %v4226 = vpop.permute.xlu0 %4225
    %v4228 = vrot.slane %v4117, 6
    %4229 = vrot.lane.b32.xlu0 %v4228, 24
    %v4230 = vpop.permute.xlu0 %4229
    %v4232 = vsel %vm848, %v4049, %v4221
    %v4233 = vsel %vm1122, %v4232, %v4226
    %v4234 = vsel %vm1124, %v4233, %v4230
    %v4235 = vrot.slane %v4117, 1
    %4236 = vrot.lane.b32.xlu0 %v4235, 8
    %v4237 = vpop.permute.xlu0 %4236
    %v4239 = vrot.slane %v4117, 2
    %4240 = vrot.lane.b32.xlu0 %v4239, 16
    %v4241 = vpop.permute.xlu0 %4240
    %v4244 = vrot.slane %v4185, 6
    %4245 = vrot.lane.b32.xlu0 %v4244, 24
    %v4246 = vpop.permute.xlu0 %4245
    %v4248 = vsel %vm848, %v4117, %v4237
    %v4249 = vsel %vm1122, %v4248, %v4241
    %v4250 = vsel %vm1124, %v4249, %v4246
    %v4251 = vrot.slane %v4185, 1
    %4252 = vrot.lane.b32.xlu0 %v4251, 8
    %v4253 = vpop.permute.xlu0 %4252
    %v4255 = vrot.slane %v4185, 2
    %4256 = vrot.lane.b32.xlu0 %v4255, 16
    %v4257 = vpop.permute.xlu0 %4256
    %v4259 = vrot.slane %v4185, 3
    %4260 = vrot.lane.b32.xlu0 %v4259, 24
    %v4261 = vpop.permute.xlu0 %4260
    %v4263 = vsel %vm848, %v4185, %v4253
    %v4264 = vsel %vm1122, %v4263, %v4257
    %v4265 = vsel %vm1124, %v4264, %v4261
    %v4267 = vrot.slane %v4218, 3
    %v4270 = vrot.slane %v4234, 1
    %v4273 = vrot.slane %v4250, 7
    %v4276 = vrot.slane %v4265, 5
    %v4278 = vsel %vm2250, %v4202, %v4267
    %v4279 = vsel %vm2252, %v4278, %v4270
    %v4280 = vsel %vm2254, %v4279, %v4273
    %v4281 = vsel %vm793, %v4280, %v4276
    %v4283 = vsel %vm821, %v4281, 0
    %4285 = vmatpush.msra.mxu0 0.0
    %4286 = vmatpush.msra.mxu0 0.0
    %4287 = vmatpush.msra.mxu0 0.0
    %4288 = vmatpush.msra.mxu0 0.0
    %4289 = vmatpush.msra.mxu0 0.0
    %4290 = vmatpush.msra.mxu0 0.0
    %4291 = vmatpush.msra.mxu0 0.0
    %4292 = vmatpush.msra.mxu0 0.0
    %4293 = vmatpush.msra.mxu0 0.0
    %4294 = vmatpush.msra.mxu0 0.0
    %4295 = vmatpush.msra.mxu0 0.0
    %4296 = vmatpush.msra.mxu0 0.0
    %4297 = vmatpush.msra.mxu0 %v707
    %4298 = vmatpush.msra.mxu0 %v706
    %4299 = vmatpush.msra.mxu0 %v705
    %4300 = vmatpush.msra.mxu0 %v704
    %4301 = vmatmul.f32.gmra.mxu0 %v4283
    %v4302 = vpop.f32.mrf.mxu0
    %v4303 = vadd.f32 %v2258, %v4302
    %4304 = vdwg.mxu0
    %v4305 = vadd.f32 %v3892, %v4303
    %v4306 = vsel %vm2284, %v4305, 0.0
    %4307 = vadd.xlane.f32.xlu0 %v4306
    %v4308 = vpop.xlane.xlu0 %4307
    %v4309 = vmul.f32 %v4308, %v1162
    %v4310 = vsub.f32 %v4305, %v4309
    %v4311 = vmul.f32 %v4310, %v4310
    %v4312 = vsel %vm2284, %v4311, 0.0
    %4313 = vadd.xlane.f32.xlu0 %v4312
    %v4314 = vpop.xlane.xlu0 %4313
    %v4315 = vmul.f32 %v4314, %v1162
    %v4316 = vadd.f32 %v4315, 1e-05
    %v4317 = vrsqrt.pop %v4316
    %v4318 = vmul.f32 %v4317, %v4316
    %v4319 = vmul.f32 %v4318, %v4317
    %v4320 = vmul.f32 0.5, %v4319
    %v4321 = vsub.f32 1.5, %v4320
    %v4322 = vmul.f32 %v4317, %v4321
    %vm4323 = vweird.f32 %v4316
    %vm4324 = vweird.f32 %v4317
    %vm4325 = vmor %vm4323, %vm4324
    %v4326 = vsel %vm4325, %v4317, %v4322
    %v4327 = vmul.f32 %v4310, %v4326
    %v4328 = vmul.f32 %v4327, %v2308
    %v4329 = vadd.f32 %v4328, %v2312
    %v4331 = vsel %vm821, %v4329, 0
    %4333 = vmatpush.msra.mxu0 0.0
    %4334 = vmatpush.msra.mxu0 0.0
    %4335 = vmatpush.msra.mxu0 0.0
    %4336 = vmatpush.msra.mxu0 0.0
    %4337 = vmatpush.msra.mxu0 0.0
    %4338 = vmatpush.msra.mxu0 0.0
    %4339 = vmatpush.msra.mxu0 0.0
    %4340 = vmatpush.msra.mxu0 0.0
    %4341 = vmatpush.msra.mxu0 0.0
    %4342 = vmatpush.msra.mxu0 0.0
    %4343 = vmatpush.msra.mxu0 0.0
    %4344 = vmatpush.msra.mxu0 0.0
    %4345 = vmatpush.msra.mxu0 %v681
    %4346 = vmatpush.msra.mxu0 %v680
    %4347 = vmatpush.msra.mxu0 %v679
    %4348 = vmatpush.msra.mxu0 %v678
    %4349 = vmatmul.f32.gmra.mxu0 %v4331
    %v4350 = vpop.f32.mrf.mxu0
    %v4351 = vadd.f32 %v2316, %v4350
    %4352 = vdwg.mxu0
    %v4354 = vsel %vm821, %v3866, 0
    %4356 = vmatpush.msra.mxu0 0.0
    %4357 = vmatpush.msra.mxu0 0.0
    %4358 = vmatpush.msra.mxu0 0.0
    %4359 = vmatpush.msra.mxu0 0.0
    %4360 = vmatpush.msra.mxu0 0.0
    %4361 = vmatpush.msra.mxu0 0.0
    %4362 = vmatpush.msra.mxu0 0.0
    %4363 = vmatpush.msra.mxu0 0.0
    %4364 = vmatpush.msra.mxu0 0.0
    %4365 = vmatpush.msra.mxu0 0.0
    %4366 = vmatpush.msra.mxu0 0.0
    %4367 = vmatpush.msra.mxu0 0.0
    %4368 = vmatpush.msra.mxu0 %v2352
    %4369 = vmatpush.msra.mxu0 %v2350
    %4370 = vmatpush.msra.mxu0 %v2348
    %4371 = vmatpush.msra.mxu0 %v2346
    %4372 = vmatmul.f32.gmra.mxu0 %v4354
    %v4373 = vpop.f32.mrf.mxu0
    %v4374 = vadd.f32 %v2358, %v4373
    %4375 = vdwg.mxu0
    %v4377 = vsel %vm848, %v4351, 0
    %v4380 = vsel %vm848, %v4374, 0
    %4382 = vmatpush.xpose.msra.mxu0 0.0
    %4383 = vmatpush.xpose.msra.mxu0 0.0
    %4384 = vmatpush.xpose.msra.mxu0 0.0
    %4385 = vmatpush.xpose.msra.mxu0 0.0
    %4386 = vmatpush.xpose.msra.mxu0 0.0
    %4387 = vmatpush.xpose.msra.mxu0 0.0
    %4388 = vmatpush.xpose.msra.mxu0 0.0
    %4389 = vmatpush.xpose.msra.mxu0 0.0
    %4390 = vmatpush.xpose.msra.mxu0 0.0
    %4391 = vmatpush.xpose.msra.mxu0 0.0
    %4392 = vmatpush.xpose.msra.mxu0 0.0
    %4393 = vmatpush.xpose.msra.mxu0 0.0
    %4394 = vmatpush.xpose.msra.mxu0 0.0
    %4395 = vmatpush.xpose.msra.mxu0 0.0
    %4396 = vmatpush.xpose.msra.mxu0 0.0
    %4397 = vmatpush.xpose.msra.mxu0 %v4380
    %4398 = vmatmul.f32.gmra.mxu0 %v4377
    %v4399 = vpop.f32.mrf.mxu0
    %v4400 = vadd.f32 0.0, %v4399
    %4401 = vdwg.mxu0
    %v4402 = vmul.f32 %v4400, 0.35355338
    %v4403 = vsel %vm2410, %v4402, -inf
    %4404 = vmax.xlane.f32.xlu0 %v4403
    %v4405 = vpop.xlane.xlu0 %4404
    %v4406 = vsub.f32 %v4402, %v4405
    %v4407 = vmul.f32 %v4406, 1.442695
    %v4408 = vpow.pop %v4407
    %v4409 = vsel %vm2410, %v4408, 0.0
    %4410 = vadd.xlane.f32.xlu0 %v4409
    %v4411 = vpop.xlane.xlu0 %4410
    %v4412 = vrcp.pop %v4411
    %v4413 = vmul.f32 %v4408, %v4412
    %4414 = vrot.lane.b32.xlu0 %v4374, 96
    %v4415 = vpop.permute.xlu0 %4414
    %v4418 = vsel %vm848, %v4413, 0
    %4420 = vmatpush.msra.mxu0 0.0
    %4421 = vmatpush.msra.mxu0 0.0
    %4422 = vmatpush.msra.mxu0 0.0
    %4423 = vmatpush.msra.mxu0 0.0
    %4424 = vmatpush.msra.mxu0 0.0
    %4425 = vmatpush.msra.mxu0 0.0
    %4426 = vmatpush.msra.mxu0 0.0
    %4427 = vmatpush.msra.mxu0 0.0
    %4428 = vmatpush.msra.mxu0 0.0
    %4429 = vmatpush.msra.mxu0 0.0
    %4430 = vmatpush.msra.mxu0 0.0
    %4431 = vmatpush.msra.mxu0 0.0
    %4432 = vmatpush.msra.mxu0 0.0
    %4433 = vmatpush.msra.mxu0 0.0
    %4434 = vmatpush.msra.mxu0 0.0
    %4435 = vmatpush.msra.mxu0 %v4415
    %4436 = vmatmul.f32.gmra.mxu0 %v4418
    %v4437 = vpop.f32.mrf.mxu0
    %v4438 = vadd.f32 0.0, %v4437
    %4439 = vdwg.mxu0
    %4440 = vrot.lane.b32.xlu0 %v4351, 120
    %v4441 = vpop.permute.xlu0 %4440
    %4442 = vrot.lane.b32.xlu0 %v4374, 120
    %v4443 = vpop.permute.xlu0 %4442
    %v4444 = vsel %vm848, %v4441, 0
    %v4446 = vsel %vm848, %v4443, 0
    %4448 = vmatpush.xpose.msra.mxu0 0.0
    %4449 = vmatpush.xpose.msra.mxu0 0.0
    %4450 = vmatpush.xpose.msra.mxu0 0.0
    %4451 = vmatpush.xpose.msra.mxu0 0.0
    %4452 = vmatpush.xpose.msra.mxu0 0.0
    %4453 = vmatpush.xpose.msra.mxu0 0.0
    %4454 = vmatpush.xpose.msra.mxu0 0.0
    %4455 = vmatpush.xpose.msra.mxu0 0.0
    %4456 = vmatpush.xpose.msra.mxu0 0.0
    %4457 = vmatpush.xpose.msra.mxu0 0.0
    %4458 = vmatpush.xpose.msra.mxu0 0.0
    %4459 = vmatpush.xpose.msra.mxu0 0.0
    %4460 = vmatpush.xpose.msra.mxu0 0.0
    %4461 = vmatpush.xpose.msra.mxu0 0.0
    %4462 = vmatpush.xpose.msra.mxu0 0.0
    %4463 = vmatpush.xpose.msra.mxu0 %v4446
    %4464 = vmatmul.f32.gmra.mxu0 %v4444
    %v4465 = vpop.f32.mrf.mxu0
    %v4466 = vadd.f32 0.0, %v4465
    %4467 = vdwg.mxu0
    %v4468 = vmul.f32 %v4466, 0.35355338
    %v4469 = vsel %vm2410, %v4468, -inf
    %4470 = vmax.xlane.f32.xlu0 %v4469
    %v4471 = vpop.xlane.xlu0 %4470
    %v4472 = vsub.f32 %v4468, %v4471
    %v4473 = vmul.f32 %v4472, 1.442695
    %v4474 = vpow.pop %v4473
    %v4475 = vsel %vm2410, %v4474, 0.0
    %4476 = vadd.xlane.f32.xlu0 %v4475
    %v4477 = vpop.xlane.xlu0 %4476
    %v4478 = vrcp.pop %v4477
    %v4479 = vmul.f32 %v4474, %v4478
    %4480 = vrot.lane.b32.xlu0 %v4374, 88
    %v4481 = vpop.permute.xlu0 %4480
    %v4484 = vsel %vm848, %v4479, 0
    %4486 = vmatpush.msra.mxu0 0.0
    %4487 = vmatpush.msra.mxu0 0.0
    %4488 = vmatpush.msra.mxu0 0.0
    %4489 = vmatpush.msra.mxu0 0.0
    %4490 = vmatpush.msra.mxu0 0.0
    %4491 = vmatpush.msra.mxu0 0.0
    %4492 = vmatpush.msra.mxu0 0.0
    %4493 = vmatpush.msra.mxu0 0.0
    %4494 = vmatpush.msra.mxu0 0.0
    %4495 = vmatpush.msra.mxu0 0.0
    %4496 = vmatpush.msra.mxu0 0.0
    %4497 = vmatpush.msra.mxu0 0.0
    %4498 = vmatpush.msra.mxu0 0.0
    %4499 = vmatpush.msra.mxu0 0.0
    %4500 = vmatpush.msra.mxu0 0.0
    %4501 = vmatpush.msra.mxu0 %v4481
    %4502 = vmatmul.f32.gmra.mxu0 %v4484
    %v4503 = vpop.f32.mrf.mxu0
    %v4504 = vadd.f32 0.0, %v4503
    %4505 = vdwg.mxu0
    %4506 = vrot.lane.b32.xlu0 %v4351, 112
    %v4507 = vpop.permute.xlu0 %4506
    %4508 = vrot.lane.b32.xlu0 %v4374, 112
    %v4509 = vpop.permute.xlu0 %4508
    %v4510 = vsel %vm848, %v4507, 0
    %v4512 = vsel %vm848, %v4509, 0
    %4514 = vmatpush.xpose.msra.mxu0 0.0
    %4515 = vmatpush.xpose.msra.mxu0 0.0
    %4516 = vmatpush.xpose.msra.mxu0 0.0
    %4517 = vmatpush.xpose.msra.mxu0 0.0
    %4518 = vmatpush.xpose.msra.mxu0 0.0
    %4519 = vmatpush.xpose.msra.mxu0 0.0
    %4520 = vmatpush.xpose.msra.mxu0 0.0
    %4521 = vmatpush.xpose.msra.mxu0 0.0
    %4522 = vmatpush.xpose.msra.mxu0 0.0
    %4523 = vmatpush.xpose.msra.mxu0 0.0
    %4524 = vmatpush.xpose.msra.mxu0 0.0
    %4525 = vmatpush.xpose.msra.mxu0 0.0
    %4526 = vmatpush.xpose.msra.mxu0 0.0
    %4527 = vmatpush.xpose.msra.mxu0 0.0
    %4528 = vmatpush.xpose.msra.mxu0 0.0
    %4529 = vmatpush.xpose.msra.mxu0 %v4512
    %4530 = vmatmul.f32.gmra.mxu0 %v4510
    %v4531 = vpop.f32.mrf.mxu0
    %v4532 = vadd.f32 0.0, %v4531
    %4533 = vdwg.mxu0
    %v4534 = vmul.f32 %v4532, 0.35355338
    %v4535 = vsel %vm2410, %v4534, -inf
    %4536 = vmax.xlane.f32.xlu0 %v4535
    %v4537 = vpop.xlane.xlu0 %4536
    %v4538 = vsub.f32 %v4534, %v4537
    %v4539 = vmul.f32 %v4538, 1.442695
    %v4540 = vpow.pop %v4539
    %v4541 = vsel %vm2410, %v4540, 0.0
    %4542 = vadd.xlane.f32.xlu0 %v4541
    %v4543 = vpop.xlane.xlu0 %4542
    %v4544 = vrcp.pop %v4543
    %v4545 = vmul.f32 %v4540, %v4544
    %4546 = vrot.lane.b32.xlu0 %v4374, 80
    %v4547 = vpop.permute.xlu0 %4546
    %v4550 = vsel %vm848, %v4545, 0
    %4552 = vmatpush.msra.mxu0 0.0
    %4553 = vmatpush.msra.mxu0 0.0
    %4554 = vmatpush.msra.mxu0 0.0
    %4555 = vmatpush.msra.mxu0 0.0
    %4556 = vmatpush.msra.mxu0 0.0
    %4557 = vmatpush.msra.mxu0 0.0
    %4558 = vmatpush.msra.mxu0 0.0
    %4559 = vmatpush.msra.mxu0 0.0
    %4560 = vmatpush.msra.mxu0 0.0
    %4561 = vmatpush.msra.mxu0 0.0
    %4562 = vmatpush.msra.mxu0 0.0
    %4563 = vmatpush.msra.mxu0 0.0
    %4564 = vmatpush.msra.mxu0 0.0
    %4565 = vmatpush.msra.mxu0 0.0
    %4566 = vmatpush.msra.mxu0 0.0
    %4567 = vmatpush.msra.mxu0 %v4547
    %4568 = vmatmul.f32.gmra.mxu0 %v4550
    %v4569 = vpop.f32.mrf.mxu0
    %v4570 = vadd.f32 0.0, %v4569
    %4571 = vdwg.mxu0
    %4572 = vrot.lane.b32.xlu0 %v4351, 104
    %v4573 = vpop.permute.xlu0 %4572
    %4574 = vrot.lane.b32.xlu0 %v4374, 104
    %v4575 = vpop.permute.xlu0 %4574
    %v4576 = vsel %vm848, %v4573, 0
    %v4578 = vsel %vm848, %v4575, 0
    %4580 = vmatpush.xpose.msra.mxu0 0.0
    %4581 = vmatpush.xpose.msra.mxu0 0.0
    %4582 = vmatpush.xpose.msra.mxu0 0.0
    %4583 = vmatpush.xpose.msra.mxu0 0.0
    %4584 = vmatpush.xpose.msra.mxu0 0.0
    %4585 = vmatpush.xpose.msra.mxu0 0.0
    %4586 = vmatpush.xpose.msra.mxu0 0.0
    %4587 = vmatpush.xpose.msra.mxu0 0.0
    %4588 = vmatpush.xpose.msra.mxu0 0.0
    %4589 = vmatpush.xpose.msra.mxu0 0.0
    %4590 = vmatpush.xpose.msra.mxu0 0.0
    %4591 = vmatpush.xpose.msra.mxu0 0.0
    %4592 = vmatpush.xpose.msra.mxu0 0.0
    %4593 = vmatpush.xpose.msra.mxu0 0.0
    %4594 = vmatpush.xpose.msra.mxu0 0.0
    %4595 = vmatpush.xpose.msra.mxu0 %v4578
    %4596 = vmatmul.f32.gmra.mxu0 %v4576
    %v4597 = vpop.f32.mrf.mxu0
    %v4598 = vadd.f32 0.0, %v4597
    %4599 = vdwg.mxu0
    %v4600 = vmul.f32 %v4598, 0.35355338
    %v4601 = vsel %vm2410, %v4600, -inf
    %4602 = vmax.xlane.f32.xlu0 %v4601
    %v4603 = vpop.xlane.xlu0 %4602
    %v4604 = vsub.f32 %v4600, %v4603
    %v4605 = vmul.f32 %v4604, 1.442695
    %v4606 = vpow.pop %v4605
    %v4607 = vsel %vm2410, %v4606, 0.0
    %4608 = vadd.xlane.f32.xlu0 %v4607
    %v4609 = vpop.xlane.xlu0 %4608
    %v4610 = vrcp.pop %v4609
    %v4611 = vmul.f32 %v4606, %v4610
    %4612 = vrot.lane.b32.xlu0 %v4374, 72
    %v4613 = vpop.permute.xlu0 %4612
    %v4616 = vsel %vm848, %v4611, 0
    %4618 = vmatpush.msra.mxu0 0.0
    %4619 = vmatpush.msra.mxu0 0.0
    %4620 = vmatpush.msra.mxu0 0.0
    %4621 = vmatpush.msra.mxu0 0.0
    %4622 = vmatpush.msra.mxu0 0.0
    %4623 = vmatpush.msra.mxu0 0.0
    %4624 = vmatpush.msra.mxu0 0.0
    %4625 = vmatpush.msra.mxu0 0.0
    %4626 = vmatpush.msra.mxu0 0.0
    %4627 = vmatpush.msra.mxu0 0.0
    %4628 = vmatpush.msra.mxu0 0.0
    %4629 = vmatpush.msra.mxu0 0.0
    %4630 = vmatpush.msra.mxu0 0.0
    %4631 = vmatpush.msra.mxu0 0.0
    %4632 = vmatpush.msra.mxu0 0.0
    %4633 = vmatpush.msra.mxu0 %v4613
    %4634 = vmatmul.f32.gmra.mxu0 %v4616
    %v4635 = vpop.f32.mrf.mxu0
    %v4636 = vadd.f32 0.0, %v4635
    %4637 = vdwg.mxu0
    %4639 = vrot.lane.b32.xlu0 %v4504, 8
    %v4640 = vpop.permute.xlu0 %4639
    %4643 = vrot.lane.b32.xlu0 %v4570, 16
    %v4644 = vpop.permute.xlu0 %4643
    %4647 = vrot.lane.b32.xlu0 %v4636, 24
    %v4648 = vpop.permute.xlu0 %4647
    %v4650 = vsel %vm848, %v4438, %v4640
    %v4651 = vsel %vm1122, %v4650, %v4644
    %v4652 = vsel %vm1124, %v4651, %v4648
    %v4654 = vsel %vm821, %v4652, 0
    %4656 = vmatpush.msra.mxu0 0.0
    %4657 = vmatpush.msra.mxu0 0.0
    %4658 = vmatpush.msra.mxu0 0.0
    %4659 = vmatpush.msra.mxu0 0.0
    %4660 = vmatpush.msra.mxu0 0.0
    %4661 = vmatpush.msra.mxu0 0.0
    %4662 = vmatpush.msra.mxu0 0.0
    %4663 = vmatpush.msra.mxu0 0.0
    %4664 = vmatpush.msra.mxu0 0.0
    %4665 = vmatpush.msra.mxu0 0.0
    %4666 = vmatpush.msra.mxu0 0.0
    %4667 = vmatpush.msra.mxu0 0.0
    %4668 = vmatpush.msra.mxu0 %v677
    %4669 = vmatpush.msra.mxu0 %v676
    %4670 = vmatpush.msra.mxu0 %v675
    %4671 = vmatpush.msra.mxu0 %v674
    %4672 = vmatmul.f32.gmra.mxu0 %v4654
    %v4673 = vpop.f32.mrf.mxu0
    %v4674 = vadd.f32 %v2662, %v4673
    %4675 = vdwg.mxu0
    %v4676 = vadd.f32 %v4329, %v4674
    %v4677 = vsel %vm2284, %v4676, 0.0
    %4678 = vadd.xlane.f32.xlu0 %v4677
    %v4679 = vpop.xlane.xlu0 %4678
    %v4680 = vmul.f32 %v4679, %v1162
    %v4681 = vsub.f32 %v4676, %v4680
    %v4682 = vmul.f32 %v4681, %v4681
    %v4683 = vsel %vm2284, %v4682, 0.0
    %4684 = vadd.xlane.f32.xlu0 %v4683
    %v4685 = vpop.xlane.xlu0 %4684
    %v4686 = vmul.f32 %v4685, %v1162
    %v4687 = vadd.f32 %v4686, 1e-05
    %v4688 = vrsqrt.pop %v4687
    %v4689 = vmul.f32 %v4688, %v4687
    %v4690 = vmul.f32 %v4689, %v4688
    %v4691 = vmul.f32 0.5, %v4690
    %v4692 = vsub.f32 1.5, %v4691
    %v4693 = vmul.f32 %v4688, %v4692
    %vm4694 = vweird.f32 %v4687
    %vm4695 = vweird.f32 %v4688
    %vm4696 = vmor %vm4694, %vm4695
    %v4697 = vsel %vm4696, %v4688, %v4693
    %v4698 = vmul.f32 %v4681, %v4697
    %v4699 = vmul.f32 %v4698, %v2711
    %v4700 = vadd.f32 %v4699, %v2715
    %v4702 = vsel %vm821, %v4700, 0
    %4704 = vmatpush.msra.mxu0 0.0
    %4705 = vmatpush.msra.mxu0 0.0
    %4706 = vmatpush.msra.mxu0 0.0
    %4707 = vmatpush.msra.mxu0 0.0
    %4708 = vmatpush.msra.mxu0 0.0
    %4709 = vmatpush.msra.mxu0 0.0
    %4710 = vmatpush.msra.mxu0 0.0
    %4711 = vmatpush.msra.mxu0 0.0
    %4712 = vmatpush.msra.mxu0 0.0
    %4713 = vmatpush.msra.mxu0 0.0
    %4714 = vmatpush.msra.mxu0 0.0
    %4715 = vmatpush.msra.mxu0 0.0
    %4716 = vmatpush.msra.mxu0 %v687
    %4717 = vmatpush.msra.mxu0 %v686
    %4718 = vmatpush.msra.mxu0 %v685
    %4719 = vmatpush.msra.mxu0 %v684
    %4720 = vmatmul.f32.gmra.mxu0 %v4702
    %v4721 = vpop.f32.mrf.mxu0
    %v4722 = vadd.f32 %v2719, %v4721
    %4723 = vdwg.mxu0
    %v4724 = vmul.f32 %v4722, 0.5
    %v4725 = vmul.f32 %v4722, 0.70710677
    %vm4726 = vcmp.lt.f32.partialorder %v4725, 0.0
    %v4727 = vsel %vm4726, -1.0, 1.0
    %v4728 = vand.u32 2147483647, %v4725
    %v4729 = vmul.f32 %v4728, 0.3275911
    %v4730 = vadd.f32 %v4729, 1.0
    %v4731 = vrcp.pop %v4730
    %v4732 = vmul.f32 %v4730, %v4731
    %v4733 = vsub.f32 1.0, %v4732
    %v4734 = vmul.f32 %v4731, %v4733
    %v4735 = vadd.f32 %v4731, %v4734
    %vm4736 = vweird.f32 %v4730
    %vm4737 = vweird.f32 %v4731
    %vm4738 = vmor %vm4736, %vm4737
    %v4739 = vsel %vm4738, %v4731, %v4735
    %v4740 = vand.u32 2147483647, %v4730
    %vm4741 = vcmp.eq.f32.partialorder %v4740, 8.507059e+37
    %v4742 = vand.u32 %v4730, 2147483648
    %v4743 = vor.u32 1.1754944e-38, %v4742
    %v4744 = vsel %vm4741, %v4743, %v4739
    %v4745 = vmul.f32 1.0, %v4744
    %v4746 = vmul.f32 %v4745, 1.0614054
    %v4747 = vadd.f32 %v4746, -1.4531521
    %v4748 = vmul.f32 %v4747, %v4745
    %v4749 = vadd.f32 %v4748, 1.4214138
    %v4750 = vmul.f32 %v4749, %v4745
    %v4751 = vadd.f32 %v4750, -0.28449672
    %v4752 = vmul.f32 %v4751, %v4745
    %v4753 = vadd.f32 %v4752, 0.2548296
    %v4754 = vmul.f32 %v4753, %v4745
    %v4755 = vsub.f32 0.0, %v4728
    %v4756 = vmul.f32 %v4755, %v4728
    %v4757 = vmul.f32 %v4756, 1.442695
    %v4758 = vpow.pop %v4757
    %v4759 = vmul.f32 %v4754, %v4758
    %v4760 = vsub.f32 1.0, %v4759
    %v4761 = vmul.f32 %v4727, %v4760
    %v4762 = vadd.f32 %v4761, 1.0
    %v4763 = vmul.f32 %v4724, %v4762
    %v4765 = vsel %vm1259, %v4763, 0
    %4767 = vmatpush.msra.mxu0 0.0
    %4768 = vmatpush.msra.mxu0 0.0
    %4769 = vmatpush.msra.mxu0 0.0
    %4770 = vmatpush.msra.mxu0 0.0
    %4771 = vmatpush.msra.mxu0 0.0
    %4772 = vmatpush.msra.mxu0 0.0
    %4773 = vmatpush.msra.mxu0 0.0
    %4774 = vmatpush.msra.mxu0 0.0
    %4775 = vmatpush.msra.mxu0 %v695
    %4776 = vmatpush.msra.mxu0 %v694
    %4777 = vmatpush.msra.mxu0 %v693
    %4778 = vmatpush.msra.mxu0 %v692
    %4779 = vmatpush.msra.mxu0 %v691
    %4780 = vmatpush.msra.mxu0 %v690
    %4781 = vmatpush.msra.mxu0 %v689
    %4782 = vmatpush.msra.mxu0 %v688
    %4783 = vmatmul.f32.gmra.mxu0 %v4765
    %v4784 = vpop.f32.mrf.mxu0
    %v4785 = vadd.f32 %v2785, %v4784
    %4786 = vdwg.mxu0
    %v4787 = vadd.f32 %v4700, %v4785
    %v4788 = vsel %vm2284, %v4787, 0.0
    %4789 = vadd.xlane.f32.xlu0 %v4788
    %v4790 = vpop.xlane.xlu0 %4789
    %v4791 = vmul.f32 %v4790, %v1162
    %v4792 = vsub.f32 %v4787, %v4791
    %v4793 = vmul.f32 %v4792, %v4792
    %v4794 = vsel %vm2284, %v4793, 0.0
    %4795 = vadd.xlane.f32.xlu0 %v4794
    %v4796 = vpop.xlane.xlu0 %4795
    %v4797 = vmul.f32 %v4796, %v1162
    %v4798 = vadd.f32 %v4797, 1e-05
    %v4799 = vrsqrt.pop %v4798
    %v4800 = vmul.f32 %v4799, %v4798
    %v4801 = vmul.f32 %v4800, %v4799
    %v4802 = vmul.f32 0.5, %v4801
    %v4803 = vsub.f32 1.5, %v4802
    %v4804 = vmul.f32 %v4799, %v4803
    %vm4805 = vweird.f32 %v4798
    %vm4806 = vweird.f32 %v4799
    %vm4807 = vmor %vm4805, %vm4806
    %v4808 = vsel %vm4807, %v4799, %v4804
    %v4809 = vmul.f32 %v4792, %v4808
    %v4810 = vmul.f32 %v4809, %v2834
    %v4811 = vadd.f32 %v4810, %v2838
    %v4812 = vsel %vm2284, %v4811, 0.0
    %4813 = vadd.xlane.f32.xlu0 %v4812
    %v4814 = vpop.xlane.xlu0 %4813
    %v4815 = vmul.f32 %v4814, %v1162
    %v4816 = vsub.f32 %v4811, %v4815
    %v4817 = vmul.f32 %v4816, %v4816
    %v4818 = vsel %vm2284, %v4817, 0.0
    %4819 = vadd.xlane.f32.xlu0 %v4818
    %v4820 = vpop.xlane.xlu0 %4819
    %v4821 = vmul.f32 %v4820, %v1162
    %v4822 = vadd.f32 %v4821, 1e-05
    %v4823 = vrsqrt.pop %v4822
    %v4824 = vmul.f32 %v4823, %v4822
    %v4825 = vmul.f32 %v4824, %v4823
    %v4826 = vmul.f32 0.5, %v4825
    %v4827 = vsub.f32 1.5, %v4826
    %v4828 = vmul.f32 %v4823, %v4827
    %vm4829 = vweird.f32 %v4822
    %vm4830 = vweird.f32 %v4823
    %vm4831 = vmor %vm4829, %vm4830
    %v4832 = vsel %vm4831, %v4823, %v4828
    %v4833 = vmul.f32 %v4816, %v4832
    %v4834 = vmul.f32 %v4833, %v2864
    %v4835 = vadd.f32 %v4834, %v2868
    %v4837 = vrot.slane %v4835, 4
    %v4838 = vsel %vm821, %v4837, 0
    %4840 = vmatpush.msra.mxu0 0.0
    %4841 = vmatpush.msra.mxu0 0.0
    %4842 = vmatpush.msra.mxu0 0.0
    %4843 = vmatpush.msra.mxu0 0.0
    %4844 = vmatpush.msra.mxu0 0.0
    %4845 = vmatpush.msra.mxu0 0.0
    %4846 = vmatpush.msra.mxu0 0.0
    %4847 = vmatpush.msra.mxu0 0.0
    %4848 = vmatpush.msra.mxu0 0.0
    %4849 = vmatpush.msra.mxu0 0.0
    %4850 = vmatpush.msra.mxu0 0.0
    %4851 = vmatpush.msra.mxu0 0.0
    %4852 = vmatpush.msra.mxu0 %v779
    %4853 = vmatpush.msra.mxu0 %v778
    %4854 = vmatpush.msra.mxu0 %v777
    %4855 = vmatpush.msra.mxu0 %v776
    %4856 = vmatmul.f32.gmra.mxu0 %v4838
    %v4857 = vpop.f32.mrf.mxu0
    %v4858 = vadd.f32 %v775, %v4857
    %4859 = vdwg.mxu0
    %s4860 = scalar_lea.vmem %s113, 1
    %4861 = vst.msk [vmem:[%s4860] sm:$0x1] %vm2895, %v4858
    // Predicated region
    $region354: #{informer_forward.1} parent=1 // pred_check
      _
    $region355: #{informer_forward.1} parent=1 // pred_check_branch
      %4863 = sbr.rel (0) target = $region357
    $region356: #{informer_forward.1} parent=1 // pred_region
      _
    $region357: #{informer_forward.1} parent=1 // pred_fallthru
      _
    // Predicated region
    $region358: #{informer_forward.1} parent=1 // pred_check
      _
    $region359: #{informer_forward.1} parent=1 // pred_check_branch
      %4865 = sbr.rel (0) target = $region361
    $region360: #{informer_forward.1} parent=1 // pred_region
      _
    $region361: #{informer_forward.1} parent=1 // pred_fallthru
      _
    %4866 = vsyncpa [#allocation4], 1
    %4867 = vsyncpa [#allocation6], 1
    %4868 = vsyncpa [#allocation9], 1
    %4869 = vsyncpa [#allocation12], 1
    %4870 = vsyncpa [#allocation15], 1
    %4871 = vsyncpa [#allocation18], 1
    %4872 = vsyncpa [#allocation21], 1
    %4873 = vsyncpa [#allocation24], 1
    %4874 = vsyncpa [#allocation27], 1
    %4875 = vsyncpa [#allocation30], 1
    %4876 = vsyncpa [#allocation33], 1
    %4877 = vsyncpa [#allocation36], 1
    %4878 = vsyncpa [#allocation39], 1
    %4879 = vsyncpa [#allocation42], 1
    %4880 = vsyncpa [#allocation45], 1
    %4881 = vsyncpa [#allocation48], 1
    %4882 = vsyncpa [#allocation51], 1

</llo_original>
